<compile_context>
chip_gen: v5e
topology: v5e:2x2
jax: 0.10.0
libtpu: 0.0.40
codegen_flags: <defaults>
</compile_context>

<pallas_src>
import functools

import numpy as np

import jax
import jax.numpy as jnp
from jax import lax
from jax.experimental import pallas as pl
from jax.experimental.pallas import tpu as pltpu


def _round_up(n, m):
    return ((n + m - 1) // m) * m


# ---------------------------------------------------------------------------
# One-time parameter preparation (hoisted out of the forward pass)
# ---------------------------------------------------------------------------
def prepare_params(params):
    """Host-side, one-time re-layout of the PyTorch-style parameters into the
    banded / tiled (bf16) matrices consumed by the fused Pallas kernel."""
    w1 = np.asarray(params["w1"], np.float32)   # (4, 1, 3, 3)
    b1 = np.asarray(params["b1"], np.float32)
    w2 = np.asarray(params["w2"], np.float32)   # (32, 4, 3, 3)
    b2 = np.asarray(params["b2"], np.float32)
    w3 = np.asarray(params["w3"], np.float32)   # (64, 32, 3, 3)
    b3 = np.asarray(params["b3"], np.float32)
    wl = np.asarray(params["wl"], np.float32)   # (10, 5184)
    bl = np.asarray(params["bl"], np.float32)

    def band(w, w_in, w_out, stride=1, offset=0):
        # (Co, Ci, 3, 3) -> (3, w_in*Ci, w_out*Co) banded matrix such that
        #   out[r, j*Co + co] = sum_di  act[r + di, :] @ band[di]
        # equals a VALID 3x3 conv (output-column stride `stride`, offset
        # `offset`) on a channel-minor (H, W*Ci) activation.
        co, ci, kh, kw = w.shape
        m = np.zeros((kh, w_in * ci, w_out * co), np.float32)
        for di in range(kh):
            for j in range(w_out):
                for dj in range(kw):
                    col = offset + j * stride + dj
                    m[di, col * ci:(col + 1) * ci, j * co:(j + 1) * co] = w[:, :, di, dj].T
        return m

    # Linear: rows re-ordered from PyTorch's NCHW flatten (c*81 + i*9 + j) to
    # the kernel's (i, j*64 + c) activation layout; N zero-padded 10 -> 128.
    wl_r = np.transpose(wl.reshape(10, 64, 9, 9), (2, 3, 1, 0)).reshape(9, 576, 10)
    wl_pad = np.zeros((9, 576, 128), np.float32)
    wl_pad[:, :, :10] = wl_r
    bl_pad = np.zeros((1, 128), np.float32)
    bl_pad[0, :10] = bl

    prep = {
        # conv1 fused with the 2x2 pool: even / odd output-column bands.
        "w1e": band(w1, 28, 13, stride=2, offset=0),   # (3, 28, 52)
        "w1o": band(w1, 28, 13, stride=2, offset=1),   # (3, 28, 52)
        "b1t": np.tile(b1, 13)[None, :],               # (1, 52)
        "w2b": band(w2, 13, 11),                       # (3, 52, 352)
        "b2t": np.tile(b2, 11)[None, :],               # (1, 352)
        "w3b": band(w3, 11, 9),                        # (3, 352, 576)
        "b3t": np.tile(b3, 9)[None, :],                # (1, 576)
        "wlr": wl_pad,                                 # (9, 576, 128)
        "blt": bl_pad,                                 # (1, 128)
    }
    out = {}
    for k, v in prep.items():
        # Matmul weights in bf16 (MXU-native), biases stay f32 (VPU math).
        out[k] = jnp.asarray(v, jnp.bfloat16 if k.startswith("w") else jnp.float32)
    return out


# ---------------------------------------------------------------------------
# Fused Pallas kernel: conv1 + ReLU + maxpool + conv2 + conv3 + flatten + linear
# All activations are 2-D slabs with row index = h * Bt + b (H-major,
# batch-minor), so each conv tap is a contiguous, sublane-aligned slice and a
# single MXU matmul with M = Ho * Bt.
# ---------------------------------------------------------------------------
def _fused_forward_kernel(Bt, x_ref, w1e_ref, w1o_ref, b1_ref, w2_ref, b2_ref,
                          w3_ref, b3_ref, wl_ref, bl_ref, out_ref,
                          h1_ref, h2_ref, h3_ref):
    f32 = jnp.float32
    bf16 = jnp.bfloat16

    # ---- conv1 (3x3, 1->4) + bias + ReLU, fused with 2x2/2 max-pool --------
    # Input rows are parity-ordered: block rows [0, 14*Bt) are even input rows
    # (0,2,...,26), rows [14*Bt, 28*Bt) are odd input rows (1,3,...,27).
    xe_lo = x_ref[0 * Bt:13 * Bt, :].astype(bf16)     # input rows 0,2,...,24
    xe_hi = x_ref[1 * Bt:14 * Bt, :].astype(bf16)     # input rows 2,4,...,26
    xo_lo = x_ref[14 * Bt:27 * Bt, :].astype(bf16)    # input rows 1,3,...,25
    xo_hi = x_ref[15 * Bt:28 * Bt, :].astype(bf16)    # input rows 3,5,...,27

    e_taps = (xe_lo, xo_lo, xe_hi)   # conv output rows 0,2,...,24 (taps 0,1,2)
    o_taps = (xo_lo, xe_hi, xo_hi)   # conv output rows 1,3,...,25

    def conv1_partial(taps, w_ref):
        acc = jnp.dot(taps[0], w_ref[0], preferred_element_type=f32)
        for di in (1, 2):
            acc = acc + jnp.dot(taps[di], w_ref[di], preferred_element_type=f32)
        return acc

    m = conv1_partial(e_taps, w1e_ref)
    m = jnp.maximum(m, conv1_partial(e_taps, w1o_ref))
    m = jnp.maximum(m, conv1_partial(o_taps, w1e_ref))
    m = jnp.maximum(m, conv1_partial(o_taps, w1o_ref))
    # TODO(synk): Dropout2d(p=0.2) is identity at inference; training-mode
    # channel masking (RNG) is not implemented.
    h1_ref[...] = jnp.maximum(m + b1_ref[...], 0.0)              # (13*Bt, 52)

    # ---- conv2 (3x3, 4->32) + bias, no ReLU (duplicate-key Sequential) -----
    h2_ref[...] = jnp.broadcast_to(b2_ref[...], h2_ref.shape)
    for di in range(3):
        h2_ref[...] += jnp.dot(h1_ref[di * Bt:(di + 11) * Bt, :].astype(bf16),
                               w2_ref[di], preferred_element_type=f32)  # (11*Bt, 352)

    # ---- conv3 (3x3, 32->64) + bias -----------------------------------------
    h3_ref[...] = jnp.broadcast_to(b3_ref[...], h3_ref.shape)
    for di in range(3):
        h3_ref[...] += jnp.dot(h2_ref[di * Bt:(di + 9) * Bt, :].astype(bf16),
                               w3_ref[di], preferred_element_type=f32)  # (9*Bt, 576)

    # ---- flatten (NCHW order folded into the pre-permuted weight) + Linear --
    out_ref[...] = jnp.broadcast_to(bl_ref[...], out_ref.shape)         # (Bt, 128)
    for i in range(9):
        out_ref[...] += jnp.dot(h3_ref[i * Bt:(i + 1) * Bt, :].astype(bf16),
                                wl_ref[i], preferred_element_type=f32)


def model_forward(x_nchw, prep, *, batch_tile=128):
    """Fused Pallas forward. x_nchw: (B, 1, 28, 28) f32, prep: prepare_params(...)."""
    if x_nchw.ndim != 4:
        raise ValueError("Expected input to a 4D tensor")
    if x_nchw.shape[1:] != (1, 28, 28):
        raise ValueError("Expected each sample to have shape [1, 28, 28]")
    B = x_nchw.shape[0]

    # Batch tile (multiple of 8 for sublane alignment); pad B up to G*Bt.
    Bt = int(min(batch_tile, _round_up(B, 8)))
    G = pl.cdiv(B, Bt)
    Bp = G * Bt

    x2 = x_nchw[:, 0, :, :].astype(jnp.float32)                     # (B, 28, 28)
    if Bp != B:
        x2 = jnp.pad(x2, ((0, Bp - B), (0, 0), (0, 0)))
    # Parity-order the rows (even rows then odd rows), then lay each batch tile
    # out H-major / batch-minor: block row index = h_parity_idx * Bt + b.
    x_par = jnp.concatenate([x2[:, 0::2, :], x2[:, 1::2, :]], axis=1)    # (Bp, 28, 28)
    x_blk = (x_par.reshape(G, Bt, 28, 28)
                  .transpose(0, 2, 1, 3)
                  .reshape(G, 28 * Bt, 28))                              # (G, 28*Bt, 28)

    kernel = functools.partial(_fused_forward_kernel, Bt)

    flops_per_sample = 2 * (12 * 13 * 28 * 52 + 3 * 11 * 52 * 352
                            + 3 * 9 * 352 * 576 + 9 * 576 * 128)
    weight_bytes = sum(int(np.prod(v.shape)) * v.dtype.itemsize for v in prep.values())
    cost = pl.CostEstimate(
        flops=int(flops_per_sample) * int(Bp),
        transcendentals=0,
        bytes_accessed=int(weight_bytes) + int(Bp) * (28 * 28 + 128) * 4,
    )

    out = pl.pallas_call(
        kernel,
        out_shape=jax.ShapeDtypeStruct((Bp, 128), jnp.float32),
        grid=(G,),
        in_specs=[
            pl.BlockSpec((None, 28 * Bt, 28), lambda g: (g, 0, 0)),  # input tile
            pl.BlockSpec((3, 28, 52), lambda g: (0, 0, 0)),          # conv1 band, even cols
            pl.BlockSpec((3, 28, 52), lambda g: (0, 0, 0)),          # conv1 band, odd cols
            pl.BlockSpec((1, 52), lambda g: (0, 0)),                 # b1 tiled
            pl.BlockSpec((3, 52, 352), lambda g: (0, 0, 0)),         # conv2 band
            pl.BlockSpec((1, 352), lambda g: (0, 0)),                # b2 tiled
            pl.BlockSpec((3, 352, 576), lambda g: (0, 0, 0)),        # conv3 band
            pl.BlockSpec((1, 576), lambda g: (0, 0)),                # b3 tiled
            pl.BlockSpec((9, 576, 128), lambda g: (0, 0, 0)),        # linear (reordered, N-padded)
            pl.BlockSpec((1, 128), lambda g: (0, 0)),                # linear bias (N-padded)
        ],
        out_specs=pl.BlockSpec((Bt, 128), lambda g: (g, 0)),
        scratch_shapes=[
            pltpu.VMEM((13 * Bt, 52), jnp.float32),    # pooled conv1 activation
            pltpu.VMEM((11 * Bt, 352), jnp.float32),   # conv2 activation
            pltpu.VMEM((9 * Bt, 576), jnp.float32),    # conv3 activation
        ],
        compiler_params=pltpu.CompilerParams(
            dimension_semantics=("parallel",),
            vmem_limit_bytes=64 * 1024 * 1024,
        ),
        cost_estimate=cost,
    )(x_blk, prep["w1e"], prep["w1o"], prep["b1t"],
      prep["w2b"], prep["b2t"], prep["w3b"], prep["b3t"],
      prep["wlr"], prep["blt"])
    return out[:B, :10]


# ---------------------------------------------------------------------------
# Pure-JAX reference (numerical validation of the Pallas pipeline)
# ---------------------------------------------------------------------------
def reference_forward(x, params):
    def conv(h, w, b):
        y = lax.conv_general_dilated(
            h, w, (1, 1), "VALID",
            dimension_numbers=("NCHW", "OIHW", "NCHW"),
            precision=lax.Precision.HIGHEST,
        )
        return y + b[None, :, None, None]

    h = jnp.maximum(conv(x, params["w1"], params["b1"]), 0.0)
    h = lax.reduce_window(h, -jnp.inf, lax.max, (1, 1, 2, 2), (1, 1, 2, 2), "VALID")
    h = conv(h, params["w2"], params["b2"])
    h = conv(h, params["w3"], params["b3"])
    flat = h.reshape(h.shape[0], -1)
    return jnp.dot(flat, params["wl"].T, precision=lax.Precision.HIGHEST) + params["bl"]


# ---------------------------------------------------------------------------
# Main
# ---------------------------------------------------------------------------
if __name__ == "__main__":
    key = jax.random.PRNGKey(0)
    ks = jax.random.split(key, 9)

    def init(k, shape, fan_in):
        return (jax.random.normal(k, shape, jnp.float32) / jnp.sqrt(fan_in)).astype(jnp.float32)

    params = dict(
        w1=init(ks[1], (4, 1, 3, 3), 9.0),      b1=init(ks[2], (4,), 9.0),
        w2=init(ks[3], (32, 4, 3, 3), 36.0),    b2=init(ks[4], (32,), 36.0),
        w3=init(ks[5], (64, 32, 3, 3), 288.0),  b3=init(ks[6], (64,), 288.0),
        wl=init(ks[7], (10, 5184), 5184.0),     bl=init(ks[8], (10,), 5184.0),
    )

    B = 2
    x = jax.random.normal(ks[0], (B, 1, 28, 28), jnp.float32)

    prep = prepare_params(params)            # one-time weight re-layout (bf16 banded)
    fwd = jax.jit(model_forward)
    out = jax.block_until_ready(fwd(x, prep))
    assert out.shape == (B, 10), out.shape

    ref = jax.block_until_ready(reference_forward(x, params))
    # Kernel matmuls use bf16 inputs with f32 accumulation (MXU-native), so
    # results match the fp32/HIGHEST reference only to bf16-level accuracy.
    err = float(jnp.max(jnp.abs(out - ref)))
    scale = float(jnp.maximum(jnp.max(jnp.abs(ref)), 1e-6))
    assert err / scale < 5e-2, f"Pallas vs reference mismatch: abs err {err}, scale {scale}"

    print("KERNEL_OK")
</pallas_src>

<mosaic_0001>
module attributes {stable_mosaic.version = 11 : i64} {
  func.func @_fused_forward_kernel(%arg0: i32, %arg1: memref<1x224x28xf32, #tpu.memory_space<vmem>>, %arg2: memref<3x28x52xbf16, #tpu.memory_space<vmem>>, %arg3: memref<3x28x52xbf16, #tpu.memory_space<vmem>>, %arg4: memref<1x52xf32, #tpu.memory_space<vmem>>, %arg5: memref<3x52x352xbf16, #tpu.memory_space<vmem>>, %arg6: memref<1x352xf32, #tpu.memory_space<vmem>>, %arg7: memref<3x352x576xbf16, #tpu.memory_space<vmem>>, %arg8: memref<1x576xf32, #tpu.memory_space<vmem>>, %arg9: memref<9x576x128xbf16, #tpu.memory_space<vmem>>, %arg10: memref<1x128xf32, #tpu.memory_space<vmem>>, %arg11: memref<8x128xf32, #tpu.memory_space<vmem>>, %arg12: memref<104x52xf32, #tpu.memory_space<vmem>>, %arg13: memref<88x352xf32, #tpu.memory_space<vmem>>, %arg14: memref<72x576xf32, #tpu.memory_space<vmem>>) attributes {dimension_semantics = [#tpu.dimension_semantics<parallel>], iteration_bounds = array<i64: 1>, scalar_prefetch = 0 : i64, scratch_operands = 3 : i64, tpu.core_type = #tpu.core_type<tc>, window_params = [{transform_indices = @transform_0, window_bounds = array<i64: 1, 224, 28>}, {pipeline_mode = #tpu.pipeline_mode<synchronous>, transform_indices = @transform_1, window_bounds = array<i64: 3, 28, 52>}, {pipeline_mode = #tpu.pipeline_mode<synchronous>, transform_indices = @transform_2, window_bounds = array<i64: 3, 28, 52>}, {pipeline_mode = #tpu.pipeline_mode<synchronous>, transform_indices = @transform_3, window_bounds = array<i64: 1, 52>}, {pipeline_mode = #tpu.pipeline_mode<synchronous>, transform_indices = @transform_4, window_bounds = array<i64: 3, 52, 352>}, {pipeline_mode = #tpu.pipeline_mode<synchronous>, transform_indices = @transform_5, window_bounds = array<i64: 1, 352>}, {pipeline_mode = #tpu.pipeline_mode<synchronous>, transform_indices = @transform_6, window_bounds = array<i64: 3, 352, 576>}, {pipeline_mode = #tpu.pipeline_mode<synchronous>, transform_indices = @transform_7, window_bounds = array<i64: 1, 576>}, {pipeline_mode = #tpu.pipeline_mode<synchronous>, transform_indices = @transform_8, window_bounds = array<i64: 9, 576, 128>}, {pipeline_mode = #tpu.pipeline_mode<synchronous>, transform_indices = @transform_9, window_bounds = array<i64: 1, 128>}, {transform_indices = @transform_10, window_bounds = array<i64: 8, 128>}]} {
    %c0 = arith.constant 0 : index
    %c0_0 = arith.constant 0 : index
    %c0_1 = arith.constant 0 : index
    %0 = vector.load %arg1[%c0, %c0_0, %c0_1] : memref<1x224x28xf32, #tpu.memory_space<vmem>>, vector<1x104x28xf32>
    %1 = vector.shape_cast %0 : vector<1x104x28xf32> to vector<104x28xf32>
    %2 = arith.truncf %1 : vector<104x28xf32> to vector<104x28xbf16>
    %c0_2 = arith.constant 0 : index
    %c8 = arith.constant 8 : index
    %c0_3 = arith.constant 0 : index
    %3 = vector.load %arg1[%c0_2, %c8, %c0_3] : memref<1x224x28xf32, #tpu.memory_space<vmem>>, vector<1x104x28xf32>
    %4 = vector.shape_cast %3 : vector<1x104x28xf32> to vector<104x28xf32>
    %5 = arith.truncf %4 : vector<104x28xf32> to vector<104x28xbf16>
    %c0_4 = arith.constant 0 : index
    %c112 = arith.constant 112 : index
    %c0_5 = arith.constant 0 : index
    %6 = vector.load %arg1[%c0_4, %c112, %c0_5] : memref<1x224x28xf32, #tpu.memory_space<vmem>>, vector<1x104x28xf32>
    %7 = vector.shape_cast %6 : vector<1x104x28xf32> to vector<104x28xf32>
    %8 = arith.truncf %7 : vector<104x28xf32> to vector<104x28xbf16>
    %c0_6 = arith.constant 0 : index
    %c120 = arith.constant 120 : index
    %c0_7 = arith.constant 0 : index
    %9 = vector.load %arg1[%c0_6, %c120, %c0_7] : memref<1x224x28xf32, #tpu.memory_space<vmem>>, vector<1x104x28xf32>
    %10 = vector.shape_cast %9 : vector<1x104x28xf32> to vector<104x28xf32>
    %11 = arith.truncf %10 : vector<104x28xf32> to vector<104x28xbf16>
    %c0_8 = arith.constant 0 : index
    %c0_9 = arith.constant 0 : index
    %c0_10 = arith.constant 0 : index
    %12 = vector.load %arg2[%c0_8, %c0_9, %c0_10] : memref<3x28x52xbf16, #tpu.memory_space<vmem>>, vector<1x28x52xbf16>
    %13 = vector.shape_cast %12 : vector<1x28x52xbf16> to vector<28x52xbf16>
    %cst = arith.constant dense<0.000000e+00> : vector<104x52xf32>
    %14 = tpu.matmul %2, %13, %cst {dimension_numbers = #tpu.dot_dimension_numbers<[1], [0], [0], [1], [0, 0, 1, 1], [], []>} : vector<104x28xbf16>, vector<28x52xbf16>, vector<104x52xf32> -> vector<104x52xf32>
    %c1 = arith.constant 1 : index
    %c0_11 = arith.constant 0 : index
    %c0_12 = arith.constant 0 : index
    %15 = vector.load %arg2[%c1, %c0_11, %c0_12] : memref<3x28x52xbf16, #tpu.memory_space<vmem>>, vector<1x28x52xbf16>
    %16 = vector.shape_cast %15 : vector<1x28x52xbf16> to vector<28x52xbf16>
    %cst_13 = arith.constant dense<0.000000e+00> : vector<104x52xf32>
    %17 = tpu.matmul %8, %16, %cst_13 {dimension_numbers = #tpu.dot_dimension_numbers<[1], [0], [0], [1], [0, 0, 1, 1], [], []>} : vector<104x28xbf16>, vector<28x52xbf16>, vector<104x52xf32> -> vector<104x52xf32>
    %18 = arith.addf %14, %17 : vector<104x52xf32>
    %c2 = arith.constant 2 : index
    %c0_14 = arith.constant 0 : index
    %c0_15 = arith.constant 0 : index
    %19 = vector.load %arg2[%c2, %c0_14, %c0_15] : memref<3x28x52xbf16, #tpu.memory_space<vmem>>, vector<1x28x52xbf16>
    %20 = vector.shape_cast %19 : vector<1x28x52xbf16> to vector<28x52xbf16>
    %cst_16 = arith.constant dense<0.000000e+00> : vector<104x52xf32>
    %21 = tpu.matmul %5, %20, %cst_16 {dimension_numbers = #tpu.dot_dimension_numbers<[1], [0], [0], [1], [0, 0, 1, 1], [], []>} : vector<104x28xbf16>, vector<28x52xbf16>, vector<104x52xf32> -> vector<104x52xf32>
    %22 = arith.addf %18, %21 : vector<104x52xf32>
    %c0_17 = arith.constant 0 : index
    %c0_18 = arith.constant 0 : index
    %c0_19 = arith.constant 0 : index
    %23 = vector.load %arg3[%c0_17, %c0_18, %c0_19] : memref<3x28x52xbf16, #tpu.memory_space<vmem>>, vector<1x28x52xbf16>
    %24 = vector.shape_cast %23 : vector<1x28x52xbf16> to vector<28x52xbf16>
    %cst_20 = arith.constant dense<0.000000e+00> : vector<104x52xf32>
    %25 = tpu.matmul %2, %24, %cst_20 {dimension_numbers = #tpu.dot_dimension_numbers<[1], [0], [0], [1], [0, 0, 1, 1], [], []>} : vector<104x28xbf16>, vector<28x52xbf16>, vector<104x52xf32> -> vector<104x52xf32>
    %c1_21 = arith.constant 1 : index
    %c0_22 = arith.constant 0 : index
    %c0_23 = arith.constant 0 : index
    %26 = vector.load %arg3[%c1_21, %c0_22, %c0_23] : memref<3x28x52xbf16, #tpu.memory_space<vmem>>, vector<1x28x52xbf16>
    %27 = vector.shape_cast %26 : vector<1x28x52xbf16> to vector<28x52xbf16>
    %cst_24 = arith.constant dense<0.000000e+00> : vector<104x52xf32>
    %28 = tpu.matmul %8, %27, %cst_24 {dimension_numbers = #tpu.dot_dimension_numbers<[1], [0], [0], [1], [0, 0, 1, 1], [], []>} : vector<104x28xbf16>, vector<28x52xbf16>, vector<104x52xf32> -> vector<104x52xf32>
    %29 = arith.addf %25, %28 : vector<104x52xf32>
    %c2_25 = arith.constant 2 : index
    %c0_26 = arith.constant 0 : index
    %c0_27 = arith.constant 0 : index
    %30 = vector.load %arg3[%c2_25, %c0_26, %c0_27] : memref<3x28x52xbf16, #tpu.memory_space<vmem>>, vector<1x28x52xbf16>
    %31 = vector.shape_cast %30 : vector<1x28x52xbf16> to vector<28x52xbf16>
    %cst_28 = arith.constant dense<0.000000e+00> : vector<104x52xf32>
    %32 = tpu.matmul %5, %31, %cst_28 {dimension_numbers = #tpu.dot_dimension_numbers<[1], [0], [0], [1], [0, 0, 1, 1], [], []>} : vector<104x28xbf16>, vector<28x52xbf16>, vector<104x52xf32> -> vector<104x52xf32>
    %33 = arith.addf %29, %32 : vector<104x52xf32>
    %34 = arith.maximumf %22, %33 : vector<104x52xf32>
    %c0_29 = arith.constant 0 : index
    %c0_30 = arith.constant 0 : index
    %c0_31 = arith.constant 0 : index
    %35 = vector.load %arg2[%c0_29, %c0_30, %c0_31] : memref<3x28x52xbf16, #tpu.memory_space<vmem>>, vector<1x28x52xbf16>
    %36 = vector.shape_cast %35 : vector<1x28x52xbf16> to vector<28x52xbf16>
    %cst_32 = arith.constant dense<0.000000e+00> : vector<104x52xf32>
    %37 = tpu.matmul %8, %36, %cst_32 {dimension_numbers = #tpu.dot_dimension_numbers<[1], [0], [0], [1], [0, 0, 1, 1], [], []>} : vector<104x28xbf16>, vector<28x52xbf16>, vector<104x52xf32> -> vector<104x52xf32>
    %c1_33 = arith.constant 1 : index
    %c0_34 = arith.constant 0 : index
    %c0_35 = arith.constant 0 : index
    %38 = vector.load %arg2[%c1_33, %c0_34, %c0_35] : memref<3x28x52xbf16, #tpu.memory_space<vmem>>, vector<1x28x52xbf16>
    %39 = vector.shape_cast %38 : vector<1x28x52xbf16> to vector<28x52xbf16>
    %cst_36 = arith.constant dense<0.000000e+00> : vector<104x52xf32>
    %40 = tpu.matmul %5, %39, %cst_36 {dimension_numbers = #tpu.dot_dimension_numbers<[1], [0], [0], [1], [0, 0, 1, 1], [], []>} : vector<104x28xbf16>, vector<28x52xbf16>, vector<104x52xf32> -> vector<104x52xf32>
    %41 = arith.addf %37, %40 : vector<104x52xf32>
    %c2_37 = arith.constant 2 : index
    %c0_38 = arith.constant 0 : index
    %c0_39 = arith.constant 0 : index
    %42 = vector.load %arg2[%c2_37, %c0_38, %c0_39] : memref<3x28x52xbf16, #tpu.memory_space<vmem>>, vector<1x28x52xbf16>
    %43 = vector.shape_cast %42 : vector<1x28x52xbf16> to vector<28x52xbf16>
    %cst_40 = arith.constant dense<0.000000e+00> : vector<104x52xf32>
    %44 = tpu.matmul %11, %43, %cst_40 {dimension_numbers = #tpu.dot_dimension_numbers<[1], [0], [0], [1], [0, 0, 1, 1], [], []>} : vector<104x28xbf16>, vector<28x52xbf16>, vector<104x52xf32> -> vector<104x52xf32>
    %45 = arith.addf %41, %44 : vector<104x52xf32>
    %46 = arith.maximumf %34, %45 : vector<104x52xf32>
    %c0_41 = arith.constant 0 : index
    %c0_42 = arith.constant 0 : index
    %c0_43 = arith.constant 0 : index
    %47 = vector.load %arg3[%c0_41, %c0_42, %c0_43] : memref<3x28x52xbf16, #tpu.memory_space<vmem>>, vector<1x28x52xbf16>
    %48 = vector.shape_cast %47 : vector<1x28x52xbf16> to vector<28x52xbf16>
    %cst_44 = arith.constant dense<0.000000e+00> : vector<104x52xf32>
    %49 = tpu.matmul %8, %48, %cst_44 {dimension_numbers = #tpu.dot_dimension_numbers<[1], [0], [0], [1], [0, 0, 1, 1], [], []>} : vector<104x28xbf16>, vector<28x52xbf16>, vector<104x52xf32> -> vector<104x52xf32>
    %c1_45 = arith.constant 1 : index
    %c0_46 = arith.constant 0 : index
    %c0_47 = arith.constant 0 : index
    %50 = vector.load %arg3[%c1_45, %c0_46, %c0_47] : memref<3x28x52xbf16, #tpu.memory_space<vmem>>, vector<1x28x52xbf16>
    %51 = vector.shape_cast %50 : vector<1x28x52xbf16> to vector<28x52xbf16>
    %cst_48 = arith.constant dense<0.000000e+00> : vector<104x52xf32>
    %52 = tpu.matmul %5, %51, %cst_48 {dimension_numbers = #tpu.dot_dimension_numbers<[1], [0], [0], [1], [0, 0, 1, 1], [], []>} : vector<104x28xbf16>, vector<28x52xbf16>, vector<104x52xf32> -> vector<104x52xf32>
    %53 = arith.addf %49, %52 : vector<104x52xf32>
    %c2_49 = arith.constant 2 : index
    %c0_50 = arith.constant 0 : index
    %c0_51 = arith.constant 0 : index
    %54 = vector.load %arg3[%c2_49, %c0_50, %c0_51] : memref<3x28x52xbf16, #tpu.memory_space<vmem>>, vector<1x28x52xbf16>
    %55 = vector.shape_cast %54 : vector<1x28x52xbf16> to vector<28x52xbf16>
    %cst_52 = arith.constant dense<0.000000e+00> : vector<104x52xf32>
    %56 = tpu.matmul %11, %55, %cst_52 {dimension_numbers = #tpu.dot_dimension_numbers<[1], [0], [0], [1], [0, 0, 1, 1], [], []>} : vector<104x28xbf16>, vector<28x52xbf16>, vector<104x52xf32> -> vector<104x52xf32>
    %57 = arith.addf %53, %56 : vector<104x52xf32>
    %58 = arith.maximumf %46, %57 : vector<104x52xf32>
    %c0_53 = arith.constant 0 : index
    %c0_54 = arith.constant 0 : index
    %59 = vector.load %arg4[%c0_53, %c0_54] : memref<1x52xf32, #tpu.memory_space<vmem>>, vector<1x52xf32>
    %60 = vector.broadcast %59 : vector<1x52xf32> to vector<104x52xf32>
    %61 = arith.addf %58, %60 : vector<104x52xf32>
    %cst_55 = arith.constant 0.000000e+00 : f32
    %62 = vector.broadcast %cst_55 : f32 to vector<104x52xf32>
    %63 = arith.maximumf %61, %62 : vector<104x52xf32>
    %c0_56 = arith.constant 0 : index
    %c0_57 = arith.constant 0 : index
    %64 = vector.load %arg12[%c0_56, %c0_57] : memref<104x52xf32, #tpu.memory_space<vmem>>, vector<104x52xf32>
    tpu.vector_store %arg12[%c0_56, %c0_57], %63 {strides = array<i32>} : memref<104x52xf32, #tpu.memory_space<vmem>>, vector<104x52xf32>,
    %c0_58 = arith.constant 0 : index
    %c0_59 = arith.constant 0 : index
    %65 = vector.load %arg6[%c0_58, %c0_59] : memref<1x352xf32, #tpu.memory_space<vmem>>, vector<1x352xf32>
    %66 = vector.shape_cast %65 : vector<1x352xf32> to vector<1x352xf32>
    %67 = vector.broadcast %66 : vector<1x352xf32> to vector<88x352xf32>
    %c0_60 = arith.constant 0 : index
    %c0_61 = arith.constant 0 : index
    %68 = vector.load %arg13[%c0_60, %c0_61] : memref<88x352xf32, #tpu.memory_space<vmem>>, vector<88x352xf32>
    tpu.vector_store %arg13[%c0_60, %c0_61], %67 {strides = array<i32>} : memref<88x352xf32, #tpu.memory_space<vmem>>, vector<88x352xf32>,
    %c0_62 = arith.constant 0 : index
    %c0_63 = arith.constant 0 : index
    %69 = vector.load %arg13[%c0_62, %c0_63] : memref<88x352xf32, #tpu.memory_space<vmem>>, vector<88x352xf32>
    %c0_64 = arith.constant 0 : index
    %c0_65 = arith.constant 0 : index
    %70 = vector.load %arg12[%c0_64, %c0_65] : memref<104x52xf32, #tpu.memory_space<vmem>>, vector<88x52xf32>
    %71 = arith.truncf %70 : vector<88x52xf32> to vector<88x52xbf16>
    %c0_66 = arith.constant 0 : index
    %c0_67 = arith.constant 0 : index
    %c0_68 = arith.constant 0 : index
    %72 = vector.load %arg5[%c0_66, %c0_67, %c0_68] : memref<3x52x352xbf16, #tpu.memory_space<vmem>>, vector<1x52x352xbf16>
    %73 = vector.shape_cast %72 : vector<1x52x352xbf16> to vector<52x352xbf16>
    %cst_69 = arith.constant dense<0.000000e+00> : vector<88x352xf32>
    %74 = tpu.matmul %71, %73, %cst_69 {dimension_numbers = #tpu.dot_dimension_numbers<[1], [0], [0], [1], [0, 0, 1, 1], [], []>} : vector<88x52xbf16>, vector<52x352xbf16>, vector<88x352xf32> -> vector<88x352xf32>
    %75 = arith.addf %69, %74 : vector<88x352xf32>
    %c0_70 = arith.constant 0 : index
    %c0_71 = arith.constant 0 : index
    %76 = vector.load %arg13[%c0_70, %c0_71] : memref<88x352xf32, #tpu.memory_space<vmem>>, vector<88x352xf32>
    tpu.vector_store %arg13[%c0_70, %c0_71], %75 {strides = array<i32>} : memref<88x352xf32, #tpu.memory_space<vmem>>, vector<88x352xf32>,
    %c0_72 = arith.constant 0 : index
    %c0_73 = arith.constant 0 : index
    %77 = vector.load %arg13[%c0_72, %c0_73] : memref<88x352xf32, #tpu.memory_space<vmem>>, vector<88x352xf32>
    %c8_74 = arith.constant 8 : index
    %c0_75 = arith.constant 0 : index
    %78 = vector.load %arg12[%c8_74, %c0_75] : memref<104x52xf32, #tpu.memory_space<vmem>>, vector<88x52xf32>
    %79 = arith.truncf %78 : vector<88x52xf32> to vector<88x52xbf16>
    %c1_76 = arith.constant 1 : index
    %c0_77 = arith.constant 0 : index
    %c0_78 = arith.constant 0 : index
    %80 = vector.load %arg5[%c1_76, %c0_77, %c0_78] : memref<3x52x352xbf16, #tpu.memory_space<vmem>>, vector<1x52x352xbf16>
    %81 = vector.shape_cast %80 : vector<1x52x352xbf16> to vector<52x352xbf16>
    %cst_79 = arith.constant dense<0.000000e+00> : vector<88x352xf32>
    %82 = tpu.matmul %79, %81, %cst_79 {dimension_numbers = #tpu.dot_dimension_numbers<[1], [0], [0], [1], [0, 0, 1, 1], [], []>} : vector<88x52xbf16>, vector<52x352xbf16>, vector<88x352xf32> -> vector<88x352xf32>
    %83 = arith.addf %77, %82 : vector<88x352xf32>
    %c0_80 = arith.constant 0 : index
    %c0_81 = arith.constant 0 : index
    %84 = vector.load %arg13[%c0_80, %c0_81] : memref<88x352xf32, #tpu.memory_space<vmem>>, vector<88x352xf32>
    tpu.vector_store %arg13[%c0_80, %c0_81], %83 {strides = array<i32>} : memref<88x352xf32, #tpu.memory_space<vmem>>, vector<88x352xf32>,
    %c0_82 = arith.constant 0 : index
    %c0_83 = arith.constant 0 : index
    %85 = vector.load %arg13[%c0_82, %c0_83] : memref<88x352xf32, #tpu.memory_space<vmem>>, vector<88x352xf32>
    %c16 = arith.constant 16 : index
    %c0_84 = arith.constant 0 : index
    %86 = vector.load %arg12[%c16, %c0_84] : memref<104x52xf32, #tpu.memory_space<vmem>>, vector<88x52xf32>
    %87 = arith.truncf %86 : vector<88x52xf32> to vector<88x52xbf16>
    %c2_85 = arith.constant 2 : index
    %c0_86 = arith.constant 0 : index
    %c0_87 = arith.constant 0 : index
    %88 = vector.load %arg5[%c2_85, %c0_86, %c0_87] : memref<3x52x352xbf16, #tpu.memory_space<vmem>>, vector<1x52x352xbf16>
    %89 = vector.shape_cast %88 : vector<1x52x352xbf16> to vector<52x352xbf16>
    %cst_88 = arith.constant dense<0.000000e+00> : vector<88x352xf32>
    %90 = tpu.matmul %87, %89, %cst_88 {dimension_numbers = #tpu.dot_dimension_numbers<[1], [0], [0], [1], [0, 0, 1, 1], [], []>} : vector<88x52xbf16>, vector<52x352xbf16>, vector<88x352xf32> -> vector<88x352xf32>
    %91 = arith.addf %85, %90 : vector<88x352xf32>
    %c0_89 = arith.constant 0 : index
    %c0_90 = arith.constant 0 : index
    %92 = vector.load %arg13[%c0_89, %c0_90] : memref<88x352xf32, #tpu.memory_space<vmem>>, vector<88x352xf32>
    tpu.vector_store %arg13[%c0_89, %c0_90], %91 {strides = array<i32>} : memref<88x352xf32, #tpu.memory_space<vmem>>, vector<88x352xf32>,
    %c0_91 = arith.constant 0 : index
    %c0_92 = arith.constant 0 : index
    %93 = vector.load %arg8[%c0_91, %c0_92] : memref<1x576xf32, #tpu.memory_space<vmem>>, vector<1x576xf32>
    %94 = vector.shape_cast %93 : vector<1x576xf32> to vector<1x576xf32>
    %95 = vector.broadcast %94 : vector<1x576xf32> to vector<72x576xf32>
    %c0_93 = arith.constant 0 : index
    %c0_94 = arith.constant 0 : index
    %96 = vector.load %arg14[%c0_93, %c0_94] : memref<72x576xf32, #tpu.memory_space<vmem>>, vector<72x576xf32>
    tpu.vector_store %arg14[%c0_93, %c0_94], %95 {strides = array<i32>} : memref<72x576xf32, #tpu.memory_space<vmem>>, vector<72x576xf32>,
    %c0_95 = arith.constant 0 : index
    %c0_96 = arith.constant 0 : index
    %97 = vector.load %arg14[%c0_95, %c0_96] : memref<72x576xf32, #tpu.memory_space<vmem>>, vector<72x576xf32>
    %c0_97 = arith.constant 0 : index
    %c0_98 = arith.constant 0 : index
    %98 = vector.load %arg13[%c0_97, %c0_98] : memref<88x352xf32, #tpu.memory_space<vmem>>, vector<72x352xf32>
    %99 = arith.truncf %98 : vector<72x352xf32> to vector<72x352xbf16>
    %c0_99 = arith.constant 0 : index
    %c0_100 = arith.constant 0 : index
    %c0_101 = arith.constant 0 : index
    %100 = vector.load %arg7[%c0_99, %c0_100, %c0_101] : memref<3x352x576xbf16, #tpu.memory_space<vmem>>, vector<1x352x576xbf16>
    %101 = vector.shape_cast %100 : vector<1x352x576xbf16> to vector<352x576xbf16>
    %cst_102 = arith.constant dense<0.000000e+00> : vector<72x576xf32>
    %102 = tpu.matmul %99, %101, %cst_102 {dimension_numbers = #tpu.dot_dimension_numbers<[1], [0], [0], [1], [0, 0, 1, 1], [], []>} : vector<72x352xbf16>, vector<352x576xbf16>, vector<72x576xf32> -> vector<72x576xf32>
    %103 = arith.addf %97, %102 : vector<72x576xf32>
    %c0_103 = arith.constant 0 : index
    %c0_104 = arith.constant 0 : index
    %104 = vector.load %arg14[%c0_103, %c0_104] : memref<72x576xf32, #tpu.memory_space<vmem>>, vector<72x576xf32>
    tpu.vector_store %arg14[%c0_103, %c0_104], %103 {strides = array<i32>} : memref<72x576xf32, #tpu.memory_space<vmem>>, vector<72x576xf32>,
    %c0_105 = arith.constant 0 : index
    %c0_106 = arith.constant 0 : index
    %105 = vector.load %arg14[%c0_105, %c0_106] : memref<72x576xf32, #tpu.memory_space<vmem>>, vector<72x576xf32>
    %c8_107 = arith.constant 8 : index
    %c0_108 = arith.constant 0 : index
    %106 = vector.load %arg13[%c8_107, %c0_108] : memref<88x352xf32, #tpu.memory_space<vmem>>, vector<72x352xf32>
    %107 = arith.truncf %106 : vector<72x352xf32> to vector<72x352xbf16>
    %c1_109 = arith.constant 1 : index
    %c0_110 = arith.constant 0 : index
    %c0_111 = arith.constant 0 : index
    %108 = vector.load %arg7[%c1_109, %c0_110, %c0_111] : memref<3x352x576xbf16, #tpu.memory_space<vmem>>, vector<1x352x576xbf16>
    %109 = vector.shape_cast %108 : vector<1x352x576xbf16> to vector<352x576xbf16>
    %cst_112 = arith.constant dense<0.000000e+00> : vector<72x576xf32>
    %110 = tpu.matmul %107, %109, %cst_112 {dimension_numbers = #tpu.dot_dimension_numbers<[1], [0], [0], [1], [0, 0, 1, 1], [], []>} : vector<72x352xbf16>, vector<352x576xbf16>, vector<72x576xf32> -> vector<72x576xf32>
    %111 = arith.addf %105, %110 : vector<72x576xf32>
    %c0_113 = arith.constant 0 : index
    %c0_114 = arith.constant 0 : index
    %112 = vector.load %arg14[%c0_113, %c0_114] : memref<72x576xf32, #tpu.memory_space<vmem>>, vector<72x576xf32>
    tpu.vector_store %arg14[%c0_113, %c0_114], %111 {strides = array<i32>} : memref<72x576xf32, #tpu.memory_space<vmem>>, vector<72x576xf32>,
    %c0_115 = arith.constant 0 : index
    %c0_116 = arith.constant 0 : index
    %113 = vector.load %arg14[%c0_115, %c0_116] : memref<72x576xf32, #tpu.memory_space<vmem>>, vector<72x576xf32>
    %c16_117 = arith.constant 16 : index
    %c0_118 = arith.constant 0 : index
    %114 = vector.load %arg13[%c16_117, %c0_118] : memref<88x352xf32, #tpu.memory_space<vmem>>, vector<72x352xf32>
    %115 = arith.truncf %114 : vector<72x352xf32> to vector<72x352xbf16>
    %c2_119 = arith.constant 2 : index
    %c0_120 = arith.constant 0 : index
    %c0_121 = arith.constant 0 : index
    %116 = vector.load %arg7[%c2_119, %c0_120, %c0_121] : memref<3x352x576xbf16, #tpu.memory_space<vmem>>, vector<1x352x576xbf16>
    %117 = vector.shape_cast %116 : vector<1x352x576xbf16> to vector<352x576xbf16>
    %cst_122 = arith.constant dense<0.000000e+00> : vector<72x576xf32>
    %118 = tpu.matmul %115, %117, %cst_122 {dimension_numbers = #tpu.dot_dimension_numbers<[1], [0], [0], [1], [0, 0, 1, 1], [], []>} : vector<72x352xbf16>, vector<352x576xbf16>, vector<72x576xf32> -> vector<72x576xf32>
    %119 = arith.addf %113, %118 : vector<72x576xf32>
    %c0_123 = arith.constant 0 : index
    %c0_124 = arith.constant 0 : index
    %120 = vector.load %arg14[%c0_123, %c0_124] : memref<72x576xf32, #tpu.memory_space<vmem>>, vector<72x576xf32>
    tpu.vector_store %arg14[%c0_123, %c0_124], %119 {strides = array<i32>} : memref<72x576xf32, #tpu.memory_space<vmem>>, vector<72x576xf32>,
    %c0_125 = arith.constant 0 : index
    %c0_126 = arith.constant 0 : index
    %121 = vector.load %arg10[%c0_125, %c0_126] : memref<1x128xf32, #tpu.memory_space<vmem>>, vector<1x128xf32>
    %122 = vector.shape_cast %121 : vector<1x128xf32> to vector<1x128xf32>
    %123 = vector.broadcast %122 : vector<1x128xf32> to vector<8x128xf32>
    %c0_127 = arith.constant 0 : index
    %c0_128 = arith.constant 0 : index
    %124 = vector.load %arg11[%c0_127, %c0_128] : memref<8x128xf32, #tpu.memory_space<vmem>>, vector<8x128xf32>
    tpu.vector_store %arg11[%c0_127, %c0_128], %123 {strides = array<i32>} : memref<8x128xf32, #tpu.memory_space<vmem>>, vector<8x128xf32>,
    %c0_129 = arith.constant 0 : index
    %c0_130 = arith.constant 0 : index
    %125 = vector.load %arg11[%c0_129, %c0_130] : memref<8x128xf32, #tpu.memory_space<vmem>>, vector<8x128xf32>
    %c0_131 = arith.constant 0 : index
    %c0_132 = arith.constant 0 : index
    %126 = vector.load %arg14[%c0_131, %c0_132] : memref<72x576xf32, #tpu.memory_space<vmem>>, vector<8x576xf32>
    %127 = arith.truncf %126 : vector<8x576xf32> to vector<8x576xbf16>
    %c0_133 = arith.constant 0 : index
    %c0_134 = arith.constant 0 : index
    %c0_135 = arith.constant 0 : index
    %128 = vector.load %arg9[%c0_133, %c0_134, %c0_135] : memref<9x576x128xbf16, #tpu.memory_space<vmem>>, vector<1x576x128xbf16>
    %129 = vector.shape_cast %128 : vector<1x576x128xbf16> to vector<576x128xbf16>
    %cst_136 = arith.constant dense<0.000000e+00> : vector<8x128xf32>
    %130 = tpu.matmul %127, %129, %cst_136 {dimension_numbers = #tpu.dot_dimension_numbers<[1], [0], [0], [1], [0, 0, 1, 1], [], []>} : vector<8x576xbf16>, vector<576x128xbf16>, vector<8x128xf32> -> vector<8x128xf32>
    %131 = arith.addf %125, %130 : vector<8x128xf32>
    %c0_137 = arith.constant 0 : index
    %c0_138 = arith.constant 0 : index
    %132 = vector.load %arg11[%c0_137, %c0_138] : memref<8x128xf32, #tpu.memory_space<vmem>>, vector<8x128xf32>
    tpu.vector_store %arg11[%c0_137, %c0_138], %131 {strides = array<i32>} : memref<8x128xf32, #tpu.memory_space<vmem>>, vector<8x128xf32>,
    %c0_139 = arith.constant 0 : index
    %c0_140 = arith.constant 0 : index
    %133 = vector.load %arg11[%c0_139, %c0_140] : memref<8x128xf32, #tpu.memory_space<vmem>>, vector<8x128xf32>
    %c8_141 = arith.constant 8 : index
    %c0_142 = arith.constant 0 : index
    %134 = vector.load %arg14[%c8_141, %c0_142] : memref<72x576xf32, #tpu.memory_space<vmem>>, vector<8x576xf32>
    %135 = arith.truncf %134 : vector<8x576xf32> to vector<8x576xbf16>
    %c1_143 = arith.constant 1 : index
    %c0_144 = arith.constant 0 : index
    %c0_145 = arith.constant 0 : index
    %136 = vector.load %arg9[%c1_143, %c0_144, %c0_145] : memref<9x576x128xbf16, #tpu.memory_space<vmem>>, vector<1x576x128xbf16>
    %137 = vector.shape_cast %136 : vector<1x576x128xbf16> to vector<576x128xbf16>
    %cst_146 = arith.constant dense<0.000000e+00> : vector<8x128xf32>
    %138 = tpu.matmul %135, %137, %cst_146 {dimension_numbers = #tpu.dot_dimension_numbers<[1], [0], [0], [1], [0, 0, 1, 1], [], []>} : vector<8x576xbf16>, vector<576x128xbf16>, vector<8x128xf32> -> vector<8x128xf32>
    %139 = arith.addf %133, %138 : vector<8x128xf32>
    %c0_147 = arith.constant 0 : index
    %c0_148 = arith.constant 0 : index
    %140 = vector.load %arg11[%c0_147, %c0_148] : memref<8x128xf32, #tpu.memory_space<vmem>>, vector<8x128xf32>
    tpu.vector_store %arg11[%c0_147, %c0_148], %139 {strides = array<i32>} : memref<8x128xf32, #tpu.memory_space<vmem>>, vector<8x128xf32>,
    %c0_149 = arith.constant 0 : index
    %c0_150 = arith.constant 0 : index
    %141 = vector.load %arg11[%c0_149, %c0_150] : memref<8x128xf32, #tpu.memory_space<vmem>>, vector<8x128xf32>
    %c16_151 = arith.constant 16 : index
    %c0_152 = arith.constant 0 : index
    %142 = vector.load %arg14[%c16_151, %c0_152] : memref<72x576xf32, #tpu.memory_space<vmem>>, vector<8x576xf32>
    %143 = arith.truncf %142 : vector<8x576xf32> to vector<8x576xbf16>
    %c2_153 = arith.constant 2 : index
    %c0_154 = arith.constant 0 : index
    %c0_155 = arith.constant 0 : index
    %144 = vector.load %arg9[%c2_153, %c0_154, %c0_155] : memref<9x576x128xbf16, #tpu.memory_space<vmem>>, vector<1x576x128xbf16>
    %145 = vector.shape_cast %144 : vector<1x576x128xbf16> to vector<576x128xbf16>
    %cst_156 = arith.constant dense<0.000000e+00> : vector<8x128xf32>
    %146 = tpu.matmul %143, %145, %cst_156 {dimension_numbers = #tpu.dot_dimension_numbers<[1], [0], [0], [1], [0, 0, 1, 1], [], []>} : vector<8x576xbf16>, vector<576x128xbf16>, vector<8x128xf32> -> vector<8x128xf32>
    %147 = arith.addf %141, %146 : vector<8x128xf32>
    %c0_157 = arith.constant 0 : index
    %c0_158 = arith.constant 0 : index
    %148 = vector.load %arg11[%c0_157, %c0_158] : memref<8x128xf32, #tpu.memory_space<vmem>>, vector<8x128xf32>
    tpu.vector_store %arg11[%c0_157, %c0_158], %147 {strides = array<i32>} : memref<8x128xf32, #tpu.memory_space<vmem>>, vector<8x128xf32>,
    %c0_159 = arith.constant 0 : index
    %c0_160 = arith.constant 0 : index
    %149 = vector.load %arg11[%c0_159, %c0_160] : memref<8x128xf32, #tpu.memory_space<vmem>>, vector<8x128xf32>
    %c24 = arith.constant 24 : index
    %c0_161 = arith.constant 0 : index
    %150 = vector.load %arg14[%c24, %c0_161] : memref<72x576xf32, #tpu.memory_space<vmem>>, vector<8x576xf32>
    %151 = arith.truncf %150 : vector<8x576xf32> to vector<8x576xbf16>
    %c3 = arith.constant 3 : index
    %c0_162 = arith.constant 0 : index
    %c0_163 = arith.constant 0 : index
    %152 = vector.load %arg9[%c3, %c0_162, %c0_163] : memref<9x576x128xbf16, #tpu.memory_space<vmem>>, vector<1x576x128xbf16>
    %153 = vector.shape_cast %152 : vector<1x576x128xbf16> to vector<576x128xbf16>
    %cst_164 = arith.constant dense<0.000000e+00> : vector<8x128xf32>
    %154 = tpu.matmul %151, %153, %cst_164 {dimension_numbers = #tpu.dot_dimension_numbers<[1], [0], [0], [1], [0, 0, 1, 1], [], []>} : vector<8x576xbf16>, vector<576x128xbf16>, vector<8x128xf32> -> vector<8x128xf32>
    %155 = arith.addf %149, %154 : vector<8x128xf32>
    %c0_165 = arith.constant 0 : index
    %c0_166 = arith.constant 0 : index
    %156 = vector.load %arg11[%c0_165, %c0_166] : memref<8x128xf32, #tpu.memory_space<vmem>>, vector<8x128xf32>
    tpu.vector_store %arg11[%c0_165, %c0_166], %155 {strides = array<i32>} : memref<8x128xf32, #tpu.memory_space<vmem>>, vector<8x128xf32>,
    %c0_167 = arith.constant 0 : index
    %c0_168 = arith.constant 0 : index
    %157 = vector.load %arg11[%c0_167, %c0_168] : memref<8x128xf32, #tpu.memory_space<vmem>>, vector<8x128xf32>
    %c32 = arith.constant 32 : index
    %c0_169 = arith.constant 0 : index
    %158 = vector.load %arg14[%c32, %c0_169] : memref<72x576xf32, #tpu.memory_space<vmem>>, vector<8x576xf32>
    %159 = arith.truncf %158 : vector<8x576xf32> to vector<8x576xbf16>
    %c4 = arith.constant 4 : index
    %c0_170 = arith.constant 0 : index
    %c0_171 = arith.constant 0 : index
    %160 = vector.load %arg9[%c4, %c0_170, %c0_171] : memref<9x576x128xbf16, #tpu.memory_space<vmem>>, vector<1x576x128xbf16>
    %161 = vector.shape_cast %160 : vector<1x576x128xbf16> to vector<576x128xbf16>
    %cst_172 = arith.constant dense<0.000000e+00> : vector<8x128xf32>
    %162 = tpu.matmul %159, %161, %cst_172 {dimension_numbers = #tpu.dot_dimension_numbers<[1], [0], [0], [1], [0, 0, 1, 1], [], []>} : vector<8x576xbf16>, vector<576x128xbf16>, vector<8x128xf32> -> vector<8x128xf32>
    %163 = arith.addf %157, %162 : vector<8x128xf32>
    %c0_173 = arith.constant 0 : index
    %c0_174 = arith.constant 0 : index
    %164 = vector.load %arg11[%c0_173, %c0_174] : memref<8x128xf32, #tpu.memory_space<vmem>>, vector<8x128xf32>
    tpu.vector_store %arg11[%c0_173, %c0_174], %163 {strides = array<i32>} : memref<8x128xf32, #tpu.memory_space<vmem>>, vector<8x128xf32>,
    %c0_175 = arith.constant 0 : index
    %c0_176 = arith.constant 0 : index
    %165 = vector.load %arg11[%c0_175, %c0_176] : memref<8x128xf32, #tpu.memory_space<vmem>>, vector<8x128xf32>
    %c40 = arith.constant 40 : index
    %c0_177 = arith.constant 0 : index
    %166 = vector.load %arg14[%c40, %c0_177] : memref<72x576xf32, #tpu.memory_space<vmem>>, vector<8x576xf32>
    %167 = arith.truncf %166 : vector<8x576xf32> to vector<8x576xbf16>
    %c5 = arith.constant 5 : index
    %c0_178 = arith.constant 0 : index
    %c0_179 = arith.constant 0 : index
    %168 = vector.load %arg9[%c5, %c0_178, %c0_179] : memref<9x576x128xbf16, #tpu.memory_space<vmem>>, vector<1x576x128xbf16>
    %169 = vector.shape_cast %168 : vector<1x576x128xbf16> to vector<576x128xbf16>
    %cst_180 = arith.constant dense<0.000000e+00> : vector<8x128xf32>
    %170 = tpu.matmul %167, %169, %cst_180 {dimension_numbers = #tpu.dot_dimension_numbers<[1], [0], [0], [1], [0, 0, 1, 1], [], []>} : vector<8x576xbf16>, vector<576x128xbf16>, vector<8x128xf32> -> vector<8x128xf32>
    %171 = arith.addf %165, %170 : vector<8x128xf32>
    %c0_181 = arith.constant 0 : index
    %c0_182 = arith.constant 0 : index
    %172 = vector.load %arg11[%c0_181, %c0_182] : memref<8x128xf32, #tpu.memory_space<vmem>>, vector<8x128xf32>
    tpu.vector_store %arg11[%c0_181, %c0_182], %171 {strides = array<i32>} : memref<8x128xf32, #tpu.memory_space<vmem>>, vector<8x128xf32>,
    %c0_183 = arith.constant 0 : index
    %c0_184 = arith.constant 0 : index
    %173 = vector.load %arg11[%c0_183, %c0_184] : memref<8x128xf32, #tpu.memory_space<vmem>>, vector<8x128xf32>
    %c48 = arith.constant 48 : index
    %c0_185 = arith.constant 0 : index
    %174 = vector.load %arg14[%c48, %c0_185] : memref<72x576xf32, #tpu.memory_space<vmem>>, vector<8x576xf32>
    %175 = arith.truncf %174 : vector<8x576xf32> to vector<8x576xbf16>
    %c6 = arith.constant 6 : index
    %c0_186 = arith.constant 0 : index
    %c0_187 = arith.constant 0 : index
    %176 = vector.load %arg9[%c6, %c0_186, %c0_187] : memref<9x576x128xbf16, #tpu.memory_space<vmem>>, vector<1x576x128xbf16>
    %177 = vector.shape_cast %176 : vector<1x576x128xbf16> to vector<576x128xbf16>
    %cst_188 = arith.constant dense<0.000000e+00> : vector<8x128xf32>
    %178 = tpu.matmul %175, %177, %cst_188 {dimension_numbers = #tpu.dot_dimension_numbers<[1], [0], [0], [1], [0, 0, 1, 1], [], []>} : vector<8x576xbf16>, vector<576x128xbf16>, vector<8x128xf32> -> vector<8x128xf32>
    %179 = arith.addf %173, %178 : vector<8x128xf32>
    %c0_189 = arith.constant 0 : index
    %c0_190 = arith.constant 0 : index
    %180 = vector.load %arg11[%c0_189, %c0_190] : memref<8x128xf32, #tpu.memory_space<vmem>>, vector<8x128xf32>
    tpu.vector_store %arg11[%c0_189, %c0_190], %179 {strides = array<i32>} : memref<8x128xf32, #tpu.memory_space<vmem>>, vector<8x128xf32>,
    %c0_191 = arith.constant 0 : index
    %c0_192 = arith.constant 0 : index
    %181 = vector.load %arg11[%c0_191, %c0_192] : memref<8x128xf32, #tpu.memory_space<vmem>>, vector<8x128xf32>
    %c56 = arith.constant 56 : index
    %c0_193 = arith.constant 0 : index
    %182 = vector.load %arg14[%c56, %c0_193] : memref<72x576xf32, #tpu.memory_space<vmem>>, vector<8x576xf32>
    %183 = arith.truncf %182 : vector<8x576xf32> to vector<8x576xbf16>
    %c7 = arith.constant 7 : index
    %c0_194 = arith.constant 0 : index
    %c0_195 = arith.constant 0 : index
    %184 = vector.load %arg9[%c7, %c0_194, %c0_195] : memref<9x576x128xbf16, #tpu.memory_space<vmem>>, vector<1x576x128xbf16>
    %185 = vector.shape_cast %184 : vector<1x576x128xbf16> to vector<576x128xbf16>
    %cst_196 = arith.constant dense<0.000000e+00> : vector<8x128xf32>
    %186 = tpu.matmul %183, %185, %cst_196 {dimension_numbers = #tpu.dot_dimension_numbers<[1], [0], [0], [1], [0, 0, 1, 1], [], []>} : vector<8x576xbf16>, vector<576x128xbf16>, vector<8x128xf32> -> vector<8x128xf32>
    %187 = arith.addf %181, %186 : vector<8x128xf32>
    %c0_197 = arith.constant 0 : index
    %c0_198 = arith.constant 0 : index
    %188 = vector.load %arg11[%c0_197, %c0_198] : memref<8x128xf32, #tpu.memory_space<vmem>>, vector<8x128xf32>
    tpu.vector_store %arg11[%c0_197, %c0_198], %187 {strides = array<i32>} : memref<8x128xf32, #tpu.memory_space<vmem>>, vector<8x128xf32>,
    %c0_199 = arith.constant 0 : index
    %c0_200 = arith.constant 0 : index
    %189 = vector.load %arg11[%c0_199, %c0_200] : memref<8x128xf32, #tpu.memory_space<vmem>>, vector<8x128xf32>
    %c64 = arith.constant 64 : index
    %c0_201 = arith.constant 0 : index
    %190 = vector.load %arg14[%c64, %c0_201] : memref<72x576xf32, #tpu.memory_space<vmem>>, vector<8x576xf32>
    %191 = arith.truncf %190 : vector<8x576xf32> to vector<8x576xbf16>
    %c8_202 = arith.constant 8 : index
    %c0_203 = arith.constant 0 : index
    %c0_204 = arith.constant 0 : index
    %192 = vector.load %arg9[%c8_202, %c0_203, %c0_204] : memref<9x576x128xbf16, #tpu.memory_space<vmem>>, vector<1x576x128xbf16>
    %193 = vector.shape_cast %192 : vector<1x576x128xbf16> to vector<576x128xbf16>
    %cst_205 = arith.constant dense<0.000000e+00> : vector<8x128xf32>
    %194 = tpu.matmul %191, %193, %cst_205 {dimension_numbers = #tpu.dot_dimension_numbers<[1], [0], [0], [1], [0, 0, 1, 1], [], []>} : vector<8x576xbf16>, vector<576x128xbf16>, vector<8x128xf32> -> vector<8x128xf32>
    %195 = arith.addf %189, %194 : vector<8x128xf32>
    %c0_206 = arith.constant 0 : index
    %c0_207 = arith.constant 0 : index
    %196 = vector.load %arg11[%c0_206, %c0_207] : memref<8x128xf32, #tpu.memory_space<vmem>>, vector<8x128xf32>
    tpu.vector_store %arg11[%c0_206, %c0_207], %195 {strides = array<i32>} : memref<8x128xf32, #tpu.memory_space<vmem>>, vector<8x128xf32>,
    return
  }
  func.func @transform_0(%arg0: i32) -> (i32, i32, i32) {
    %c0_i32 = arith.constant 0 : i32
    %c0_i32_0 = arith.constant 0 : i32
    %c0_i32_1 = arith.constant 0 : i32
    return %arg0, %c0_i32, %c0_i32_0 : i32, i32, i32
  }
  func.func @transform_1(%arg0: i32) -> (i32, i32, i32) {
    %c0_i32 = arith.constant 0 : i32
    %c0_i32_0 = arith.constant 0 : i32
    %c0_i32_1 = arith.constant 0 : i32
    %c0_i32_2 = arith.constant 0 : i32
    return %c0_i32, %c0_i32_0, %c0_i32_1 : i32, i32, i32
  }
  func.func @transform_2(%arg0: i32) -> (i32, i32, i32) {
    %c0_i32 = arith.constant 0 : i32
    %c0_i32_0 = arith.constant 0 : i32
    %c0_i32_1 = arith.constant 0 : i32
    %c0_i32_2 = arith.constant 0 : i32
    return %c0_i32, %c0_i32_0, %c0_i32_1 : i32, i32, i32
  }
  func.func @transform_3(%arg0: i32) -> (i32, i32) {
    %c0_i32 = arith.constant 0 : i32
    %c0_i32_0 = arith.constant 0 : i32
    %c0_i32_1 = arith.constant 0 : i32
    return %c0_i32, %c0_i32_0 : i32, i32
  }
  func.func @transform_4(%arg0: i32) -> (i32, i32, i32) {
    %c0_i32 = arith.constant 0 : i32
    %c0_i32_0 = arith.constant 0 : i32
    %c0_i32_1 = arith.constant 0 : i32
    %c0_i32_2 = arith.constant 0 : i32
    return %c0_i32, %c0_i32_0, %c0_i32_1 : i32, i32, i32
  }
  func.func @transform_5(%arg0: i32) -> (i32, i32) {
    %c0_i32 = arith.constant 0 : i32
    %c0_i32_0 = arith.constant 0 : i32
    %c0_i32_1 = arith.constant 0 : i32
    return %c0_i32, %c0_i32_0 : i32, i32
  }
  func.func @transform_6(%arg0: i32) -> (i32, i32, i32) {
    %c0_i32 = arith.constant 0 : i32
    %c0_i32_0 = arith.constant 0 : i32
    %c0_i32_1 = arith.constant 0 : i32
    %c0_i32_2 = arith.constant 0 : i32
    return %c0_i32, %c0_i32_0, %c0_i32_1 : i32, i32, i32
  }
  func.func @transform_7(%arg0: i32) -> (i32, i32) {
    %c0_i32 = arith.constant 0 : i32
    %c0_i32_0 = arith.constant 0 : i32
    %c0_i32_1 = arith.constant 0 : i32
    return %c0_i32, %c0_i32_0 : i32, i32
  }
  func.func @transform_8(%arg0: i32) -> (i32, i32, i32) {
    %c0_i32 = arith.constant 0 : i32
    %c0_i32_0 = arith.constant 0 : i32
    %c0_i32_1 = arith.constant 0 : i32
    %c0_i32_2 = arith.constant 0 : i32
    return %c0_i32, %c0_i32_0, %c0_i32_1 : i32, i32, i32
  }
  func.func @transform_9(%arg0: i32) -> (i32, i32) {
    %c0_i32 = arith.constant 0 : i32
    %c0_i32_0 = arith.constant 0 : i32
    %c0_i32_1 = arith.constant 0 : i32
    return %c0_i32, %c0_i32_0 : i32, i32
  }
  func.func @transform_10(%arg0: i32) -> (i32, i32) {
    %c0_i32 = arith.constant 0 : i32
    %c0_i32_0 = arith.constant 0 : i32
    return %arg0, %c0_i32 : i32, i32
  }
}

</mosaic_0001>

<llo_original>
// kernel: model_forward.1
$region0: #{model_forward.1}
  #allocation0 [shape = 'u32[]', space=smem, size = 0x4, offset = 0x4, fixed_abs, tag = 'smem constant byte address 0x4 - core index']
  #allocation1 [shape = 'u32[72,128]{1,0:T(1,128)}', space=vmem, size = 0x9000, scoped, tag = 'internal scratch']
  #allocation2 [shape = 'f32[104,52]{1,0:T(8,128)}', space=vmem, size = 0xd000, scoped, tag = 'scratch operand']
  #allocation3 [shape = 'f32[88,352]{1,0:T(8,128)}', space=vmem, size = 0x21000, scoped, tag = 'scratch operand']
  #allocation4 [shape = 'f32[72,576]{1,0:T(8,128)}', space=vmem, size = 0x2d000, scoped, tag = 'scratch operand']
  %s0 = inlined_call_operand.vmem [shape: f32[1,224,28], index: 0, kind: input, shape index: {}]
  %s1 = inlined_call_operand.vmem [shape: bf16[3,28,52], index: 1, kind: input, shape index: {}]
  %s2 = inlined_call_operand.vmem [shape: bf16[3,28,52], index: 2, kind: input, shape index: {}]
  %s3 = inlined_call_operand.vmem [shape: f32[1,52], index: 3, kind: input, shape index: {}]
  %s4 = inlined_call_operand.vmem [shape: bf16[3,52,352], index: 4, kind: input, shape index: {}]
  %s5 = inlined_call_operand.vmem [shape: f32[1,352], index: 5, kind: input, shape index: {}]
  %s6 = inlined_call_operand.vmem [shape: bf16[3,352,576], index: 6, kind: input, shape index: {}]
  %s7 = inlined_call_operand.vmem [shape: f32[1,576], index: 7, kind: input, shape index: {}]
  %s8 = inlined_call_operand.vmem [shape: bf16[9,576,128], index: 8, kind: input, shape index: {}]
  %s9 = inlined_call_operand.vmem [shape: f32[1,128], index: 9, kind: input, shape index: {}]
  %s10 = inlined_call_operand.vmem [shape: f32[8,128], index: 10, kind: output, shape index: {}]
  %s11 = sld [smem:[#allocation0]]
  $region50: #{model_forward.1} parent=0
    _
  %s13 = ssub.s32 1, %s11
  %s14 = scalar_select 0, %s13, %s11
  // Predicated region
  $region2: #{model_forward.1} parent=0 // pred_check
    _
  $region3: #{model_forward.1} parent=0 // pred_check_branch
    %16 = sbr.rel (0) target = $region5
  $region4: #{model_forward.1} parent=0 // pred_region
    _
  $region5: #{model_forward.1} parent=0 // pred_fallthru
    _
  // Predicated region
  $region6: #{model_forward.1} parent=0 // pred_check
    _
  $region7: #{model_forward.1} parent=0 // pred_check_branch
    %18 = sbr.rel (0) target = $region9
  $region8: #{model_forward.1} parent=0 // pred_region
    _
  $region9: #{model_forward.1} parent=0 // pred_fallthru
    _
  // Predicated region
  $region10: #{model_forward.1} parent=0 // pred_check
    _
  $region11: #{model_forward.1} parent=0 // pred_check_branch
    %20 = sbr.rel (0) target = $region13
  $region12: #{model_forward.1} parent=0 // pred_region
    _
  $region13: #{model_forward.1} parent=0 // pred_fallthru
    _
  // Predicated region
  $region14: #{model_forward.1} parent=0 // pred_check
    _
  $region15: #{model_forward.1} parent=0 // pred_check_branch
    %22 = sbr.rel (0) target = $region17
  $region16: #{model_forward.1} parent=0 // pred_region
    _
  $region17: #{model_forward.1} parent=0 // pred_fallthru
    _
  // Predicated region
  $region18: #{model_forward.1} parent=0 // pred_check
    _
  $region19: #{model_forward.1} parent=0 // pred_check_branch
    %24 = sbr.rel (0) target = $region21
  $region20: #{model_forward.1} parent=0 // pred_region
    _
  $region21: #{model_forward.1} parent=0 // pred_fallthru
    _
  // Predicated region
  $region22: #{model_forward.1} parent=0 // pred_check
    _
  $region23: #{model_forward.1} parent=0 // pred_check_branch
    %26 = sbr.rel (0) target = $region25
  $region24: #{model_forward.1} parent=0 // pred_region
    _
  $region25: #{model_forward.1} parent=0 // pred_fallthru
    _
  // Predicated region
  $region26: #{model_forward.1} parent=0 // pred_check
    _
  $region27: #{model_forward.1} parent=0 // pred_check_branch
    %28 = sbr.rel (0) target = $region29
  $region28: #{model_forward.1} parent=0 // pred_region
    _
  $region29: #{model_forward.1} parent=0 // pred_fallthru
    _
  // Predicated region
  $region30: #{model_forward.1} parent=0 // pred_check
    _
  $region31: #{model_forward.1} parent=0 // pred_check_branch
    %30 = sbr.rel (0) target = $region33
  $region32: #{model_forward.1} parent=0 // pred_region
    _
  $region33: #{model_forward.1} parent=0 // pred_fallthru
    _
  // Predicated region
  $region34: #{model_forward.1} parent=0 // pred_check
    _
  $region35: #{model_forward.1} parent=0 // pred_check_branch
    %32 = sbr.rel (0) target = $region37
  $region36: #{model_forward.1} parent=0 // pred_region
    _
  $region37: #{model_forward.1} parent=0 // pred_fallthru
    _
  // Predicated region
  $region38: #{model_forward.1} parent=0 // pred_check
    _
  $region39: #{model_forward.1} parent=0 // pred_check_branch
    %34 = sbr.rel (0) target = $region41
  $region40: #{model_forward.1} parent=0 // pred_region
    _
  $region41: #{model_forward.1} parent=0 // pred_fallthru
    _
  %v36 = vld [vmem:[%s0] sm:$0xff]
  %v37 = vld [vmem:[%s0 + $0x8] sm:$0xff]
  %v38 = vld [vmem:[%s0 + $0x10] sm:$0xff]
  %v39 = vld [vmem:[%s0 + $0x18] sm:$0xff]
  %v40 = vld [vmem:[%s0 + $0x20] sm:$0xff]
  %v41 = vld [vmem:[%s0 + $0x28] sm:$0xff]
  %v42 = vld [vmem:[%s0 + $0x30] sm:$0xff]
  %v43 = vld [vmem:[%s0 + $0x38] sm:$0xff]
  %v44 = vld [vmem:[%s0 + $0x40] sm:$0xff]
  %v45 = vld [vmem:[%s0 + $0x48] sm:$0xff]
  %v46 = vld [vmem:[%s0 + $0x50] sm:$0xff]
  %v47 = vld [vmem:[%s0 + $0x58] sm:$0xff]
  %v48 = vld [vmem:[%s0 + $0x60] sm:$0xff]
  %v49 = vpack.c.bf16 %v37, %v36
  %v50 = vpack.c.bf16 %v39, %v38
  %v51 = vpack.c.bf16 %v41, %v40
  %v52 = vpack.c.bf16 %v43, %v42
  %v53 = vpack.c.bf16 %v45, %v44
  %v54 = vpack.c.bf16 %v47, %v46
  %v55 = vpack.c.bf16 %v48, %v48
  %v56 = vld [vmem:[%s0 + $0x68] sm:$0xff]
  %v57 = vpack.c.bf16 %v38, %v37
  %v58 = vpack.c.bf16 %v40, %v39
  %v59 = vpack.c.bf16 %v42, %v41
  %v60 = vpack.c.bf16 %v44, %v43
  %v61 = vpack.c.bf16 %v46, %v45
  %v62 = vpack.c.bf16 %v48, %v47
  %v63 = vpack.c.bf16 %v56, %v56
  %v64 = vld [vmem:[%s0 + $0x70] sm:$0xff]
  %v65 = vld [vmem:[%s0 + $0x78] sm:$0xff]
  %v66 = vld [vmem:[%s0 + $0x80] sm:$0xff]
  %v67 = vld [vmem:[%s0 + $0x88] sm:$0xff]
  %v68 = vld [vmem:[%s0 + $0x90] sm:$0xff]
  %v69 = vld [vmem:[%s0 + $0x98] sm:$0xff]
  %v70 = vld [vmem:[%s0 + $0xa0] sm:$0xff]
  %v71 = vld [vmem:[%s0 + $0xa8] sm:$0xff]
  %v72 = vld [vmem:[%s0 + $0xb0] sm:$0xff]
  %v73 = vld [vmem:[%s0 + $0xb8] sm:$0xff]
  %v74 = vld [vmem:[%s0 + $0xc0] sm:$0xff]
  %v75 = vld [vmem:[%s0 + $0xc8] sm:$0xff]
  %v76 = vld [vmem:[%s0 + $0xd0] sm:$0xff]
  %v77 = vpack.c.bf16 %v65, %v64
  %v78 = vpack.c.bf16 %v67, %v66
  %v79 = vpack.c.bf16 %v69, %v68
  %v80 = vpack.c.bf16 %v71, %v70
  %v81 = vpack.c.bf16 %v73, %v72
  %v82 = vpack.c.bf16 %v75, %v74
  %v83 = vpack.c.bf16 %v76, %v76
  %v84 = vld [vmem:[%s0 + $0xd8] sm:$0xff]
  %v85 = vpack.c.bf16 %v66, %v65
  %v86 = vpack.c.bf16 %v68, %v67
  %v87 = vpack.c.bf16 %v70, %v69
  %v88 = vpack.c.bf16 %v72, %v71
  %v89 = vpack.c.bf16 %v74, %v73
  %v90 = vpack.c.bf16 %v76, %v75
  %v91 = vpack.c.bf16 %v84, %v84
  %v92 = vld [vmem:[%s1] sm:$0xf]
  %v93 = vld [vmem:[%s1 + $0x4] sm:$0xf]
  %v94 = vld [vmem:[%s1 + $0x8] sm:$0xf]
  %v95 = vld [vmem:[%s1 + $0xc] sm:$0x3]
  %s96 = scalar_lea.vmem %s1, 16
  %v97 = vld [vmem:[%s96] sm:$0xf]
  %v98 = vld [vmem:[%s96 + $0x4] sm:$0xf]
  %v99 = vld [vmem:[%s96 + $0x8] sm:$0xf]
  %v100 = vld [vmem:[%s96 + $0xc] sm:$0x3]
  %v105 = vunpack.c.l.b16 %v97
  %v106 = vunpack.c.l.b16 %v98
  %v107 = vunpack.c.l.b16 %v99
  %v108 = vunpack.c.l.b16 %v100
  %v109 = vpack.c.b16 %v106, %v105
  %v110 = vpack.c.b16 %v108, %v107
  %vm112 = vcmask 228352
  %v114 = vsel %vm112, %v77, 0
  %v117 = vsel %vm112, %v78, 0
  %v120 = vsel %vm112, %v79, 0
  %v123 = vsel %vm112, %v80, 0
  %v126 = vsel %vm112, %v81, 0
  %v129 = vsel %vm112, %v82, 0
  %v132 = vsel %vm112, %v83, 0
  %vm134 = vcmask 1045504
  %v136 = vsel %vm134, %v110, 0
  %138 = vmatpush.bf16.msra.mxu0 0
  %139 = vmatpush.bf16.msra.mxu0 0
  %140 = vmatpush.bf16.msra.mxu0 0
  %141 = vmatpush.bf16.msra.mxu0 0
  %142 = vmatpush.bf16.msra.mxu0 0
  %143 = vmatpush.bf16.msra.mxu0 0
  %144 = vmatpush.bf16.msra.mxu0 %v136
  %145 = vmatpush.bf16.msra.mxu0 %v109
  %146 = vmatmul.bf16.gmra.mxu0 %v114
  %v147 = vpop.f32.mrf.mxu0
  %v148 = vadd.f32 0.0, %v147
  %v149 = vpop.f32.mrf.mxu0
  %v150 = vadd.f32 0.0, %v149
  %151 = vmatmul.bf16.gmra.mxu0 %v117
  %v152 = vpop.f32.mrf.mxu0
  %v153 = vadd.f32 0.0, %v152
  %v154 = vpop.f32.mrf.mxu0
  %v155 = vadd.f32 0.0, %v154
  %156 = vmatmul.bf16.gmra.mxu0 %v120
  %v157 = vpop.f32.mrf.mxu0
  %v158 = vadd.f32 0.0, %v157
  %v159 = vpop.f32.mrf.mxu0
  %v160 = vadd.f32 0.0, %v159
  %161 = vmatmul.bf16.gmra.mxu0 %v123
  %v162 = vpop.f32.mrf.mxu0
  %v163 = vadd.f32 0.0, %v162
  %v164 = vpop.f32.mrf.mxu0
  %v165 = vadd.f32 0.0, %v164
  %166 = vmatmul.bf16.gmra.mxu0 %v126
  %v167 = vpop.f32.mrf.mxu0
  %v168 = vadd.f32 0.0, %v167
  %v169 = vpop.f32.mrf.mxu0
  %v170 = vadd.f32 0.0, %v169
  %171 = vmatmul.bf16.gmra.mxu0 %v129
  %v172 = vpop.f32.mrf.mxu0
  %v173 = vadd.f32 0.0, %v172
  %v174 = vpop.f32.mrf.mxu0
  %v175 = vadd.f32 0.0, %v174
  %176 = vmatmul.bf16.gmra.mxu0 %v132
  %v177 = vpop.f32.mrf.mxu0
  %v178 = vadd.f32 0.0, %v177
  %v179 = vpop.f32.mrf.mxu0
  %180 = vdwg.mxu0
  %v185 = vunpack.c.l.b16 %v92
  %v186 = vunpack.c.l.b16 %v93
  %v187 = vunpack.c.l.b16 %v94
  %v188 = vunpack.c.l.b16 %v95
  %v189 = vpack.c.b16 %v186, %v185
  %v190 = vpack.c.b16 %v188, %v187
  %v193 = vsel %vm112, %v49, 0
  %v196 = vsel %vm112, %v50, 0
  %v199 = vsel %vm112, %v51, 0
  %v202 = vsel %vm112, %v52, 0
  %v205 = vsel %vm112, %v53, 0
  %v208 = vsel %vm112, %v54, 0
  %v211 = vsel %vm112, %v55, 0
  %v214 = vsel %vm134, %v190, 0
  %216 = vmatpush.bf16.msra.mxu0 0
  %217 = vmatpush.bf16.msra.mxu0 0
  %218 = vmatpush.bf16.msra.mxu0 0
  %219 = vmatpush.bf16.msra.mxu0 0
  %220 = vmatpush.bf16.msra.mxu0 0
  %221 = vmatpush.bf16.msra.mxu0 0
  %222 = vmatpush.bf16.msra.mxu0 %v214
  %223 = vmatpush.bf16.msra.mxu0 %v189
  %224 = vmatmul.bf16.gmra.mxu0 %v193
  %v225 = vpop.f32.mrf.mxu0
  %v226 = vadd.f32 %v148, %v225
  %v227 = vpop.f32.mrf.mxu0
  %v228 = vadd.f32 %v150, %v227
  %229 = vmatmul.bf16.gmra.mxu0 %v196
  %v230 = vpop.f32.mrf.mxu0
  %v231 = vadd.f32 %v153, %v230
  %v232 = vpop.f32.mrf.mxu0
  %v233 = vadd.f32 %v155, %v232
  %234 = vmatmul.bf16.gmra.mxu0 %v199
  %v235 = vpop.f32.mrf.mxu0
  %v236 = vadd.f32 %v158, %v235
  %v237 = vpop.f32.mrf.mxu0
  %v238 = vadd.f32 %v160, %v237
  %239 = vmatmul.bf16.gmra.mxu0 %v202
  %v240 = vpop.f32.mrf.mxu0
  %v241 = vadd.f32 %v163, %v240
  %v242 = vpop.f32.mrf.mxu0
  %v243 = vadd.f32 %v165, %v242
  %244 = vmatmul.bf16.gmra.mxu0 %v205
  %v245 = vpop.f32.mrf.mxu0
  %v246 = vadd.f32 %v168, %v245
  %v247 = vpop.f32.mrf.mxu0
  %v248 = vadd.f32 %v170, %v247
  %249 = vmatmul.bf16.gmra.mxu0 %v208
  %v250 = vpop.f32.mrf.mxu0
  %v251 = vadd.f32 %v173, %v250
  %v252 = vpop.f32.mrf.mxu0
  %v253 = vadd.f32 %v175, %v252
  %254 = vmatmul.bf16.gmra.mxu0 %v211
  %v255 = vpop.f32.mrf.mxu0
  %v256 = vadd.f32 %v178, %v255
  %v257 = vpop.f32.mrf.mxu0
  %258 = vdwg.mxu0
  %s259 = scalar_lea.vmem %s1, 32
  %v260 = vld [vmem:[%s259] sm:$0xf]
  %v261 = vld [vmem:[%s259 + $0x4] sm:$0xf]
  %v262 = vld [vmem:[%s259 + $0x8] sm:$0xf]
  %v263 = vld [vmem:[%s259 + $0xc] sm:$0x3]
  %v268 = vunpack.c.l.b16 %v260
  %v269 = vunpack.c.l.b16 %v261
  %v270 = vunpack.c.l.b16 %v262
  %v271 = vunpack.c.l.b16 %v263
  %v272 = vpack.c.b16 %v269, %v268
  %v273 = vpack.c.b16 %v271, %v270
  %v276 = vsel %vm112, %v57, 0
  %v279 = vsel %vm112, %v58, 0
  %v282 = vsel %vm112, %v59, 0
  %v285 = vsel %vm112, %v60, 0
  %v288 = vsel %vm112, %v61, 0
  %v291 = vsel %vm112, %v62, 0
  %v294 = vsel %vm112, %v63, 0
  %v297 = vsel %vm134, %v273, 0
  %299 = vmatpush.bf16.msra.mxu0 0
  %300 = vmatpush.bf16.msra.mxu0 0
  %301 = vmatpush.bf16.msra.mxu0 0
  %302 = vmatpush.bf16.msra.mxu0 0
  %303 = vmatpush.bf16.msra.mxu0 0
  %304 = vmatpush.bf16.msra.mxu0 0
  %305 = vmatpush.bf16.msra.mxu0 %v297
  %306 = vmatpush.bf16.msra.mxu0 %v272
  %307 = vmatmul.bf16.gmra.mxu0 %v276
  %v308 = vpop.f32.mrf.mxu0
  %v309 = vadd.f32 0.0, %v308
  %v310 = vpop.f32.mrf.mxu0
  %v311 = vadd.f32 0.0, %v310
  %312 = vmatmul.bf16.gmra.mxu0 %v279
  %v313 = vpop.f32.mrf.mxu0
  %v314 = vadd.f32 0.0, %v313
  %v315 = vpop.f32.mrf.mxu0
  %v316 = vadd.f32 0.0, %v315
  %317 = vmatmul.bf16.gmra.mxu0 %v282
  %v318 = vpop.f32.mrf.mxu0
  %v319 = vadd.f32 0.0, %v318
  %v320 = vpop.f32.mrf.mxu0
  %v321 = vadd.f32 0.0, %v320
  %322 = vmatmul.bf16.gmra.mxu0 %v285
  %v323 = vpop.f32.mrf.mxu0
  %v324 = vadd.f32 0.0, %v323
  %v325 = vpop.f32.mrf.mxu0
  %v326 = vadd.f32 0.0, %v325
  %327 = vmatmul.bf16.gmra.mxu0 %v288
  %v328 = vpop.f32.mrf.mxu0
  %v329 = vadd.f32 0.0, %v328
  %v330 = vpop.f32.mrf.mxu0
  %v331 = vadd.f32 0.0, %v330
  %332 = vmatmul.bf16.gmra.mxu0 %v291
  %v333 = vpop.f32.mrf.mxu0
  %v334 = vadd.f32 0.0, %v333
  %v335 = vpop.f32.mrf.mxu0
  %v336 = vadd.f32 0.0, %v335
  %337 = vmatmul.bf16.gmra.mxu0 %v294
  %v338 = vpop.f32.mrf.mxu0
  %v339 = vadd.f32 0.0, %v338
  %v340 = vpop.f32.mrf.mxu0
  %341 = vdwg.mxu0
  %v342 = vadd.f32 %v226, %v309
  %v343 = vadd.f32 %v228, %v311
  %v344 = vadd.f32 %v231, %v314
  %v345 = vadd.f32 %v233, %v316
  %v346 = vadd.f32 %v236, %v319
  %v347 = vadd.f32 %v238, %v321
  %v348 = vadd.f32 %v241, %v324
  %v349 = vadd.f32 %v243, %v326
  %v350 = vadd.f32 %v246, %v329
  %v351 = vadd.f32 %v248, %v331
  %v352 = vadd.f32 %v251, %v334
  %v353 = vadd.f32 %v253, %v336
  %v354 = vadd.f32 %v256, %v339
  %v355 = vld [vmem:[%s2] sm:$0xf]
  %v356 = vld [vmem:[%s2 + $0x4] sm:$0xf]
  %v357 = vld [vmem:[%s2 + $0x8] sm:$0xf]
  %v358 = vld [vmem:[%s2 + $0xc] sm:$0x3]
  %s359 = scalar_lea.vmem %s2, 16
  %v360 = vld [vmem:[%s359] sm:$0xf]
  %v361 = vld [vmem:[%s359 + $0x4] sm:$0xf]
  %v362 = vld [vmem:[%s359 + $0x8] sm:$0xf]
  %v363 = vld [vmem:[%s359 + $0xc] sm:$0x3]
  %v368 = vunpack.c.l.b16 %v360
  %v369 = vunpack.c.l.b16 %v361
  %v370 = vunpack.c.l.b16 %v362
  %v371 = vunpack.c.l.b16 %v363
  %v372 = vpack.c.b16 %v369, %v368
  %v373 = vpack.c.b16 %v371, %v370
  %v376 = vsel %vm134, %v373, 0
  %378 = vmatpush.bf16.msra.mxu0 0
  %379 = vmatpush.bf16.msra.mxu0 0
  %380 = vmatpush.bf16.msra.mxu0 0
  %381 = vmatpush.bf16.msra.mxu0 0
  %382 = vmatpush.bf16.msra.mxu0 0
  %383 = vmatpush.bf16.msra.mxu0 0
  %384 = vmatpush.bf16.msra.mxu0 %v376
  %385 = vmatpush.bf16.msra.mxu0 %v372
  %386 = vmatmul.bf16.gmra.mxu0 %v114
  %v387 = vpop.f32.mrf.mxu0
  %v388 = vadd.f32 0.0, %v387
  %v389 = vpop.f32.mrf.mxu0
  %v390 = vadd.f32 0.0, %v389
  %391 = vmatmul.bf16.gmra.mxu0 %v117
  %v392 = vpop.f32.mrf.mxu0
  %v393 = vadd.f32 0.0, %v392
  %v394 = vpop.f32.mrf.mxu0
  %v395 = vadd.f32 0.0, %v394
  %396 = vmatmul.bf16.gmra.mxu0 %v120
  %v397 = vpop.f32.mrf.mxu0
  %v398 = vadd.f32 0.0, %v397
  %v399 = vpop.f32.mrf.mxu0
  %v400 = vadd.f32 0.0, %v399
  %401 = vmatmul.bf16.gmra.mxu0 %v123
  %v402 = vpop.f32.mrf.mxu0
  %v403 = vadd.f32 0.0, %v402
  %v404 = vpop.f32.mrf.mxu0
  %v405 = vadd.f32 0.0, %v404
  %406 = vmatmul.bf16.gmra.mxu0 %v126
  %v407 = vpop.f32.mrf.mxu0
  %v408 = vadd.f32 0.0, %v407
  %v409 = vpop.f32.mrf.mxu0
  %v410 = vadd.f32 0.0, %v409
  %411 = vmatmul.bf16.gmra.mxu0 %v129
  %v412 = vpop.f32.mrf.mxu0
  %v413 = vadd.f32 0.0, %v412
  %v414 = vpop.f32.mrf.mxu0
  %v415 = vadd.f32 0.0, %v414
  %416 = vmatmul.bf16.gmra.mxu0 %v132
  %v417 = vpop.f32.mrf.mxu0
  %v418 = vadd.f32 0.0, %v417
  %v419 = vpop.f32.mrf.mxu0
  %420 = vdwg.mxu0
  %v425 = vunpack.c.l.b16 %v355
  %v426 = vunpack.c.l.b16 %v356
  %v427 = vunpack.c.l.b16 %v357
  %v428 = vunpack.c.l.b16 %v358
  %v429 = vpack.c.b16 %v426, %v425
  %v430 = vpack.c.b16 %v428, %v427
  %v433 = vsel %vm134, %v430, 0
  %435 = vmatpush.bf16.msra.mxu0 0
  %436 = vmatpush.bf16.msra.mxu0 0
  %437 = vmatpush.bf16.msra.mxu0 0
  %438 = vmatpush.bf16.msra.mxu0 0
  %439 = vmatpush.bf16.msra.mxu0 0
  %440 = vmatpush.bf16.msra.mxu0 0
  %441 = vmatpush.bf16.msra.mxu0 %v433
  %442 = vmatpush.bf16.msra.mxu0 %v429
  %443 = vmatmul.bf16.gmra.mxu0 %v193
  %v444 = vpop.f32.mrf.mxu0
  %v445 = vadd.f32 %v388, %v444
  %v446 = vpop.f32.mrf.mxu0
  %v447 = vadd.f32 %v390, %v446
  %448 = vmatmul.bf16.gmra.mxu0 %v196
  %v449 = vpop.f32.mrf.mxu0
  %v450 = vadd.f32 %v393, %v449
  %v451 = vpop.f32.mrf.mxu0
  %v452 = vadd.f32 %v395, %v451
  %453 = vmatmul.bf16.gmra.mxu0 %v199
  %v454 = vpop.f32.mrf.mxu0
  %v455 = vadd.f32 %v398, %v454
  %v456 = vpop.f32.mrf.mxu0
  %v457 = vadd.f32 %v400, %v456
  %458 = vmatmul.bf16.gmra.mxu0 %v202
  %v459 = vpop.f32.mrf.mxu0
  %v460 = vadd.f32 %v403, %v459
  %v461 = vpop.f32.mrf.mxu0
  %v462 = vadd.f32 %v405, %v461
  %463 = vmatmul.bf16.gmra.mxu0 %v205
  %v464 = vpop.f32.mrf.mxu0
  %v465 = vadd.f32 %v408, %v464
  %v466 = vpop.f32.mrf.mxu0
  %v467 = vadd.f32 %v410, %v466
  %468 = vmatmul.bf16.gmra.mxu0 %v208
  %v469 = vpop.f32.mrf.mxu0
  %v470 = vadd.f32 %v413, %v469
  %v471 = vpop.f32.mrf.mxu0
  %v472 = vadd.f32 %v415, %v471
  %473 = vmatmul.bf16.gmra.mxu0 %v211
  %v474 = vpop.f32.mrf.mxu0
  %v475 = vadd.f32 %v418, %v474
  %v476 = vpop.f32.mrf.mxu0
  %477 = vdwg.mxu0
  %s478 = scalar_lea.vmem %s2, 32
  %v479 = vld [vmem:[%s478] sm:$0xf]
  %v480 = vld [vmem:[%s478 + $0x4] sm:$0xf]
  %v481 = vld [vmem:[%s478 + $0x8] sm:$0xf]
  %v482 = vld [vmem:[%s478 + $0xc] sm:$0x3]
  %v487 = vunpack.c.l.b16 %v479
  %v488 = vunpack.c.l.b16 %v480
  %v489 = vunpack.c.l.b16 %v481
  %v490 = vunpack.c.l.b16 %v482
  %v491 = vpack.c.b16 %v488, %v487
  %v492 = vpack.c.b16 %v490, %v489
  %v495 = vsel %vm134, %v492, 0
  %497 = vmatpush.bf16.msra.mxu0 0
  %498 = vmatpush.bf16.msra.mxu0 0
  %499 = vmatpush.bf16.msra.mxu0 0
  %500 = vmatpush.bf16.msra.mxu0 0
  %501 = vmatpush.bf16.msra.mxu0 0
  %502 = vmatpush.bf16.msra.mxu0 0
  %503 = vmatpush.bf16.msra.mxu0 %v495
  %504 = vmatpush.bf16.msra.mxu0 %v491
  %505 = vmatmul.bf16.gmra.mxu0 %v276
  %v506 = vpop.f32.mrf.mxu0
  %v507 = vadd.f32 0.0, %v506
  %v508 = vpop.f32.mrf.mxu0
  %v509 = vadd.f32 0.0, %v508
  %510 = vmatmul.bf16.gmra.mxu0 %v279
  %v511 = vpop.f32.mrf.mxu0
  %v512 = vadd.f32 0.0, %v511
  %v513 = vpop.f32.mrf.mxu0
  %v514 = vadd.f32 0.0, %v513
  %515 = vmatmul.bf16.gmra.mxu0 %v282
  %v516 = vpop.f32.mrf.mxu0
  %v517 = vadd.f32 0.0, %v516
  %v518 = vpop.f32.mrf.mxu0
  %v519 = vadd.f32 0.0, %v518
  %520 = vmatmul.bf16.gmra.mxu0 %v285
  %v521 = vpop.f32.mrf.mxu0
  %v522 = vadd.f32 0.0, %v521
  %v523 = vpop.f32.mrf.mxu0
  %v524 = vadd.f32 0.0, %v523
  %525 = vmatmul.bf16.gmra.mxu0 %v288
  %v526 = vpop.f32.mrf.mxu0
  %v527 = vadd.f32 0.0, %v526
  %v528 = vpop.f32.mrf.mxu0
  %v529 = vadd.f32 0.0, %v528
  %530 = vmatmul.bf16.gmra.mxu0 %v291
  %v531 = vpop.f32.mrf.mxu0
  %v532 = vadd.f32 0.0, %v531
  %v533 = vpop.f32.mrf.mxu0
  %v534 = vadd.f32 0.0, %v533
  %535 = vmatmul.bf16.gmra.mxu0 %v294
  %v536 = vpop.f32.mrf.mxu0
  %v537 = vadd.f32 0.0, %v536
  %v538 = vpop.f32.mrf.mxu0
  %539 = vdwg.mxu0
  %v540 = vadd.f32 %v445, %v507
  %v541 = vadd.f32 %v447, %v509
  %v542 = vadd.f32 %v450, %v512
  %v543 = vadd.f32 %v452, %v514
  %v544 = vadd.f32 %v455, %v517
  %v545 = vadd.f32 %v457, %v519
  %v546 = vadd.f32 %v460, %v522
  %v547 = vadd.f32 %v462, %v524
  %v548 = vadd.f32 %v465, %v527
  %v549 = vadd.f32 %v467, %v529
  %v550 = vadd.f32 %v470, %v532
  %v551 = vadd.f32 %v472, %v534
  %v552 = vadd.f32 %v475, %v537
  %v553 = vmax.f32 %v342, %v540
  %v554 = vmax.f32 %v343, %v541
  %v555 = vmax.f32 %v344, %v542
  %v556 = vmax.f32 %v345, %v543
  %v557 = vmax.f32 %v346, %v544
  %v558 = vmax.f32 %v347, %v545
  %v559 = vmax.f32 %v348, %v546
  %v560 = vmax.f32 %v349, %v547
  %v561 = vmax.f32 %v350, %v548
  %v562 = vmax.f32 %v351, %v549
  %v563 = vmax.f32 %v352, %v550
  %v564 = vmax.f32 %v353, %v551
  %v565 = vmax.f32 %v354, %v552
  %566 = vmatpush.bf16.msra.mxu0 0
  %567 = vmatpush.bf16.msra.mxu0 0
  %568 = vmatpush.bf16.msra.mxu0 0
  %569 = vmatpush.bf16.msra.mxu0 0
  %570 = vmatpush.bf16.msra.mxu0 0
  %571 = vmatpush.bf16.msra.mxu0 0
  %572 = vmatpush.bf16.msra.mxu0 %v136
  %573 = vmatpush.bf16.msra.mxu0 %v109
  %574 = vmatmul.bf16.gmra.mxu0 %v276
  %v575 = vpop.f32.mrf.mxu0
  %v576 = vadd.f32 0.0, %v575
  %v577 = vpop.f32.mrf.mxu0
  %v578 = vadd.f32 0.0, %v577
  %579 = vmatmul.bf16.gmra.mxu0 %v279
  %v580 = vpop.f32.mrf.mxu0
  %v581 = vadd.f32 0.0, %v580
  %v582 = vpop.f32.mrf.mxu0
  %v583 = vadd.f32 0.0, %v582
  %584 = vmatmul.bf16.gmra.mxu0 %v282
  %v585 = vpop.f32.mrf.mxu0
  %v586 = vadd.f32 0.0, %v585
  %v587 = vpop.f32.mrf.mxu0
  %v588 = vadd.f32 0.0, %v587
  %589 = vmatmul.bf16.gmra.mxu0 %v285
  %v590 = vpop.f32.mrf.mxu0
  %v591 = vadd.f32 0.0, %v590
  %v592 = vpop.f32.mrf.mxu0
  %v593 = vadd.f32 0.0, %v592
  %594 = vmatmul.bf16.gmra.mxu0 %v288
  %v595 = vpop.f32.mrf.mxu0
  %v596 = vadd.f32 0.0, %v595
  %v597 = vpop.f32.mrf.mxu0
  %v598 = vadd.f32 0.0, %v597
  %599 = vmatmul.bf16.gmra.mxu0 %v291
  %v600 = vpop.f32.mrf.mxu0
  %v601 = vadd.f32 0.0, %v600
  %v602 = vpop.f32.mrf.mxu0
  %v603 = vadd.f32 0.0, %v602
  %604 = vmatmul.bf16.gmra.mxu0 %v294
  %v605 = vpop.f32.mrf.mxu0
  %v606 = vadd.f32 0.0, %v605
  %v607 = vpop.f32.mrf.mxu0
  %608 = vdwg.mxu0
  %609 = vmatpush.bf16.msra.mxu0 0
  %610 = vmatpush.bf16.msra.mxu0 0
  %611 = vmatpush.bf16.msra.mxu0 0
  %612 = vmatpush.bf16.msra.mxu0 0
  %613 = vmatpush.bf16.msra.mxu0 0
  %614 = vmatpush.bf16.msra.mxu0 0
  %615 = vmatpush.bf16.msra.mxu0 %v214
  %616 = vmatpush.bf16.msra.mxu0 %v189
  %617 = vmatmul.bf16.gmra.mxu0 %v114
  %v618 = vpop.f32.mrf.mxu0
  %v619 = vadd.f32 %v576, %v618
  %v620 = vpop.f32.mrf.mxu0
  %v621 = vadd.f32 %v578, %v620
  %622 = vmatmul.bf16.gmra.mxu0 %v117
  %v623 = vpop.f32.mrf.mxu0
  %v624 = vadd.f32 %v581, %v623
  %v625 = vpop.f32.mrf.mxu0
  %v626 = vadd.f32 %v583, %v625
  %627 = vmatmul.bf16.gmra.mxu0 %v120
  %v628 = vpop.f32.mrf.mxu0
  %v629 = vadd.f32 %v586, %v628
  %v630 = vpop.f32.mrf.mxu0
  %v631 = vadd.f32 %v588, %v630
  %632 = vmatmul.bf16.gmra.mxu0 %v123
  %v633 = vpop.f32.mrf.mxu0
  %v634 = vadd.f32 %v591, %v633
  %v635 = vpop.f32.mrf.mxu0
  %v636 = vadd.f32 %v593, %v635
  %637 = vmatmul.bf16.gmra.mxu0 %v126
  %v638 = vpop.f32.mrf.mxu0
  %v639 = vadd.f32 %v596, %v638
  %v640 = vpop.f32.mrf.mxu0
  %v641 = vadd.f32 %v598, %v640
  %642 = vmatmul.bf16.gmra.mxu0 %v129
  %v643 = vpop.f32.mrf.mxu0
  %v644 = vadd.f32 %v601, %v643
  %v645 = vpop.f32.mrf.mxu0
  %v646 = vadd.f32 %v603, %v645
  %647 = vmatmul.bf16.gmra.mxu0 %v132
  %v648 = vpop.f32.mrf.mxu0
  %v649 = vadd.f32 %v606, %v648
  %v650 = vpop.f32.mrf.mxu0
  %651 = vdwg.mxu0
  %v653 = vsel %vm112, %v85, 0
  %v656 = vsel %vm112, %v86, 0
  %v659 = vsel %vm112, %v87, 0
  %v662 = vsel %vm112, %v88, 0
  %v665 = vsel %vm112, %v89, 0
  %v668 = vsel %vm112, %v90, 0
  %v671 = vsel %vm112, %v91, 0
  %673 = vmatpush.bf16.msra.mxu0 0
  %674 = vmatpush.bf16.msra.mxu0 0
  %675 = vmatpush.bf16.msra.mxu0 0
  %676 = vmatpush.bf16.msra.mxu0 0
  %677 = vmatpush.bf16.msra.mxu0 0
  %678 = vmatpush.bf16.msra.mxu0 0
  %679 = vmatpush.bf16.msra.mxu0 %v297
  %680 = vmatpush.bf16.msra.mxu0 %v272
  %681 = vmatmul.bf16.gmra.mxu0 %v653
  %v682 = vpop.f32.mrf.mxu0
  %v683 = vadd.f32 0.0, %v682
  %v684 = vpop.f32.mrf.mxu0
  %v685 = vadd.f32 0.0, %v684
  %686 = vmatmul.bf16.gmra.mxu0 %v656
  %v687 = vpop.f32.mrf.mxu0
  %v688 = vadd.f32 0.0, %v687
  %v689 = vpop.f32.mrf.mxu0
  %v690 = vadd.f32 0.0, %v689
  %691 = vmatmul.bf16.gmra.mxu0 %v659
  %v692 = vpop.f32.mrf.mxu0
  %v693 = vadd.f32 0.0, %v692
  %v694 = vpop.f32.mrf.mxu0
  %v695 = vadd.f32 0.0, %v694
  %696 = vmatmul.bf16.gmra.mxu0 %v662
  %v697 = vpop.f32.mrf.mxu0
  %v698 = vadd.f32 0.0, %v697
  %v699 = vpop.f32.mrf.mxu0
  %v700 = vadd.f32 0.0, %v699
  %701 = vmatmul.bf16.gmra.mxu0 %v665
  %v702 = vpop.f32.mrf.mxu0
  %v703 = vadd.f32 0.0, %v702
  %v704 = vpop.f32.mrf.mxu0
  %v705 = vadd.f32 0.0, %v704
  %706 = vmatmul.bf16.gmra.mxu0 %v668
  %v707 = vpop.f32.mrf.mxu0
  %v708 = vadd.f32 0.0, %v707
  %v709 = vpop.f32.mrf.mxu0
  %v710 = vadd.f32 0.0, %v709
  %711 = vmatmul.bf16.gmra.mxu0 %v671
  %v712 = vpop.f32.mrf.mxu0
  %v713 = vadd.f32 0.0, %v712
  %v714 = vpop.f32.mrf.mxu0
  %715 = vdwg.mxu0
  %v716 = vadd.f32 %v619, %v683
  %v717 = vadd.f32 %v621, %v685
  %v718 = vadd.f32 %v624, %v688
  %v719 = vadd.f32 %v626, %v690
  %v720 = vadd.f32 %v629, %v693
  %v721 = vadd.f32 %v631, %v695
  %v722 = vadd.f32 %v634, %v698
  %v723 = vadd.f32 %v636, %v700
  %v724 = vadd.f32 %v639, %v703
  %v725 = vadd.f32 %v641, %v705
  %v726 = vadd.f32 %v644, %v708
  %v727 = vadd.f32 %v646, %v710
  %v728 = vadd.f32 %v649, %v713
  %v729 = vmax.f32 %v553, %v716
  %v730 = vmax.f32 %v554, %v717
  %v731 = vmax.f32 %v555, %v718
  %v732 = vmax.f32 %v556, %v719
  %v733 = vmax.f32 %v557, %v720
  %v734 = vmax.f32 %v558, %v721
  %v735 = vmax.f32 %v559, %v722
  %v736 = vmax.f32 %v560, %v723
  %v737 = vmax.f32 %v561, %v724
  %v738 = vmax.f32 %v562, %v725
  %v739 = vmax.f32 %v563, %v726
  %v740 = vmax.f32 %v564, %v727
  %v741 = vmax.f32 %v565, %v728
  %742 = vmatpush.bf16.msra.mxu0 0
  %743 = vmatpush.bf16.msra.mxu0 0
  %744 = vmatpush.bf16.msra.mxu0 0
  %745 = vmatpush.bf16.msra.mxu0 0
  %746 = vmatpush.bf16.msra.mxu0 0
  %747 = vmatpush.bf16.msra.mxu0 0
  %748 = vmatpush.bf16.msra.mxu0 %v376
  %749 = vmatpush.bf16.msra.mxu0 %v372
  %750 = vmatmul.bf16.gmra.mxu0 %v276
  %v751 = vpop.f32.mrf.mxu0
  %v752 = vadd.f32 0.0, %v751
  %v753 = vpop.f32.mrf.mxu0
  %v754 = vadd.f32 0.0, %v753
  %755 = vmatmul.bf16.gmra.mxu0 %v279
  %v756 = vpop.f32.mrf.mxu0
  %v757 = vadd.f32 0.0, %v756
  %v758 = vpop.f32.mrf.mxu0
  %v759 = vadd.f32 0.0, %v758
  %760 = vmatmul.bf16.gmra.mxu0 %v282
  %v761 = vpop.f32.mrf.mxu0
  %v762 = vadd.f32 0.0, %v761
  %v763 = vpop.f32.mrf.mxu0
  %v764 = vadd.f32 0.0, %v763
  %765 = vmatmul.bf16.gmra.mxu0 %v285
  %v766 = vpop.f32.mrf.mxu0
  %v767 = vadd.f32 0.0, %v766
  %v768 = vpop.f32.mrf.mxu0
  %v769 = vadd.f32 0.0, %v768
  %770 = vmatmul.bf16.gmra.mxu0 %v288
  %v771 = vpop.f32.mrf.mxu0
  %v772 = vadd.f32 0.0, %v771
  %v773 = vpop.f32.mrf.mxu0
  %v774 = vadd.f32 0.0, %v773
  %775 = vmatmul.bf16.gmra.mxu0 %v291
  %v776 = vpop.f32.mrf.mxu0
  %v777 = vadd.f32 0.0, %v776
  %v778 = vpop.f32.mrf.mxu0
  %v779 = vadd.f32 0.0, %v778
  %780 = vmatmul.bf16.gmra.mxu0 %v294
  %v781 = vpop.f32.mrf.mxu0
  %v782 = vadd.f32 0.0, %v781
  %v783 = vpop.f32.mrf.mxu0
  %784 = vdwg.mxu0
  %785 = vmatpush.bf16.msra.mxu0 0
  %786 = vmatpush.bf16.msra.mxu0 0
  %787 = vmatpush.bf16.msra.mxu0 0
  %788 = vmatpush.bf16.msra.mxu0 0
  %789 = vmatpush.bf16.msra.mxu0 0
  %790 = vmatpush.bf16.msra.mxu0 0
  %791 = vmatpush.bf16.msra.mxu0 %v433
  %792 = vmatpush.bf16.msra.mxu0 %v429
  %793 = vmatmul.bf16.gmra.mxu0 %v114
  %v794 = vpop.f32.mrf.mxu0
  %v795 = vadd.f32 %v752, %v794
  %v796 = vpop.f32.mrf.mxu0
  %v797 = vadd.f32 %v754, %v796
  %798 = vmatmul.bf16.gmra.mxu0 %v117
  %v799 = vpop.f32.mrf.mxu0
  %v800 = vadd.f32 %v757, %v799
  %v801 = vpop.f32.mrf.mxu0
  %v802 = vadd.f32 %v759, %v801
  %803 = vmatmul.bf16.gmra.mxu0 %v120
  %v804 = vpop.f32.mrf.mxu0
  %v805 = vadd.f32 %v762, %v804
  %v806 = vpop.f32.mrf.mxu0
  %v807 = vadd.f32 %v764, %v806
  %808 = vmatmul.bf16.gmra.mxu0 %v123
  %v809 = vpop.f32.mrf.mxu0
  %v810 = vadd.f32 %v767, %v809
  %v811 = vpop.f32.mrf.mxu0
  %v812 = vadd.f32 %v769, %v811
  %813 = vmatmul.bf16.gmra.mxu0 %v126
  %v814 = vpop.f32.mrf.mxu0
  %v815 = vadd.f32 %v772, %v814
  %v816 = vpop.f32.mrf.mxu0
  %v817 = vadd.f32 %v774, %v816
  %818 = vmatmul.bf16.gmra.mxu0 %v129
  %v819 = vpop.f32.mrf.mxu0
  %v820 = vadd.f32 %v777, %v819
  %v821 = vpop.f32.mrf.mxu0
  %v822 = vadd.f32 %v779, %v821
  %823 = vmatmul.bf16.gmra.mxu0 %v132
  %v824 = vpop.f32.mrf.mxu0
  %v825 = vadd.f32 %v782, %v824
  %v826 = vpop.f32.mrf.mxu0
  %827 = vdwg.mxu0
  %828 = vmatpush.bf16.msra.mxu0 0
  %829 = vmatpush.bf16.msra.mxu0 0
  %830 = vmatpush.bf16.msra.mxu0 0
  %831 = vmatpush.bf16.msra.mxu0 0
  %832 = vmatpush.bf16.msra.mxu0 0
  %833 = vmatpush.bf16.msra.mxu0 0
  %834 = vmatpush.bf16.msra.mxu0 %v495
  %835 = vmatpush.bf16.msra.mxu0 %v491
  %836 = vmatmul.bf16.gmra.mxu0 %v653
  %v837 = vpop.f32.mrf.mxu0
  %v838 = vadd.f32 0.0, %v837
  %v839 = vpop.f32.mrf.mxu0
  %v840 = vadd.f32 0.0, %v839
  %841 = vmatmul.bf16.gmra.mxu0 %v656
  %v842 = vpop.f32.mrf.mxu0
  %v843 = vadd.f32 0.0, %v842
  %v844 = vpop.f32.mrf.mxu0
  %v845 = vadd.f32 0.0, %v844
  %846 = vmatmul.bf16.gmra.mxu0 %v659
  %v847 = vpop.f32.mrf.mxu0
  %v848 = vadd.f32 0.0, %v847
  %v849 = vpop.f32.mrf.mxu0
  %v850 = vadd.f32 0.0, %v849
  %851 = vmatmul.bf16.gmra.mxu0 %v662
  %v852 = vpop.f32.mrf.mxu0
  %v853 = vadd.f32 0.0, %v852
  %v854 = vpop.f32.mrf.mxu0
  %v855 = vadd.f32 0.0, %v854
  %856 = vmatmul.bf16.gmra.mxu0 %v665
  %v857 = vpop.f32.mrf.mxu0
  %v858 = vadd.f32 0.0, %v857
  %v859 = vpop.f32.mrf.mxu0
  %v860 = vadd.f32 0.0, %v859
  %861 = vmatmul.bf16.gmra.mxu0 %v668
  %v862 = vpop.f32.mrf.mxu0
  %v863 = vadd.f32 0.0, %v862
  %v864 = vpop.f32.mrf.mxu0
  %v865 = vadd.f32 0.0, %v864
  %866 = vmatmul.bf16.gmra.mxu0 %v671
  %v867 = vpop.f32.mrf.mxu0
  %v868 = vadd.f32 0.0, %v867
  %v869 = vpop.f32.mrf.mxu0
  %870 = vdwg.mxu0
  %v871 = vadd.f32 %v795, %v838
  %v872 = vadd.f32 %v797, %v840
  %v873 = vadd.f32 %v800, %v843
  %v874 = vadd.f32 %v802, %v845
  %v875 = vadd.f32 %v805, %v848
  %v876 = vadd.f32 %v807, %v850
  %v877 = vadd.f32 %v810, %v853
  %v878 = vadd.f32 %v812, %v855
  %v879 = vadd.f32 %v815, %v858
  %v880 = vadd.f32 %v817, %v860
  %v881 = vadd.f32 %v820, %v863
  %v882 = vadd.f32 %v822, %v865
  %v883 = vadd.f32 %v825, %v868
  %v884 = vmax.f32 %v729, %v871
  %v885 = vmax.f32 %v730, %v872
  %v886 = vmax.f32 %v731, %v873
  %v887 = vmax.f32 %v732, %v874
  %v888 = vmax.f32 %v733, %v875
  %v889 = vmax.f32 %v734, %v876
  %v890 = vmax.f32 %v735, %v877
  %v891 = vmax.f32 %v736, %v878
  %v892 = vmax.f32 %v737, %v879
  %v893 = vmax.f32 %v738, %v880
  %v894 = vmax.f32 %v739, %v881
  %v895 = vmax.f32 %v740, %v882
  %v896 = vmax.f32 %v741, %v883
  %v897 = vld [vmem:[%s3] sm:$0x1]
  %v899 = vperm.slane %v897, 0
  %v901 = vadd.f32 %v884, %v899
  %v902 = vadd.f32 %v885, %v899
  %v903 = vadd.f32 %v886, %v899
  %v904 = vadd.f32 %v887, %v899
  %v905 = vadd.f32 %v888, %v899
  %v906 = vadd.f32 %v889, %v899
  %v907 = vadd.f32 %v890, %v899
  %v908 = vadd.f32 %v891, %v899
  %v909 = vadd.f32 %v892, %v899
  %v910 = vadd.f32 %v893, %v899
  %v911 = vadd.f32 %v894, %v899
  %v912 = vadd.f32 %v895, %v899
  %v913 = vadd.f32 %v896, %v899
  %v914 = vmax.f32 %v901, 0.0
  %v915 = vmax.f32 %v902, 0.0
  %v916 = vmax.f32 %v903, 0.0
  %v917 = vmax.f32 %v904, 0.0
  %v918 = vmax.f32 %v905, 0.0
  %v919 = vmax.f32 %v906, 0.0
  %v920 = vmax.f32 %v907, 0.0
  %v921 = vmax.f32 %v908, 0.0
  %v922 = vmax.f32 %v909, 0.0
  %v923 = vmax.f32 %v910, 0.0
  %v924 = vmax.f32 %v911, 0.0
  %v925 = vmax.f32 %v912, 0.0
  %v926 = vmax.f32 %v913, 0.0
  %vm927 = vcmask 424960
  %928 = vst.msk [vmem:[#allocation2] sm:$0xff] %vm927, %v914
  %929 = vst.msk [vmem:[#allocation2 + $0x8] sm:$0xff] %vm927, %v915
  %930 = vst.msk [vmem:[#allocation2 + $0x10] sm:$0xff] %vm927, %v916
  %931 = vst.msk [vmem:[#allocation2 + $0x18] sm:$0xff] %vm927, %v917
  %932 = vst.msk [vmem:[#allocation2 + $0x20] sm:$0xff] %vm927, %v918
  %933 = vst.msk [vmem:[#allocation2 + $0x28] sm:$0xff] %vm927, %v919
  %934 = vst.msk [vmem:[#allocation2 + $0x30] sm:$0xff] %vm927, %v920
  %935 = vst.msk [vmem:[#allocation2 + $0x38] sm:$0xff] %vm927, %v921
  %936 = vst.msk [vmem:[#allocation2 + $0x40] sm:$0xff] %vm927, %v922
  %937 = vst.msk [vmem:[#allocation2 + $0x48] sm:$0xff] %vm927, %v923
  %938 = vst.msk [vmem:[#allocation2 + $0x50] sm:$0xff] %vm927, %v924
  %939 = vst.msk [vmem:[#allocation2 + $0x58] sm:$0xff] %vm927, %v925
  %940 = vst.msk [vmem:[#allocation2 + $0x60] sm:$0xff] %vm927, %v926
  %v941 = vld [vmem:[%s5] sm:$0x7]
  %v943 = vperm.slane %v941, 0
  %v944 = vperm.slane %v941, 1
  %v945 = vperm.slane %v941, 2
  %949 = vst [vmem:[#allocation3] sm:$0xff] %v943
  %950 = vst [vmem:[#allocation3 + $0x8] sm:$0xff] %v944
  %vm951 = vcmask 785408
  %952 = vst.msk [vmem:[#allocation3 + $0x10] sm:$0xff] %vm951, %v945
  %953 = vst [vmem:[#allocation3 + $0x18] sm:$0xff] %v943
  %954 = vst [vmem:[#allocation3 + $0x20] sm:$0xff] %v944
  %955 = vst.msk [vmem:[#allocation3 + $0x28] sm:$0xff] %vm951, %v945
  %956 = vst [vmem:[#allocation3 + $0x30] sm:$0xff] %v943
  %957 = vst [vmem:[#allocation3 + $0x38] sm:$0xff] %v944
  %958 = vst.msk [vmem:[#allocation3 + $0x40] sm:$0xff] %vm951, %v945
  %959 = vst [vmem:[#allocation3 + $0x48] sm:$0xff] %v943
  %960 = vst [vmem:[#allocation3 + $0x50] sm:$0xff] %v944
  %961 = vst.msk [vmem:[#allocation3 + $0x58] sm:$0xff] %vm951, %v945
  %962 = vst [vmem:[#allocation3 + $0x60] sm:$0xff] %v943
  %963 = vst [vmem:[#allocation3 + $0x68] sm:$0xff] %v944
  %964 = vst.msk [vmem:[#allocation3 + $0x70] sm:$0xff] %vm951, %v945
  %965 = vst [vmem:[#allocation3 + $0x78] sm:$0xff] %v943
  %966 = vst [vmem:[#allocation3 + $0x80] sm:$0xff] %v944
  %967 = vst.msk [vmem:[#allocation3 + $0x88] sm:$0xff] %vm951, %v945
  %968 = vst [vmem:[#allocation3 + $0x90] sm:$0xff] %v943
  %969 = vst [vmem:[#allocation3 + $0x98] sm:$0xff] %v944
  %970 = vst.msk [vmem:[#allocation3 + $0xa0] sm:$0xff] %vm951, %v945
  %971 = vst [vmem:[#allocation3 + $0xa8] sm:$0xff] %v943
  %972 = vst [vmem:[#allocation3 + $0xb0] sm:$0xff] %v944
  %973 = vst.msk [vmem:[#allocation3 + $0xb8] sm:$0xff] %vm951, %v945
  %974 = vst [vmem:[#allocation3 + $0xc0] sm:$0xff] %v943
  %975 = vst [vmem:[#allocation3 + $0xc8] sm:$0xff] %v944
  %976 = vst.msk [vmem:[#allocation3 + $0xd0] sm:$0xff] %vm951, %v945
  %977 = vst [vmem:[#allocation3 + $0xd8] sm:$0xff] %v943
  %978 = vst [vmem:[#allocation3 + $0xe0] sm:$0xff] %v944
  %979 = vst.msk [vmem:[#allocation3 + $0xe8] sm:$0xff] %vm951, %v945
  %980 = vst [vmem:[#allocation3 + $0xf0] sm:$0xff] %v943
  %981 = vst [vmem:[#allocation3 + $0xf8] sm:$0xff] %v944
  %982 = vst.msk [vmem:[#allocation3 + $0x100] sm:$0xff] %vm951, %v945
  %v983 = vld [vmem:[#allocation3] sm:$0xff]
  %v984 = vld [vmem:[#allocation3 + $0x8] sm:$0xff]
  %v985 = vld [vmem:[#allocation3 + $0x10] sm:$0xff]
  %v986 = vld [vmem:[#allocation3 + $0x18] sm:$0xff]
  %v987 = vld [vmem:[#allocation3 + $0x20] sm:$0xff]
  %v988 = vld [vmem:[#allocation3 + $0x28] sm:$0xff]
  %v989 = vld [vmem:[#allocation3 + $0x30] sm:$0xff]
  %v990 = vld [vmem:[#allocation3 + $0x38] sm:$0xff]
  %v991 = vld [vmem:[#allocation3 + $0x40] sm:$0xff]
  %v992 = vld [vmem:[#allocation3 + $0x48] sm:$0xff]
  %v993 = vld [vmem:[#allocation3 + $0x50] sm:$0xff]
  %v994 = vld [vmem:[#allocation3 + $0x58] sm:$0xff]
  %v995 = vld [vmem:[#allocation3 + $0x60] sm:$0xff]
  %v996 = vld [vmem:[#allocation3 + $0x68] sm:$0xff]
  %v997 = vld [vmem:[#allocation3 + $0x70] sm:$0xff]
  %v998 = vld [vmem:[#allocation3 + $0x78] sm:$0xff]
  %v999 = vld [vmem:[#allocation3 + $0x80] sm:$0xff]
  %v1000 = vld [vmem:[#allocation3 + $0x88] sm:$0xff]
  %v1001 = vld [vmem:[#allocation3 + $0x90] sm:$0xff]
  %v1002 = vld [vmem:[#allocation3 + $0x98] sm:$0xff]
  %v1003 = vld [vmem:[#allocation3 + $0xa0] sm:$0xff]
  %v1004 = vld [vmem:[#allocation3 + $0xa8] sm:$0xff]
  %v1005 = vld [vmem:[#allocation3 + $0xb0] sm:$0xff]
  %v1006 = vld [vmem:[#allocation3 + $0xb8] sm:$0xff]
  %v1007 = vld [vmem:[#allocation3 + $0xc0] sm:$0xff]
  %v1008 = vld [vmem:[#allocation3 + $0xc8] sm:$0xff]
  %v1009 = vld [vmem:[#allocation3 + $0xd0] sm:$0xff]
  %v1010 = vld [vmem:[#allocation3 + $0xd8] sm:$0xff]
  %v1011 = vld [vmem:[#allocation3 + $0xe0] sm:$0xff]
  %v1012 = vld [vmem:[#allocation3 + $0xe8] sm:$0xff]
  %v1013 = vld [vmem:[#allocation3 + $0xf0] sm:$0xff]
  %v1014 = vld [vmem:[#allocation3 + $0xf8] sm:$0xff]
  %v1015 = vld [vmem:[#allocation3 + $0x100] sm:$0xff]
  %v1016 = vld [vmem:[#allocation2] sm:$0xff]
  %v1017 = vld [vmem:[#allocation2 + $0x8] sm:$0xff]
  %v1018 = vld [vmem:[#allocation2 + $0x10] sm:$0xff]
  %v1019 = vld [vmem:[#allocation2 + $0x18] sm:$0xff]
  %v1020 = vld [vmem:[#allocation2 + $0x20] sm:$0xff]
  %v1021 = vld [vmem:[#allocation2 + $0x28] sm:$0xff]
  %v1022 = vld [vmem:[#allocation2 + $0x30] sm:$0xff]
  %v1023 = vld [vmem:[#allocation2 + $0x38] sm:$0xff]
  %v1024 = vld [vmem:[#allocation2 + $0x40] sm:$0xff]
  %v1025 = vld [vmem:[#allocation2 + $0x48] sm:$0xff]
  %v1026 = vld [vmem:[#allocation2 + $0x50] sm:$0xff]
  %v1027 = vpack.c.bf16 %v1017, %v1016
  %v1028 = vpack.c.bf16 %v1019, %v1018
  %v1029 = vpack.c.bf16 %v1021, %v1020
  %v1030 = vpack.c.bf16 %v1023, %v1022
  %v1031 = vpack.c.bf16 %v1025, %v1024
  %v1032 = vpack.c.bf16 %v1026, %v1026
  %v1033 = vld [vmem:[%s4] sm:$0xff]
  %v1034 = vld [vmem:[%s4 + $0x8] sm:$0xf]
  %v1035 = vld [vmem:[%s4 + $0xc] sm:$0xff]
  %v1036 = vld [vmem:[%s4 + $0x14] sm:$0xf]
  %v1037 = vld [vmem:[%s4 + $0x18] sm:$0xff]
  %v1038 = vld [vmem:[%s4 + $0x20] sm:$0xf]
  %v1039 = vld [vmem:[%s4 + $0x24] sm:$0xff]
  %v1040 = vld [vmem:[%s4 + $0x2c] sm:$0xf]
  %v1041 = vld [vmem:[%s4 + $0x30] sm:$0xff]
  %v1042 = vld [vmem:[%s4 + $0x38] sm:$0xf]
  %v1043 = vld [vmem:[%s4 + $0x3c] sm:$0xff]
  %v1044 = vld [vmem:[%s4 + $0x44] sm:$0xf]
  %v1045 = vld [vmem:[%s4 + $0x48] sm:$0x33]
  %v1046 = vld [vmem:[%s4 + $0x50] sm:$0x3]
  %v1061 = vunpack.c.l.b16 %v1033
  %v1062 = vunpack.c.h.b16 %v1033
  %v1063 = vunpack.c.l.b16 %v1034
  %v1064 = vunpack.c.l.b16 %v1035
  %v1065 = vunpack.c.h.b16 %v1035
  %v1066 = vunpack.c.l.b16 %v1036
  %v1067 = vunpack.c.l.b16 %v1037
  %v1068 = vunpack.c.h.b16 %v1037
  %v1069 = vunpack.c.l.b16 %v1038
  %v1070 = vunpack.c.l.b16 %v1039
  %v1071 = vunpack.c.h.b16 %v1039
  %v1072 = vunpack.c.l.b16 %v1040
  %v1073 = vunpack.c.l.b16 %v1041
  %v1074 = vunpack.c.h.b16 %v1041
  %v1075 = vunpack.c.l.b16 %v1042
  %v1076 = vunpack.c.l.b16 %v1043
  %v1077 = vunpack.c.h.b16 %v1043
  %v1078 = vunpack.c.l.b16 %v1044
  %v1079 = vunpack.c.l.b16 %v1045
  %v1080 = vunpack.c.h.b16 %v1045
  %v1081 = vunpack.c.l.b16 %v1046
  %v1082 = vpack.c.b16 %v1064, %v1061
  %v1083 = vpack.c.b16 %v1065, %v1062
  %v1084 = vpack.c.b16 %v1066, %v1063
  %v1085 = vpack.c.b16 %v1070, %v1067
  %v1086 = vpack.c.b16 %v1071, %v1068
  %v1087 = vpack.c.b16 %v1072, %v1069
  %v1088 = vpack.c.b16 %v1076, %v1073
  %v1089 = vpack.c.b16 %v1077, %v1074
  %v1090 = vpack.c.b16 %v1078, %v1075
  %v1091 = vpack.c.b16 %v1079, %v1079
  %v1092 = vpack.c.b16 %v1080, %v1080
  %v1093 = vpack.c.b16 %v1081, %v1081
  %v1104 = vsel %vm927, %v1027, 0
  %v1107 = vsel %vm927, %v1028, 0
  %v1110 = vsel %vm927, %v1029, 0
  %v1113 = vsel %vm927, %v1030, 0
  %v1116 = vsel %vm927, %v1031, 0
  %v1119 = vsel %vm927, %v1032, 0
  %vm1121 = vcmask 1041408
  %v1123 = vsel %vm1121, %v1091, 0
  %v1126 = vsel %vm1121, %v1092, 0
  %v1129 = vsel %vm1121, %v1093, 0
  %1131 = vmatpush.bf16.msra.mxu0 0
  %1132 = vmatpush.bf16.msra.mxu0 0
  %1133 = vmatpush.bf16.msra.mxu0 0
  %1134 = vmatpush.bf16.msra.mxu0 0
  %1135 = vmatpush.bf16.msra.mxu0 %v1123
  %1136 = vmatpush.bf16.msra.mxu0 %v1088
  %1137 = vmatpush.bf16.msra.mxu0 %v1085
  %1138 = vmatpush.bf16.msra.mxu0 %v1082
  %1139 = vmatmul.bf16.gmra.mxu0 %v1104
  %v1140 = vpop.f32.mrf.mxu0
  %v1141 = vadd.f32 0.0, %v1140
  %v1142 = vpop.f32.mrf.mxu0
  %v1143 = vadd.f32 0.0, %v1142
  %1144 = vmatmul.bf16.gmra.mxu0 %v1107
  %v1145 = vpop.f32.mrf.mxu0
  %v1146 = vadd.f32 0.0, %v1145
  %v1147 = vpop.f32.mrf.mxu0
  %v1148 = vadd.f32 0.0, %v1147
  %1149 = vmatmul.bf16.gmra.mxu0 %v1110
  %v1150 = vpop.f32.mrf.mxu0
  %v1151 = vadd.f32 0.0, %v1150
  %v1152 = vpop.f32.mrf.mxu0
  %v1153 = vadd.f32 0.0, %v1152
  %1154 = vmatmul.bf16.gmra.mxu0 %v1113
  %v1155 = vpop.f32.mrf.mxu0
  %v1156 = vadd.f32 0.0, %v1155
  %v1157 = vpop.f32.mrf.mxu0
  %v1158 = vadd.f32 0.0, %v1157
  %1159 = vmatmul.bf16.gmra.mxu0 %v1116
  %v1160 = vpop.f32.mrf.mxu0
  %v1161 = vadd.f32 0.0, %v1160
  %v1162 = vpop.f32.mrf.mxu0
  %v1163 = vadd.f32 0.0, %v1162
  %1164 = vmatmul.bf16.gmra.mxu0 %v1119
  %v1165 = vpop.f32.mrf.mxu0
  %v1166 = vadd.f32 0.0, %v1165
  %v1167 = vpop.f32.mrf.mxu0
  %1168 = vdwg.mxu0
  %1169 = vmatpush.bf16.msra.mxu0 0
  %1170 = vmatpush.bf16.msra.mxu0 0
  %1171 = vmatpush.bf16.msra.mxu0 0
  %1172 = vmatpush.bf16.msra.mxu0 0
  %1173 = vmatpush.bf16.msra.mxu0 %v1126
  %1174 = vmatpush.bf16.msra.mxu0 %v1089
  %1175 = vmatpush.bf16.msra.mxu0 %v1086
  %1176 = vmatpush.bf16.msra.mxu0 %v1083
  %1177 = vmatmul.bf16.gmra.mxu0 %v1104
  %v1178 = vpop.f32.mrf.mxu0
  %v1179 = vadd.f32 0.0, %v1178
  %v1180 = vpop.f32.mrf.mxu0
  %v1181 = vadd.f32 0.0, %v1180
  %1182 = vmatmul.bf16.gmra.mxu0 %v1107
  %v1183 = vpop.f32.mrf.mxu0
  %v1184 = vadd.f32 0.0, %v1183
  %v1185 = vpop.f32.mrf.mxu0
  %v1186 = vadd.f32 0.0, %v1185
  %1187 = vmatmul.bf16.gmra.mxu0 %v1110
  %v1188 = vpop.f32.mrf.mxu0
  %v1189 = vadd.f32 0.0, %v1188
  %v1190 = vpop.f32.mrf.mxu0
  %v1191 = vadd.f32 0.0, %v1190
  %1192 = vmatmul.bf16.gmra.mxu0 %v1113
  %v1193 = vpop.f32.mrf.mxu0
  %v1194 = vadd.f32 0.0, %v1193
  %v1195 = vpop.f32.mrf.mxu0
  %v1196 = vadd.f32 0.0, %v1195
  %1197 = vmatmul.bf16.gmra.mxu0 %v1116
  %v1198 = vpop.f32.mrf.mxu0
  %v1199 = vadd.f32 0.0, %v1198
  %v1200 = vpop.f32.mrf.mxu0
  %v1201 = vadd.f32 0.0, %v1200
  %1202 = vmatmul.bf16.gmra.mxu0 %v1119
  %v1203 = vpop.f32.mrf.mxu0
  %v1204 = vadd.f32 0.0, %v1203
  %v1205 = vpop.f32.mrf.mxu0
  %1206 = vdwg.mxu0
  %1207 = vmatpush.bf16.msra.mxu0 0
  %1208 = vmatpush.bf16.msra.mxu0 0
  %1209 = vmatpush.bf16.msra.mxu0 0
  %1210 = vmatpush.bf16.msra.mxu0 0
  %1211 = vmatpush.bf16.msra.mxu0 %v1129
  %1212 = vmatpush.bf16.msra.mxu0 %v1090
  %1213 = vmatpush.bf16.msra.mxu0 %v1087
  %1214 = vmatpush.bf16.msra.mxu0 %v1084
  %1215 = vmatmul.bf16.gmra.mxu0 %v1104
  %v1216 = vpop.f32.mrf.mxu0
  %v1217 = vadd.f32 0.0, %v1216
  %v1218 = vpop.f32.mrf.mxu0
  %v1219 = vadd.f32 0.0, %v1218
  %1220 = vmatmul.bf16.gmra.mxu0 %v1107
  %v1221 = vpop.f32.mrf.mxu0
  %v1222 = vadd.f32 0.0, %v1221
  %v1223 = vpop.f32.mrf.mxu0
  %v1224 = vadd.f32 0.0, %v1223
  %1225 = vmatmul.bf16.gmra.mxu0 %v1110
  %v1226 = vpop.f32.mrf.mxu0
  %v1227 = vadd.f32 0.0, %v1226
  %v1228 = vpop.f32.mrf.mxu0
  %v1229 = vadd.f32 0.0, %v1228
  %1230 = vmatmul.bf16.gmra.mxu0 %v1113
  %v1231 = vpop.f32.mrf.mxu0
  %v1232 = vadd.f32 0.0, %v1231
  %v1233 = vpop.f32.mrf.mxu0
  %v1234 = vadd.f32 0.0, %v1233
  %1235 = vmatmul.bf16.gmra.mxu0 %v1116
  %v1236 = vpop.f32.mrf.mxu0
  %v1237 = vadd.f32 0.0, %v1236
  %v1238 = vpop.f32.mrf.mxu0
  %v1239 = vadd.f32 0.0, %v1238
  %1240 = vmatmul.bf16.gmra.mxu0 %v1119
  %v1241 = vpop.f32.mrf.mxu0
  %v1242 = vadd.f32 0.0, %v1241
  %v1243 = vpop.f32.mrf.mxu0
  %1244 = vdwg.mxu0
  %v1245 = vadd.f32 %v983, %v1141
  %v1246 = vadd.f32 %v984, %v1179
  %v1247 = vadd.f32 %v985, %v1217
  %v1248 = vadd.f32 %v986, %v1143
  %v1249 = vadd.f32 %v987, %v1181
  %v1250 = vadd.f32 %v988, %v1219
  %v1251 = vadd.f32 %v989, %v1146
  %v1252 = vadd.f32 %v990, %v1184
  %v1253 = vadd.f32 %v991, %v1222
  %v1254 = vadd.f32 %v992, %v1148
  %v1255 = vadd.f32 %v993, %v1186
  %v1256 = vadd.f32 %v994, %v1224
  %v1257 = vadd.f32 %v995, %v1151
  %v1258 = vadd.f32 %v996, %v1189
  %v1259 = vadd.f32 %v997, %v1227
  %v1260 = vadd.f32 %v998, %v1153
  %v1261 = vadd.f32 %v999, %v1191
  %v1262 = vadd.f32 %v1000, %v1229
  %v1263 = vadd.f32 %v1001, %v1156
  %v1264 = vadd.f32 %v1002, %v1194
  %v1265 = vadd.f32 %v1003, %v1232
  %v1266 = vadd.f32 %v1004, %v1158
  %v1267 = vadd.f32 %v1005, %v1196
  %v1268 = vadd.f32 %v1006, %v1234
  %v1269 = vadd.f32 %v1007, %v1161
  %v1270 = vadd.f32 %v1008, %v1199
  %v1271 = vadd.f32 %v1009, %v1237
  %v1272 = vadd.f32 %v1010, %v1163
  %v1273 = vadd.f32 %v1011, %v1201
  %v1274 = vadd.f32 %v1012, %v1239
  %v1275 = vadd.f32 %v1013, %v1166
  %v1276 = vadd.f32 %v1014, %v1204
  %v1277 = vadd.f32 %v1015, %v1242
  %1278 = vst [vmem:[#allocation3] sm:$0xff] %v1245
  %1279 = vst [vmem:[#allocation3 + $0x8] sm:$0xff] %v1246
  %1280 = vst.msk [vmem:[#allocation3 + $0x10] sm:$0xff] %vm951, %v1247
  %1281 = vst [vmem:[#allocation3 + $0x18] sm:$0xff] %v1248
  %1282 = vst [vmem:[#allocation3 + $0x20] sm:$0xff] %v1249
  %1283 = vst.msk [vmem:[#allocation3 + $0x28] sm:$0xff] %vm951, %v1250
  %1284 = vst [vmem:[#allocation3 + $0x30] sm:$0xff] %v1251
  %1285 = vst [vmem:[#allocation3 + $0x38] sm:$0xff] %v1252
  %1286 = vst.msk [vmem:[#allocation3 + $0x40] sm:$0xff] %vm951, %v1253
  %1287 = vst [vmem:[#allocation3 + $0x48] sm:$0xff] %v1254
  %1288 = vst [vmem:[#allocation3 + $0x50] sm:$0xff] %v1255
  %1289 = vst.msk [vmem:[#allocation3 + $0x58] sm:$0xff] %vm951, %v1256
  %1290 = vst [vmem:[#allocation3 + $0x60] sm:$0xff] %v1257
  %1291 = vst [vmem:[#allocation3 + $0x68] sm:$0xff] %v1258
  %1292 = vst.msk [vmem:[#allocation3 + $0x70] sm:$0xff] %vm951, %v1259
  %1293 = vst [vmem:[#allocation3 + $0x78] sm:$0xff] %v1260
  %1294 = vst [vmem:[#allocation3 + $0x80] sm:$0xff] %v1261
  %1295 = vst.msk [vmem:[#allocation3 + $0x88] sm:$0xff] %vm951, %v1262
  %1296 = vst [vmem:[#allocation3 + $0x90] sm:$0xff] %v1263
  %1297 = vst [vmem:[#allocation3 + $0x98] sm:$0xff] %v1264
  %1298 = vst.msk [vmem:[#allocation3 + $0xa0] sm:$0xff] %vm951, %v1265
  %1299 = vst [vmem:[#allocation3 + $0xa8] sm:$0xff] %v1266
  %1300 = vst [vmem:[#allocation3 + $0xb0] sm:$0xff] %v1267
  %1301 = vst.msk [vmem:[#allocation3 + $0xb8] sm:$0xff] %vm951, %v1268
  %1302 = vst [vmem:[#allocation3 + $0xc0] sm:$0xff] %v1269
  %1303 = vst [vmem:[#allocation3 + $0xc8] sm:$0xff] %v1270
  %1304 = vst.msk [vmem:[#allocation3 + $0xd0] sm:$0xff] %vm951, %v1271
  %1305 = vst [vmem:[#allocation3 + $0xd8] sm:$0xff] %v1272
  %1306 = vst [vmem:[#allocation3 + $0xe0] sm:$0xff] %v1273
  %1307 = vst.msk [vmem:[#allocation3 + $0xe8] sm:$0xff] %vm951, %v1274
  %1308 = vst [vmem:[#allocation3 + $0xf0] sm:$0xff] %v1275
  %1309 = vst [vmem:[#allocation3 + $0xf8] sm:$0xff] %v1276
  %1310 = vst.msk [vmem:[#allocation3 + $0x100] sm:$0xff] %vm951, %v1277
  %v1311 = vld [vmem:[#allocation3] sm:$0xff]
  %v1312 = vld [vmem:[#allocation3 + $0x8] sm:$0xff]
  %v1313 = vld [vmem:[#allocation3 + $0x10] sm:$0xff]
  %v1314 = vld [vmem:[#allocation3 + $0x18] sm:$0xff]
  %v1315 = vld [vmem:[#allocation3 + $0x20] sm:$0xff]
  %v1316 = vld [vmem:[#allocation3 + $0x28] sm:$0xff]
  %v1317 = vld [vmem:[#allocation3 + $0x30] sm:$0xff]
  %v1318 = vld [vmem:[#allocation3 + $0x38] sm:$0xff]
  %v1319 = vld [vmem:[#allocation3 + $0x40] sm:$0xff]
  %v1320 = vld [vmem:[#allocation3 + $0x48] sm:$0xff]
  %v1321 = vld [vmem:[#allocation3 + $0x50] sm:$0xff]
  %v1322 = vld [vmem:[#allocation3 + $0x58] sm:$0xff]
  %v1323 = vld [vmem:[#allocation3 + $0x60] sm:$0xff]
  %v1324 = vld [vmem:[#allocation3 + $0x68] sm:$0xff]
  %v1325 = vld [vmem:[#allocation3 + $0x70] sm:$0xff]
  %v1326 = vld [vmem:[#allocation3 + $0x78] sm:$0xff]
  %v1327 = vld [vmem:[#allocation3 + $0x80] sm:$0xff]
  %v1328 = vld [vmem:[#allocation3 + $0x88] sm:$0xff]
  %v1329 = vld [vmem:[#allocation3 + $0x90] sm:$0xff]
  %v1330 = vld [vmem:[#allocation3 + $0x98] sm:$0xff]
  %v1331 = vld [vmem:[#allocation3 + $0xa0] sm:$0xff]
  %v1332 = vld [vmem:[#allocation3 + $0xa8] sm:$0xff]
  %v1333 = vld [vmem:[#allocation3 + $0xb0] sm:$0xff]
  %v1334 = vld [vmem:[#allocation3 + $0xb8] sm:$0xff]
  %v1335 = vld [vmem:[#allocation3 + $0xc0] sm:$0xff]
  %v1336 = vld [vmem:[#allocation3 + $0xc8] sm:$0xff]
  %v1337 = vld [vmem:[#allocation3 + $0xd0] sm:$0xff]
  %v1338 = vld [vmem:[#allocation3 + $0xd8] sm:$0xff]
  %v1339 = vld [vmem:[#allocation3 + $0xe0] sm:$0xff]
  %v1340 = vld [vmem:[#allocation3 + $0xe8] sm:$0xff]
  %v1341 = vld [vmem:[#allocation3 + $0xf0] sm:$0xff]
  %v1342 = vld [vmem:[#allocation3 + $0xf8] sm:$0xff]
  %v1343 = vld [vmem:[#allocation3 + $0x100] sm:$0xff]
  %v1344 = vld [vmem:[#allocation2 + $0x8] sm:$0xff]
  %v1345 = vld [vmem:[#allocation2 + $0x10] sm:$0xff]
  %v1346 = vld [vmem:[#allocation2 + $0x18] sm:$0xff]
  %v1347 = vld [vmem:[#allocation2 + $0x20] sm:$0xff]
  %v1348 = vld [vmem:[#allocation2 + $0x28] sm:$0xff]
  %v1349 = vld [vmem:[#allocation2 + $0x30] sm:$0xff]
  %v1350 = vld [vmem:[#allocation2 + $0x38] sm:$0xff]
  %v1351 = vld [vmem:[#allocation2 + $0x40] sm:$0xff]
  %v1352 = vld [vmem:[#allocation2 + $0x48] sm:$0xff]
  %v1353 = vld [vmem:[#allocation2 + $0x50] sm:$0xff]
  %v1354 = vld [vmem:[#allocation2 + $0x58] sm:$0xff]
  %v1355 = vpack.c.bf16 %v1345, %v1344
  %v1356 = vpack.c.bf16 %v1347, %v1346
  %v1357 = vpack.c.bf16 %v1349, %v1348
  %v1358 = vpack.c.bf16 %v1351, %v1350
  %v1359 = vpack.c.bf16 %v1353, %v1352
  %v1360 = vpack.c.bf16 %v1354, %v1354
  %s1361 = scalar_lea.vmem %s4, 84
  %v1362 = vld [vmem:[%s1361] sm:$0xff]
  %v1363 = vld [vmem:[%s1361 + $0x8] sm:$0xf]
  %v1364 = vld [vmem:[%s1361 + $0xc] sm:$0xff]
  %v1365 = vld [vmem:[%s1361 + $0x14] sm:$0xf]
  %v1366 = vld [vmem:[%s1361 + $0x18] sm:$0xff]
  %v1367 = vld [vmem:[%s1361 + $0x20] sm:$0xf]
  %v1368 = vld [vmem:[%s1361 + $0x24] sm:$0xff]
  %v1369 = vld [vmem:[%s1361 + $0x2c] sm:$0xf]
  %v1370 = vld [vmem:[%s1361 + $0x30] sm:$0xff]
  %v1371 = vld [vmem:[%s1361 + $0x38] sm:$0xf]
  %v1372 = vld [vmem:[%s1361 + $0x3c] sm:$0xff]
  %v1373 = vld [vmem:[%s1361 + $0x44] sm:$0xf]
  %v1374 = vld [vmem:[%s1361 + $0x48] sm:$0x33]
  %v1375 = vld [vmem:[%s1361 + $0x50] sm:$0x3]
  %v1390 = vunpack.c.l.b16 %v1362
  %v1391 = vunpack.c.h.b16 %v1362
  %v1392 = vunpack.c.l.b16 %v1363
  %v1393 = vunpack.c.l.b16 %v1364
  %v1394 = vunpack.c.h.b16 %v1364
  %v1395 = vunpack.c.l.b16 %v1365
  %v1396 = vunpack.c.l.b16 %v1366
  %v1397 = vunpack.c.h.b16 %v1366
  %v1398 = vunpack.c.l.b16 %v1367
  %v1399 = vunpack.c.l.b16 %v1368
  %v1400 = vunpack.c.h.b16 %v1368
  %v1401 = vunpack.c.l.b16 %v1369
  %v1402 = vunpack.c.l.b16 %v1370
  %v1403 = vunpack.c.h.b16 %v1370
  %v1404 = vunpack.c.l.b16 %v1371
  %v1405 = vunpack.c.l.b16 %v1372
  %v1406 = vunpack.c.h.b16 %v1372
  %v1407 = vunpack.c.l.b16 %v1373
  %v1408 = vunpack.c.l.b16 %v1374
  %v1409 = vunpack.c.h.b16 %v1374
  %v1410 = vunpack.c.l.b16 %v1375
  %v1411 = vpack.c.b16 %v1393, %v1390
  %v1412 = vpack.c.b16 %v1394, %v1391
  %v1413 = vpack.c.b16 %v1395, %v1392
  %v1414 = vpack.c.b16 %v1399, %v1396
  %v1415 = vpack.c.b16 %v1400, %v1397
  %v1416 = vpack.c.b16 %v1401, %v1398
  %v1417 = vpack.c.b16 %v1405, %v1402
  %v1418 = vpack.c.b16 %v1406, %v1403
  %v1419 = vpack.c.b16 %v1407, %v1404
  %v1420 = vpack.c.b16 %v1408, %v1408
  %v1421 = vpack.c.b16 %v1409, %v1409
  %v1422 = vpack.c.b16 %v1410, %v1410
  %v1433 = vsel %vm927, %v1355, 0
  %v1436 = vsel %vm927, %v1356, 0
  %v1439 = vsel %vm927, %v1357, 0
  %v1442 = vsel %vm927, %v1358, 0
  %v1445 = vsel %vm927, %v1359, 0
  %v1448 = vsel %vm927, %v1360, 0
  %v1451 = vsel %vm1121, %v1420, 0
  %v1454 = vsel %vm1121, %v1421, 0
  %v1457 = vsel %vm1121, %v1422, 0
  %1459 = vmatpush.bf16.msra.mxu0 0
  %1460 = vmatpush.bf16.msra.mxu0 0
  %1461 = vmatpush.bf16.msra.mxu0 0
  %1462 = vmatpush.bf16.msra.mxu0 0
  %1463 = vmatpush.bf16.msra.mxu0 %v1451
  %1464 = vmatpush.bf16.msra.mxu0 %v1417
  %1465 = vmatpush.bf16.msra.mxu0 %v1414
  %1466 = vmatpush.bf16.msra.mxu0 %v1411
  %1467 = vmatmul.bf16.gmra.mxu0 %v1433
  %v1468 = vpop.f32.mrf.mxu0
  %v1469 = vadd.f32 0.0, %v1468
  %v1470 = vpop.f32.mrf.mxu0
  %v1471 = vadd.f32 0.0, %v1470
  %1472 = vmatmul.bf16.gmra.mxu0 %v1436
  %v1473 = vpop.f32.mrf.mxu0
  %v1474 = vadd.f32 0.0, %v1473
  %v1475 = vpop.f32.mrf.mxu0
  %v1476 = vadd.f32 0.0, %v1475
  %1477 = vmatmul.bf16.gmra.mxu0 %v1439
  %v1478 = vpop.f32.mrf.mxu0
  %v1479 = vadd.f32 0.0, %v1478
  %v1480 = vpop.f32.mrf.mxu0
  %v1481 = vadd.f32 0.0, %v1480
  %1482 = vmatmul.bf16.gmra.mxu0 %v1442
  %v1483 = vpop.f32.mrf.mxu0
  %v1484 = vadd.f32 0.0, %v1483
  %v1485 = vpop.f32.mrf.mxu0
  %v1486 = vadd.f32 0.0, %v1485
  %1487 = vmatmul.bf16.gmra.mxu0 %v1445
  %v1488 = vpop.f32.mrf.mxu0
  %v1489 = vadd.f32 0.0, %v1488
  %v1490 = vpop.f32.mrf.mxu0
  %v1491 = vadd.f32 0.0, %v1490
  %1492 = vmatmul.bf16.gmra.mxu0 %v1448
  %v1493 = vpop.f32.mrf.mxu0
  %v1494 = vadd.f32 0.0, %v1493
  %v1495 = vpop.f32.mrf.mxu0
  %1496 = vdwg.mxu0
  %1497 = vmatpush.bf16.msra.mxu0 0
  %1498 = vmatpush.bf16.msra.mxu0 0
  %1499 = vmatpush.bf16.msra.mxu0 0
  %1500 = vmatpush.bf16.msra.mxu0 0
  %1501 = vmatpush.bf16.msra.mxu0 %v1454
  %1502 = vmatpush.bf16.msra.mxu0 %v1418
  %1503 = vmatpush.bf16.msra.mxu0 %v1415
  %1504 = vmatpush.bf16.msra.mxu0 %v1412
  %1505 = vmatmul.bf16.gmra.mxu0 %v1433
  %v1506 = vpop.f32.mrf.mxu0
  %v1507 = vadd.f32 0.0, %v1506
  %v1508 = vpop.f32.mrf.mxu0
  %v1509 = vadd.f32 0.0, %v1508
  %1510 = vmatmul.bf16.gmra.mxu0 %v1436
  %v1511 = vpop.f32.mrf.mxu0
  %v1512 = vadd.f32 0.0, %v1511
  %v1513 = vpop.f32.mrf.mxu0
  %v1514 = vadd.f32 0.0, %v1513
  %1515 = vmatmul.bf16.gmra.mxu0 %v1439
  %v1516 = vpop.f32.mrf.mxu0
  %v1517 = vadd.f32 0.0, %v1516
  %v1518 = vpop.f32.mrf.mxu0
  %v1519 = vadd.f32 0.0, %v1518
  %1520 = vmatmul.bf16.gmra.mxu0 %v1442
  %v1521 = vpop.f32.mrf.mxu0
  %v1522 = vadd.f32 0.0, %v1521
  %v1523 = vpop.f32.mrf.mxu0
  %v1524 = vadd.f32 0.0, %v1523
  %1525 = vmatmul.bf16.gmra.mxu0 %v1445
  %v1526 = vpop.f32.mrf.mxu0
  %v1527 = vadd.f32 0.0, %v1526
  %v1528 = vpop.f32.mrf.mxu0
  %v1529 = vadd.f32 0.0, %v1528
  %1530 = vmatmul.bf16.gmra.mxu0 %v1448
  %v1531 = vpop.f32.mrf.mxu0
  %v1532 = vadd.f32 0.0, %v1531
  %v1533 = vpop.f32.mrf.mxu0
  %1534 = vdwg.mxu0
  %1535 = vmatpush.bf16.msra.mxu0 0
  %1536 = vmatpush.bf16.msra.mxu0 0
  %1537 = vmatpush.bf16.msra.mxu0 0
  %1538 = vmatpush.bf16.msra.mxu0 0
  %1539 = vmatpush.bf16.msra.mxu0 %v1457
  %1540 = vmatpush.bf16.msra.mxu0 %v1419
  %1541 = vmatpush.bf16.msra.mxu0 %v1416
  %1542 = vmatpush.bf16.msra.mxu0 %v1413
  %1543 = vmatmul.bf16.gmra.mxu0 %v1433
  %v1544 = vpop.f32.mrf.mxu0
  %v1545 = vadd.f32 0.0, %v1544
  %v1546 = vpop.f32.mrf.mxu0
  %v1547 = vadd.f32 0.0, %v1546
  %1548 = vmatmul.bf16.gmra.mxu0 %v1436
  %v1549 = vpop.f32.mrf.mxu0
  %v1550 = vadd.f32 0.0, %v1549
  %v1551 = vpop.f32.mrf.mxu0
  %v1552 = vadd.f32 0.0, %v1551
  %1553 = vmatmul.bf16.gmra.mxu0 %v1439
  %v1554 = vpop.f32.mrf.mxu0
  %v1555 = vadd.f32 0.0, %v1554
  %v1556 = vpop.f32.mrf.mxu0
  %v1557 = vadd.f32 0.0, %v1556
  %1558 = vmatmul.bf16.gmra.mxu0 %v1442
  %v1559 = vpop.f32.mrf.mxu0
  %v1560 = vadd.f32 0.0, %v1559
  %v1561 = vpop.f32.mrf.mxu0
  %v1562 = vadd.f32 0.0, %v1561
  %1563 = vmatmul.bf16.gmra.mxu0 %v1445
  %v1564 = vpop.f32.mrf.mxu0
  %v1565 = vadd.f32 0.0, %v1564
  %v1566 = vpop.f32.mrf.mxu0
  %v1567 = vadd.f32 0.0, %v1566
  %1568 = vmatmul.bf16.gmra.mxu0 %v1448
  %v1569 = vpop.f32.mrf.mxu0
  %v1570 = vadd.f32 0.0, %v1569
  %v1571 = vpop.f32.mrf.mxu0
  %1572 = vdwg.mxu0
  %v1573 = vadd.f32 %v1311, %v1469
  %v1574 = vadd.f32 %v1312, %v1507
  %v1575 = vadd.f32 %v1313, %v1545
  %v1576 = vadd.f32 %v1314, %v1471
  %v1577 = vadd.f32 %v1315, %v1509
  %v1578 = vadd.f32 %v1316, %v1547
  %v1579 = vadd.f32 %v1317, %v1474
  %v1580 = vadd.f32 %v1318, %v1512
  %v1581 = vadd.f32 %v1319, %v1550
  %v1582 = vadd.f32 %v1320, %v1476
  %v1583 = vadd.f32 %v1321, %v1514
  %v1584 = vadd.f32 %v1322, %v1552
  %v1585 = vadd.f32 %v1323, %v1479
  %v1586 = vadd.f32 %v1324, %v1517
  %v1587 = vadd.f32 %v1325, %v1555
  %v1588 = vadd.f32 %v1326, %v1481
  %v1589 = vadd.f32 %v1327, %v1519
  %v1590 = vadd.f32 %v1328, %v1557
  %v1591 = vadd.f32 %v1329, %v1484
  %v1592 = vadd.f32 %v1330, %v1522
  %v1593 = vadd.f32 %v1331, %v1560
  %v1594 = vadd.f32 %v1332, %v1486
  %v1595 = vadd.f32 %v1333, %v1524
  %v1596 = vadd.f32 %v1334, %v1562
  %v1597 = vadd.f32 %v1335, %v1489
  %v1598 = vadd.f32 %v1336, %v1527
  %v1599 = vadd.f32 %v1337, %v1565
  %v1600 = vadd.f32 %v1338, %v1491
  %v1601 = vadd.f32 %v1339, %v1529
  %v1602 = vadd.f32 %v1340, %v1567
  %v1603 = vadd.f32 %v1341, %v1494
  %v1604 = vadd.f32 %v1342, %v1532
  %v1605 = vadd.f32 %v1343, %v1570
  %1606 = vst [vmem:[#allocation3] sm:$0xff] %v1573
  %1607 = vst [vmem:[#allocation3 + $0x8] sm:$0xff] %v1574
  %1608 = vst.msk [vmem:[#allocation3 + $0x10] sm:$0xff] %vm951, %v1575
  %1609 = vst [vmem:[#allocation3 + $0x18] sm:$0xff] %v1576
  %1610 = vst [vmem:[#allocation3 + $0x20] sm:$0xff] %v1577
  %1611 = vst.msk [vmem:[#allocation3 + $0x28] sm:$0xff] %vm951, %v1578
  %1612 = vst [vmem:[#allocation3 + $0x30] sm:$0xff] %v1579
  %1613 = vst [vmem:[#allocation3 + $0x38] sm:$0xff] %v1580
  %1614 = vst.msk [vmem:[#allocation3 + $0x40] sm:$0xff] %vm951, %v1581
  %1615 = vst [vmem:[#allocation3 + $0x48] sm:$0xff] %v1582
  %1616 = vst [vmem:[#allocation3 + $0x50] sm:$0xff] %v1583
  %1617 = vst.msk [vmem:[#allocation3 + $0x58] sm:$0xff] %vm951, %v1584
  %1618 = vst [vmem:[#allocation3 + $0x60] sm:$0xff] %v1585
  %1619 = vst [vmem:[#allocation3 + $0x68] sm:$0xff] %v1586
  %1620 = vst.msk [vmem:[#allocation3 + $0x70] sm:$0xff] %vm951, %v1587
  %1621 = vst [vmem:[#allocation3 + $0x78] sm:$0xff] %v1588
  %1622 = vst [vmem:[#allocation3 + $0x80] sm:$0xff] %v1589
  %1623 = vst.msk [vmem:[#allocation3 + $0x88] sm:$0xff] %vm951, %v1590
  %1624 = vst [vmem:[#allocation3 + $0x90] sm:$0xff] %v1591
  %1625 = vst [vmem:[#allocation3 + $0x98] sm:$0xff] %v1592
  %1626 = vst.msk [vmem:[#allocation3 + $0xa0] sm:$0xff] %vm951, %v1593
  %1627 = vst [vmem:[#allocation3 + $0xa8] sm:$0xff] %v1594
  %1628 = vst [vmem:[#allocation3 + $0xb0] sm:$0xff] %v1595
  %1629 = vst.msk [vmem:[#allocation3 + $0xb8] sm:$0xff] %vm951, %v1596
  %1630 = vst [vmem:[#allocation3 + $0xc0] sm:$0xff] %v1597
  %1631 = vst [vmem:[#allocation3 + $0xc8] sm:$0xff] %v1598
  %1632 = vst.msk [vmem:[#allocation3 + $0xd0] sm:$0xff] %vm951, %v1599
  %1633 = vst [vmem:[#allocation3 + $0xd8] sm:$0xff] %v1600
  %1634 = vst [vmem:[#allocation3 + $0xe0] sm:$0xff] %v1601
  %1635 = vst.msk [vmem:[#allocation3 + $0xe8] sm:$0xff] %vm951, %v1602
  %1636 = vst [vmem:[#allocation3 + $0xf0] sm:$0xff] %v1603
  %1637 = vst [vmem:[#allocation3 + $0xf8] sm:$0xff] %v1604
  %1638 = vst.msk [vmem:[#allocation3 + $0x100] sm:$0xff] %vm951, %v1605
  %v1639 = vld [vmem:[#allocation3] sm:$0xff]
  %v1640 = vld [vmem:[#allocation3 + $0x8] sm:$0xff]
  %v1641 = vld [vmem:[#allocation3 + $0x10] sm:$0xff]
  %v1642 = vld [vmem:[#allocation3 + $0x18] sm:$0xff]
  %v1643 = vld [vmem:[#allocation3 + $0x20] sm:$0xff]
  %v1644 = vld [vmem:[#allocation3 + $0x28] sm:$0xff]
  %v1645 = vld [vmem:[#allocation3 + $0x30] sm:$0xff]
  %v1646 = vld [vmem:[#allocation3 + $0x38] sm:$0xff]
  %v1647 = vld [vmem:[#allocation3 + $0x40] sm:$0xff]
  %v1648 = vld [vmem:[#allocation3 + $0x48] sm:$0xff]
  %v1649 = vld [vmem:[#allocation3 + $0x50] sm:$0xff]
  %v1650 = vld [vmem:[#allocation3 + $0x58] sm:$0xff]
  %v1651 = vld [vmem:[#allocation3 + $0x60] sm:$0xff]
  %v1652 = vld [vmem:[#allocation3 + $0x68] sm:$0xff]
  %v1653 = vld [vmem:[#allocation3 + $0x70] sm:$0xff]
  %v1654 = vld [vmem:[#allocation3 + $0x78] sm:$0xff]
  %v1655 = vld [vmem:[#allocation3 + $0x80] sm:$0xff]
  %v1656 = vld [vmem:[#allocation3 + $0x88] sm:$0xff]
  %v1657 = vld [vmem:[#allocation3 + $0x90] sm:$0xff]
  %v1658 = vld [vmem:[#allocation3 + $0x98] sm:$0xff]
  %v1659 = vld [vmem:[#allocation3 + $0xa0] sm:$0xff]
  %v1660 = vld [vmem:[#allocation3 + $0xa8] sm:$0xff]
  %v1661 = vld [vmem:[#allocation3 + $0xb0] sm:$0xff]
  %v1662 = vld [vmem:[#allocation3 + $0xb8] sm:$0xff]
  %v1663 = vld [vmem:[#allocation3 + $0xc0] sm:$0xff]
  %v1664 = vld [vmem:[#allocation3 + $0xc8] sm:$0xff]
  %v1665 = vld [vmem:[#allocation3 + $0xd0] sm:$0xff]
  %v1666 = vld [vmem:[#allocation3 + $0xd8] sm:$0xff]
  %v1667 = vld [vmem:[#allocation3 + $0xe0] sm:$0xff]
  %v1668 = vld [vmem:[#allocation3 + $0xe8] sm:$0xff]
  %v1669 = vld [vmem:[#allocation3 + $0xf0] sm:$0xff]
  %v1670 = vld [vmem:[#allocation3 + $0xf8] sm:$0xff]
  %v1671 = vld [vmem:[#allocation3 + $0x100] sm:$0xff]
  %v1672 = vld [vmem:[#allocation2 + $0x10] sm:$0xff]
  %v1673 = vld [vmem:[#allocation2 + $0x18] sm:$0xff]
  %v1674 = vld [vmem:[#allocation2 + $0x20] sm:$0xff]
  %v1675 = vld [vmem:[#allocation2 + $0x28] sm:$0xff]
  %v1676 = vld [vmem:[#allocation2 + $0x30] sm:$0xff]
  %v1677 = vld [vmem:[#allocation2 + $0x38] sm:$0xff]
  %v1678 = vld [vmem:[#allocation2 + $0x40] sm:$0xff]
  %v1679 = vld [vmem:[#allocation2 + $0x48] sm:$0xff]
  %v1680 = vld [vmem:[#allocation2 + $0x50] sm:$0xff]
  %v1681 = vld [vmem:[#allocation2 + $0x58] sm:$0xff]
  %v1682 = vld [vmem:[#allocation2 + $0x60] sm:$0xff]
  %v1683 = vpack.c.bf16 %v1673, %v1672
  %v1684 = vpack.c.bf16 %v1675, %v1674
  %v1685 = vpack.c.bf16 %v1677, %v1676
  %v1686 = vpack.c.bf16 %v1679, %v1678
  %v1687 = vpack.c.bf16 %v1681, %v1680
  %v1688 = vpack.c.bf16 %v1682, %v1682
  %s1689 = scalar_lea.vmem %s4, 168
  %v1690 = vld [vmem:[%s1689] sm:$0xff]
  %v1691 = vld [vmem:[%s1689 + $0x8] sm:$0xf]
  %v1692 = vld [vmem:[%s1689 + $0xc] sm:$0xff]
  %v1693 = vld [vmem:[%s1689 + $0x14] sm:$0xf]
  %v1694 = vld [vmem:[%s1689 + $0x18] sm:$0xff]
  %v1695 = vld [vmem:[%s1689 + $0x20] sm:$0xf]
  %v1696 = vld [vmem:[%s1689 + $0x24] sm:$0xff]
  %v1697 = vld [vmem:[%s1689 + $0x2c] sm:$0xf]
  %v1698 = vld [vmem:[%s1689 + $0x30] sm:$0xff]
  %v1699 = vld [vmem:[%s1689 + $0x38] sm:$0xf]
  %v1700 = vld [vmem:[%s1689 + $0x3c] sm:$0xff]
  %v1701 = vld [vmem:[%s1689 + $0x44] sm:$0xf]
  %v1702 = vld [vmem:[%s1689 + $0x48] sm:$0x33]
  %v1703 = vld [vmem:[%s1689 + $0x50] sm:$0x3]
  %v1718 = vunpack.c.l.b16 %v1690
  %v1719 = vunpack.c.h.b16 %v1690
  %v1720 = vunpack.c.l.b16 %v1691
  %v1721 = vunpack.c.l.b16 %v1692
  %v1722 = vunpack.c.h.b16 %v1692
  %v1723 = vunpack.c.l.b16 %v1693
  %v1724 = vunpack.c.l.b16 %v1694
  %v1725 = vunpack.c.h.b16 %v1694
  %v1726 = vunpack.c.l.b16 %v1695
  %v1727 = vunpack.c.l.b16 %v1696
  %v1728 = vunpack.c.h.b16 %v1696
  %v1729 = vunpack.c.l.b16 %v1697
  %v1730 = vunpack.c.l.b16 %v1698
  %v1731 = vunpack.c.h.b16 %v1698
  %v1732 = vunpack.c.l.b16 %v1699
  %v1733 = vunpack.c.l.b16 %v1700
  %v1734 = vunpack.c.h.b16 %v1700
  %v1735 = vunpack.c.l.b16 %v1701
  %v1736 = vunpack.c.l.b16 %v1702
  %v1737 = vunpack.c.h.b16 %v1702
  %v1738 = vunpack.c.l.b16 %v1703
  %v1739 = vpack.c.b16 %v1721, %v1718
  %v1740 = vpack.c.b16 %v1722, %v1719
  %v1741 = vpack.c.b16 %v1723, %v1720
  %v1742 = vpack.c.b16 %v1727, %v1724
  %v1743 = vpack.c.b16 %v1728, %v1725
  %v1744 = vpack.c.b16 %v1729, %v1726
  %v1745 = vpack.c.b16 %v1733, %v1730
  %v1746 = vpack.c.b16 %v1734, %v1731
  %v1747 = vpack.c.b16 %v1735, %v1732
  %v1748 = vpack.c.b16 %v1736, %v1736
  %v1749 = vpack.c.b16 %v1737, %v1737
  %v1750 = vpack.c.b16 %v1738, %v1738
  %v1761 = vsel %vm927, %v1683, 0
  %v1764 = vsel %vm927, %v1684, 0
  %v1767 = vsel %vm927, %v1685, 0
  %v1770 = vsel %vm927, %v1686, 0
  %v1773 = vsel %vm927, %v1687, 0
  %v1776 = vsel %vm927, %v1688, 0
  %v1779 = vsel %vm1121, %v1748, 0
  %v1782 = vsel %vm1121, %v1749, 0
  %v1785 = vsel %vm1121, %v1750, 0
  %1787 = vmatpush.bf16.msra.mxu0 0
  %1788 = vmatpush.bf16.msra.mxu0 0
  %1789 = vmatpush.bf16.msra.mxu0 0
  %1790 = vmatpush.bf16.msra.mxu0 0
  %1791 = vmatpush.bf16.msra.mxu0 %v1779
  %1792 = vmatpush.bf16.msra.mxu0 %v1745
  %1793 = vmatpush.bf16.msra.mxu0 %v1742
  %1794 = vmatpush.bf16.msra.mxu0 %v1739
  %1795 = vmatmul.bf16.gmra.mxu0 %v1761
  %v1796 = vpop.f32.mrf.mxu0
  %v1797 = vadd.f32 0.0, %v1796
  %v1798 = vpop.f32.mrf.mxu0
  %v1799 = vadd.f32 0.0, %v1798
  %1800 = vmatmul.bf16.gmra.mxu0 %v1764
  %v1801 = vpop.f32.mrf.mxu0
  %v1802 = vadd.f32 0.0, %v1801
  %v1803 = vpop.f32.mrf.mxu0
  %v1804 = vadd.f32 0.0, %v1803
  %1805 = vmatmul.bf16.gmra.mxu0 %v1767
  %v1806 = vpop.f32.mrf.mxu0
  %v1807 = vadd.f32 0.0, %v1806
  %v1808 = vpop.f32.mrf.mxu0
  %v1809 = vadd.f32 0.0, %v1808
  %1810 = vmatmul.bf16.gmra.mxu0 %v1770
  %v1811 = vpop.f32.mrf.mxu0
  %v1812 = vadd.f32 0.0, %v1811
  %v1813 = vpop.f32.mrf.mxu0
  %v1814 = vadd.f32 0.0, %v1813
  %1815 = vmatmul.bf16.gmra.mxu0 %v1773
  %v1816 = vpop.f32.mrf.mxu0
  %v1817 = vadd.f32 0.0, %v1816
  %v1818 = vpop.f32.mrf.mxu0
  %v1819 = vadd.f32 0.0, %v1818
  %1820 = vmatmul.bf16.gmra.mxu0 %v1776
  %v1821 = vpop.f32.mrf.mxu0
  %v1822 = vadd.f32 0.0, %v1821
  %v1823 = vpop.f32.mrf.mxu0
  %1824 = vdwg.mxu0
  %1825 = vmatpush.bf16.msra.mxu0 0
  %1826 = vmatpush.bf16.msra.mxu0 0
  %1827 = vmatpush.bf16.msra.mxu0 0
  %1828 = vmatpush.bf16.msra.mxu0 0
  %1829 = vmatpush.bf16.msra.mxu0 %v1782
  %1830 = vmatpush.bf16.msra.mxu0 %v1746
  %1831 = vmatpush.bf16.msra.mxu0 %v1743
  %1832 = vmatpush.bf16.msra.mxu0 %v1740
  %1833 = vmatmul.bf16.gmra.mxu0 %v1761
  %v1834 = vpop.f32.mrf.mxu0
  %v1835 = vadd.f32 0.0, %v1834
  %v1836 = vpop.f32.mrf.mxu0
  %v1837 = vadd.f32 0.0, %v1836
  %1838 = vmatmul.bf16.gmra.mxu0 %v1764
  %v1839 = vpop.f32.mrf.mxu0
  %v1840 = vadd.f32 0.0, %v1839
  %v1841 = vpop.f32.mrf.mxu0
  %v1842 = vadd.f32 0.0, %v1841
  %1843 = vmatmul.bf16.gmra.mxu0 %v1767
  %v1844 = vpop.f32.mrf.mxu0
  %v1845 = vadd.f32 0.0, %v1844
  %v1846 = vpop.f32.mrf.mxu0
  %v1847 = vadd.f32 0.0, %v1846
  %1848 = vmatmul.bf16.gmra.mxu0 %v1770
  %v1849 = vpop.f32.mrf.mxu0
  %v1850 = vadd.f32 0.0, %v1849
  %v1851 = vpop.f32.mrf.mxu0
  %v1852 = vadd.f32 0.0, %v1851
  %1853 = vmatmul.bf16.gmra.mxu0 %v1773
  %v1854 = vpop.f32.mrf.mxu0
  %v1855 = vadd.f32 0.0, %v1854
  %v1856 = vpop.f32.mrf.mxu0
  %v1857 = vadd.f32 0.0, %v1856
  %1858 = vmatmul.bf16.gmra.mxu0 %v1776
  %v1859 = vpop.f32.mrf.mxu0
  %v1860 = vadd.f32 0.0, %v1859
  %v1861 = vpop.f32.mrf.mxu0
  %1862 = vdwg.mxu0
  %1863 = vmatpush.bf16.msra.mxu0 0
  %1864 = vmatpush.bf16.msra.mxu0 0
  %1865 = vmatpush.bf16.msra.mxu0 0
  %1866 = vmatpush.bf16.msra.mxu0 0
  %1867 = vmatpush.bf16.msra.mxu0 %v1785
  %1868 = vmatpush.bf16.msra.mxu0 %v1747
  %1869 = vmatpush.bf16.msra.mxu0 %v1744
  %1870 = vmatpush.bf16.msra.mxu0 %v1741
  %1871 = vmatmul.bf16.gmra.mxu0 %v1761
  %v1872 = vpop.f32.mrf.mxu0
  %v1873 = vadd.f32 0.0, %v1872
  %v1874 = vpop.f32.mrf.mxu0
  %v1875 = vadd.f32 0.0, %v1874
  %1876 = vmatmul.bf16.gmra.mxu0 %v1764
  %v1877 = vpop.f32.mrf.mxu0
  %v1878 = vadd.f32 0.0, %v1877
  %v1879 = vpop.f32.mrf.mxu0
  %v1880 = vadd.f32 0.0, %v1879
  %1881 = vmatmul.bf16.gmra.mxu0 %v1767
  %v1882 = vpop.f32.mrf.mxu0
  %v1883 = vadd.f32 0.0, %v1882
  %v1884 = vpop.f32.mrf.mxu0
  %v1885 = vadd.f32 0.0, %v1884
  %1886 = vmatmul.bf16.gmra.mxu0 %v1770
  %v1887 = vpop.f32.mrf.mxu0
  %v1888 = vadd.f32 0.0, %v1887
  %v1889 = vpop.f32.mrf.mxu0
  %v1890 = vadd.f32 0.0, %v1889
  %1891 = vmatmul.bf16.gmra.mxu0 %v1773
  %v1892 = vpop.f32.mrf.mxu0
  %v1893 = vadd.f32 0.0, %v1892
  %v1894 = vpop.f32.mrf.mxu0
  %v1895 = vadd.f32 0.0, %v1894
  %1896 = vmatmul.bf16.gmra.mxu0 %v1776
  %v1897 = vpop.f32.mrf.mxu0
  %v1898 = vadd.f32 0.0, %v1897
  %v1899 = vpop.f32.mrf.mxu0
  %1900 = vdwg.mxu0
  %v1901 = vadd.f32 %v1639, %v1797
  %v1902 = vadd.f32 %v1640, %v1835
  %v1903 = vadd.f32 %v1641, %v1873
  %v1904 = vadd.f32 %v1642, %v1799
  %v1905 = vadd.f32 %v1643, %v1837
  %v1906 = vadd.f32 %v1644, %v1875
  %v1907 = vadd.f32 %v1645, %v1802
  %v1908 = vadd.f32 %v1646, %v1840
  %v1909 = vadd.f32 %v1647, %v1878
  %v1910 = vadd.f32 %v1648, %v1804
  %v1911 = vadd.f32 %v1649, %v1842
  %v1912 = vadd.f32 %v1650, %v1880
  %v1913 = vadd.f32 %v1651, %v1807
  %v1914 = vadd.f32 %v1652, %v1845
  %v1915 = vadd.f32 %v1653, %v1883
  %v1916 = vadd.f32 %v1654, %v1809
  %v1917 = vadd.f32 %v1655, %v1847
  %v1918 = vadd.f32 %v1656, %v1885
  %v1919 = vadd.f32 %v1657, %v1812
  %v1920 = vadd.f32 %v1658, %v1850
  %v1921 = vadd.f32 %v1659, %v1888
  %v1922 = vadd.f32 %v1660, %v1814
  %v1923 = vadd.f32 %v1661, %v1852
  %v1924 = vadd.f32 %v1662, %v1890
  %v1925 = vadd.f32 %v1663, %v1817
  %v1926 = vadd.f32 %v1664, %v1855
  %v1927 = vadd.f32 %v1665, %v1893
  %v1928 = vadd.f32 %v1666, %v1819
  %v1929 = vadd.f32 %v1667, %v1857
  %v1930 = vadd.f32 %v1668, %v1895
  %v1931 = vadd.f32 %v1669, %v1822
  %v1932 = vadd.f32 %v1670, %v1860
  %v1933 = vadd.f32 %v1671, %v1898
  %1934 = vst [vmem:[#allocation3] sm:$0xff] %v1901
  %1935 = vst [vmem:[#allocation3 + $0x8] sm:$0xff] %v1902
  %1936 = vst.msk [vmem:[#allocation3 + $0x10] sm:$0xff] %vm951, %v1903
  %1937 = vst [vmem:[#allocation3 + $0x18] sm:$0xff] %v1904
  %1938 = vst [vmem:[#allocation3 + $0x20] sm:$0xff] %v1905
  %1939 = vst.msk [vmem:[#allocation3 + $0x28] sm:$0xff] %vm951, %v1906
  %1940 = vst [vmem:[#allocation3 + $0x30] sm:$0xff] %v1907
  %1941 = vst [vmem:[#allocation3 + $0x38] sm:$0xff] %v1908
  %1942 = vst.msk [vmem:[#allocation3 + $0x40] sm:$0xff] %vm951, %v1909
  %1943 = vst [vmem:[#allocation3 + $0x48] sm:$0xff] %v1910
  %1944 = vst [vmem:[#allocation3 + $0x50] sm:$0xff] %v1911
  %1945 = vst.msk [vmem:[#allocation3 + $0x58] sm:$0xff] %vm951, %v1912
  %1946 = vst [vmem:[#allocation3 + $0x60] sm:$0xff] %v1913
  %1947 = vst [vmem:[#allocation3 + $0x68] sm:$0xff] %v1914
  %1948 = vst.msk [vmem:[#allocation3 + $0x70] sm:$0xff] %vm951, %v1915
  %1949 = vst [vmem:[#allocation3 + $0x78] sm:$0xff] %v1916
  %1950 = vst [vmem:[#allocation3 + $0x80] sm:$0xff] %v1917
  %1951 = vst.msk [vmem:[#allocation3 + $0x88] sm:$0xff] %vm951, %v1918
  %1952 = vst [vmem:[#allocation3 + $0x90] sm:$0xff] %v1919
  %1953 = vst [vmem:[#allocation3 + $0x98] sm:$0xff] %v1920
  %1954 = vst.msk [vmem:[#allocation3 + $0xa0] sm:$0xff] %vm951, %v1921
  %1955 = vst [vmem:[#allocation3 + $0xa8] sm:$0xff] %v1922
  %1956 = vst [vmem:[#allocation3 + $0xb0] sm:$0xff] %v1923
  %1957 = vst.msk [vmem:[#allocation3 + $0xb8] sm:$0xff] %vm951, %v1924
  %1958 = vst [vmem:[#allocation3 + $0xc0] sm:$0xff] %v1925
  %1959 = vst [vmem:[#allocation3 + $0xc8] sm:$0xff] %v1926
  %1960 = vst.msk [vmem:[#allocation3 + $0xd0] sm:$0xff] %vm951, %v1927
  %1961 = vst [vmem:[#allocation3 + $0xd8] sm:$0xff] %v1928
  %1962 = vst [vmem:[#allocation3 + $0xe0] sm:$0xff] %v1929
  %1963 = vst.msk [vmem:[#allocation3 + $0xe8] sm:$0xff] %vm951, %v1930
  %1964 = vst [vmem:[#allocation3 + $0xf0] sm:$0xff] %v1931
  %1965 = vst [vmem:[#allocation3 + $0xf8] sm:$0xff] %v1932
  %1966 = vst.msk [vmem:[#allocation3 + $0x100] sm:$0xff] %vm951, %v1933
  %v1967 = vld [vmem:[%s7] sm:$0x1f]
  %v1969 = vperm.slane %v1967, 0
  %v1970 = vperm.slane %v1967, 1
  %v1971 = vperm.slane %v1967, 2
  %v1972 = vperm.slane %v1967, 3
  %v1973 = vperm.slane %v1967, 4
  %1979 = vst [vmem:[#allocation4] sm:$0xff] %v1969
  %1980 = vst [vmem:[#allocation4 + $0x8] sm:$0xff] %v1970
  %1981 = vst [vmem:[#allocation4 + $0x10] sm:$0xff] %v1971
  %1982 = vst [vmem:[#allocation4 + $0x18] sm:$0xff] %v1972
  %vm1983 = vcmask 523264
  %1984 = vst.msk [vmem:[#allocation4 + $0x20] sm:$0xff] %vm1983, %v1973
  %1985 = vst [vmem:[#allocation4 + $0x28] sm:$0xff] %v1969
  %1986 = vst [vmem:[#allocation4 + $0x30] sm:$0xff] %v1970
  %1987 = vst [vmem:[#allocation4 + $0x38] sm:$0xff] %v1971
  %1988 = vst [vmem:[#allocation4 + $0x40] sm:$0xff] %v1972
  %1989 = vst.msk [vmem:[#allocation4 + $0x48] sm:$0xff] %vm1983, %v1973
  %1990 = vst [vmem:[#allocation4 + $0x50] sm:$0xff] %v1969
  %1991 = vst [vmem:[#allocation4 + $0x58] sm:$0xff] %v1970
  %1992 = vst [vmem:[#allocation4 + $0x60] sm:$0xff] %v1971
  %1993 = vst [vmem:[#allocation4 + $0x68] sm:$0xff] %v1972
  %1994 = vst.msk [vmem:[#allocation4 + $0x70] sm:$0xff] %vm1983, %v1973
  %1995 = vst [vmem:[#allocation4 + $0x78] sm:$0xff] %v1969
  %1996 = vst [vmem:[#allocation4 + $0x80] sm:$0xff] %v1970
  %1997 = vst [vmem:[#allocation4 + $0x88] sm:$0xff] %v1971
  %1998 = vst [vmem:[#allocation4 + $0x90] sm:$0xff] %v1972
  %1999 = vst.msk [vmem:[#allocation4 + $0x98] sm:$0xff] %vm1983, %v1973
  %2000 = vst [vmem:[#allocation4 + $0xa0] sm:$0xff] %v1969
  %2001 = vst [vmem:[#allocation4 + $0xa8] sm:$0xff] %v1970
  %2002 = vst [vmem:[#allocation4 + $0xb0] sm:$0xff] %v1971
  %2003 = vst [vmem:[#allocation4 + $0xb8] sm:$0xff] %v1972
  %2004 = vst.msk [vmem:[#allocation4 + $0xc0] sm:$0xff] %vm1983, %v1973
  %2005 = vst [vmem:[#allocation4 + $0xc8] sm:$0xff] %v1969
  %2006 = vst [vmem:[#allocation4 + $0xd0] sm:$0xff] %v1970
  %2007 = vst [vmem:[#allocation4 + $0xd8] sm:$0xff] %v1971
  %2008 = vst [vmem:[#allocation4 + $0xe0] sm:$0xff] %v1972
  %2009 = vst.msk [vmem:[#allocation4 + $0xe8] sm:$0xff] %vm1983, %v1973
  %2010 = vst [vmem:[#allocation4 + $0xf0] sm:$0xff] %v1969
  %2011 = vst [vmem:[#allocation4 + $0xf8] sm:$0xff] %v1970
  %2012 = vst [vmem:[#allocation4 + $0x100] sm:$0xff] %v1971
  %2013 = vst [vmem:[#allocation4 + $0x108] sm:$0xff] %v1972
  %2014 = vst.msk [vmem:[#allocation4 + $0x110] sm:$0xff] %vm1983, %v1973
  %2015 = vst [vmem:[#allocation4 + $0x118] sm:$0xff] %v1969
  %2016 = vst [vmem:[#allocation4 + $0x120] sm:$0xff] %v1970
  %2017 = vst [vmem:[#allocation4 + $0x128] sm:$0xff] %v1971
  %2018 = vst [vmem:[#allocation4 + $0x130] sm:$0xff] %v1972
  %2019 = vst.msk [vmem:[#allocation4 + $0x138] sm:$0xff] %vm1983, %v1973
  %2020 = vst [vmem:[#allocation4 + $0x140] sm:$0xff] %v1969
  %2021 = vst [vmem:[#allocation4 + $0x148] sm:$0xff] %v1970
  %2022 = vst [vmem:[#allocation4 + $0x150] sm:$0xff] %v1971
  %2023 = vst [vmem:[#allocation4 + $0x158] sm:$0xff] %v1972
  %2024 = vst.msk [vmem:[#allocation4 + $0x160] sm:$0xff] %vm1983, %v1973
  %v2025 = vld [vmem:[#allocation4] sm:$0xff]
  %v2026 = vld [vmem:[#allocation4 + $0x8] sm:$0xff]
  %v2027 = vld [vmem:[#allocation4 + $0x10] sm:$0xff]
  %v2028 = vld [vmem:[#allocation4 + $0x18] sm:$0xff]
  %v2029 = vld [vmem:[#allocation4 + $0x20] sm:$0xff]
  %v2030 = vld [vmem:[#allocation4 + $0x28] sm:$0xff]
  %v2031 = vld [vmem:[#allocation4 + $0x30] sm:$0xff]
  %v2032 = vld [vmem:[#allocation4 + $0x38] sm:$0xff]
  %v2033 = vld [vmem:[#allocation4 + $0x40] sm:$0xff]
  %v2034 = vld [vmem:[#allocation4 + $0x48] sm:$0xff]
  %v2035 = vld [vmem:[#allocation4 + $0x50] sm:$0xff]
  %v2036 = vld [vmem:[#allocation4 + $0x58] sm:$0xff]
  %v2037 = vld [vmem:[#allocation4 + $0x60] sm:$0xff]
  %v2038 = vld [vmem:[#allocation4 + $0x68] sm:$0xff]
  %v2039 = vld [vmem:[#allocation4 + $0x70] sm:$0xff]
  %v2040 = vld [vmem:[#allocation4 + $0x78] sm:$0xff]
  %v2041 = vld [vmem:[#allocation4 + $0x80] sm:$0xff]
  %v2042 = vld [vmem:[#allocation4 + $0x88] sm:$0xff]
  %v2043 = vld [vmem:[#allocation4 + $0x90] sm:$0xff]
  %v2044 = vld [vmem:[#allocation4 + $0x98] sm:$0xff]
  %v2045 = vld [vmem:[#allocation4 + $0xa0] sm:$0xff]
  %v2046 = vld [vmem:[#allocation4 + $0xa8] sm:$0xff]
  %v2047 = vld [vmem:[#allocation4 + $0xb0] sm:$0xff]
  %v2048 = vld [vmem:[#allocation4 + $0xb8] sm:$0xff]
  %v2049 = vld [vmem:[#allocation4 + $0xc0] sm:$0xff]
  %v2050 = vld [vmem:[#allocation4 + $0xc8] sm:$0xff]
  %v2051 = vld [vmem:[#allocation4 + $0xd0] sm:$0xff]
  %v2052 = vld [vmem:[#allocation4 + $0xd8] sm:$0xff]
  %v2053 = vld [vmem:[#allocation4 + $0xe0] sm:$0xff]
  %v2054 = vld [vmem:[#allocation4 + $0xe8] sm:$0xff]
  %v2055 = vld [vmem:[#allocation4 + $0xf0] sm:$0xff]
  %v2056 = vld [vmem:[#allocation4 + $0xf8] sm:$0xff]
  %v2057 = vld [vmem:[#allocation4 + $0x100] sm:$0xff]
  %v2058 = vld [vmem:[#allocation4 + $0x108] sm:$0xff]
  %v2059 = vld [vmem:[#allocation4 + $0x110] sm:$0xff]
  %v2060 = vld [vmem:[#allocation4 + $0x118] sm:$0xff]
  %v2061 = vld [vmem:[#allocation4 + $0x120] sm:$0xff]
  %v2062 = vld [vmem:[#allocation4 + $0x128] sm:$0xff]
  %v2063 = vld [vmem:[#allocation4 + $0x130] sm:$0xff]
  %v2064 = vld [vmem:[#allocation4 + $0x138] sm:$0xff]
  %v2065 = vld [vmem:[#allocation4 + $0x140] sm:$0xff]
  %v2066 = vld [vmem:[#allocation4 + $0x148] sm:$0xff]
  %v2067 = vld [vmem:[#allocation4 + $0x150] sm:$0xff]
  %v2068 = vld [vmem:[#allocation4 + $0x158] sm:$0xff]
  %v2069 = vld [vmem:[#allocation4 + $0x160] sm:$0xff]
  %v2070 = vld [vmem:[#allocation3] sm:$0xff]
  %v2071 = vld [vmem:[#allocation3 + $0x8] sm:$0xff]
  %v2072 = vld [vmem:[#allocation3 + $0x10] sm:$0xff]
  %v2073 = vld [vmem:[#allocation3 + $0x18] sm:$0xff]
  %v2074 = vld [vmem:[#allocation3 + $0x20] sm:$0xff]
  %v2075 = vld [vmem:[#allocation3 + $0x28] sm:$0xff]
  %v2076 = vld [vmem:[#allocation3 + $0x30] sm:$0xff]
  %v2077 = vld [vmem:[#allocation3 + $0x38] sm:$0xff]
  %v2078 = vld [vmem:[#allocation3 + $0x40] sm:$0xff]
  %v2079 = vld [vmem:[#allocation3 + $0x48] sm:$0xff]
  %v2080 = vld [vmem:[#allocation3 + $0x50] sm:$0xff]
  %v2081 = vld [vmem:[#allocation3 + $0x58] sm:$0xff]
  %v2082 = vld [vmem:[#allocation3 + $0x60] sm:$0xff]
  %v2083 = vld [vmem:[#allocation3 + $0x68] sm:$0xff]
  %v2084 = vld [vmem:[#allocation3 + $0x70] sm:$0xff]
  %v2085 = vld [vmem:[#allocation3 + $0x78] sm:$0xff]
  %v2086 = vld [vmem:[#allocation3 + $0x80] sm:$0xff]
  %v2087 = vld [vmem:[#allocation3 + $0x88] sm:$0xff]
  %v2088 = vld [vmem:[#allocation3 + $0x90] sm:$0xff]
  %v2089 = vld [vmem:[#allocation3 + $0x98] sm:$0xff]
  %v2090 = vld [vmem:[#allocation3 + $0xa0] sm:$0xff]
  %v2091 = vld [vmem:[#allocation3 + $0xa8] sm:$0xff]
  %v2092 = vld [vmem:[#allocation3 + $0xb0] sm:$0xff]
  %v2093 = vld [vmem:[#allocation3 + $0xb8] sm:$0xff]
  %v2094 = vld [vmem:[#allocation3 + $0xc0] sm:$0xff]
  %v2095 = vld [vmem:[#allocation3 + $0xc8] sm:$0xff]
  %v2096 = vld [vmem:[#allocation3 + $0xd0] sm:$0xff]
  %v2097 = vpack.c.bf16 %v2073, %v2070
  %v2098 = vpack.c.bf16 %v2074, %v2071
  %v2099 = vpack.c.bf16 %v2075, %v2072
  %v2100 = vpack.c.bf16 %v2079, %v2076
  %v2101 = vpack.c.bf16 %v2080, %v2077
  %v2102 = vpack.c.bf16 %v2081, %v2078
  %v2103 = vpack.c.bf16 %v2085, %v2082
  %v2104 = vpack.c.bf16 %v2086, %v2083
  %v2105 = vpack.c.bf16 %v2087, %v2084
  %v2106 = vpack.c.bf16 %v2091, %v2088
  %v2107 = vpack.c.bf16 %v2092, %v2089
  %v2108 = vpack.c.bf16 %v2093, %v2090
  %v2109 = vpack.c.bf16 %v2094, %v2094
  %v2110 = vpack.c.bf16 %v2095, %v2095
  %v2111 = vpack.c.bf16 %v2096, %v2096
  %v2112 = vld [vmem:[%s6] sm:$0xff]
  %v2113 = vld [vmem:[%s6 + $0x8] sm:$0xff]
  %v2114 = vld [vmem:[%s6 + $0x10] sm:$0xf]
  %v2115 = vld [vmem:[%s6 + $0x14] sm:$0xff]
  %v2116 = vld [vmem:[%s6 + $0x1c] sm:$0xff]
  %v2117 = vld [vmem:[%s6 + $0x24] sm:$0xf]
  %v2118 = vld [vmem:[%s6 + $0x28] sm:$0xff]
  %v2119 = vld [vmem:[%s6 + $0x30] sm:$0xff]
  %v2120 = vld [vmem:[%s6 + $0x38] sm:$0xf]
  %v2121 = vld [vmem:[%s6 + $0x3c] sm:$0xff]
  %v2122 = vld [vmem:[%s6 + $0x44] sm:$0xff]
  %v2123 = vld [vmem:[%s6 + $0x4c] sm:$0xf]
  %v2124 = vld [vmem:[%s6 + $0x50] sm:$0xff]
  %v2125 = vld [vmem:[%s6 + $0x58] sm:$0xff]
  %v2126 = vld [vmem:[%s6 + $0x60] sm:$0xf]
  %v2127 = vld [vmem:[%s6 + $0x64] sm:$0xff]
  %v2128 = vld [vmem:[%s6 + $0x6c] sm:$0xff]
  %v2129 = vld [vmem:[%s6 + $0x74] sm:$0xf]
  %v2130 = vld [vmem:[%s6 + $0x78] sm:$0xff]
  %v2131 = vld [vmem:[%s6 + $0x80] sm:$0xff]
  %v2132 = vld [vmem:[%s6 + $0x88] sm:$0xf]
  %v2133 = vld [vmem:[%s6 + $0x8c] sm:$0xff]
  %v2134 = vld [vmem:[%s6 + $0x94] sm:$0xff]
  %v2135 = vld [vmem:[%s6 + $0x9c] sm:$0xf]
  %v2136 = vld [vmem:[%s6 + $0xa0] sm:$0xff]
  %v2137 = vld [vmem:[%s6 + $0xa8] sm:$0xff]
  %v2138 = vld [vmem:[%s6 + $0xb0] sm:$0xf]
  %v2139 = vld [vmem:[%s6 + $0xb4] sm:$0xff]
  %v2140 = vld [vmem:[%s6 + $0xbc] sm:$0xff]
  %v2141 = vld [vmem:[%s6 + $0xc4] sm:$0xf]
  %v2142 = vld [vmem:[%s6 + $0xc8] sm:$0xff]
  %v2143 = vld [vmem:[%s6 + $0xd0] sm:$0xff]
  %v2144 = vld [vmem:[%s6 + $0xd8] sm:$0xf]
  %v2145 = vld [vmem:[%s6 + $0xdc] sm:$0xff]
  %v2146 = vld [vmem:[%s6 + $0xe4] sm:$0xff]
  %v2147 = vld [vmem:[%s6 + $0xec] sm:$0xf]
  %v2148 = vld [vmem:[%s6 + $0xf0] sm:$0xff]
  %v2149 = vld [vmem:[%s6 + $0xf8] sm:$0xff]
  %v2150 = vld [vmem:[%s6 + $0x100] sm:$0xf]
  %v2151 = vld [vmem:[%s6 + $0x104] sm:$0xff]
  %v2152 = vld [vmem:[%s6 + $0x10c] sm:$0xff]
  %v2153 = vld [vmem:[%s6 + $0x114] sm:$0xf]
  %v2154 = vld [vmem:[%s6 + $0x118] sm:$0xff]
  %v2155 = vld [vmem:[%s6 + $0x120] sm:$0xff]
  %v2156 = vld [vmem:[%s6 + $0x128] sm:$0xf]
  %v2157 = vld [vmem:[%s6 + $0x12c] sm:$0xff]
  %v2158 = vld [vmem:[%s6 + $0x134] sm:$0xff]
  %v2159 = vld [vmem:[%s6 + $0x13c] sm:$0xf]
  %v2160 = vld [vmem:[%s6 + $0x140] sm:$0xff]
  %v2161 = vld [vmem:[%s6 + $0x148] sm:$0xff]
  %v2162 = vld [vmem:[%s6 + $0x150] sm:$0xf]
  %v2163 = vld [vmem:[%s6 + $0x154] sm:$0xff]
  %v2164 = vld [vmem:[%s6 + $0x15c] sm:$0xff]
  %v2165 = vld [vmem:[%s6 + $0x164] sm:$0xf]
  %v2166 = vld [vmem:[%s6 + $0x168] sm:$0xff]
  %v2167 = vld [vmem:[%s6 + $0x170] sm:$0xff]
  %v2168 = vld [vmem:[%s6 + $0x178] sm:$0xf]
  %v2169 = vld [vmem:[%s6 + $0x17c] sm:$0xff]
  %v2170 = vld [vmem:[%s6 + $0x184] sm:$0xff]
  %v2171 = vld [vmem:[%s6 + $0x18c] sm:$0xf]
  %v2172 = vld [vmem:[%s6 + $0x190] sm:$0xff]
  %v2173 = vld [vmem:[%s6 + $0x198] sm:$0xff]
  %v2174 = vld [vmem:[%s6 + $0x1a0] sm:$0xf]
  %v2175 = vld [vmem:[%s6 + $0x1a4] sm:$0xff]
  %v2176 = vld [vmem:[%s6 + $0x1ac] sm:$0xff]
  %v2177 = vld [vmem:[%s6 + $0x1b4] sm:$0xf]
  %v2178 = vld [vmem:[%s6 + $0x1b8] sm:$0xff]
  %v2179 = vld [vmem:[%s6 + $0x1c0] sm:$0xff]
  %v2180 = vld [vmem:[%s6 + $0x1c8] sm:$0xf]
  %v2181 = vld [vmem:[%s6 + $0x1cc] sm:$0xff]
  %v2182 = vld [vmem:[%s6 + $0x1d4] sm:$0xff]
  %v2183 = vld [vmem:[%s6 + $0x1dc] sm:$0xf]
  %v2184 = vld [vmem:[%s6 + $0x1e0] sm:$0xff]
  %v2185 = vld [vmem:[%s6 + $0x1e8] sm:$0xff]
  %v2186 = vld [vmem:[%s6 + $0x1f0] sm:$0xf]
  %v2187 = vld [vmem:[%s6 + $0x1f4] sm:$0xff]
  %v2188 = vld [vmem:[%s6 + $0x1fc] sm:$0xff]
  %v2189 = vld [vmem:[%s6 + $0x204] sm:$0xf]
  %v2190 = vld [vmem:[%s6 + $0x208] sm:$0xff]
  %v2191 = vld [vmem:[%s6 + $0x210] sm:$0xff]
  %v2192 = vld [vmem:[%s6 + $0x218] sm:$0xf]
  %v2193 = vld [vmem:[%s6 + $0x21c] sm:$0xff]
  %v2194 = vld [vmem:[%s6 + $0x224] sm:$0xff]
  %v2195 = vld [vmem:[%s6 + $0x22c] sm:$0xf]
  %v2196 = vld [vmem:[%s6 + $0x230] sm:$0xff]
  %v2197 = vld [vmem:[%s6 + $0x238] sm:$0xff]
  %v2198 = vld [vmem:[%s6 + $0x240] sm:$0xf]
  %v2199 = vld [vmem:[%s6 + $0x244] sm:$0xff]
  %v2200 = vld [vmem:[%s6 + $0x24c] sm:$0xff]
  %v2201 = vld [vmem:[%s6 + $0x254] sm:$0xf]
  %v2202 = vld [vmem:[%s6 + $0x258] sm:$0xff]
  %v2203 = vld [vmem:[%s6 + $0x260] sm:$0xff]
  %v2204 = vld [vmem:[%s6 + $0x268] sm:$0xf]
  %v2205 = vld [vmem:[%s6 + $0x26c] sm:$0xff]
  %v2206 = vld [vmem:[%s6 + $0x274] sm:$0xff]
  %v2207 = vld [vmem:[%s6 + $0x27c] sm:$0xf]
  %v2208 = vld [vmem:[%s6 + $0x280] sm:$0xff]
  %v2209 = vld [vmem:[%s6 + $0x288] sm:$0xff]
  %v2210 = vld [vmem:[%s6 + $0x290] sm:$0xf]
  %v2211 = vld [vmem:[%s6 + $0x294] sm:$0xff]
  %v2212 = vld [vmem:[%s6 + $0x29c] sm:$0xff]
  %v2213 = vld [vmem:[%s6 + $0x2a4] sm:$0xf]
  %v2214 = vld [vmem:[%s6 + $0x2a8] sm:$0xff]
  %v2215 = vld [vmem:[%s6 + $0x2b0] sm:$0xff]
  %v2216 = vld [vmem:[%s6 + $0x2b8] sm:$0xf]
  %v2217 = vld [vmem:[%s6 + $0x2bc] sm:$0xff]
  %v2218 = vld [vmem:[%s6 + $0x2c4] sm:$0xff]
  %v2219 = vld [vmem:[%s6 + $0x2cc] sm:$0xf]
  %v2220 = vld [vmem:[%s6 + $0x2d0] sm:$0xff]
  %v2221 = vld [vmem:[%s6 + $0x2d8] sm:$0xff]
  %v2222 = vld [vmem:[%s6 + $0x2e0] sm:$0xf]
  %v2223 = vld [vmem:[%s6 + $0x2e4] sm:$0xff]
  %v2224 = vld [vmem:[%s6 + $0x2ec] sm:$0xff]
  %v2225 = vld [vmem:[%s6 + $0x2f4] sm:$0xf]
  %v2226 = vld [vmem:[%s6 + $0x2f8] sm:$0xff]
  %v2227 = vld [vmem:[%s6 + $0x300] sm:$0xff]
  %v2228 = vld [vmem:[%s6 + $0x308] sm:$0xf]
  %v2229 = vld [vmem:[%s6 + $0x30c] sm:$0xff]
  %v2230 = vld [vmem:[%s6 + $0x314] sm:$0xff]
  %v2231 = vld [vmem:[%s6 + $0x31c] sm:$0xf]
  %v2232 = vld [vmem:[%s6 + $0x320] sm:$0xff]
  %v2233 = vld [vmem:[%s6 + $0x328] sm:$0xff]
  %v2234 = vld [vmem:[%s6 + $0x330] sm:$0xf]
  %v2235 = vld [vmem:[%s6 + $0x334] sm:$0xff]
  %v2236 = vld [vmem:[%s6 + $0x33c] sm:$0xff]
  %v2237 = vld [vmem:[%s6 + $0x344] sm:$0xf]
  %v2238 = vld [vmem:[%s6 + $0x348] sm:$0xff]
  %v2239 = vld [vmem:[%s6 + $0x350] sm:$0xff]
  %v2240 = vld [vmem:[%s6 + $0x358] sm:$0xf]
  %v2241 = vld [vmem:[%s6 + $0x35c] sm:$0xff]
  %v2242 = vld [vmem:[%s6 + $0x364] sm:$0xff]
  %v2243 = vld [vmem:[%s6 + $0x36c] sm:$0xf]
  %v2376 = vunpack.c.l.b16 %v2112
  %v2377 = vunpack.c.h.b16 %v2112
  %v2378 = vunpack.c.l.b16 %v2113
  %v2379 = vunpack.c.h.b16 %v2113
  %v2380 = vunpack.c.l.b16 %v2114
  %v2381 = vunpack.c.l.b16 %v2115
  %v2382 = vunpack.c.h.b16 %v2115
  %v2383 = vunpack.c.l.b16 %v2116
  %v2384 = vunpack.c.h.b16 %v2116
  %v2385 = vunpack.c.l.b16 %v2117
  %v2386 = vunpack.c.l.b16 %v2118
  %v2387 = vunpack.c.h.b16 %v2118
  %v2388 = vunpack.c.l.b16 %v2119
  %v2389 = vunpack.c.h.b16 %v2119
  %v2390 = vunpack.c.l.b16 %v2120
  %v2391 = vunpack.c.l.b16 %v2121
  %v2392 = vunpack.c.h.b16 %v2121
  %v2393 = vunpack.c.l.b16 %v2122
  %v2394 = vunpack.c.h.b16 %v2122
  %v2395 = vunpack.c.l.b16 %v2123
  %v2396 = vunpack.c.l.b16 %v2124
  %v2397 = vunpack.c.h.b16 %v2124
  %v2398 = vunpack.c.l.b16 %v2125
  %v2399 = vunpack.c.h.b16 %v2125
  %v2400 = vunpack.c.l.b16 %v2126
  %v2401 = vunpack.c.l.b16 %v2127
  %v2402 = vunpack.c.h.b16 %v2127
  %v2403 = vunpack.c.l.b16 %v2128
  %v2404 = vunpack.c.h.b16 %v2128
  %v2405 = vunpack.c.l.b16 %v2129
  %v2406 = vunpack.c.l.b16 %v2130
  %v2407 = vunpack.c.h.b16 %v2130
  %v2408 = vunpack.c.l.b16 %v2131
  %v2409 = vunpack.c.h.b16 %v2131
  %v2410 = vunpack.c.l.b16 %v2132
  %v2411 = vunpack.c.l.b16 %v2133
  %v2412 = vunpack.c.h.b16 %v2133
  %v2413 = vunpack.c.l.b16 %v2134
  %v2414 = vunpack.c.h.b16 %v2134
  %v2415 = vunpack.c.l.b16 %v2135
  %v2416 = vunpack.c.l.b16 %v2136
  %v2417 = vunpack.c.h.b16 %v2136
  %v2418 = vunpack.c.l.b16 %v2137
  %v2419 = vunpack.c.h.b16 %v2137
  %v2420 = vunpack.c.l.b16 %v2138
  %v2421 = vunpack.c.l.b16 %v2139
  %v2422 = vunpack.c.h.b16 %v2139
  %v2423 = vunpack.c.l.b16 %v2140
  %v2424 = vunpack.c.h.b16 %v2140
  %v2425 = vunpack.c.l.b16 %v2141
  %v2426 = vunpack.c.l.b16 %v2142
  %v2427 = vunpack.c.h.b16 %v2142
  %v2428 = vunpack.c.l.b16 %v2143
  %v2429 = vunpack.c.h.b16 %v2143
  %v2430 = vunpack.c.l.b16 %v2144
  %v2431 = vunpack.c.l.b16 %v2145
  %v2432 = vunpack.c.h.b16 %v2145
  %v2433 = vunpack.c.l.b16 %v2146
  %v2434 = vunpack.c.h.b16 %v2146
  %v2435 = vunpack.c.l.b16 %v2147
  %v2436 = vunpack.c.l.b16 %v2148
  %v2437 = vunpack.c.h.b16 %v2148
  %v2438 = vunpack.c.l.b16 %v2149
  %v2439 = vunpack.c.h.b16 %v2149
  %v2440 = vunpack.c.l.b16 %v2150
  %v2441 = vunpack.c.l.b16 %v2151
  %v2442 = vunpack.c.h.b16 %v2151
  %v2443 = vunpack.c.l.b16 %v2152
  %v2444 = vunpack.c.h.b16 %v2152
  %v2445 = vunpack.c.l.b16 %v2153
  %v2446 = vunpack.c.l.b16 %v2154
  %v2447 = vunpack.c.h.b16 %v2154
  %v2448 = vunpack.c.l.b16 %v2155
  %v2449 = vunpack.c.h.b16 %v2155
  %v2450 = vunpack.c.l.b16 %v2156
  %v2451 = vunpack.c.l.b16 %v2157
  %v2452 = vunpack.c.h.b16 %v2157
  %v2453 = vunpack.c.l.b16 %v2158
  %v2454 = vunpack.c.h.b16 %v2158
  %v2455 = vunpack.c.l.b16 %v2159
  %v2456 = vunpack.c.l.b16 %v2160
  %v2457 = vunpack.c.h.b16 %v2160
  %v2458 = vunpack.c.l.b16 %v2161
  %v2459 = vunpack.c.h.b16 %v2161
  %v2460 = vunpack.c.l.b16 %v2162
  %v2461 = vunpack.c.l.b16 %v2163
  %v2462 = vunpack.c.h.b16 %v2163
  %v2463 = vunpack.c.l.b16 %v2164
  %v2464 = vunpack.c.h.b16 %v2164
  %v2465 = vunpack.c.l.b16 %v2165
  %v2466 = vunpack.c.l.b16 %v2166
  %v2467 = vunpack.c.h.b16 %v2166
  %v2468 = vunpack.c.l.b16 %v2167
  %v2469 = vunpack.c.h.b16 %v2167
  %v2470 = vunpack.c.l.b16 %v2168
  %v2471 = vunpack.c.l.b16 %v2169
  %v2472 = vunpack.c.h.b16 %v2169
  %v2473 = vunpack.c.l.b16 %v2170
  %v2474 = vunpack.c.h.b16 %v2170
  %v2475 = vunpack.c.l.b16 %v2171
  %v2476 = vunpack.c.l.b16 %v2172
  %v2477 = vunpack.c.h.b16 %v2172
  %v2478 = vunpack.c.l.b16 %v2173
  %v2479 = vunpack.c.h.b16 %v2173
  %v2480 = vunpack.c.l.b16 %v2174
  %v2481 = vunpack.c.l.b16 %v2175
  %v2482 = vunpack.c.h.b16 %v2175
  %v2483 = vunpack.c.l.b16 %v2176
  %v2484 = vunpack.c.h.b16 %v2176
  %v2485 = vunpack.c.l.b16 %v2177
  %v2486 = vunpack.c.l.b16 %v2178
  %v2487 = vunpack.c.h.b16 %v2178
  %v2488 = vunpack.c.l.b16 %v2179
  %v2489 = vunpack.c.h.b16 %v2179
  %v2490 = vunpack.c.l.b16 %v2180
  %v2491 = vunpack.c.l.b16 %v2181
  %v2492 = vunpack.c.h.b16 %v2181
  %v2493 = vunpack.c.l.b16 %v2182
  %v2494 = vunpack.c.h.b16 %v2182
  %v2495 = vunpack.c.l.b16 %v2183
  %v2496 = vunpack.c.l.b16 %v2184
  %v2497 = vunpack.c.h.b16 %v2184
  %v2498 = vunpack.c.l.b16 %v2185
  %v2499 = vunpack.c.h.b16 %v2185
  %v2500 = vunpack.c.l.b16 %v2186
  %v2501 = vunpack.c.l.b16 %v2187
  %v2502 = vunpack.c.h.b16 %v2187
  %v2503 = vunpack.c.l.b16 %v2188
  %v2504 = vunpack.c.h.b16 %v2188
  %v2505 = vunpack.c.l.b16 %v2189
  %v2506 = vunpack.c.l.b16 %v2190
  %v2507 = vunpack.c.h.b16 %v2190
  %v2508 = vunpack.c.l.b16 %v2191
  %v2509 = vunpack.c.h.b16 %v2191
  %v2510 = vunpack.c.l.b16 %v2192
  %v2511 = vunpack.c.l.b16 %v2193
  %v2512 = vunpack.c.h.b16 %v2193
  %v2513 = vunpack.c.l.b16 %v2194
  %v2514 = vunpack.c.h.b16 %v2194
  %v2515 = vunpack.c.l.b16 %v2195
  %v2516 = vunpack.c.l.b16 %v2196
  %v2517 = vunpack.c.h.b16 %v2196
  %v2518 = vunpack.c.l.b16 %v2197
  %v2519 = vunpack.c.h.b16 %v2197
  %v2520 = vunpack.c.l.b16 %v2198
  %v2521 = vunpack.c.l.b16 %v2199
  %v2522 = vunpack.c.h.b16 %v2199
  %v2523 = vunpack.c.l.b16 %v2200
  %v2524 = vunpack.c.h.b16 %v2200
  %v2525 = vunpack.c.l.b16 %v2201
  %v2526 = vunpack.c.l.b16 %v2202
  %v2527 = vunpack.c.h.b16 %v2202
  %v2528 = vunpack.c.l.b16 %v2203
  %v2529 = vunpack.c.h.b16 %v2203
  %v2530 = vunpack.c.l.b16 %v2204
  %v2531 = vunpack.c.l.b16 %v2205
  %v2532 = vunpack.c.h.b16 %v2205
  %v2533 = vunpack.c.l.b16 %v2206
  %v2534 = vunpack.c.h.b16 %v2206
  %v2535 = vunpack.c.l.b16 %v2207
  %v2536 = vunpack.c.l.b16 %v2208
  %v2537 = vunpack.c.h.b16 %v2208
  %v2538 = vunpack.c.l.b16 %v2209
  %v2539 = vunpack.c.h.b16 %v2209
  %v2540 = vunpack.c.l.b16 %v2210
  %v2541 = vunpack.c.l.b16 %v2211
  %v2542 = vunpack.c.h.b16 %v2211
  %v2543 = vunpack.c.l.b16 %v2212
  %v2544 = vunpack.c.h.b16 %v2212
  %v2545 = vunpack.c.l.b16 %v2213
  %v2546 = vunpack.c.l.b16 %v2214
  %v2547 = vunpack.c.h.b16 %v2214
  %v2548 = vunpack.c.l.b16 %v2215
  %v2549 = vunpack.c.h.b16 %v2215
  %v2550 = vunpack.c.l.b16 %v2216
  %v2551 = vunpack.c.l.b16 %v2217
  %v2552 = vunpack.c.h.b16 %v2217
  %v2553 = vunpack.c.l.b16 %v2218
  %v2554 = vunpack.c.h.b16 %v2218
  %v2555 = vunpack.c.l.b16 %v2219
  %v2556 = vunpack.c.l.b16 %v2220
  %v2557 = vunpack.c.h.b16 %v2220
  %v2558 = vunpack.c.l.b16 %v2221
  %v2559 = vunpack.c.h.b16 %v2221
  %v2560 = vunpack.c.l.b16 %v2222
  %v2561 = vunpack.c.l.b16 %v2223
  %v2562 = vunpack.c.h.b16 %v2223
  %v2563 = vunpack.c.l.b16 %v2224
  %v2564 = vunpack.c.h.b16 %v2224
  %v2565 = vunpack.c.l.b16 %v2225
  %v2566 = vunpack.c.l.b16 %v2226
  %v2567 = vunpack.c.h.b16 %v2226
  %v2568 = vunpack.c.l.b16 %v2227
  %v2569 = vunpack.c.h.b16 %v2227
  %v2570 = vunpack.c.l.b16 %v2228
  %v2571 = vunpack.c.l.b16 %v2229
  %v2572 = vunpack.c.h.b16 %v2229
  %v2573 = vunpack.c.l.b16 %v2230
  %v2574 = vunpack.c.h.b16 %v2230
  %v2575 = vunpack.c.l.b16 %v2231
  %v2576 = vunpack.c.l.b16 %v2232
  %v2577 = vunpack.c.h.b16 %v2232
  %v2578 = vunpack.c.l.b16 %v2233
  %v2579 = vunpack.c.h.b16 %v2233
  %v2580 = vunpack.c.l.b16 %v2234
  %v2581 = vunpack.c.l.b16 %v2235
  %v2582 = vunpack.c.h.b16 %v2235
  %v2583 = vunpack.c.l.b16 %v2236
  %v2584 = vunpack.c.h.b16 %v2236
  %v2585 = vunpack.c.l.b16 %v2237
  %v2586 = vunpack.c.l.b16 %v2238
  %v2587 = vunpack.c.h.b16 %v2238
  %v2588 = vunpack.c.l.b16 %v2239
  %v2589 = vunpack.c.h.b16 %v2239
  %v2590 = vunpack.c.l.b16 %v2240
  %v2591 = vunpack.c.l.b16 %v2241
  %v2592 = vunpack.c.h.b16 %v2241
  %v2593 = vunpack.c.l.b16 %v2242
  %v2594 = vunpack.c.h.b16 %v2242
  %v2595 = vunpack.c.l.b16 %v2243
  %v2596 = vpack.c.b16 %v2381, %v2376
  %v2597 = vpack.c.b16 %v2382, %v2377
  %v2598 = vpack.c.b16 %v2383, %v2378
  %v2599 = vpack.c.b16 %v2384, %v2379
  %v2600 = vpack.c.b16 %v2385, %v2380
  %v2601 = vpack.c.b16 %v2391, %v2386
  %v2602 = vpack.c.b16 %v2392, %v2387
  %v2603 = vpack.c.b16 %v2393, %v2388
  %v2604 = vpack.c.b16 %v2394, %v2389
  %v2605 = vpack.c.b16 %v2395, %v2390
  %v2606 = vpack.c.b16 %v2401, %v2396
  %v2607 = vpack.c.b16 %v2402, %v2397
  %v2608 = vpack.c.b16 %v2403, %v2398
  %v2609 = vpack.c.b16 %v2404, %v2399
  %v2610 = vpack.c.b16 %v2405, %v2400
  %v2611 = vpack.c.b16 %v2411, %v2406
  %v2612 = vpack.c.b16 %v2412, %v2407
  %v2613 = vpack.c.b16 %v2413, %v2408
  %v2614 = vpack.c.b16 %v2414, %v2409
  %v2615 = vpack.c.b16 %v2415, %v2410
  %v2616 = vpack.c.b16 %v2421, %v2416
  %v2617 = vpack.c.b16 %v2422, %v2417
  %v2618 = vpack.c.b16 %v2423, %v2418
  %v2619 = vpack.c.b16 %v2424, %v2419
  %v2620 = vpack.c.b16 %v2425, %v2420
  %v2621 = vpack.c.b16 %v2431, %v2426
  %v2622 = vpack.c.b16 %v2432, %v2427
  %v2623 = vpack.c.b16 %v2433, %v2428
  %v2624 = vpack.c.b16 %v2434, %v2429
  %v2625 = vpack.c.b16 %v2435, %v2430
  %v2626 = vpack.c.b16 %v2441, %v2436
  %v2627 = vpack.c.b16 %v2442, %v2437
  %v2628 = vpack.c.b16 %v2443, %v2438
  %v2629 = vpack.c.b16 %v2444, %v2439
  %v2630 = vpack.c.b16 %v2445, %v2440
  %v2631 = vpack.c.b16 %v2451, %v2446
  %v2632 = vpack.c.b16 %v2452, %v2447
  %v2633 = vpack.c.b16 %v2453, %v2448
  %v2634 = vpack.c.b16 %v2454, %v2449
  %v2635 = vpack.c.b16 %v2455, %v2450
  %v2636 = vpack.c.b16 %v2461, %v2456
  %v2637 = vpack.c.b16 %v2462, %v2457
  %v2638 = vpack.c.b16 %v2463, %v2458
  %v2639 = vpack.c.b16 %v2464, %v2459
  %v2640 = vpack.c.b16 %v2465, %v2460
  %v2641 = vpack.c.b16 %v2471, %v2466
  %v2642 = vpack.c.b16 %v2472, %v2467
  %v2643 = vpack.c.b16 %v2473, %v2468
  %v2644 = vpack.c.b16 %v2474, %v2469
  %v2645 = vpack.c.b16 %v2475, %v2470
  %v2646 = vpack.c.b16 %v2481, %v2476
  %v2647 = vpack.c.b16 %v2482, %v2477
  %v2648 = vpack.c.b16 %v2483, %v2478
  %v2649 = vpack.c.b16 %v2484, %v2479
  %v2650 = vpack.c.b16 %v2485, %v2480
  %v2651 = vpack.c.b16 %v2491, %v2486
  %v2652 = vpack.c.b16 %v2492, %v2487
  %v2653 = vpack.c.b16 %v2493, %v2488
  %v2654 = vpack.c.b16 %v2494, %v2489
  %v2655 = vpack.c.b16 %v2495, %v2490
  %v2656 = vpack.c.b16 %v2501, %v2496
  %v2657 = vpack.c.b16 %v2502, %v2497
  %v2658 = vpack.c.b16 %v2503, %v2498
  %v2659 = vpack.c.b16 %v2504, %v2499
  %v2660 = vpack.c.b16 %v2505, %v2500
  %v2661 = vpack.c.b16 %v2511, %v2506
  %v2662 = vpack.c.b16 %v2512, %v2507
  %v2663 = vpack.c.b16 %v2513, %v2508
  %v2664 = vpack.c.b16 %v2514, %v2509
  %v2665 = vpack.c.b16 %v2515, %v2510
  %v2666 = vpack.c.b16 %v2521, %v2516
  %v2667 = vpack.c.b16 %v2522, %v2517
  %v2668 = vpack.c.b16 %v2523, %v2518
  %v2669 = vpack.c.b16 %v2524, %v2519
  %v2670 = vpack.c.b16 %v2525, %v2520
  %v2671 = vpack.c.b16 %v2531, %v2526
  %v2672 = vpack.c.b16 %v2532, %v2527
  %v2673 = vpack.c.b16 %v2533, %v2528
  %v2674 = vpack.c.b16 %v2534, %v2529
  %v2675 = vpack.c.b16 %v2535, %v2530
  %v2676 = vpack.c.b16 %v2541, %v2536
  %v2677 = vpack.c.b16 %v2542, %v2537
  %v2678 = vpack.c.b16 %v2543, %v2538
  %v2679 = vpack.c.b16 %v2544, %v2539
  %v2680 = vpack.c.b16 %v2545, %v2540
  %v2681 = vpack.c.b16 %v2551, %v2546
  %v2682 = vpack.c.b16 %v2552, %v2547
  %v2683 = vpack.c.b16 %v2553, %v2548
  %v2684 = vpack.c.b16 %v2554, %v2549
  %v2685 = vpack.c.b16 %v2555, %v2550
  %v2686 = vpack.c.b16 %v2561, %v2556
  %v2687 = vpack.c.b16 %v2562, %v2557
  %v2688 = vpack.c.b16 %v2563, %v2558
  %v2689 = vpack.c.b16 %v2564, %v2559
  %v2690 = vpack.c.b16 %v2565, %v2560
  %v2691 = vpack.c.b16 %v2571, %v2566
  %v2692 = vpack.c.b16 %v2572, %v2567
  %v2693 = vpack.c.b16 %v2573, %v2568
  %v2694 = vpack.c.b16 %v2574, %v2569
  %v2695 = vpack.c.b16 %v2575, %v2570
  %v2696 = vpack.c.b16 %v2581, %v2576
  %v2697 = vpack.c.b16 %v2582, %v2577
  %v2698 = vpack.c.b16 %v2583, %v2578
  %v2699 = vpack.c.b16 %v2584, %v2579
  %v2700 = vpack.c.b16 %v2585, %v2580
  %v2701 = vpack.c.b16 %v2591, %v2586
  %v2702 = vpack.c.b16 %v2592, %v2587
  %v2703 = vpack.c.b16 %v2593, %v2588
  %v2704 = vpack.c.b16 %v2594, %v2589
  %v2705 = vpack.c.b16 %v2595, %v2590
  %v2817 = vsel %vm951, %v2099, 0
  %v2820 = vsel %vm951, %v2102, 0
  %v2823 = vsel %vm951, %v2105, 0
  %v2826 = vsel %vm951, %v2108, 0
  %v2829 = vsel %vm951, %v2111, 0
  %2831 = vmatpush.bf16.msra.mxu0 %v2631
  %2832 = vmatpush.bf16.msra.mxu0 %v2626
  %2833 = vmatpush.bf16.msra.mxu0 %v2621
  %2834 = vmatpush.bf16.msra.mxu0 %v2616
  %2835 = vmatpush.bf16.msra.mxu0 %v2611
  %2836 = vmatpush.bf16.msra.mxu0 %v2606
  %2837 = vmatpush.bf16.msra.mxu0 %v2601
  %2838 = vmatpush.bf16.msra.mxu0 %v2596
  %2839 = vmatmul.bf16.gmra.mxu0 %v2097
  %v2840 = vpop.f32.mrf.mxu0
  %v2841 = vadd.f32 0.0, %v2840
  %v2842 = vpop.f32.mrf.mxu0
  %v2843 = vadd.f32 0.0, %v2842
  %2844 = vmatmul.bf16.gmra.mxu0 %v2100
  %v2845 = vpop.f32.mrf.mxu0
  %v2846 = vadd.f32 0.0, %v2845
  %v2847 = vpop.f32.mrf.mxu0
  %v2848 = vadd.f32 0.0, %v2847
  %2849 = vmatmul.bf16.gmra.mxu0 %v2103
  %v2850 = vpop.f32.mrf.mxu0
  %v2851 = vadd.f32 0.0, %v2850
  %v2852 = vpop.f32.mrf.mxu0
  %v2853 = vadd.f32 0.0, %v2852
  %2854 = vmatmul.bf16.gmra.mxu0 %v2106
  %v2855 = vpop.f32.mrf.mxu0
  %v2856 = vadd.f32 0.0, %v2855
  %v2857 = vpop.f32.mrf.mxu0
  %v2858 = vadd.f32 0.0, %v2857
  %2859 = vmatmul.bf16.gmra.mxu0 %v2109
  %v2860 = vpop.f32.mrf.mxu0
  %v2861 = vadd.f32 0.0, %v2860
  %v2862 = vpop.f32.mrf.mxu0
  %2863 = vdwg.mxu0
  %2864 = vmatpush.bf16.msra.mxu0 %v2671
  %2865 = vmatpush.bf16.msra.mxu0 %v2666
  %2866 = vmatpush.bf16.msra.mxu0 %v2661
  %2867 = vmatpush.bf16.msra.mxu0 %v2656
  %2868 = vmatpush.bf16.msra.mxu0 %v2651
  %2869 = vmatpush.bf16.msra.mxu0 %v2646
  %2870 = vmatpush.bf16.msra.mxu0 %v2641
  %2871 = vmatpush.bf16.msra.mxu0 %v2636
  %2872 = vmatmul.bf16.gmra.mxu0 %v2098
  %v2873 = vpop.f32.mrf.mxu0
  %v2874 = vadd.f32 %v2841, %v2873
  %v2875 = vpop.f32.mrf.mxu0
  %v2876 = vadd.f32 %v2843, %v2875
  %2877 = vmatmul.bf16.gmra.mxu0 %v2101
  %v2878 = vpop.f32.mrf.mxu0
  %v2879 = vadd.f32 %v2846, %v2878
  %v2880 = vpop.f32.mrf.mxu0
  %v2881 = vadd.f32 %v2848, %v2880
  %2882 = vmatmul.bf16.gmra.mxu0 %v2104
  %v2883 = vpop.f32.mrf.mxu0
  %v2884 = vadd.f32 %v2851, %v2883
  %v2885 = vpop.f32.mrf.mxu0
  %v2886 = vadd.f32 %v2853, %v2885
  %2887 = vmatmul.bf16.gmra.mxu0 %v2107
  %v2888 = vpop.f32.mrf.mxu0
  %v2889 = vadd.f32 %v2856, %v2888
  %v2890 = vpop.f32.mrf.mxu0
  %v2891 = vadd.f32 %v2858, %v2890
  %2892 = vmatmul.bf16.gmra.mxu0 %v2110
  %v2893 = vpop.f32.mrf.mxu0
  %v2894 = vadd.f32 %v2861, %v2893
  %v2895 = vpop.f32.mrf.mxu0
  %2896 = vdwg.mxu0
  %2897 = vmatpush.bf16.msra.mxu0 0
  %2898 = vmatpush.bf16.msra.mxu0 0
  %2899 = vmatpush.bf16.msra.mxu0 %v2701
  %2900 = vmatpush.bf16.msra.mxu0 %v2696
  %2901 = vmatpush.bf16.msra.mxu0 %v2691
  %2902 = vmatpush.bf16.msra.mxu0 %v2686
  %2903 = vmatpush.bf16.msra.mxu0 %v2681
  %2904 = vmatpush.bf16.msra.mxu0 %v2676
  %2905 = vmatmul.bf16.gmra.mxu0 %v2817
  %v2906 = vpop.f32.mrf.mxu0
  %v2907 = vadd.f32 %v2874, %v2906
  %v2908 = vpop.f32.mrf.mxu0
  %v2909 = vadd.f32 %v2876, %v2908
  %2910 = vmatmul.bf16.gmra.mxu0 %v2820
  %v2911 = vpop.f32.mrf.mxu0
  %v2912 = vadd.f32 %v2879, %v2911
  %v2913 = vpop.f32.mrf.mxu0
  %v2914 = vadd.f32 %v2881, %v2913
  %2915 = vmatmul.bf16.gmra.mxu0 %v2823
  %v2916 = vpop.f32.mrf.mxu0
  %v2917 = vadd.f32 %v2884, %v2916
  %v2918 = vpop.f32.mrf.mxu0
  %v2919 = vadd.f32 %v2886, %v2918
  %2920 = vmatmul.bf16.gmra.mxu0 %v2826
  %v2921 = vpop.f32.mrf.mxu0
  %v2922 = vadd.f32 %v2889, %v2921
  %v2923 = vpop.f32.mrf.mxu0
  %v2924 = vadd.f32 %v2891, %v2923
  %2925 = vmatmul.bf16.gmra.mxu0 %v2829
  %v2926 = vpop.f32.mrf.mxu0
  %v2927 = vadd.f32 %v2894, %v2926
  %v2928 = vpop.f32.mrf.mxu0
  %2929 = vdwg.mxu0
  %2930 = vmatpush.bf16.msra.mxu0 %v2632
  %2931 = vmatpush.bf16.msra.mxu0 %v2627
  %2932 = vmatpush.bf16.msra.mxu0 %v2622
  %2933 = vmatpush.bf16.msra.mxu0 %v2617
  %2934 = vmatpush.bf16.msra.mxu0 %v2612
  %2935 = vmatpush.bf16.msra.mxu0 %v2607
  %2936 = vmatpush.bf16.msra.mxu0 %v2602
  %2937 = vmatpush.bf16.msra.mxu0 %v2597
  %2938 = vmatmul.bf16.gmra.mxu0 %v2097
  %v2939 = vpop.f32.mrf.mxu0
  %v2940 = vadd.f32 0.0, %v2939
  %v2941 = vpop.f32.mrf.mxu0
  %v2942 = vadd.f32 0.0, %v2941
  %2943 = vmatmul.bf16.gmra.mxu0 %v2100
  %v2944 = vpop.f32.mrf.mxu0
  %v2945 = vadd.f32 0.0, %v2944
  %v2946 = vpop.f32.mrf.mxu0
  %v2947 = vadd.f32 0.0, %v2946
  %2948 = vmatmul.bf16.gmra.mxu0 %v2103
  %v2949 = vpop.f32.mrf.mxu0
  %v2950 = vadd.f32 0.0, %v2949
  %v2951 = vpop.f32.mrf.mxu0
  %v2952 = vadd.f32 0.0, %v2951
  %2953 = vmatmul.bf16.gmra.mxu0 %v2106
  %v2954 = vpop.f32.mrf.mxu0
  %v2955 = vadd.f32 0.0, %v2954
  %v2956 = vpop.f32.mrf.mxu0
  %v2957 = vadd.f32 0.0, %v2956
  %2958 = vmatmul.bf16.gmra.mxu0 %v2109
  %v2959 = vpop.f32.mrf.mxu0
  %v2960 = vadd.f32 0.0, %v2959
  %v2961 = vpop.f32.mrf.mxu0
  %2962 = vdwg.mxu0
  %2963 = vmatpush.bf16.msra.mxu0 %v2672
  %2964 = vmatpush.bf16.msra.mxu0 %v2667
  %2965 = vmatpush.bf16.msra.mxu0 %v2662
  %2966 = vmatpush.bf16.msra.mxu0 %v2657
  %2967 = vmatpush.bf16.msra.mxu0 %v2652
  %2968 = vmatpush.bf16.msra.mxu0 %v2647
  %2969 = vmatpush.bf16.msra.mxu0 %v2642
  %2970 = vmatpush.bf16.msra.mxu0 %v2637
  %2971 = vmatmul.bf16.gmra.mxu0 %v2098
  %v2972 = vpop.f32.mrf.mxu0
  %v2973 = vadd.f32 %v2940, %v2972
  %v2974 = vpop.f32.mrf.mxu0
  %v2975 = vadd.f32 %v2942, %v2974
  %2976 = vmatmul.bf16.gmra.mxu0 %v2101
  %v2977 = vpop.f32.mrf.mxu0
  %v2978 = vadd.f32 %v2945, %v2977
  %v2979 = vpop.f32.mrf.mxu0
  %v2980 = vadd.f32 %v2947, %v2979
  %2981 = vmatmul.bf16.gmra.mxu0 %v2104
  %v2982 = vpop.f32.mrf.mxu0
  %v2983 = vadd.f32 %v2950, %v2982
  %v2984 = vpop.f32.mrf.mxu0
  %v2985 = vadd.f32 %v2952, %v2984
  %2986 = vmatmul.bf16.gmra.mxu0 %v2107
  %v2987 = vpop.f32.mrf.mxu0
  %v2988 = vadd.f32 %v2955, %v2987
  %v2989 = vpop.f32.mrf.mxu0
  %v2990 = vadd.f32 %v2957, %v2989
  %2991 = vmatmul.bf16.gmra.mxu0 %v2110
  %v2992 = vpop.f32.mrf.mxu0
  %v2993 = vadd.f32 %v2960, %v2992
  %v2994 = vpop.f32.mrf.mxu0
  %2995 = vdwg.mxu0
  %2996 = vmatpush.bf16.msra.mxu0 0
  %2997 = vmatpush.bf16.msra.mxu0 0
  %2998 = vmatpush.bf16.msra.mxu0 %v2702
  %2999 = vmatpush.bf16.msra.mxu0 %v2697
  %3000 = vmatpush.bf16.msra.mxu0 %v2692
  %3001 = vmatpush.bf16.msra.mxu0 %v2687
  %3002 = vmatpush.bf16.msra.mxu0 %v2682
  %3003 = vmatpush.bf16.msra.mxu0 %v2677
  %3004 = vmatmul.bf16.gmra.mxu0 %v2817
  %v3005 = vpop.f32.mrf.mxu0
  %v3006 = vadd.f32 %v2973, %v3005
  %v3007 = vpop.f32.mrf.mxu0
  %v3008 = vadd.f32 %v2975, %v3007
  %3009 = vmatmul.bf16.gmra.mxu0 %v2820
  %v3010 = vpop.f32.mrf.mxu0
  %v3011 = vadd.f32 %v2978, %v3010
  %v3012 = vpop.f32.mrf.mxu0
  %v3013 = vadd.f32 %v2980, %v3012
  %3014 = vmatmul.bf16.gmra.mxu0 %v2823
  %v3015 = vpop.f32.mrf.mxu0
  %v3016 = vadd.f32 %v2983, %v3015
  %v3017 = vpop.f32.mrf.mxu0
  %v3018 = vadd.f32 %v2985, %v3017
  %3019 = vmatmul.bf16.gmra.mxu0 %v2826
  %v3020 = vpop.f32.mrf.mxu0
  %v3021 = vadd.f32 %v2988, %v3020
  %v3022 = vpop.f32.mrf.mxu0
  %v3023 = vadd.f32 %v2990, %v3022
  %3024 = vmatmul.bf16.gmra.mxu0 %v2829
  %v3025 = vpop.f32.mrf.mxu0
  %v3026 = vadd.f32 %v2993, %v3025
  %v3027 = vpop.f32.mrf.mxu0
  %3028 = vdwg.mxu0
  %3029 = vmatpush.bf16.msra.mxu0 %v2633
  %3030 = vmatpush.bf16.msra.mxu0 %v2628
  %3031 = vmatpush.bf16.msra.mxu0 %v2623
  %3032 = vmatpush.bf16.msra.mxu0 %v2618
  %3033 = vmatpush.bf16.msra.mxu0 %v2613
  %3034 = vmatpush.bf16.msra.mxu0 %v2608
  %3035 = vmatpush.bf16.msra.mxu0 %v2603
  %3036 = vmatpush.bf16.msra.mxu0 %v2598
  %3037 = vmatmul.bf16.gmra.mxu0 %v2097
  %v3038 = vpop.f32.mrf.mxu0
  %v3039 = vadd.f32 0.0, %v3038
  %v3040 = vpop.f32.mrf.mxu0
  %v3041 = vadd.f32 0.0, %v3040
  %3042 = vmatmul.bf16.gmra.mxu0 %v2100
  %v3043 = vpop.f32.mrf.mxu0
  %v3044 = vadd.f32 0.0, %v3043
  %v3045 = vpop.f32.mrf.mxu0
  %v3046 = vadd.f32 0.0, %v3045
  %3047 = vmatmul.bf16.gmra.mxu0 %v2103
  %v3048 = vpop.f32.mrf.mxu0
  %v3049 = vadd.f32 0.0, %v3048
  %v3050 = vpop.f32.mrf.mxu0
  %v3051 = vadd.f32 0.0, %v3050
  %3052 = vmatmul.bf16.gmra.mxu0 %v2106
  %v3053 = vpop.f32.mrf.mxu0
  %v3054 = vadd.f32 0.0, %v3053
  %v3055 = vpop.f32.mrf.mxu0
  %v3056 = vadd.f32 0.0, %v3055
  %3057 = vmatmul.bf16.gmra.mxu0 %v2109
  %v3058 = vpop.f32.mrf.mxu0
  %v3059 = vadd.f32 0.0, %v3058
  %v3060 = vpop.f32.mrf.mxu0
  %3061 = vdwg.mxu0
  %3062 = vmatpush.bf16.msra.mxu0 %v2673
  %3063 = vmatpush.bf16.msra.mxu0 %v2668
  %3064 = vmatpush.bf16.msra.mxu0 %v2663
  %3065 = vmatpush.bf16.msra.mxu0 %v2658
  %3066 = vmatpush.bf16.msra.mxu0 %v2653
  %3067 = vmatpush.bf16.msra.mxu0 %v2648
  %3068 = vmatpush.bf16.msra.mxu0 %v2643
  %3069 = vmatpush.bf16.msra.mxu0 %v2638
  %3070 = vmatmul.bf16.gmra.mxu0 %v2098
  %v3071 = vpop.f32.mrf.mxu0
  %v3072 = vadd.f32 %v3039, %v3071
  %v3073 = vpop.f32.mrf.mxu0
  %v3074 = vadd.f32 %v3041, %v3073
  %3075 = vmatmul.bf16.gmra.mxu0 %v2101
  %v3076 = vpop.f32.mrf.mxu0
  %v3077 = vadd.f32 %v3044, %v3076
  %v3078 = vpop.f32.mrf.mxu0
  %v3079 = vadd.f32 %v3046, %v3078
  %3080 = vmatmul.bf16.gmra.mxu0 %v2104
  %v3081 = vpop.f32.mrf.mxu0
  %v3082 = vadd.f32 %v3049, %v3081
  %v3083 = vpop.f32.mrf.mxu0
  %v3084 = vadd.f32 %v3051, %v3083
  %3085 = vmatmul.bf16.gmra.mxu0 %v2107
  %v3086 = vpop.f32.mrf.mxu0
  %v3087 = vadd.f32 %v3054, %v3086
  %v3088 = vpop.f32.mrf.mxu0
  %v3089 = vadd.f32 %v3056, %v3088
  %3090 = vmatmul.bf16.gmra.mxu0 %v2110
  %v3091 = vpop.f32.mrf.mxu0
  %v3092 = vadd.f32 %v3059, %v3091
  %v3093 = vpop.f32.mrf.mxu0
  %3094 = vdwg.mxu0
  %3095 = vmatpush.bf16.msra.mxu0 0
  %3096 = vmatpush.bf16.msra.mxu0 0
  %3097 = vmatpush.bf16.msra.mxu0 %v2703
  %3098 = vmatpush.bf16.msra.mxu0 %v2698
  %3099 = vmatpush.bf16.msra.mxu0 %v2693
  %3100 = vmatpush.bf16.msra.mxu0 %v2688
  %3101 = vmatpush.bf16.msra.mxu0 %v2683
  %3102 = vmatpush.bf16.msra.mxu0 %v2678
  %3103 = vmatmul.bf16.gmra.mxu0 %v2817
  %v3104 = vpop.f32.mrf.mxu0
  %v3105 = vadd.f32 %v3072, %v3104
  %v3106 = vpop.f32.mrf.mxu0
  %v3107 = vadd.f32 %v3074, %v3106
  %3108 = vmatmul.bf16.gmra.mxu0 %v2820
  %v3109 = vpop.f32.mrf.mxu0
  %v3110 = vadd.f32 %v3077, %v3109
  %v3111 = vpop.f32.mrf.mxu0
  %v3112 = vadd.f32 %v3079, %v3111
  %3113 = vmatmul.bf16.gmra.mxu0 %v2823
  %v3114 = vpop.f32.mrf.mxu0
  %v3115 = vadd.f32 %v3082, %v3114
  %v3116 = vpop.f32.mrf.mxu0
  %v3117 = vadd.f32 %v3084, %v3116
  %3118 = vmatmul.bf16.gmra.mxu0 %v2826
  %v3119 = vpop.f32.mrf.mxu0
  %v3120 = vadd.f32 %v3087, %v3119
  %v3121 = vpop.f32.mrf.mxu0
  %v3122 = vadd.f32 %v3089, %v3121
  %3123 = vmatmul.bf16.gmra.mxu0 %v2829
  %v3124 = vpop.f32.mrf.mxu0
  %v3125 = vadd.f32 %v3092, %v3124
  %v3126 = vpop.f32.mrf.mxu0
  %3127 = vdwg.mxu0
  %3128 = vmatpush.bf16.msra.mxu0 %v2634
  %3129 = vmatpush.bf16.msra.mxu0 %v2629
  %3130 = vmatpush.bf16.msra.mxu0 %v2624
  %3131 = vmatpush.bf16.msra.mxu0 %v2619
  %3132 = vmatpush.bf16.msra.mxu0 %v2614
  %3133 = vmatpush.bf16.msra.mxu0 %v2609
  %3134 = vmatpush.bf16.msra.mxu0 %v2604
  %3135 = vmatpush.bf16.msra.mxu0 %v2599
  %3136 = vmatmul.bf16.gmra.mxu0 %v2097
  %v3137 = vpop.f32.mrf.mxu0
  %v3138 = vadd.f32 0.0, %v3137
  %v3139 = vpop.f32.mrf.mxu0
  %v3140 = vadd.f32 0.0, %v3139
  %3141 = vmatmul.bf16.gmra.mxu0 %v2100
  %v3142 = vpop.f32.mrf.mxu0
  %v3143 = vadd.f32 0.0, %v3142
  %v3144 = vpop.f32.mrf.mxu0
  %v3145 = vadd.f32 0.0, %v3144
  %3146 = vmatmul.bf16.gmra.mxu0 %v2103
  %v3147 = vpop.f32.mrf.mxu0
  %v3148 = vadd.f32 0.0, %v3147
  %v3149 = vpop.f32.mrf.mxu0
  %v3150 = vadd.f32 0.0, %v3149
  %3151 = vmatmul.bf16.gmra.mxu0 %v2106
  %v3152 = vpop.f32.mrf.mxu0
  %v3153 = vadd.f32 0.0, %v3152
  %v3154 = vpop.f32.mrf.mxu0
  %v3155 = vadd.f32 0.0, %v3154
  %3156 = vmatmul.bf16.gmra.mxu0 %v2109
  %v3157 = vpop.f32.mrf.mxu0
  %v3158 = vadd.f32 0.0, %v3157
  %v3159 = vpop.f32.mrf.mxu0
  %3160 = vdwg.mxu0
  %3161 = vmatpush.bf16.msra.mxu0 %v2674
  %3162 = vmatpush.bf16.msra.mxu0 %v2669
  %3163 = vmatpush.bf16.msra.mxu0 %v2664
  %3164 = vmatpush.bf16.msra.mxu0 %v2659
  %3165 = vmatpush.bf16.msra.mxu0 %v2654
  %3166 = vmatpush.bf16.msra.mxu0 %v2649
  %3167 = vmatpush.bf16.msra.mxu0 %v2644
  %3168 = vmatpush.bf16.msra.mxu0 %v2639
  %3169 = vmatmul.bf16.gmra.mxu0 %v2098
  %v3170 = vpop.f32.mrf.mxu0
  %v3171 = vadd.f32 %v3138, %v3170
  %v3172 = vpop.f32.mrf.mxu0
  %v3173 = vadd.f32 %v3140, %v3172
  %3174 = vmatmul.bf16.gmra.mxu0 %v2101
  %v3175 = vpop.f32.mrf.mxu0
  %v3176 = vadd.f32 %v3143, %v3175
  %v3177 = vpop.f32.mrf.mxu0
  %v3178 = vadd.f32 %v3145, %v3177
  %3179 = vmatmul.bf16.gmra.mxu0 %v2104
  %v3180 = vpop.f32.mrf.mxu0
  %v3181 = vadd.f32 %v3148, %v3180
  %v3182 = vpop.f32.mrf.mxu0
  %v3183 = vadd.f32 %v3150, %v3182
  %3184 = vmatmul.bf16.gmra.mxu0 %v2107
  %v3185 = vpop.f32.mrf.mxu0
  %v3186 = vadd.f32 %v3153, %v3185
  %v3187 = vpop.f32.mrf.mxu0
  %v3188 = vadd.f32 %v3155, %v3187
  %3189 = vmatmul.bf16.gmra.mxu0 %v2110
  %v3190 = vpop.f32.mrf.mxu0
  %v3191 = vadd.f32 %v3158, %v3190
  %v3192 = vpop.f32.mrf.mxu0
  %3193 = vdwg.mxu0
  %3194 = vmatpush.bf16.msra.mxu0 0
  %3195 = vmatpush.bf16.msra.mxu0 0
  %3196 = vmatpush.bf16.msra.mxu0 %v2704
  %3197 = vmatpush.bf16.msra.mxu0 %v2699
  %3198 = vmatpush.bf16.msra.mxu0 %v2694
  %3199 = vmatpush.bf16.msra.mxu0 %v2689
  %3200 = vmatpush.bf16.msra.mxu0 %v2684
  %3201 = vmatpush.bf16.msra.mxu0 %v2679
  %3202 = vmatmul.bf16.gmra.mxu0 %v2817
  %v3203 = vpop.f32.mrf.mxu0
  %v3204 = vadd.f32 %v3171, %v3203
  %v3205 = vpop.f32.mrf.mxu0
  %v3206 = vadd.f32 %v3173, %v3205
  %3207 = vmatmul.bf16.gmra.mxu0 %v2820
  %v3208 = vpop.f32.mrf.mxu0
  %v3209 = vadd.f32 %v3176, %v3208
  %v3210 = vpop.f32.mrf.mxu0
  %v3211 = vadd.f32 %v3178, %v3210
  %3212 = vmatmul.bf16.gmra.mxu0 %v2823
  %v3213 = vpop.f32.mrf.mxu0
  %v3214 = vadd.f32 %v3181, %v3213
  %v3215 = vpop.f32.mrf.mxu0
  %v3216 = vadd.f32 %v3183, %v3215
  %3217 = vmatmul.bf16.gmra.mxu0 %v2826
  %v3218 = vpop.f32.mrf.mxu0
  %v3219 = vadd.f32 %v3186, %v3218
  %v3220 = vpop.f32.mrf.mxu0
  %v3221 = vadd.f32 %v3188, %v3220
  %3222 = vmatmul.bf16.gmra.mxu0 %v2829
  %v3223 = vpop.f32.mrf.mxu0
  %v3224 = vadd.f32 %v3191, %v3223
  %v3225 = vpop.f32.mrf.mxu0
  %3226 = vdwg.mxu0
  %3227 = vmatpush.bf16.msra.mxu0 %v2635
  %3228 = vmatpush.bf16.msra.mxu0 %v2630
  %3229 = vmatpush.bf16.msra.mxu0 %v2625
  %3230 = vmatpush.bf16.msra.mxu0 %v2620
  %3231 = vmatpush.bf16.msra.mxu0 %v2615
  %3232 = vmatpush.bf16.msra.mxu0 %v2610
  %3233 = vmatpush.bf16.msra.mxu0 %v2605
  %3234 = vmatpush.bf16.msra.mxu0 %v2600
  %3235 = vmatmul.bf16.gmra.mxu0 %v2097
  %v3236 = vpop.f32.mrf.mxu0
  %v3237 = vadd.f32 0.0, %v3236
  %v3238 = vpop.f32.mrf.mxu0
  %v3239 = vadd.f32 0.0, %v3238
  %3240 = vmatmul.bf16.gmra.mxu0 %v2100
  %v3241 = vpop.f32.mrf.mxu0
  %v3242 = vadd.f32 0.0, %v3241
  %v3243 = vpop.f32.mrf.mxu0
  %v3244 = vadd.f32 0.0, %v3243
  %3245 = vmatmul.bf16.gmra.mxu0 %v2103
  %v3246 = vpop.f32.mrf.mxu0
  %v3247 = vadd.f32 0.0, %v3246
  %v3248 = vpop.f32.mrf.mxu0
  %v3249 = vadd.f32 0.0, %v3248
  %3250 = vmatmul.bf16.gmra.mxu0 %v2106
  %v3251 = vpop.f32.mrf.mxu0
  %v3252 = vadd.f32 0.0, %v3251
  %v3253 = vpop.f32.mrf.mxu0
  %v3254 = vadd.f32 0.0, %v3253
  %3255 = vmatmul.bf16.gmra.mxu0 %v2109
  %v3256 = vpop.f32.mrf.mxu0
  %v3257 = vadd.f32 0.0, %v3256
  %v3258 = vpop.f32.mrf.mxu0
  %3259 = vdwg.mxu0
  %3260 = vmatpush.bf16.msra.mxu0 %v2675
  %3261 = vmatpush.bf16.msra.mxu0 %v2670
  %3262 = vmatpush.bf16.msra.mxu0 %v2665
  %3263 = vmatpush.bf16.msra.mxu0 %v2660
  %3264 = vmatpush.bf16.msra.mxu0 %v2655
  %3265 = vmatpush.bf16.msra.mxu0 %v2650
  %3266 = vmatpush.bf16.msra.mxu0 %v2645
  %3267 = vmatpush.bf16.msra.mxu0 %v2640
  %3268 = vmatmul.bf16.gmra.mxu0 %v2098
  %v3269 = vpop.f32.mrf.mxu0
  %v3270 = vadd.f32 %v3237, %v3269
  %v3271 = vpop.f32.mrf.mxu0
  %v3272 = vadd.f32 %v3239, %v3271
  %3273 = vmatmul.bf16.gmra.mxu0 %v2101
  %v3274 = vpop.f32.mrf.mxu0
  %v3275 = vadd.f32 %v3242, %v3274
  %v3276 = vpop.f32.mrf.mxu0
  %v3277 = vadd.f32 %v3244, %v3276
  %3278 = vmatmul.bf16.gmra.mxu0 %v2104
  %v3279 = vpop.f32.mrf.mxu0
  %v3280 = vadd.f32 %v3247, %v3279
  %v3281 = vpop.f32.mrf.mxu0
  %v3282 = vadd.f32 %v3249, %v3281
  %3283 = vmatmul.bf16.gmra.mxu0 %v2107
  %v3284 = vpop.f32.mrf.mxu0
  %v3285 = vadd.f32 %v3252, %v3284
  %v3286 = vpop.f32.mrf.mxu0
  %v3287 = vadd.f32 %v3254, %v3286
  %3288 = vmatmul.bf16.gmra.mxu0 %v2110
  %v3289 = vpop.f32.mrf.mxu0
  %v3290 = vadd.f32 %v3257, %v3289
  %v3291 = vpop.f32.mrf.mxu0
  %3292 = vdwg.mxu0
  %3293 = vmatpush.bf16.msra.mxu0 0
  %3294 = vmatpush.bf16.msra.mxu0 0
  %3295 = vmatpush.bf16.msra.mxu0 %v2705
  %3296 = vmatpush.bf16.msra.mxu0 %v2700
  %3297 = vmatpush.bf16.msra.mxu0 %v2695
  %3298 = vmatpush.bf16.msra.mxu0 %v2690
  %3299 = vmatpush.bf16.msra.mxu0 %v2685
  %3300 = vmatpush.bf16.msra.mxu0 %v2680
  %3301 = vmatmul.bf16.gmra.mxu0 %v2817
  %v3302 = vpop.f32.mrf.mxu0
  %v3303 = vadd.f32 %v3270, %v3302
  %v3304 = vpop.f32.mrf.mxu0
  %v3305 = vadd.f32 %v3272, %v3304
  %3306 = vmatmul.bf16.gmra.mxu0 %v2820
  %v3307 = vpop.f32.mrf.mxu0
  %v3308 = vadd.f32 %v3275, %v3307
  %v3309 = vpop.f32.mrf.mxu0
  %v3310 = vadd.f32 %v3277, %v3309
  %3311 = vmatmul.bf16.gmra.mxu0 %v2823
  %v3312 = vpop.f32.mrf.mxu0
  %v3313 = vadd.f32 %v3280, %v3312
  %v3314 = vpop.f32.mrf.mxu0
  %v3315 = vadd.f32 %v3282, %v3314
  %3316 = vmatmul.bf16.gmra.mxu0 %v2826
  %v3317 = vpop.f32.mrf.mxu0
  %v3318 = vadd.f32 %v3285, %v3317
  %v3319 = vpop.f32.mrf.mxu0
  %v3320 = vadd.f32 %v3287, %v3319
  %3321 = vmatmul.bf16.gmra.mxu0 %v2829
  %v3322 = vpop.f32.mrf.mxu0
  %v3323 = vadd.f32 %v3290, %v3322
  %v3324 = vpop.f32.mrf.mxu0
  %3325 = vdwg.mxu0
  %v3326 = vadd.f32 %v2025, %v2907
  %v3327 = vadd.f32 %v2026, %v3006
  %v3328 = vadd.f32 %v2027, %v3105
  %v3329 = vadd.f32 %v2028, %v3204
  %v3330 = vadd.f32 %v2029, %v3303
  %v3331 = vadd.f32 %v2030, %v2909
  %v3332 = vadd.f32 %v2031, %v3008
  %v3333 = vadd.f32 %v2032, %v3107
  %v3334 = vadd.f32 %v2033, %v3206
  %v3335 = vadd.f32 %v2034, %v3305
  %v3336 = vadd.f32 %v2035, %v2912
  %v3337 = vadd.f32 %v2036, %v3011
  %v3338 = vadd.f32 %v2037, %v3110
  %v3339 = vadd.f32 %v2038, %v3209
  %v3340 = vadd.f32 %v2039, %v3308
  %v3341 = vadd.f32 %v2040, %v2914
  %v3342 = vadd.f32 %v2041, %v3013
  %v3343 = vadd.f32 %v2042, %v3112
  %v3344 = vadd.f32 %v2043, %v3211
  %v3345 = vadd.f32 %v2044, %v3310
  %v3346 = vadd.f32 %v2045, %v2917
  %v3347 = vadd.f32 %v2046, %v3016
  %v3348 = vadd.f32 %v2047, %v3115
  %v3349 = vadd.f32 %v2048, %v3214
  %v3350 = vadd.f32 %v2049, %v3313
  %v3351 = vadd.f32 %v2050, %v2919
  %v3352 = vadd.f32 %v2051, %v3018
  %v3353 = vadd.f32 %v2052, %v3117
  %v3354 = vadd.f32 %v2053, %v3216
  %v3355 = vadd.f32 %v2054, %v3315
  %v3356 = vadd.f32 %v2055, %v2922
  %v3357 = vadd.f32 %v2056, %v3021
  %v3358 = vadd.f32 %v2057, %v3120
  %v3359 = vadd.f32 %v2058, %v3219
  %v3360 = vadd.f32 %v2059, %v3318
  %v3361 = vadd.f32 %v2060, %v2924
  %v3362 = vadd.f32 %v2061, %v3023
  %v3363 = vadd.f32 %v2062, %v3122
  %v3364 = vadd.f32 %v2063, %v3221
  %v3365 = vadd.f32 %v2064, %v3320
  %v3366 = vadd.f32 %v2065, %v2927
  %v3367 = vadd.f32 %v2066, %v3026
  %v3368 = vadd.f32 %v2067, %v3125
  %v3369 = vadd.f32 %v2068, %v3224
  %v3370 = vadd.f32 %v2069, %v3323
  %3371 = vst [vmem:[#allocation4] sm:$0xff] %v3326
  %3372 = vst [vmem:[#allocation4 + $0x8] sm:$0xff] %v3327
  %3373 = vst [vmem:[#allocation4 + $0x10] sm:$0xff] %v3328
  %3374 = vst [vmem:[#allocation4 + $0x18] sm:$0xff] %v3329
  %3375 = vst.msk [vmem:[#allocation4 + $0x20] sm:$0xff] %vm1983, %v3330
  %3376 = vst [vmem:[#allocation4 + $0x28] sm:$0xff] %v3331
  %3377 = vst [vmem:[#allocation4 + $0x30] sm:$0xff] %v3332
  %3378 = vst [vmem:[#allocation4 + $0x38] sm:$0xff] %v3333
  %3379 = vst [vmem:[#allocation4 + $0x40] sm:$0xff] %v3334
  %3380 = vst.msk [vmem:[#allocation4 + $0x48] sm:$0xff] %vm1983, %v3335
  %3381 = vst [vmem:[#allocation4 + $0x50] sm:$0xff] %v3336
  %3382 = vst [vmem:[#allocation4 + $0x58] sm:$0xff] %v3337
  %3383 = vst [vmem:[#allocation4 + $0x60] sm:$0xff] %v3338
  %3384 = vst [vmem:[#allocation4 + $0x68] sm:$0xff] %v3339
  %3385 = vst.msk [vmem:[#allocation4 + $0x70] sm:$0xff] %vm1983, %v3340
  %3386 = vst [vmem:[#allocation4 + $0x78] sm:$0xff] %v3341
  %3387 = vst [vmem:[#allocation4 + $0x80] sm:$0xff] %v3342
  %3388 = vst [vmem:[#allocation4 + $0x88] sm:$0xff] %v3343
  %3389 = vst [vmem:[#allocation4 + $0x90] sm:$0xff] %v3344
  %3390 = vst.msk [vmem:[#allocation4 + $0x98] sm:$0xff] %vm1983, %v3345
  %3391 = vst [vmem:[#allocation4 + $0xa0] sm:$0xff] %v3346
  %3392 = vst [vmem:[#allocation4 + $0xa8] sm:$0xff] %v3347
  %3393 = vst [vmem:[#allocation4 + $0xb0] sm:$0xff] %v3348
  %3394 = vst [vmem:[#allocation4 + $0xb8] sm:$0xff] %v3349
  %3395 = vst.msk [vmem:[#allocation4 + $0xc0] sm:$0xff] %vm1983, %v3350
  %3396 = vst [vmem:[#allocation4 + $0xc8] sm:$0xff] %v3351
  %3397 = vst [vmem:[#allocation4 + $0xd0] sm:$0xff] %v3352
  %3398 = vst [vmem:[#allocation4 + $0xd8] sm:$0xff] %v3353
  %3399 = vst [vmem:[#allocation4 + $0xe0] sm:$0xff] %v3354
  %3400 = vst.msk [vmem:[#allocation4 + $0xe8] sm:$0xff] %vm1983, %v3355
  %3401 = vst [vmem:[#allocation4 + $0xf0] sm:$0xff] %v3356
  %3402 = vst [vmem:[#allocation4 + $0xf8] sm:$0xff] %v3357
  %3403 = vst [vmem:[#allocation4 + $0x100] sm:$0xff] %v3358
  %3404 = vst [vmem:[#allocation4 + $0x108] sm:$0xff] %v3359
  %3405 = vst.msk [vmem:[#allocation4 + $0x110] sm:$0xff] %vm1983, %v3360
  %3406 = vst [vmem:[#allocation4 + $0x118] sm:$0xff] %v3361
  %3407 = vst [vmem:[#allocation4 + $0x120] sm:$0xff] %v3362
  %3408 = vst [vmem:[#allocation4 + $0x128] sm:$0xff] %v3363
  %3409 = vst [vmem:[#allocation4 + $0x130] sm:$0xff] %v3364
  %3410 = vst.msk [vmem:[#allocation4 + $0x138] sm:$0xff] %vm1983, %v3365
  %3411 = vst [vmem:[#allocation4 + $0x140] sm:$0xff] %v3366
  %3412 = vst [vmem:[#allocation4 + $0x148] sm:$0xff] %v3367
  %3413 = vst [vmem:[#allocation4 + $0x150] sm:$0xff] %v3368
  %3414 = vst [vmem:[#allocation4 + $0x158] sm:$0xff] %v3369
  %3415 = vst.msk [vmem:[#allocation4 + $0x160] sm:$0xff] %vm1983, %v3370
  %v3416 = vld [vmem:[#allocation4] sm:$0xff]
  %v3417 = vld [vmem:[#allocation4 + $0x8] sm:$0xff]
  %v3418 = vld [vmem:[#allocation4 + $0x10] sm:$0xff]
  %v3419 = vld [vmem:[#allocation4 + $0x18] sm:$0xff]
  %v3420 = vld [vmem:[#allocation4 + $0x20] sm:$0xff]
  %v3421 = vld [vmem:[#allocation4 + $0x28] sm:$0xff]
  %v3422 = vld [vmem:[#allocation4 + $0x30] sm:$0xff]
  %v3423 = vld [vmem:[#allocation4 + $0x38] sm:$0xff]
  %v3424 = vld [vmem:[#allocation4 + $0x40] sm:$0xff]
  %v3425 = vld [vmem:[#allocation4 + $0x48] sm:$0xff]
  %v3426 = vld [vmem:[#allocation4 + $0x50] sm:$0xff]
  %v3427 = vld [vmem:[#allocation4 + $0x58] sm:$0xff]
  %v3428 = vld [vmem:[#allocation4 + $0x60] sm:$0xff]
  %v3429 = vld [vmem:[#allocation4 + $0x68] sm:$0xff]
  %v3430 = vld [vmem:[#allocation4 + $0x70] sm:$0xff]
  %v3431 = vld [vmem:[#allocation4 + $0x78] sm:$0xff]
  %v3432 = vld [vmem:[#allocation4 + $0x80] sm:$0xff]
  %v3433 = vld [vmem:[#allocation4 + $0x88] sm:$0xff]
  %v3434 = vld [vmem:[#allocation4 + $0x90] sm:$0xff]
  %v3435 = vld [vmem:[#allocation4 + $0x98] sm:$0xff]
  %v3436 = vld [vmem:[#allocation4 + $0xa0] sm:$0xff]
  %v3437 = vld [vmem:[#allocation4 + $0xa8] sm:$0xff]
  %v3438 = vld [vmem:[#allocation4 + $0xb0] sm:$0xff]
  %v3439 = vld [vmem:[#allocation4 + $0xb8] sm:$0xff]
  %v3440 = vld [vmem:[#allocation4 + $0xc0] sm:$0xff]
  %v3441 = vld [vmem:[#allocation4 + $0xc8] sm:$0xff]
  %v3442 = vld [vmem:[#allocation4 + $0xd0] sm:$0xff]
  %v3443 = vld [vmem:[#allocation4 + $0xd8] sm:$0xff]
  %v3444 = vld [vmem:[#allocation4 + $0xe0] sm:$0xff]
  %v3445 = vld [vmem:[#allocation4 + $0xe8] sm:$0xff]
  %v3446 = vld [vmem:[#allocation4 + $0xf0] sm:$0xff]
  %v3447 = vld [vmem:[#allocation4 + $0xf8] sm:$0xff]
  %v3448 = vld [vmem:[#allocation4 + $0x100] sm:$0xff]
  %v3449 = vld [vmem:[#allocation4 + $0x108] sm:$0xff]
  %v3450 = vld [vmem:[#allocation4 + $0x110] sm:$0xff]
  %v3451 = vld [vmem:[#allocation4 + $0x118] sm:$0xff]
  %v3452 = vld [vmem:[#allocation4 + $0x120] sm:$0xff]
  %v3453 = vld [vmem:[#allocation4 + $0x128] sm:$0xff]
  %v3454 = vld [vmem:[#allocation4 + $0x130] sm:$0xff]
  %v3455 = vld [vmem:[#allocation4 + $0x138] sm:$0xff]
  %v3456 = vld [vmem:[#allocation4 + $0x140] sm:$0xff]
  %v3457 = vld [vmem:[#allocation4 + $0x148] sm:$0xff]
  %v3458 = vld [vmem:[#allocation4 + $0x150] sm:$0xff]
  %v3459 = vld [vmem:[#allocation4 + $0x158] sm:$0xff]
  %v3460 = vld [vmem:[#allocation4 + $0x160] sm:$0xff]
  %v3461 = vld [vmem:[#allocation3 + $0x18] sm:$0xff]
  %v3462 = vld [vmem:[#allocation3 + $0x20] sm:$0xff]
  %v3463 = vld [vmem:[#allocation3 + $0x28] sm:$0xff]
  %v3464 = vld [vmem:[#allocation3 + $0x30] sm:$0xff]
  %v3465 = vld [vmem:[#allocation3 + $0x38] sm:$0xff]
  %v3466 = vld [vmem:[#allocation3 + $0x40] sm:$0xff]
  %v3467 = vld [vmem:[#allocation3 + $0x48] sm:$0xff]
  %v3468 = vld [vmem:[#allocation3 + $0x50] sm:$0xff]
  %v3469 = vld [vmem:[#allocation3 + $0x58] sm:$0xff]
  %v3470 = vld [vmem:[#allocation3 + $0x60] sm:$0xff]
  %v3471 = vld [vmem:[#allocation3 + $0x68] sm:$0xff]
  %v3472 = vld [vmem:[#allocation3 + $0x70] sm:$0xff]
  %v3473 = vld [vmem:[#allocation3 + $0x78] sm:$0xff]
  %v3474 = vld [vmem:[#allocation3 + $0x80] sm:$0xff]
  %v3475 = vld [vmem:[#allocation3 + $0x88] sm:$0xff]
  %v3476 = vld [vmem:[#allocation3 + $0x90] sm:$0xff]
  %v3477 = vld [vmem:[#allocation3 + $0x98] sm:$0xff]
  %v3478 = vld [vmem:[#allocation3 + $0xa0] sm:$0xff]
  %v3479 = vld [vmem:[#allocation3 + $0xa8] sm:$0xff]
  %v3480 = vld [vmem:[#allocation3 + $0xb0] sm:$0xff]
  %v3481 = vld [vmem:[#allocation3 + $0xb8] sm:$0xff]
  %v3482 = vld [vmem:[#allocation3 + $0xc0] sm:$0xff]
  %v3483 = vld [vmem:[#allocation3 + $0xc8] sm:$0xff]
  %v3484 = vld [vmem:[#allocation3 + $0xd0] sm:$0xff]
  %v3485 = vld [vmem:[#allocation3 + $0xd8] sm:$0xff]
  %v3486 = vld [vmem:[#allocation3 + $0xe0] sm:$0xff]
  %v3487 = vld [vmem:[#allocation3 + $0xe8] sm:$0xff]
  %v3488 = vpack.c.bf16 %v3464, %v3461
  %v3489 = vpack.c.bf16 %v3465, %v3462
  %v3490 = vpack.c.bf16 %v3466, %v3463
  %v3491 = vpack.c.bf16 %v3470, %v3467
  %v3492 = vpack.c.bf16 %v3471, %v3468
  %v3493 = vpack.c.bf16 %v3472, %v3469
  %v3494 = vpack.c.bf16 %v3476, %v3473
  %v3495 = vpack.c.bf16 %v3477, %v3474
  %v3496 = vpack.c.bf16 %v3478, %v3475
  %v3497 = vpack.c.bf16 %v3482, %v3479
  %v3498 = vpack.c.bf16 %v3483, %v3480
  %v3499 = vpack.c.bf16 %v3484, %v3481
  %v3500 = vpack.c.bf16 %v3485, %v3485
  %v3501 = vpack.c.bf16 %v3486, %v3486
  %v3502 = vpack.c.bf16 %v3487, %v3487
  %s3503 = scalar_lea.vmem %s6, 880
  %v3504 = vld [vmem:[%s3503] sm:$0xff]
  %v3505 = vld [vmem:[%s3503 + $0x8] sm:$0xff]
  %v3506 = vld [vmem:[%s3503 + $0x10] sm:$0xf]
  %v3507 = vld [vmem:[%s3503 + $0x14] sm:$0xff]
  %v3508 = vld [vmem:[%s3503 + $0x1c] sm:$0xff]
  %v3509 = vld [vmem:[%s3503 + $0x24] sm:$0xf]
  %v3510 = vld [vmem:[%s3503 + $0x28] sm:$0xff]
  %v3511 = vld [vmem:[%s3503 + $0x30] sm:$0xff]
  %v3512 = vld [vmem:[%s3503 + $0x38] sm:$0xf]
  %v3513 = vld [vmem:[%s3503 + $0x3c] sm:$0xff]
  %v3514 = vld [vmem:[%s3503 + $0x44] sm:$0xff]
  %v3515 = vld [vmem:[%s3503 + $0x4c] sm:$0xf]
  %v3516 = vld [vmem:[%s3503 + $0x50] sm:$0xff]
  %v3517 = vld [vmem:[%s3503 + $0x58] sm:$0xff]
  %v3518 = vld [vmem:[%s3503 + $0x60] sm:$0xf]
  %v3519 = vld [vmem:[%s3503 + $0x64] sm:$0xff]
  %v3520 = vld [vmem:[%s3503 + $0x6c] sm:$0xff]
  %v3521 = vld [vmem:[%s3503 + $0x74] sm:$0xf]
  %v3522 = vld [vmem:[%s3503 + $0x78] sm:$0xff]
  %v3523 = vld [vmem:[%s3503 + $0x80] sm:$0xff]
  %v3524 = vld [vmem:[%s3503 + $0x88] sm:$0xf]
  %v3525 = vld [vmem:[%s3503 + $0x8c] sm:$0xff]
  %v3526 = vld [vmem:[%s3503 + $0x94] sm:$0xff]
  %v3527 = vld [vmem:[%s3503 + $0x9c] sm:$0xf]
  %v3528 = vld [vmem:[%s3503 + $0xa0] sm:$0xff]
  %v3529 = vld [vmem:[%s3503 + $0xa8] sm:$0xff]
  %v3530 = vld [vmem:[%s3503 + $0xb0] sm:$0xf]
  %v3531 = vld [vmem:[%s3503 + $0xb4] sm:$0xff]
  %v3532 = vld [vmem:[%s3503 + $0xbc] sm:$0xff]
  %v3533 = vld [vmem:[%s3503 + $0xc4] sm:$0xf]
  %v3534 = vld [vmem:[%s3503 + $0xc8] sm:$0xff]
  %v3535 = vld [vmem:[%s3503 + $0xd0] sm:$0xff]
  %v3536 = vld [vmem:[%s3503 + $0xd8] sm:$0xf]
  %v3537 = vld [vmem:[%s3503 + $0xdc] sm:$0xff]
  %v3538 = vld [vmem:[%s3503 + $0xe4] sm:$0xff]
  %v3539 = vld [vmem:[%s3503 + $0xec] sm:$0xf]
  %v3540 = vld [vmem:[%s3503 + $0xf0] sm:$0xff]
  %v3541 = vld [vmem:[%s3503 + $0xf8] sm:$0xff]
  %v3542 = vld [vmem:[%s3503 + $0x100] sm:$0xf]
  %v3543 = vld [vmem:[%s3503 + $0x104] sm:$0xff]
  %v3544 = vld [vmem:[%s3503 + $0x10c] sm:$0xff]
  %v3545 = vld [vmem:[%s3503 + $0x114] sm:$0xf]
  %v3546 = vld [vmem:[%s3503 + $0x118] sm:$0xff]
  %v3547 = vld [vmem:[%s3503 + $0x120] sm:$0xff]
  %v3548 = vld [vmem:[%s3503 + $0x128] sm:$0xf]
  %v3549 = vld [vmem:[%s3503 + $0x12c] sm:$0xff]
  %v3550 = vld [vmem:[%s3503 + $0x134] sm:$0xff]
  %v3551 = vld [vmem:[%s3503 + $0x13c] sm:$0xf]
  %v3552 = vld [vmem:[%s3503 + $0x140] sm:$0xff]
  %v3553 = vld [vmem:[%s3503 + $0x148] sm:$0xff]
  %v3554 = vld [vmem:[%s3503 + $0x150] sm:$0xf]
  %v3555 = vld [vmem:[%s3503 + $0x154] sm:$0xff]
  %v3556 = vld [vmem:[%s3503 + $0x15c] sm:$0xff]
  %v3557 = vld [vmem:[%s3503 + $0x164] sm:$0xf]
  %v3558 = vld [vmem:[%s3503 + $0x168] sm:$0xff]
  %v3559 = vld [vmem:[%s3503 + $0x170] sm:$0xff]
  %v3560 = vld [vmem:[%s3503 + $0x178] sm:$0xf]
  %v3561 = vld [vmem:[%s3503 + $0x17c] sm:$0xff]
  %v3562 = vld [vmem:[%s3503 + $0x184] sm:$0xff]
  %v3563 = vld [vmem:[%s3503 + $0x18c] sm:$0xf]
  %v3564 = vld [vmem:[%s3503 + $0x190] sm:$0xff]
  %v3565 = vld [vmem:[%s3503 + $0x198] sm:$0xff]
  %v3566 = vld [vmem:[%s3503 + $0x1a0] sm:$0xf]
  %v3567 = vld [vmem:[%s3503 + $0x1a4] sm:$0xff]
  %v3568 = vld [vmem:[%s3503 + $0x1ac] sm:$0xff]
  %v3569 = vld [vmem:[%s3503 + $0x1b4] sm:$0xf]
  %v3570 = vld [vmem:[%s3503 + $0x1b8] sm:$0xff]
  %v3571 = vld [vmem:[%s3503 + $0x1c0] sm:$0xff]
  %v3572 = vld [vmem:[%s3503 + $0x1c8] sm:$0xf]
  %v3573 = vld [vmem:[%s3503 + $0x1cc] sm:$0xff]
  %v3574 = vld [vmem:[%s3503 + $0x1d4] sm:$0xff]
  %v3575 = vld [vmem:[%s3503 + $0x1dc] sm:$0xf]
  %v3576 = vld [vmem:[%s3503 + $0x1e0] sm:$0xff]
  %v3577 = vld [vmem:[%s3503 + $0x1e8] sm:$0xff]
  %v3578 = vld [vmem:[%s3503 + $0x1f0] sm:$0xf]
  %v3579 = vld [vmem:[%s3503 + $0x1f4] sm:$0xff]
  %v3580 = vld [vmem:[%s3503 + $0x1fc] sm:$0xff]
  %v3581 = vld [vmem:[%s3503 + $0x204] sm:$0xf]
  %v3582 = vld [vmem:[%s3503 + $0x208] sm:$0xff]
  %v3583 = vld [vmem:[%s3503 + $0x210] sm:$0xff]
  %v3584 = vld [vmem:[%s3503 + $0x218] sm:$0xf]
  %v3585 = vld [vmem:[%s3503 + $0x21c] sm:$0xff]
  %v3586 = vld [vmem:[%s3503 + $0x224] sm:$0xff]
  %v3587 = vld [vmem:[%s3503 + $0x22c] sm:$0xf]
  %v3588 = vld [vmem:[%s3503 + $0x230] sm:$0xff]
  %v3589 = vld [vmem:[%s3503 + $0x238] sm:$0xff]
  %v3590 = vld [vmem:[%s3503 + $0x240] sm:$0xf]
  %v3591 = vld [vmem:[%s3503 + $0x244] sm:$0xff]
  %v3592 = vld [vmem:[%s3503 + $0x24c] sm:$0xff]
  %v3593 = vld [vmem:[%s3503 + $0x254] sm:$0xf]
  %v3594 = vld [vmem:[%s3503 + $0x258] sm:$0xff]
  %v3595 = vld [vmem:[%s3503 + $0x260] sm:$0xff]
  %v3596 = vld [vmem:[%s3503 + $0x268] sm:$0xf]
  %v3597 = vld [vmem:[%s3503 + $0x26c] sm:$0xff]
  %v3598 = vld [vmem:[%s3503 + $0x274] sm:$0xff]
  %v3599 = vld [vmem:[%s3503 + $0x27c] sm:$0xf]
  %v3600 = vld [vmem:[%s3503 + $0x280] sm:$0xff]
  %v3601 = vld [vmem:[%s3503 + $0x288] sm:$0xff]
  %v3602 = vld [vmem:[%s3503 + $0x290] sm:$0xf]
  %v3603 = vld [vmem:[%s3503 + $0x294] sm:$0xff]
  %v3604 = vld [vmem:[%s3503 + $0x29c] sm:$0xff]
  %v3605 = vld [vmem:[%s3503 + $0x2a4] sm:$0xf]
  %v3606 = vld [vmem:[%s3503 + $0x2a8] sm:$0xff]
  %v3607 = vld [vmem:[%s3503 + $0x2b0] sm:$0xff]
  %v3608 = vld [vmem:[%s3503 + $0x2b8] sm:$0xf]
  %v3609 = vld [vmem:[%s3503 + $0x2bc] sm:$0xff]
  %v3610 = vld [vmem:[%s3503 + $0x2c4] sm:$0xff]
  %v3611 = vld [vmem:[%s3503 + $0x2cc] sm:$0xf]
  %v3612 = vld [vmem:[%s3503 + $0x2d0] sm:$0xff]
  %v3613 = vld [vmem:[%s3503 + $0x2d8] sm:$0xff]
  %v3614 = vld [vmem:[%s3503 + $0x2e0] sm:$0xf]
  %v3615 = vld [vmem:[%s3503 + $0x2e4] sm:$0xff]
  %v3616 = vld [vmem:[%s3503 + $0x2ec] sm:$0xff]
  %v3617 = vld [vmem:[%s3503 + $0x2f4] sm:$0xf]
  %v3618 = vld [vmem:[%s3503 + $0x2f8] sm:$0xff]
  %v3619 = vld [vmem:[%s3503 + $0x300] sm:$0xff]
  %v3620 = vld [vmem:[%s3503 + $0x308] sm:$0xf]
  %v3621 = vld [vmem:[%s3503 + $0x30c] sm:$0xff]
  %v3622 = vld [vmem:[%s3503 + $0x314] sm:$0xff]
  %v3623 = vld [vmem:[%s3503 + $0x31c] sm:$0xf]
  %v3624 = vld [vmem:[%s3503 + $0x320] sm:$0xff]
  %v3625 = vld [vmem:[%s3503 + $0x328] sm:$0xff]
  %v3626 = vld [vmem:[%s3503 + $0x330] sm:$0xf]
  %v3627 = vld [vmem:[%s3503 + $0x334] sm:$0xff]
  %v3628 = vld [vmem:[%s3503 + $0x33c] sm:$0xff]
  %v3629 = vld [vmem:[%s3503 + $0x344] sm:$0xf]
  %v3630 = vld [vmem:[%s3503 + $0x348] sm:$0xff]
  %v3631 = vld [vmem:[%s3503 + $0x350] sm:$0xff]
  %v3632 = vld [vmem:[%s3503 + $0x358] sm:$0xf]
  %v3633 = vld [vmem:[%s3503 + $0x35c] sm:$0xff]
  %v3634 = vld [vmem:[%s3503 + $0x364] sm:$0xff]
  %v3635 = vld [vmem:[%s3503 + $0x36c] sm:$0xf]
  %v3768 = vunpack.c.l.b16 %v3504
  %v3769 = vunpack.c.h.b16 %v3504
  %v3770 = vunpack.c.l.b16 %v3505
  %v3771 = vunpack.c.h.b16 %v3505
  %v3772 = vunpack.c.l.b16 %v3506
  %v3773 = vunpack.c.l.b16 %v3507
  %v3774 = vunpack.c.h.b16 %v3507
  %v3775 = vunpack.c.l.b16 %v3508
  %v3776 = vunpack.c.h.b16 %v3508
  %v3777 = vunpack.c.l.b16 %v3509
  %v3778 = vunpack.c.l.b16 %v3510
  %v3779 = vunpack.c.h.b16 %v3510
  %v3780 = vunpack.c.l.b16 %v3511
  %v3781 = vunpack.c.h.b16 %v3511
  %v3782 = vunpack.c.l.b16 %v3512
  %v3783 = vunpack.c.l.b16 %v3513
  %v3784 = vunpack.c.h.b16 %v3513
  %v3785 = vunpack.c.l.b16 %v3514
  %v3786 = vunpack.c.h.b16 %v3514
  %v3787 = vunpack.c.l.b16 %v3515
  %v3788 = vunpack.c.l.b16 %v3516
  %v3789 = vunpack.c.h.b16 %v3516
  %v3790 = vunpack.c.l.b16 %v3517
  %v3791 = vunpack.c.h.b16 %v3517
  %v3792 = vunpack.c.l.b16 %v3518
  %v3793 = vunpack.c.l.b16 %v3519
  %v3794 = vunpack.c.h.b16 %v3519
  %v3795 = vunpack.c.l.b16 %v3520
  %v3796 = vunpack.c.h.b16 %v3520
  %v3797 = vunpack.c.l.b16 %v3521
  %v3798 = vunpack.c.l.b16 %v3522
  %v3799 = vunpack.c.h.b16 %v3522
  %v3800 = vunpack.c.l.b16 %v3523
  %v3801 = vunpack.c.h.b16 %v3523
  %v3802 = vunpack.c.l.b16 %v3524
  %v3803 = vunpack.c.l.b16 %v3525
  %v3804 = vunpack.c.h.b16 %v3525
  %v3805 = vunpack.c.l.b16 %v3526
  %v3806 = vunpack.c.h.b16 %v3526
  %v3807 = vunpack.c.l.b16 %v3527
  %v3808 = vunpack.c.l.b16 %v3528
  %v3809 = vunpack.c.h.b16 %v3528
  %v3810 = vunpack.c.l.b16 %v3529
  %v3811 = vunpack.c.h.b16 %v3529
  %v3812 = vunpack.c.l.b16 %v3530
  %v3813 = vunpack.c.l.b16 %v3531
  %v3814 = vunpack.c.h.b16 %v3531
  %v3815 = vunpack.c.l.b16 %v3532
  %v3816 = vunpack.c.h.b16 %v3532
  %v3817 = vunpack.c.l.b16 %v3533
  %v3818 = vunpack.c.l.b16 %v3534
  %v3819 = vunpack.c.h.b16 %v3534
  %v3820 = vunpack.c.l.b16 %v3535
  %v3821 = vunpack.c.h.b16 %v3535
  %v3822 = vunpack.c.l.b16 %v3536
  %v3823 = vunpack.c.l.b16 %v3537
  %v3824 = vunpack.c.h.b16 %v3537
  %v3825 = vunpack.c.l.b16 %v3538
  %v3826 = vunpack.c.h.b16 %v3538
  %v3827 = vunpack.c.l.b16 %v3539
  %v3828 = vunpack.c.l.b16 %v3540
  %v3829 = vunpack.c.h.b16 %v3540
  %v3830 = vunpack.c.l.b16 %v3541
  %v3831 = vunpack.c.h.b16 %v3541
  %v3832 = vunpack.c.l.b16 %v3542
  %v3833 = vunpack.c.l.b16 %v3543
  %v3834 = vunpack.c.h.b16 %v3543
  %v3835 = vunpack.c.l.b16 %v3544
  %v3836 = vunpack.c.h.b16 %v3544
  %v3837 = vunpack.c.l.b16 %v3545
  %v3838 = vunpack.c.l.b16 %v3546
  %v3839 = vunpack.c.h.b16 %v3546
  %v3840 = vunpack.c.l.b16 %v3547
  %v3841 = vunpack.c.h.b16 %v3547
  %v3842 = vunpack.c.l.b16 %v3548
  %v3843 = vunpack.c.l.b16 %v3549
  %v3844 = vunpack.c.h.b16 %v3549
  %v3845 = vunpack.c.l.b16 %v3550
  %v3846 = vunpack.c.h.b16 %v3550
  %v3847 = vunpack.c.l.b16 %v3551
  %v3848 = vunpack.c.l.b16 %v3552
  %v3849 = vunpack.c.h.b16 %v3552
  %v3850 = vunpack.c.l.b16 %v3553
  %v3851 = vunpack.c.h.b16 %v3553
  %v3852 = vunpack.c.l.b16 %v3554
  %v3853 = vunpack.c.l.b16 %v3555
  %v3854 = vunpack.c.h.b16 %v3555
  %v3855 = vunpack.c.l.b16 %v3556
  %v3856 = vunpack.c.h.b16 %v3556
  %v3857 = vunpack.c.l.b16 %v3557
  %v3858 = vunpack.c.l.b16 %v3558
  %v3859 = vunpack.c.h.b16 %v3558
  %v3860 = vunpack.c.l.b16 %v3559
  %v3861 = vunpack.c.h.b16 %v3559
  %v3862 = vunpack.c.l.b16 %v3560
  %v3863 = vunpack.c.l.b16 %v3561
  %v3864 = vunpack.c.h.b16 %v3561
  %v3865 = vunpack.c.l.b16 %v3562
  %v3866 = vunpack.c.h.b16 %v3562
  %v3867 = vunpack.c.l.b16 %v3563
  %v3868 = vunpack.c.l.b16 %v3564
  %v3869 = vunpack.c.h.b16 %v3564
  %v3870 = vunpack.c.l.b16 %v3565
  %v3871 = vunpack.c.h.b16 %v3565
  %v3872 = vunpack.c.l.b16 %v3566
  %v3873 = vunpack.c.l.b16 %v3567
  %v3874 = vunpack.c.h.b16 %v3567
  %v3875 = vunpack.c.l.b16 %v3568
  %v3876 = vunpack.c.h.b16 %v3568
  %v3877 = vunpack.c.l.b16 %v3569
  %v3878 = vunpack.c.l.b16 %v3570
  %v3879 = vunpack.c.h.b16 %v3570
  %v3880 = vunpack.c.l.b16 %v3571
  %v3881 = vunpack.c.h.b16 %v3571
  %v3882 = vunpack.c.l.b16 %v3572
  %v3883 = vunpack.c.l.b16 %v3573
  %v3884 = vunpack.c.h.b16 %v3573
  %v3885 = vunpack.c.l.b16 %v3574
  %v3886 = vunpack.c.h.b16 %v3574
  %v3887 = vunpack.c.l.b16 %v3575
  %v3888 = vunpack.c.l.b16 %v3576
  %v3889 = vunpack.c.h.b16 %v3576
  %v3890 = vunpack.c.l.b16 %v3577
  %v3891 = vunpack.c.h.b16 %v3577
  %v3892 = vunpack.c.l.b16 %v3578
  %v3893 = vunpack.c.l.b16 %v3579
  %v3894 = vunpack.c.h.b16 %v3579
  %v3895 = vunpack.c.l.b16 %v3580
  %v3896 = vunpack.c.h.b16 %v3580
  %v3897 = vunpack.c.l.b16 %v3581
  %v3898 = vunpack.c.l.b16 %v3582
  %v3899 = vunpack.c.h.b16 %v3582
  %v3900 = vunpack.c.l.b16 %v3583
  %v3901 = vunpack.c.h.b16 %v3583
  %v3902 = vunpack.c.l.b16 %v3584
  %v3903 = vunpack.c.l.b16 %v3585
  %v3904 = vunpack.c.h.b16 %v3585
  %v3905 = vunpack.c.l.b16 %v3586
  %v3906 = vunpack.c.h.b16 %v3586
  %v3907 = vunpack.c.l.b16 %v3587
  %v3908 = vunpack.c.l.b16 %v3588
  %v3909 = vunpack.c.h.b16 %v3588
  %v3910 = vunpack.c.l.b16 %v3589
  %v3911 = vunpack.c.h.b16 %v3589
  %v3912 = vunpack.c.l.b16 %v3590
  %v3913 = vunpack.c.l.b16 %v3591
  %v3914 = vunpack.c.h.b16 %v3591
  %v3915 = vunpack.c.l.b16 %v3592
  %v3916 = vunpack.c.h.b16 %v3592
  %v3917 = vunpack.c.l.b16 %v3593
  %v3918 = vunpack.c.l.b16 %v3594
  %v3919 = vunpack.c.h.b16 %v3594
  %v3920 = vunpack.c.l.b16 %v3595
  %v3921 = vunpack.c.h.b16 %v3595
  %v3922 = vunpack.c.l.b16 %v3596
  %v3923 = vunpack.c.l.b16 %v3597
  %v3924 = vunpack.c.h.b16 %v3597
  %v3925 = vunpack.c.l.b16 %v3598
  %v3926 = vunpack.c.h.b16 %v3598
  %v3927 = vunpack.c.l.b16 %v3599
  %v3928 = vunpack.c.l.b16 %v3600
  %v3929 = vunpack.c.h.b16 %v3600
  %v3930 = vunpack.c.l.b16 %v3601
  %v3931 = vunpack.c.h.b16 %v3601
  %v3932 = vunpack.c.l.b16 %v3602
  %v3933 = vunpack.c.l.b16 %v3603
  %v3934 = vunpack.c.h.b16 %v3603
  %v3935 = vunpack.c.l.b16 %v3604
  %v3936 = vunpack.c.h.b16 %v3604
  %v3937 = vunpack.c.l.b16 %v3605
  %v3938 = vunpack.c.l.b16 %v3606
  %v3939 = vunpack.c.h.b16 %v3606
  %v3940 = vunpack.c.l.b16 %v3607
  %v3941 = vunpack.c.h.b16 %v3607
  %v3942 = vunpack.c.l.b16 %v3608
  %v3943 = vunpack.c.l.b16 %v3609
  %v3944 = vunpack.c.h.b16 %v3609
  %v3945 = vunpack.c.l.b16 %v3610
  %v3946 = vunpack.c.h.b16 %v3610
  %v3947 = vunpack.c.l.b16 %v3611
  %v3948 = vunpack.c.l.b16 %v3612
  %v3949 = vunpack.c.h.b16 %v3612
  %v3950 = vunpack.c.l.b16 %v3613
  %v3951 = vunpack.c.h.b16 %v3613
  %v3952 = vunpack.c.l.b16 %v3614
  %v3953 = vunpack.c.l.b16 %v3615
  %v3954 = vunpack.c.h.b16 %v3615
  %v3955 = vunpack.c.l.b16 %v3616
  %v3956 = vunpack.c.h.b16 %v3616
  %v3957 = vunpack.c.l.b16 %v3617
  %v3958 = vunpack.c.l.b16 %v3618
  %v3959 = vunpack.c.h.b16 %v3618
  %v3960 = vunpack.c.l.b16 %v3619
  %v3961 = vunpack.c.h.b16 %v3619
  %v3962 = vunpack.c.l.b16 %v3620
  %v3963 = vunpack.c.l.b16 %v3621
  %v3964 = vunpack.c.h.b16 %v3621
  %v3965 = vunpack.c.l.b16 %v3622
  %v3966 = vunpack.c.h.b16 %v3622
  %v3967 = vunpack.c.l.b16 %v3623
  %v3968 = vunpack.c.l.b16 %v3624
  %v3969 = vunpack.c.h.b16 %v3624
  %v3970 = vunpack.c.l.b16 %v3625
  %v3971 = vunpack.c.h.b16 %v3625
  %v3972 = vunpack.c.l.b16 %v3626
  %v3973 = vunpack.c.l.b16 %v3627
  %v3974 = vunpack.c.h.b16 %v3627
  %v3975 = vunpack.c.l.b16 %v3628
  %v3976 = vunpack.c.h.b16 %v3628
  %v3977 = vunpack.c.l.b16 %v3629
  %v3978 = vunpack.c.l.b16 %v3630
  %v3979 = vunpack.c.h.b16 %v3630
  %v3980 = vunpack.c.l.b16 %v3631
  %v3981 = vunpack.c.h.b16 %v3631
  %v3982 = vunpack.c.l.b16 %v3632
  %v3983 = vunpack.c.l.b16 %v3633
  %v3984 = vunpack.c.h.b16 %v3633
  %v3985 = vunpack.c.l.b16 %v3634
  %v3986 = vunpack.c.h.b16 %v3634
  %v3987 = vunpack.c.l.b16 %v3635
  %v3988 = vpack.c.b16 %v3773, %v3768
  %v3989 = vpack.c.b16 %v3774, %v3769
  %v3990 = vpack.c.b16 %v3775, %v3770
  %v3991 = vpack.c.b16 %v3776, %v3771
  %v3992 = vpack.c.b16 %v3777, %v3772
  %v3993 = vpack.c.b16 %v3783, %v3778
  %v3994 = vpack.c.b16 %v3784, %v3779
  %v3995 = vpack.c.b16 %v3785, %v3780
  %v3996 = vpack.c.b16 %v3786, %v3781
  %v3997 = vpack.c.b16 %v3787, %v3782
  %v3998 = vpack.c.b16 %v3793, %v3788
  %v3999 = vpack.c.b16 %v3794, %v3789
  %v4000 = vpack.c.b16 %v3795, %v3790
  %v4001 = vpack.c.b16 %v3796, %v3791
  %v4002 = vpack.c.b16 %v3797, %v3792
  %v4003 = vpack.c.b16 %v3803, %v3798
  %v4004 = vpack.c.b16 %v3804, %v3799
  %v4005 = vpack.c.b16 %v3805, %v3800
  %v4006 = vpack.c.b16 %v3806, %v3801
  %v4007 = vpack.c.b16 %v3807, %v3802
  %v4008 = vpack.c.b16 %v3813, %v3808
  %v4009 = vpack.c.b16 %v3814, %v3809
  %v4010 = vpack.c.b16 %v3815, %v3810
  %v4011 = vpack.c.b16 %v3816, %v3811
  %v4012 = vpack.c.b16 %v3817, %v3812
  %v4013 = vpack.c.b16 %v3823, %v3818
  %v4014 = vpack.c.b16 %v3824, %v3819
  %v4015 = vpack.c.b16 %v3825, %v3820
  %v4016 = vpack.c.b16 %v3826, %v3821
  %v4017 = vpack.c.b16 %v3827, %v3822
  %v4018 = vpack.c.b16 %v3833, %v3828
  %v4019 = vpack.c.b16 %v3834, %v3829
  %v4020 = vpack.c.b16 %v3835, %v3830
  %v4021 = vpack.c.b16 %v3836, %v3831
  %v4022 = vpack.c.b16 %v3837, %v3832
  %v4023 = vpack.c.b16 %v3843, %v3838
  %v4024 = vpack.c.b16 %v3844, %v3839
  %v4025 = vpack.c.b16 %v3845, %v3840
  %v4026 = vpack.c.b16 %v3846, %v3841
  %v4027 = vpack.c.b16 %v3847, %v3842
  %v4028 = vpack.c.b16 %v3853, %v3848
  %v4029 = vpack.c.b16 %v3854, %v3849
  %v4030 = vpack.c.b16 %v3855, %v3850
  %v4031 = vpack.c.b16 %v3856, %v3851
  %v4032 = vpack.c.b16 %v3857, %v3852
  %v4033 = vpack.c.b16 %v3863, %v3858
  %v4034 = vpack.c.b16 %v3864, %v3859
  %v4035 = vpack.c.b16 %v3865, %v3860
  %v4036 = vpack.c.b16 %v3866, %v3861
  %v4037 = vpack.c.b16 %v3867, %v3862
  %v4038 = vpack.c.b16 %v3873, %v3868
  %v4039 = vpack.c.b16 %v3874, %v3869
  %v4040 = vpack.c.b16 %v3875, %v3870
  %v4041 = vpack.c.b16 %v3876, %v3871
  %v4042 = vpack.c.b16 %v3877, %v3872
  %v4043 = vpack.c.b16 %v3883, %v3878
  %v4044 = vpack.c.b16 %v3884, %v3879
  %v4045 = vpack.c.b16 %v3885, %v3880
  %v4046 = vpack.c.b16 %v3886, %v3881
  %v4047 = vpack.c.b16 %v3887, %v3882
  %v4048 = vpack.c.b16 %v3893, %v3888
  %v4049 = vpack.c.b16 %v3894, %v3889
  %v4050 = vpack.c.b16 %v3895, %v3890
  %v4051 = vpack.c.b16 %v3896, %v3891
  %v4052 = vpack.c.b16 %v3897, %v3892
  %v4053 = vpack.c.b16 %v3903, %v3898
  %v4054 = vpack.c.b16 %v3904, %v3899
  %v4055 = vpack.c.b16 %v3905, %v3900
  %v4056 = vpack.c.b16 %v3906, %v3901
  %v4057 = vpack.c.b16 %v3907, %v3902
  %v4058 = vpack.c.b16 %v3913, %v3908
  %v4059 = vpack.c.b16 %v3914, %v3909
  %v4060 = vpack.c.b16 %v3915, %v3910
  %v4061 = vpack.c.b16 %v3916, %v3911
  %v4062 = vpack.c.b16 %v3917, %v3912
  %v4063 = vpack.c.b16 %v3923, %v3918
  %v4064 = vpack.c.b16 %v3924, %v3919
  %v4065 = vpack.c.b16 %v3925, %v3920
  %v4066 = vpack.c.b16 %v3926, %v3921
  %v4067 = vpack.c.b16 %v3927, %v3922
  %v4068 = vpack.c.b16 %v3933, %v3928
  %v4069 = vpack.c.b16 %v3934, %v3929
  %v4070 = vpack.c.b16 %v3935, %v3930
  %v4071 = vpack.c.b16 %v3936, %v3931
  %v4072 = vpack.c.b16 %v3937, %v3932
  %v4073 = vpack.c.b16 %v3943, %v3938
  %v4074 = vpack.c.b16 %v3944, %v3939
  %v4075 = vpack.c.b16 %v3945, %v3940
  %v4076 = vpack.c.b16 %v3946, %v3941
  %v4077 = vpack.c.b16 %v3947, %v3942
  %v4078 = vpack.c.b16 %v3953, %v3948
  %v4079 = vpack.c.b16 %v3954, %v3949
  %v4080 = vpack.c.b16 %v3955, %v3950
  %v4081 = vpack.c.b16 %v3956, %v3951
  %v4082 = vpack.c.b16 %v3957, %v3952
  %v4083 = vpack.c.b16 %v3963, %v3958
  %v4084 = vpack.c.b16 %v3964, %v3959
  %v4085 = vpack.c.b16 %v3965, %v3960
  %v4086 = vpack.c.b16 %v3966, %v3961
  %v4087 = vpack.c.b16 %v3967, %v3962
  %v4088 = vpack.c.b16 %v3973, %v3968
  %v4089 = vpack.c.b16 %v3974, %v3969
  %v4090 = vpack.c.b16 %v3975, %v3970
  %v4091 = vpack.c.b16 %v3976, %v3971
  %v4092 = vpack.c.b16 %v3977, %v3972
  %v4093 = vpack.c.b16 %v3983, %v3978
  %v4094 = vpack.c.b16 %v3984, %v3979
  %v4095 = vpack.c.b16 %v3985, %v3980
  %v4096 = vpack.c.b16 %v3986, %v3981
  %v4097 = vpack.c.b16 %v3987, %v3982
  %v4209 = vsel %vm951, %v3490, 0
  %v4212 = vsel %vm951, %v3493, 0
  %v4215 = vsel %vm951, %v3496, 0
  %v4218 = vsel %vm951, %v3499, 0
  %v4221 = vsel %vm951, %v3502, 0
  %4223 = vmatpush.bf16.msra.mxu0 %v4023
  %4224 = vmatpush.bf16.msra.mxu0 %v4018
  %4225 = vmatpush.bf16.msra.mxu0 %v4013
  %4226 = vmatpush.bf16.msra.mxu0 %v4008
  %4227 = vmatpush.bf16.msra.mxu0 %v4003
  %4228 = vmatpush.bf16.msra.mxu0 %v3998
  %4229 = vmatpush.bf16.msra.mxu0 %v3993
  %4230 = vmatpush.bf16.msra.mxu0 %v3988
  %4231 = vmatmul.bf16.gmra.mxu0 %v3488
  %v4232 = vpop.f32.mrf.mxu0
  %v4233 = vadd.f32 0.0, %v4232
  %v4234 = vpop.f32.mrf.mxu0
  %v4235 = vadd.f32 0.0, %v4234
  %4236 = vmatmul.bf16.gmra.mxu0 %v3491
  %v4237 = vpop.f32.mrf.mxu0
  %v4238 = vadd.f32 0.0, %v4237
  %v4239 = vpop.f32.mrf.mxu0
  %v4240 = vadd.f32 0.0, %v4239
  %4241 = vmatmul.bf16.gmra.mxu0 %v3494
  %v4242 = vpop.f32.mrf.mxu0
  %v4243 = vadd.f32 0.0, %v4242
  %v4244 = vpop.f32.mrf.mxu0
  %v4245 = vadd.f32 0.0, %v4244
  %4246 = vmatmul.bf16.gmra.mxu0 %v3497
  %v4247 = vpop.f32.mrf.mxu0
  %v4248 = vadd.f32 0.0, %v4247
  %v4249 = vpop.f32.mrf.mxu0
  %v4250 = vadd.f32 0.0, %v4249
  %4251 = vmatmul.bf16.gmra.mxu0 %v3500
  %v4252 = vpop.f32.mrf.mxu0
  %v4253 = vadd.f32 0.0, %v4252
  %v4254 = vpop.f32.mrf.mxu0
  %4255 = vdwg.mxu0
  %4256 = vmatpush.bf16.msra.mxu0 %v4063
  %4257 = vmatpush.bf16.msra.mxu0 %v4058
  %4258 = vmatpush.bf16.msra.mxu0 %v4053
  %4259 = vmatpush.bf16.msra.mxu0 %v4048
  %4260 = vmatpush.bf16.msra.mxu0 %v4043
  %4261 = vmatpush.bf16.msra.mxu0 %v4038
  %4262 = vmatpush.bf16.msra.mxu0 %v4033
  %4263 = vmatpush.bf16.msra.mxu0 %v4028
  %4264 = vmatmul.bf16.gmra.mxu0 %v3489
  %v4265 = vpop.f32.mrf.mxu0
  %v4266 = vadd.f32 %v4233, %v4265
  %v4267 = vpop.f32.mrf.mxu0
  %v4268 = vadd.f32 %v4235, %v4267
  %4269 = vmatmul.bf16.gmra.mxu0 %v3492
  %v4270 = vpop.f32.mrf.mxu0
  %v4271 = vadd.f32 %v4238, %v4270
  %v4272 = vpop.f32.mrf.mxu0
  %v4273 = vadd.f32 %v4240, %v4272
  %4274 = vmatmul.bf16.gmra.mxu0 %v3495
  %v4275 = vpop.f32.mrf.mxu0
  %v4276 = vadd.f32 %v4243, %v4275
  %v4277 = vpop.f32.mrf.mxu0
  %v4278 = vadd.f32 %v4245, %v4277
  %4279 = vmatmul.bf16.gmra.mxu0 %v3498
  %v4280 = vpop.f32.mrf.mxu0
  %v4281 = vadd.f32 %v4248, %v4280
  %v4282 = vpop.f32.mrf.mxu0
  %v4283 = vadd.f32 %v4250, %v4282
  %4284 = vmatmul.bf16.gmra.mxu0 %v3501
  %v4285 = vpop.f32.mrf.mxu0
  %v4286 = vadd.f32 %v4253, %v4285
  %v4287 = vpop.f32.mrf.mxu0
  %4288 = vdwg.mxu0
  %4289 = vmatpush.bf16.msra.mxu0 0
  %4290 = vmatpush.bf16.msra.mxu0 0
  %4291 = vmatpush.bf16.msra.mxu0 %v4093
  %4292 = vmatpush.bf16.msra.mxu0 %v4088
  %4293 = vmatpush.bf16.msra.mxu0 %v4083
  %4294 = vmatpush.bf16.msra.mxu0 %v4078
  %4295 = vmatpush.bf16.msra.mxu0 %v4073
  %4296 = vmatpush.bf16.msra.mxu0 %v4068
  %4297 = vmatmul.bf16.gmra.mxu0 %v4209
  %v4298 = vpop.f32.mrf.mxu0
  %v4299 = vadd.f32 %v4266, %v4298
  %v4300 = vpop.f32.mrf.mxu0
  %v4301 = vadd.f32 %v4268, %v4300
  %4302 = vmatmul.bf16.gmra.mxu0 %v4212
  %v4303 = vpop.f32.mrf.mxu0
  %v4304 = vadd.f32 %v4271, %v4303
  %v4305 = vpop.f32.mrf.mxu0
  %v4306 = vadd.f32 %v4273, %v4305
  %4307 = vmatmul.bf16.gmra.mxu0 %v4215
  %v4308 = vpop.f32.mrf.mxu0
  %v4309 = vadd.f32 %v4276, %v4308
  %v4310 = vpop.f32.mrf.mxu0
  %v4311 = vadd.f32 %v4278, %v4310
  %4312 = vmatmul.bf16.gmra.mxu0 %v4218
  %v4313 = vpop.f32.mrf.mxu0
  %v4314 = vadd.f32 %v4281, %v4313
  %v4315 = vpop.f32.mrf.mxu0
  %v4316 = vadd.f32 %v4283, %v4315
  %4317 = vmatmul.bf16.gmra.mxu0 %v4221
  %v4318 = vpop.f32.mrf.mxu0
  %v4319 = vadd.f32 %v4286, %v4318
  %v4320 = vpop.f32.mrf.mxu0
  %4321 = vdwg.mxu0
  %4322 = vmatpush.bf16.msra.mxu0 %v4024
  %4323 = vmatpush.bf16.msra.mxu0 %v4019
  %4324 = vmatpush.bf16.msra.mxu0 %v4014
  %4325 = vmatpush.bf16.msra.mxu0 %v4009
  %4326 = vmatpush.bf16.msra.mxu0 %v4004
  %4327 = vmatpush.bf16.msra.mxu0 %v3999
  %4328 = vmatpush.bf16.msra.mxu0 %v3994
  %4329 = vmatpush.bf16.msra.mxu0 %v3989
  %4330 = vmatmul.bf16.gmra.mxu0 %v3488
  %v4331 = vpop.f32.mrf.mxu0
  %v4332 = vadd.f32 0.0, %v4331
  %v4333 = vpop.f32.mrf.mxu0
  %v4334 = vadd.f32 0.0, %v4333
  %4335 = vmatmul.bf16.gmra.mxu0 %v3491
  %v4336 = vpop.f32.mrf.mxu0
  %v4337 = vadd.f32 0.0, %v4336
  %v4338 = vpop.f32.mrf.mxu0
  %v4339 = vadd.f32 0.0, %v4338
  %4340 = vmatmul.bf16.gmra.mxu0 %v3494
  %v4341 = vpop.f32.mrf.mxu0
  %v4342 = vadd.f32 0.0, %v4341
  %v4343 = vpop.f32.mrf.mxu0
  %v4344 = vadd.f32 0.0, %v4343
  %4345 = vmatmul.bf16.gmra.mxu0 %v3497
  %v4346 = vpop.f32.mrf.mxu0
  %v4347 = vadd.f32 0.0, %v4346
  %v4348 = vpop.f32.mrf.mxu0
  %v4349 = vadd.f32 0.0, %v4348
  %4350 = vmatmul.bf16.gmra.mxu0 %v3500
  %v4351 = vpop.f32.mrf.mxu0
  %v4352 = vadd.f32 0.0, %v4351
  %v4353 = vpop.f32.mrf.mxu0
  %4354 = vdwg.mxu0
  %4355 = vmatpush.bf16.msra.mxu0 %v4064
  %4356 = vmatpush.bf16.msra.mxu0 %v4059
  %4357 = vmatpush.bf16.msra.mxu0 %v4054
  %4358 = vmatpush.bf16.msra.mxu0 %v4049
  %4359 = vmatpush.bf16.msra.mxu0 %v4044
  %4360 = vmatpush.bf16.msra.mxu0 %v4039
  %4361 = vmatpush.bf16.msra.mxu0 %v4034
  %4362 = vmatpush.bf16.msra.mxu0 %v4029
  %4363 = vmatmul.bf16.gmra.mxu0 %v3489
  %v4364 = vpop.f32.mrf.mxu0
  %v4365 = vadd.f32 %v4332, %v4364
  %v4366 = vpop.f32.mrf.mxu0
  %v4367 = vadd.f32 %v4334, %v4366
  %4368 = vmatmul.bf16.gmra.mxu0 %v3492
  %v4369 = vpop.f32.mrf.mxu0
  %v4370 = vadd.f32 %v4337, %v4369
  %v4371 = vpop.f32.mrf.mxu0
  %v4372 = vadd.f32 %v4339, %v4371
  %4373 = vmatmul.bf16.gmra.mxu0 %v3495
  %v4374 = vpop.f32.mrf.mxu0
  %v4375 = vadd.f32 %v4342, %v4374
  %v4376 = vpop.f32.mrf.mxu0
  %v4377 = vadd.f32 %v4344, %v4376
  %4378 = vmatmul.bf16.gmra.mxu0 %v3498
  %v4379 = vpop.f32.mrf.mxu0
  %v4380 = vadd.f32 %v4347, %v4379
  %v4381 = vpop.f32.mrf.mxu0
  %v4382 = vadd.f32 %v4349, %v4381
  %4383 = vmatmul.bf16.gmra.mxu0 %v3501
  %v4384 = vpop.f32.mrf.mxu0
  %v4385 = vadd.f32 %v4352, %v4384
  %v4386 = vpop.f32.mrf.mxu0
  %4387 = vdwg.mxu0
  %4388 = vmatpush.bf16.msra.mxu0 0
  %4389 = vmatpush.bf16.msra.mxu0 0
  %4390 = vmatpush.bf16.msra.mxu0 %v4094
  %4391 = vmatpush.bf16.msra.mxu0 %v4089
  %4392 = vmatpush.bf16.msra.mxu0 %v4084
  %4393 = vmatpush.bf16.msra.mxu0 %v4079
  %4394 = vmatpush.bf16.msra.mxu0 %v4074
  %4395 = vmatpush.bf16.msra.mxu0 %v4069
  %4396 = vmatmul.bf16.gmra.mxu0 %v4209
  %v4397 = vpop.f32.mrf.mxu0
  %v4398 = vadd.f32 %v4365, %v4397
  %v4399 = vpop.f32.mrf.mxu0
  %v4400 = vadd.f32 %v4367, %v4399
  %4401 = vmatmul.bf16.gmra.mxu0 %v4212
  %v4402 = vpop.f32.mrf.mxu0
  %v4403 = vadd.f32 %v4370, %v4402
  %v4404 = vpop.f32.mrf.mxu0
  %v4405 = vadd.f32 %v4372, %v4404
  %4406 = vmatmul.bf16.gmra.mxu0 %v4215
  %v4407 = vpop.f32.mrf.mxu0
  %v4408 = vadd.f32 %v4375, %v4407
  %v4409 = vpop.f32.mrf.mxu0
  %v4410 = vadd.f32 %v4377, %v4409
  %4411 = vmatmul.bf16.gmra.mxu0 %v4218
  %v4412 = vpop.f32.mrf.mxu0
  %v4413 = vadd.f32 %v4380, %v4412
  %v4414 = vpop.f32.mrf.mxu0
  %v4415 = vadd.f32 %v4382, %v4414
  %4416 = vmatmul.bf16.gmra.mxu0 %v4221
  %v4417 = vpop.f32.mrf.mxu0
  %v4418 = vadd.f32 %v4385, %v4417
  %v4419 = vpop.f32.mrf.mxu0
  %4420 = vdwg.mxu0
  %4421 = vmatpush.bf16.msra.mxu0 %v4025
  %4422 = vmatpush.bf16.msra.mxu0 %v4020
  %4423 = vmatpush.bf16.msra.mxu0 %v4015
  %4424 = vmatpush.bf16.msra.mxu0 %v4010
  %4425 = vmatpush.bf16.msra.mxu0 %v4005
  %4426 = vmatpush.bf16.msra.mxu0 %v4000
  %4427 = vmatpush.bf16.msra.mxu0 %v3995
  %4428 = vmatpush.bf16.msra.mxu0 %v3990
  %4429 = vmatmul.bf16.gmra.mxu0 %v3488
  %v4430 = vpop.f32.mrf.mxu0
  %v4431 = vadd.f32 0.0, %v4430
  %v4432 = vpop.f32.mrf.mxu0
  %v4433 = vadd.f32 0.0, %v4432
  %4434 = vmatmul.bf16.gmra.mxu0 %v3491
  %v4435 = vpop.f32.mrf.mxu0
  %v4436 = vadd.f32 0.0, %v4435
  %v4437 = vpop.f32.mrf.mxu0
  %v4438 = vadd.f32 0.0, %v4437
  %4439 = vmatmul.bf16.gmra.mxu0 %v3494
  %v4440 = vpop.f32.mrf.mxu0
  %v4441 = vadd.f32 0.0, %v4440
  %v4442 = vpop.f32.mrf.mxu0
  %v4443 = vadd.f32 0.0, %v4442
  %4444 = vmatmul.bf16.gmra.mxu0 %v3497
  %v4445 = vpop.f32.mrf.mxu0
  %v4446 = vadd.f32 0.0, %v4445
  %v4447 = vpop.f32.mrf.mxu0
  %v4448 = vadd.f32 0.0, %v4447
  %4449 = vmatmul.bf16.gmra.mxu0 %v3500
  %v4450 = vpop.f32.mrf.mxu0
  %v4451 = vadd.f32 0.0, %v4450
  %v4452 = vpop.f32.mrf.mxu0
  %4453 = vdwg.mxu0
  %4454 = vmatpush.bf16.msra.mxu0 %v4065
  %4455 = vmatpush.bf16.msra.mxu0 %v4060
  %4456 = vmatpush.bf16.msra.mxu0 %v4055
  %4457 = vmatpush.bf16.msra.mxu0 %v4050
  %4458 = vmatpush.bf16.msra.mxu0 %v4045
  %4459 = vmatpush.bf16.msra.mxu0 %v4040
  %4460 = vmatpush.bf16.msra.mxu0 %v4035
  %4461 = vmatpush.bf16.msra.mxu0 %v4030
  %4462 = vmatmul.bf16.gmra.mxu0 %v3489
  %v4463 = vpop.f32.mrf.mxu0
  %v4464 = vadd.f32 %v4431, %v4463
  %v4465 = vpop.f32.mrf.mxu0
  %v4466 = vadd.f32 %v4433, %v4465
  %4467 = vmatmul.bf16.gmra.mxu0 %v3492
  %v4468 = vpop.f32.mrf.mxu0
  %v4469 = vadd.f32 %v4436, %v4468
  %v4470 = vpop.f32.mrf.mxu0
  %v4471 = vadd.f32 %v4438, %v4470
  %4472 = vmatmul.bf16.gmra.mxu0 %v3495
  %v4473 = vpop.f32.mrf.mxu0
  %v4474 = vadd.f32 %v4441, %v4473
  %v4475 = vpop.f32.mrf.mxu0
  %v4476 = vadd.f32 %v4443, %v4475
  %4477 = vmatmul.bf16.gmra.mxu0 %v3498
  %v4478 = vpop.f32.mrf.mxu0
  %v4479 = vadd.f32 %v4446, %v4478
  %v4480 = vpop.f32.mrf.mxu0
  %v4481 = vadd.f32 %v4448, %v4480
  %4482 = vmatmul.bf16.gmra.mxu0 %v3501
  %v4483 = vpop.f32.mrf.mxu0
  %v4484 = vadd.f32 %v4451, %v4483
  %v4485 = vpop.f32.mrf.mxu0
  %4486 = vdwg.mxu0
  %4487 = vmatpush.bf16.msra.mxu0 0
  %4488 = vmatpush.bf16.msra.mxu0 0
  %4489 = vmatpush.bf16.msra.mxu0 %v4095
  %4490 = vmatpush.bf16.msra.mxu0 %v4090
  %4491 = vmatpush.bf16.msra.mxu0 %v4085
  %4492 = vmatpush.bf16.msra.mxu0 %v4080
  %4493 = vmatpush.bf16.msra.mxu0 %v4075
  %4494 = vmatpush.bf16.msra.mxu0 %v4070
  %4495 = vmatmul.bf16.gmra.mxu0 %v4209
  %v4496 = vpop.f32.mrf.mxu0
  %v4497 = vadd.f32 %v4464, %v4496
  %v4498 = vpop.f32.mrf.mxu0
  %v4499 = vadd.f32 %v4466, %v4498
  %4500 = vmatmul.bf16.gmra.mxu0 %v4212
  %v4501 = vpop.f32.mrf.mxu0
  %v4502 = vadd.f32 %v4469, %v4501
  %v4503 = vpop.f32.mrf.mxu0
  %v4504 = vadd.f32 %v4471, %v4503
  %4505 = vmatmul.bf16.gmra.mxu0 %v4215
  %v4506 = vpop.f32.mrf.mxu0
  %v4507 = vadd.f32 %v4474, %v4506
  %v4508 = vpop.f32.mrf.mxu0
  %v4509 = vadd.f32 %v4476, %v4508
  %4510 = vmatmul.bf16.gmra.mxu0 %v4218
  %v4511 = vpop.f32.mrf.mxu0
  %v4512 = vadd.f32 %v4479, %v4511
  %v4513 = vpop.f32.mrf.mxu0
  %v4514 = vadd.f32 %v4481, %v4513
  %4515 = vmatmul.bf16.gmra.mxu0 %v4221
  %v4516 = vpop.f32.mrf.mxu0
  %v4517 = vadd.f32 %v4484, %v4516
  %v4518 = vpop.f32.mrf.mxu0
  %4519 = vdwg.mxu0
  %4520 = vmatpush.bf16.msra.mxu0 %v4026
  %4521 = vmatpush.bf16.msra.mxu0 %v4021
  %4522 = vmatpush.bf16.msra.mxu0 %v4016
  %4523 = vmatpush.bf16.msra.mxu0 %v4011
  %4524 = vmatpush.bf16.msra.mxu0 %v4006
  %4525 = vmatpush.bf16.msra.mxu0 %v4001
  %4526 = vmatpush.bf16.msra.mxu0 %v3996
  %4527 = vmatpush.bf16.msra.mxu0 %v3991
  %4528 = vmatmul.bf16.gmra.mxu0 %v3488
  %v4529 = vpop.f32.mrf.mxu0
  %v4530 = vadd.f32 0.0, %v4529
  %v4531 = vpop.f32.mrf.mxu0
  %v4532 = vadd.f32 0.0, %v4531
  %4533 = vmatmul.bf16.gmra.mxu0 %v3491
  %v4534 = vpop.f32.mrf.mxu0
  %v4535 = vadd.f32 0.0, %v4534
  %v4536 = vpop.f32.mrf.mxu0
  %v4537 = vadd.f32 0.0, %v4536
  %4538 = vmatmul.bf16.gmra.mxu0 %v3494
  %v4539 = vpop.f32.mrf.mxu0
  %v4540 = vadd.f32 0.0, %v4539
  %v4541 = vpop.f32.mrf.mxu0
  %v4542 = vadd.f32 0.0, %v4541
  %4543 = vmatmul.bf16.gmra.mxu0 %v3497
  %v4544 = vpop.f32.mrf.mxu0
  %v4545 = vadd.f32 0.0, %v4544
  %v4546 = vpop.f32.mrf.mxu0
  %v4547 = vadd.f32 0.0, %v4546
  %4548 = vmatmul.bf16.gmra.mxu0 %v3500
  %v4549 = vpop.f32.mrf.mxu0
  %v4550 = vadd.f32 0.0, %v4549
  %v4551 = vpop.f32.mrf.mxu0
  %4552 = vdwg.mxu0
  %4553 = vmatpush.bf16.msra.mxu0 %v4066
  %4554 = vmatpush.bf16.msra.mxu0 %v4061
  %4555 = vmatpush.bf16.msra.mxu0 %v4056
  %4556 = vmatpush.bf16.msra.mxu0 %v4051
  %4557 = vmatpush.bf16.msra.mxu0 %v4046
  %4558 = vmatpush.bf16.msra.mxu0 %v4041
  %4559 = vmatpush.bf16.msra.mxu0 %v4036
  %4560 = vmatpush.bf16.msra.mxu0 %v4031
  %4561 = vmatmul.bf16.gmra.mxu0 %v3489
  %v4562 = vpop.f32.mrf.mxu0
  %v4563 = vadd.f32 %v4530, %v4562
  %v4564 = vpop.f32.mrf.mxu0
  %v4565 = vadd.f32 %v4532, %v4564
  %4566 = vmatmul.bf16.gmra.mxu0 %v3492
  %v4567 = vpop.f32.mrf.mxu0
  %v4568 = vadd.f32 %v4535, %v4567
  %v4569 = vpop.f32.mrf.mxu0
  %v4570 = vadd.f32 %v4537, %v4569
  %4571 = vmatmul.bf16.gmra.mxu0 %v3495
  %v4572 = vpop.f32.mrf.mxu0
  %v4573 = vadd.f32 %v4540, %v4572
  %v4574 = vpop.f32.mrf.mxu0
  %v4575 = vadd.f32 %v4542, %v4574
  %4576 = vmatmul.bf16.gmra.mxu0 %v3498
  %v4577 = vpop.f32.mrf.mxu0
  %v4578 = vadd.f32 %v4545, %v4577
  %v4579 = vpop.f32.mrf.mxu0
  %v4580 = vadd.f32 %v4547, %v4579
  %4581 = vmatmul.bf16.gmra.mxu0 %v3501
  %v4582 = vpop.f32.mrf.mxu0
  %v4583 = vadd.f32 %v4550, %v4582
  %v4584 = vpop.f32.mrf.mxu0
  %4585 = vdwg.mxu0
  %4586 = vmatpush.bf16.msra.mxu0 0
  %4587 = vmatpush.bf16.msra.mxu0 0
  %4588 = vmatpush.bf16.msra.mxu0 %v4096
  %4589 = vmatpush.bf16.msra.mxu0 %v4091
  %4590 = vmatpush.bf16.msra.mxu0 %v4086
  %4591 = vmatpush.bf16.msra.mxu0 %v4081
  %4592 = vmatpush.bf16.msra.mxu0 %v4076
  %4593 = vmatpush.bf16.msra.mxu0 %v4071
  %4594 = vmatmul.bf16.gmra.mxu0 %v4209
  %v4595 = vpop.f32.mrf.mxu0
  %v4596 = vadd.f32 %v4563, %v4595
  %v4597 = vpop.f32.mrf.mxu0
  %v4598 = vadd.f32 %v4565, %v4597
  %4599 = vmatmul.bf16.gmra.mxu0 %v4212
  %v4600 = vpop.f32.mrf.mxu0
  %v4601 = vadd.f32 %v4568, %v4600
  %v4602 = vpop.f32.mrf.mxu0
  %v4603 = vadd.f32 %v4570, %v4602
  %4604 = vmatmul.bf16.gmra.mxu0 %v4215
  %v4605 = vpop.f32.mrf.mxu0
  %v4606 = vadd.f32 %v4573, %v4605
  %v4607 = vpop.f32.mrf.mxu0
  %v4608 = vadd.f32 %v4575, %v4607
  %4609 = vmatmul.bf16.gmra.mxu0 %v4218
  %v4610 = vpop.f32.mrf.mxu0
  %v4611 = vadd.f32 %v4578, %v4610
  %v4612 = vpop.f32.mrf.mxu0
  %v4613 = vadd.f32 %v4580, %v4612
  %4614 = vmatmul.bf16.gmra.mxu0 %v4221
  %v4615 = vpop.f32.mrf.mxu0
  %v4616 = vadd.f32 %v4583, %v4615
  %v4617 = vpop.f32.mrf.mxu0
  %4618 = vdwg.mxu0
  %4619 = vmatpush.bf16.msra.mxu0 %v4027
  %4620 = vmatpush.bf16.msra.mxu0 %v4022
  %4621 = vmatpush.bf16.msra.mxu0 %v4017
  %4622 = vmatpush.bf16.msra.mxu0 %v4012
  %4623 = vmatpush.bf16.msra.mxu0 %v4007
  %4624 = vmatpush.bf16.msra.mxu0 %v4002
  %4625 = vmatpush.bf16.msra.mxu0 %v3997
  %4626 = vmatpush.bf16.msra.mxu0 %v3992
  %4627 = vmatmul.bf16.gmra.mxu0 %v3488
  %v4628 = vpop.f32.mrf.mxu0
  %v4629 = vadd.f32 0.0, %v4628
  %v4630 = vpop.f32.mrf.mxu0
  %v4631 = vadd.f32 0.0, %v4630
  %4632 = vmatmul.bf16.gmra.mxu0 %v3491
  %v4633 = vpop.f32.mrf.mxu0
  %v4634 = vadd.f32 0.0, %v4633
  %v4635 = vpop.f32.mrf.mxu0
  %v4636 = vadd.f32 0.0, %v4635
  %4637 = vmatmul.bf16.gmra.mxu0 %v3494
  %v4638 = vpop.f32.mrf.mxu0
  %v4639 = vadd.f32 0.0, %v4638
  %v4640 = vpop.f32.mrf.mxu0
  %v4641 = vadd.f32 0.0, %v4640
  %4642 = vmatmul.bf16.gmra.mxu0 %v3497
  %v4643 = vpop.f32.mrf.mxu0
  %v4644 = vadd.f32 0.0, %v4643
  %v4645 = vpop.f32.mrf.mxu0
  %v4646 = vadd.f32 0.0, %v4645
  %4647 = vmatmul.bf16.gmra.mxu0 %v3500
  %v4648 = vpop.f32.mrf.mxu0
  %v4649 = vadd.f32 0.0, %v4648
  %v4650 = vpop.f32.mrf.mxu0
  %4651 = vdwg.mxu0
  %4652 = vmatpush.bf16.msra.mxu0 %v4067
  %4653 = vmatpush.bf16.msra.mxu0 %v4062
  %4654 = vmatpush.bf16.msra.mxu0 %v4057
  %4655 = vmatpush.bf16.msra.mxu0 %v4052
  %4656 = vmatpush.bf16.msra.mxu0 %v4047
  %4657 = vmatpush.bf16.msra.mxu0 %v4042
  %4658 = vmatpush.bf16.msra.mxu0 %v4037
  %4659 = vmatpush.bf16.msra.mxu0 %v4032
  %4660 = vmatmul.bf16.gmra.mxu0 %v3489
  %v4661 = vpop.f32.mrf.mxu0
  %v4662 = vadd.f32 %v4629, %v4661
  %v4663 = vpop.f32.mrf.mxu0
  %v4664 = vadd.f32 %v4631, %v4663
  %4665 = vmatmul.bf16.gmra.mxu0 %v3492
  %v4666 = vpop.f32.mrf.mxu0
  %v4667 = vadd.f32 %v4634, %v4666
  %v4668 = vpop.f32.mrf.mxu0
  %v4669 = vadd.f32 %v4636, %v4668
  %4670 = vmatmul.bf16.gmra.mxu0 %v3495
  %v4671 = vpop.f32.mrf.mxu0
  %v4672 = vadd.f32 %v4639, %v4671
  %v4673 = vpop.f32.mrf.mxu0
  %v4674 = vadd.f32 %v4641, %v4673
  %4675 = vmatmul.bf16.gmra.mxu0 %v3498
  %v4676 = vpop.f32.mrf.mxu0
  %v4677 = vadd.f32 %v4644, %v4676
  %v4678 = vpop.f32.mrf.mxu0
  %v4679 = vadd.f32 %v4646, %v4678
  %4680 = vmatmul.bf16.gmra.mxu0 %v3501
  %v4681 = vpop.f32.mrf.mxu0
  %v4682 = vadd.f32 %v4649, %v4681
  %v4683 = vpop.f32.mrf.mxu0
  %4684 = vdwg.mxu0
  %4685 = vmatpush.bf16.msra.mxu0 0
  %4686 = vmatpush.bf16.msra.mxu0 0
  %4687 = vmatpush.bf16.msra.mxu0 %v4097
  %4688 = vmatpush.bf16.msra.mxu0 %v4092
  %4689 = vmatpush.bf16.msra.mxu0 %v4087
  %4690 = vmatpush.bf16.msra.mxu0 %v4082
  %4691 = vmatpush.bf16.msra.mxu0 %v4077
  %4692 = vmatpush.bf16.msra.mxu0 %v4072
  %4693 = vmatmul.bf16.gmra.mxu0 %v4209
  %v4694 = vpop.f32.mrf.mxu0
  %v4695 = vadd.f32 %v4662, %v4694
  %v4696 = vpop.f32.mrf.mxu0
  %v4697 = vadd.f32 %v4664, %v4696
  %4698 = vmatmul.bf16.gmra.mxu0 %v4212
  %v4699 = vpop.f32.mrf.mxu0
  %v4700 = vadd.f32 %v4667, %v4699
  %v4701 = vpop.f32.mrf.mxu0
  %v4702 = vadd.f32 %v4669, %v4701
  %4703 = vmatmul.bf16.gmra.mxu0 %v4215
  %v4704 = vpop.f32.mrf.mxu0
  %v4705 = vadd.f32 %v4672, %v4704
  %v4706 = vpop.f32.mrf.mxu0
  %v4707 = vadd.f32 %v4674, %v4706
  %4708 = vmatmul.bf16.gmra.mxu0 %v4218
  %v4709 = vpop.f32.mrf.mxu0
  %v4710 = vadd.f32 %v4677, %v4709
  %v4711 = vpop.f32.mrf.mxu0
  %v4712 = vadd.f32 %v4679, %v4711
  %4713 = vmatmul.bf16.gmra.mxu0 %v4221
  %v4714 = vpop.f32.mrf.mxu0
  %v4715 = vadd.f32 %v4682, %v4714
  %v4716 = vpop.f32.mrf.mxu0
  %4717 = vdwg.mxu0
  %v4718 = vadd.f32 %v3416, %v4299
  %v4719 = vadd.f32 %v3417, %v4398
  %v4720 = vadd.f32 %v3418, %v4497
  %v4721 = vadd.f32 %v3419, %v4596
  %v4722 = vadd.f32 %v3420, %v4695
  %v4723 = vadd.f32 %v3421, %v4301
  %v4724 = vadd.f32 %v3422, %v4400
  %v4725 = vadd.f32 %v3423, %v4499
  %v4726 = vadd.f32 %v3424, %v4598
  %v4727 = vadd.f32 %v3425, %v4697
  %v4728 = vadd.f32 %v3426, %v4304
  %v4729 = vadd.f32 %v3427, %v4403
  %v4730 = vadd.f32 %v3428, %v4502
  %v4731 = vadd.f32 %v3429, %v4601
  %v4732 = vadd.f32 %v3430, %v4700
  %v4733 = vadd.f32 %v3431, %v4306
  %v4734 = vadd.f32 %v3432, %v4405
  %v4735 = vadd.f32 %v3433, %v4504
  %v4736 = vadd.f32 %v3434, %v4603
  %v4737 = vadd.f32 %v3435, %v4702
  %v4738 = vadd.f32 %v3436, %v4309
  %v4739 = vadd.f32 %v3437, %v4408
  %v4740 = vadd.f32 %v3438, %v4507
  %v4741 = vadd.f32 %v3439, %v4606
  %v4742 = vadd.f32 %v3440, %v4705
  %v4743 = vadd.f32 %v3441, %v4311
  %v4744 = vadd.f32 %v3442, %v4410
  %v4745 = vadd.f32 %v3443, %v4509
  %v4746 = vadd.f32 %v3444, %v4608
  %v4747 = vadd.f32 %v3445, %v4707
  %v4748 = vadd.f32 %v3446, %v4314
  %v4749 = vadd.f32 %v3447, %v4413
  %v4750 = vadd.f32 %v3448, %v4512
  %v4751 = vadd.f32 %v3449, %v4611
  %v4752 = vadd.f32 %v3450, %v4710
  %v4753 = vadd.f32 %v3451, %v4316
  %v4754 = vadd.f32 %v3452, %v4415
  %v4755 = vadd.f32 %v3453, %v4514
  %v4756 = vadd.f32 %v3454, %v4613
  %v4757 = vadd.f32 %v3455, %v4712
  %v4758 = vadd.f32 %v3456, %v4319
  %v4759 = vadd.f32 %v3457, %v4418
  %v4760 = vadd.f32 %v3458, %v4517
  %v4761 = vadd.f32 %v3459, %v4616
  %v4762 = vadd.f32 %v3460, %v4715
  %4763 = vst [vmem:[#allocation4] sm:$0xff] %v4718
  %4764 = vst [vmem:[#allocation4 + $0x8] sm:$0xff] %v4719
  %4765 = vst [vmem:[#allocation4 + $0x10] sm:$0xff] %v4720
  %4766 = vst [vmem:[#allocation4 + $0x18] sm:$0xff] %v4721
  %4767 = vst.msk [vmem:[#allocation4 + $0x20] sm:$0xff] %vm1983, %v4722
  %4768 = vst [vmem:[#allocation4 + $0x28] sm:$0xff] %v4723
  %4769 = vst [vmem:[#allocation4 + $0x30] sm:$0xff] %v4724
  %4770 = vst [vmem:[#allocation4 + $0x38] sm:$0xff] %v4725
  %4771 = vst [vmem:[#allocation4 + $0x40] sm:$0xff] %v4726
  %4772 = vst.msk [vmem:[#allocation4 + $0x48] sm:$0xff] %vm1983, %v4727
  %4773 = vst [vmem:[#allocation4 + $0x50] sm:$0xff] %v4728
  %4774 = vst [vmem:[#allocation4 + $0x58] sm:$0xff] %v4729
  %4775 = vst [vmem:[#allocation4 + $0x60] sm:$0xff] %v4730
  %4776 = vst [vmem:[#allocation4 + $0x68] sm:$0xff] %v4731
  %4777 = vst.msk [vmem:[#allocation4 + $0x70] sm:$0xff] %vm1983, %v4732
  %4778 = vst [vmem:[#allocation4 + $0x78] sm:$0xff] %v4733
  %4779 = vst [vmem:[#allocation4 + $0x80] sm:$0xff] %v4734
  %4780 = vst [vmem:[#allocation4 + $0x88] sm:$0xff] %v4735
  %4781 = vst [vmem:[#allocation4 + $0x90] sm:$0xff] %v4736
  %4782 = vst.msk [vmem:[#allocation4 + $0x98] sm:$0xff] %vm1983, %v4737
  %4783 = vst [vmem:[#allocation4 + $0xa0] sm:$0xff] %v4738
  %4784 = vst [vmem:[#allocation4 + $0xa8] sm:$0xff] %v4739
  %4785 = vst [vmem:[#allocation4 + $0xb0] sm:$0xff] %v4740
  %4786 = vst [vmem:[#allocation4 + $0xb8] sm:$0xff] %v4741
  %4787 = vst.msk [vmem:[#allocation4 + $0xc0] sm:$0xff] %vm1983, %v4742
  %4788 = vst [vmem:[#allocation4 + $0xc8] sm:$0xff] %v4743
  %4789 = vst [vmem:[#allocation4 + $0xd0] sm:$0xff] %v4744
  %4790 = vst [vmem:[#allocation4 + $0xd8] sm:$0xff] %v4745
  %4791 = vst [vmem:[#allocation4 + $0xe0] sm:$0xff] %v4746
  %4792 = vst.msk [vmem:[#allocation4 + $0xe8] sm:$0xff] %vm1983, %v4747
  %4793 = vst [vmem:[#allocation4 + $0xf0] sm:$0xff] %v4748
  %4794 = vst [vmem:[#allocation4 + $0xf8] sm:$0xff] %v4749
  %4795 = vst [vmem:[#allocation4 + $0x100] sm:$0xff] %v4750
  %4796 = vst [vmem:[#allocation4 + $0x108] sm:$0xff] %v4751
  %4797 = vst.msk [vmem:[#allocation4 + $0x110] sm:$0xff] %vm1983, %v4752
  %4798 = vst [vmem:[#allocation4 + $0x118] sm:$0xff] %v4753
  %4799 = vst [vmem:[#allocation4 + $0x120] sm:$0xff] %v4754
  %4800 = vst [vmem:[#allocation4 + $0x128] sm:$0xff] %v4755
  %4801 = vst [vmem:[#allocation4 + $0x130] sm:$0xff] %v4756
  %4802 = vst.msk [vmem:[#allocation4 + $0x138] sm:$0xff] %vm1983, %v4757
  %4803 = vst [vmem:[#allocation4 + $0x140] sm:$0xff] %v4758
  %4804 = vst [vmem:[#allocation4 + $0x148] sm:$0xff] %v4759
  %4805 = vst [vmem:[#allocation4 + $0x150] sm:$0xff] %v4760
  %4806 = vst [vmem:[#allocation4 + $0x158] sm:$0xff] %v4761
  %4807 = vst.msk [vmem:[#allocation4 + $0x160] sm:$0xff] %vm1983, %v4762
  %v4808 = vld [vmem:[#allocation4] sm:$0xff]
  %v4809 = vld [vmem:[#allocation4 + $0x8] sm:$0xff]
  %v4810 = vld [vmem:[#allocation4 + $0x10] sm:$0xff]
  %v4811 = vld [vmem:[#allocation4 + $0x18] sm:$0xff]
  %v4812 = vld [vmem:[#allocation4 + $0x20] sm:$0xff]
  %v4813 = vld [vmem:[#allocation4 + $0x28] sm:$0xff]
  %v4814 = vld [vmem:[#allocation4 + $0x30] sm:$0xff]
  %v4815 = vld [vmem:[#allocation4 + $0x38] sm:$0xff]
  %v4816 = vld [vmem:[#allocation4 + $0x40] sm:$0xff]
  %v4817 = vld [vmem:[#allocation4 + $0x48] sm:$0xff]
  %v4818 = vld [vmem:[#allocation4 + $0x50] sm:$0xff]
  %v4819 = vld [vmem:[#allocation4 + $0x58] sm:$0xff]
  %v4820 = vld [vmem:[#allocation4 + $0x60] sm:$0xff]
  %v4821 = vld [vmem:[#allocation4 + $0x68] sm:$0xff]
  %v4822 = vld [vmem:[#allocation4 + $0x70] sm:$0xff]
  %v4823 = vld [vmem:[#allocation4 + $0x78] sm:$0xff]
  %v4824 = vld [vmem:[#allocation4 + $0x80] sm:$0xff]
  %v4825 = vld [vmem:[#allocation4 + $0x88] sm:$0xff]
  %v4826 = vld [vmem:[#allocation4 + $0x90] sm:$0xff]
  %v4827 = vld [vmem:[#allocation4 + $0x98] sm:$0xff]
  %v4828 = vld [vmem:[#allocation4 + $0xa0] sm:$0xff]
  %v4829 = vld [vmem:[#allocation4 + $0xa8] sm:$0xff]
  %v4830 = vld [vmem:[#allocation4 + $0xb0] sm:$0xff]
  %v4831 = vld [vmem:[#allocation4 + $0xb8] sm:$0xff]
  %v4832 = vld [vmem:[#allocation4 + $0xc0] sm:$0xff]
  %v4833 = vld [vmem:[#allocation4 + $0xc8] sm:$0xff]
  %v4834 = vld [vmem:[#allocation4 + $0xd0] sm:$0xff]
  %v4835 = vld [vmem:[#allocation4 + $0xd8] sm:$0xff]
  %v4836 = vld [vmem:[#allocation4 + $0xe0] sm:$0xff]
  %v4837 = vld [vmem:[#allocation4 + $0xe8] sm:$0xff]
  %v4838 = vld [vmem:[#allocation4 + $0xf0] sm:$0xff]
  %v4839 = vld [vmem:[#allocation4 + $0xf8] sm:$0xff]
  %v4840 = vld [vmem:[#allocation4 + $0x100] sm:$0xff]
  %v4841 = vld [vmem:[#allocation4 + $0x108] sm:$0xff]
  %v4842 = vld [vmem:[#allocation4 + $0x110] sm:$0xff]
  %v4843 = vld [vmem:[#allocation4 + $0x118] sm:$0xff]
  %v4844 = vld [vmem:[#allocation4 + $0x120] sm:$0xff]
  %v4845 = vld [vmem:[#allocation4 + $0x128] sm:$0xff]
  %v4846 = vld [vmem:[#allocation4 + $0x130] sm:$0xff]
  %v4847 = vld [vmem:[#allocation4 + $0x138] sm:$0xff]
  %v4848 = vld [vmem:[#allocation4 + $0x140] sm:$0xff]
  %v4849 = vld [vmem:[#allocation4 + $0x148] sm:$0xff]
  %v4850 = vld [vmem:[#allocation4 + $0x150] sm:$0xff]
  %v4851 = vld [vmem:[#allocation4 + $0x158] sm:$0xff]
  %v4852 = vld [vmem:[#allocation4 + $0x160] sm:$0xff]
  %v4853 = vld [vmem:[#allocation3 + $0x30] sm:$0xff]
  %v4854 = vld [vmem:[#allocation3 + $0x38] sm:$0xff]
  %v4855 = vld [vmem:[#allocation3 + $0x40] sm:$0xff]
  %v4856 = vld [vmem:[#allocation3 + $0x48] sm:$0xff]
  %v4857 = vld [vmem:[#allocation3 + $0x50] sm:$0xff]
  %v4858 = vld [vmem:[#allocation3 + $0x58] sm:$0xff]
  %v4859 = vld [vmem:[#allocation3 + $0x60] sm:$0xff]
  %v4860 = vld [vmem:[#allocation3 + $0x68] sm:$0xff]
  %v4861 = vld [vmem:[#allocation3 + $0x70] sm:$0xff]
  %v4862 = vld [vmem:[#allocation3 + $0x78] sm:$0xff]
  %v4863 = vld [vmem:[#allocation3 + $0x80] sm:$0xff]
  %v4864 = vld [vmem:[#allocation3 + $0x88] sm:$0xff]
  %v4865 = vld [vmem:[#allocation3 + $0x90] sm:$0xff]
  %v4866 = vld [vmem:[#allocation3 + $0x98] sm:$0xff]
  %v4867 = vld [vmem:[#allocation3 + $0xa0] sm:$0xff]
  %v4868 = vld [vmem:[#allocation3 + $0xa8] sm:$0xff]
  %v4869 = vld [vmem:[#allocation3 + $0xb0] sm:$0xff]
  %v4870 = vld [vmem:[#allocation3 + $0xb8] sm:$0xff]
  %v4871 = vld [vmem:[#allocation3 + $0xc0] sm:$0xff]
  %v4872 = vld [vmem:[#allocation3 + $0xc8] sm:$0xff]
  %v4873 = vld [vmem:[#allocation3 + $0xd0] sm:$0xff]
  %v4874 = vld [vmem:[#allocation3 + $0xd8] sm:$0xff]
  %v4875 = vld [vmem:[#allocation3 + $0xe0] sm:$0xff]
  %v4876 = vld [vmem:[#allocation3 + $0xe8] sm:$0xff]
  %v4877 = vld [vmem:[#allocation3 + $0xf0] sm:$0xff]
  %v4878 = vld [vmem:[#allocation3 + $0xf8] sm:$0xff]
  %v4879 = vld [vmem:[#allocation3 + $0x100] sm:$0xff]
  %v4880 = vpack.c.bf16 %v4856, %v4853
  %v4881 = vpack.c.bf16 %v4857, %v4854
  %v4882 = vpack.c.bf16 %v4858, %v4855
  %v4883 = vpack.c.bf16 %v4862, %v4859
  %v4884 = vpack.c.bf16 %v4863, %v4860
  %v4885 = vpack.c.bf16 %v4864, %v4861
  %v4886 = vpack.c.bf16 %v4868, %v4865
  %v4887 = vpack.c.bf16 %v4869, %v4866
  %v4888 = vpack.c.bf16 %v4870, %v4867
  %v4889 = vpack.c.bf16 %v4874, %v4871
  %v4890 = vpack.c.bf16 %v4875, %v4872
  %v4891 = vpack.c.bf16 %v4876, %v4873
  %v4892 = vpack.c.bf16 %v4877, %v4877
  %v4893 = vpack.c.bf16 %v4878, %v4878
  %v4894 = vpack.c.bf16 %v4879, %v4879
  %s4895 = scalar_lea.vmem %s6, 1760
  %v4896 = vld [vmem:[%s4895] sm:$0xff]
  %v4897 = vld [vmem:[%s4895 + $0x8] sm:$0xff]
  %v4898 = vld [vmem:[%s4895 + $0x10] sm:$0xf]
  %v4899 = vld [vmem:[%s4895 + $0x14] sm:$0xff]
  %v4900 = vld [vmem:[%s4895 + $0x1c] sm:$0xff]
  %v4901 = vld [vmem:[%s4895 + $0x24] sm:$0xf]
  %v4902 = vld [vmem:[%s4895 + $0x28] sm:$0xff]
  %v4903 = vld [vmem:[%s4895 + $0x30] sm:$0xff]
  %v4904 = vld [vmem:[%s4895 + $0x38] sm:$0xf]
  %v4905 = vld [vmem:[%s4895 + $0x3c] sm:$0xff]
  %v4906 = vld [vmem:[%s4895 + $0x44] sm:$0xff]
  %v4907 = vld [vmem:[%s4895 + $0x4c] sm:$0xf]
  %v4908 = vld [vmem:[%s4895 + $0x50] sm:$0xff]
  %v4909 = vld [vmem:[%s4895 + $0x58] sm:$0xff]
  %v4910 = vld [vmem:[%s4895 + $0x60] sm:$0xf]
  %v4911 = vld [vmem:[%s4895 + $0x64] sm:$0xff]
  %v4912 = vld [vmem:[%s4895 + $0x6c] sm:$0xff]
  %v4913 = vld [vmem:[%s4895 + $0x74] sm:$0xf]
  %v4914 = vld [vmem:[%s4895 + $0x78] sm:$0xff]
  %v4915 = vld [vmem:[%s4895 + $0x80] sm:$0xff]
  %v4916 = vld [vmem:[%s4895 + $0x88] sm:$0xf]
  %v4917 = vld [vmem:[%s4895 + $0x8c] sm:$0xff]
  %v4918 = vld [vmem:[%s4895 + $0x94] sm:$0xff]
  %v4919 = vld [vmem:[%s4895 + $0x9c] sm:$0xf]
  %v4920 = vld [vmem:[%s4895 + $0xa0] sm:$0xff]
  %v4921 = vld [vmem:[%s4895 + $0xa8] sm:$0xff]
  %v4922 = vld [vmem:[%s4895 + $0xb0] sm:$0xf]
  %v4923 = vld [vmem:[%s4895 + $0xb4] sm:$0xff]
  %v4924 = vld [vmem:[%s4895 + $0xbc] sm:$0xff]
  %v4925 = vld [vmem:[%s4895 + $0xc4] sm:$0xf]
  %v4926 = vld [vmem:[%s4895 + $0xc8] sm:$0xff]
  %v4927 = vld [vmem:[%s4895 + $0xd0] sm:$0xff]
  %v4928 = vld [vmem:[%s4895 + $0xd8] sm:$0xf]
  %v4929 = vld [vmem:[%s4895 + $0xdc] sm:$0xff]
  %v4930 = vld [vmem:[%s4895 + $0xe4] sm:$0xff]
  %v4931 = vld [vmem:[%s4895 + $0xec] sm:$0xf]
  %v4932 = vld [vmem:[%s4895 + $0xf0] sm:$0xff]
  %v4933 = vld [vmem:[%s4895 + $0xf8] sm:$0xff]
  %v4934 = vld [vmem:[%s4895 + $0x100] sm:$0xf]
  %v4935 = vld [vmem:[%s4895 + $0x104] sm:$0xff]
  %v4936 = vld [vmem:[%s4895 + $0x10c] sm:$0xff]
  %v4937 = vld [vmem:[%s4895 + $0x114] sm:$0xf]
  %v4938 = vld [vmem:[%s4895 + $0x118] sm:$0xff]
  %v4939 = vld [vmem:[%s4895 + $0x120] sm:$0xff]
  %v4940 = vld [vmem:[%s4895 + $0x128] sm:$0xf]
  %v4941 = vld [vmem:[%s4895 + $0x12c] sm:$0xff]
  %v4942 = vld [vmem:[%s4895 + $0x134] sm:$0xff]
  %v4943 = vld [vmem:[%s4895 + $0x13c] sm:$0xf]
  %v4944 = vld [vmem:[%s4895 + $0x140] sm:$0xff]
  %v4945 = vld [vmem:[%s4895 + $0x148] sm:$0xff]
  %v4946 = vld [vmem:[%s4895 + $0x150] sm:$0xf]
  %v4947 = vld [vmem:[%s4895 + $0x154] sm:$0xff]
  %v4948 = vld [vmem:[%s4895 + $0x15c] sm:$0xff]
  %v4949 = vld [vmem:[%s4895 + $0x164] sm:$0xf]
  %v4950 = vld [vmem:[%s4895 + $0x168] sm:$0xff]
  %v4951 = vld [vmem:[%s4895 + $0x170] sm:$0xff]
  %v4952 = vld [vmem:[%s4895 + $0x178] sm:$0xf]
  %v4953 = vld [vmem:[%s4895 + $0x17c] sm:$0xff]
  %v4954 = vld [vmem:[%s4895 + $0x184] sm:$0xff]
  %v4955 = vld [vmem:[%s4895 + $0x18c] sm:$0xf]
  %v4956 = vld [vmem:[%s4895 + $0x190] sm:$0xff]
  %v4957 = vld [vmem:[%s4895 + $0x198] sm:$0xff]
  %v4958 = vld [vmem:[%s4895 + $0x1a0] sm:$0xf]
  %v4959 = vld [vmem:[%s4895 + $0x1a4] sm:$0xff]
  %v4960 = vld [vmem:[%s4895 + $0x1ac] sm:$0xff]
  %v4961 = vld [vmem:[%s4895 + $0x1b4] sm:$0xf]
  %v4962 = vld [vmem:[%s4895 + $0x1b8] sm:$0xff]
  %v4963 = vld [vmem:[%s4895 + $0x1c0] sm:$0xff]
  %v4964 = vld [vmem:[%s4895 + $0x1c8] sm:$0xf]
  %v4965 = vld [vmem:[%s4895 + $0x1cc] sm:$0xff]
  %v4966 = vld [vmem:[%s4895 + $0x1d4] sm:$0xff]
  %v4967 = vld [vmem:[%s4895 + $0x1dc] sm:$0xf]
  %v4968 = vld [vmem:[%s4895 + $0x1e0] sm:$0xff]
  %v4969 = vld [vmem:[%s4895 + $0x1e8] sm:$0xff]
  %v4970 = vld [vmem:[%s4895 + $0x1f0] sm:$0xf]
  %v4971 = vld [vmem:[%s4895 + $0x1f4] sm:$0xff]
  %v4972 = vld [vmem:[%s4895 + $0x1fc] sm:$0xff]
  %v4973 = vld [vmem:[%s4895 + $0x204] sm:$0xf]
  %v4974 = vld [vmem:[%s4895 + $0x208] sm:$0xff]
  %v4975 = vld [vmem:[%s4895 + $0x210] sm:$0xff]
  %v4976 = vld [vmem:[%s4895 + $0x218] sm:$0xf]
  %v4977 = vld [vmem:[%s4895 + $0x21c] sm:$0xff]
  %v4978 = vld [vmem:[%s4895 + $0x224] sm:$0xff]
  %v4979 = vld [vmem:[%s4895 + $0x22c] sm:$0xf]
  %v4980 = vld [vmem:[%s4895 + $0x230] sm:$0xff]
  %v4981 = vld [vmem:[%s4895 + $0x238] sm:$0xff]
  %v4982 = vld [vmem:[%s4895 + $0x240] sm:$0xf]
  %v4983 = vld [vmem:[%s4895 + $0x244] sm:$0xff]
  %v4984 = vld [vmem:[%s4895 + $0x24c] sm:$0xff]
  %v4985 = vld [vmem:[%s4895 + $0x254] sm:$0xf]
  %v4986 = vld [vmem:[%s4895 + $0x258] sm:$0xff]
  %v4987 = vld [vmem:[%s4895 + $0x260] sm:$0xff]
  %v4988 = vld [vmem:[%s4895 + $0x268] sm:$0xf]
  %v4989 = vld [vmem:[%s4895 + $0x26c] sm:$0xff]
  %v4990 = vld [vmem:[%s4895 + $0x274] sm:$0xff]
  %v4991 = vld [vmem:[%s4895 + $0x27c] sm:$0xf]
  %v4992 = vld [vmem:[%s4895 + $0x280] sm:$0xff]
  %v4993 = vld [vmem:[%s4895 + $0x288] sm:$0xff]
  %v4994 = vld [vmem:[%s4895 + $0x290] sm:$0xf]
  %v4995 = vld [vmem:[%s4895 + $0x294] sm:$0xff]
  %v4996 = vld [vmem:[%s4895 + $0x29c] sm:$0xff]
  %v4997 = vld [vmem:[%s4895 + $0x2a4] sm:$0xf]
  %v4998 = vld [vmem:[%s4895 + $0x2a8] sm:$0xff]
  %v4999 = vld [vmem:[%s4895 + $0x2b0] sm:$0xff]
  %v5000 = vld [vmem:[%s4895 + $0x2b8] sm:$0xf]
  %v5001 = vld [vmem:[%s4895 + $0x2bc] sm:$0xff]
  %v5002 = vld [vmem:[%s4895 + $0x2c4] sm:$0xff]
  %v5003 = vld [vmem:[%s4895 + $0x2cc] sm:$0xf]
  %v5004 = vld [vmem:[%s4895 + $0x2d0] sm:$0xff]
  %v5005 = vld [vmem:[%s4895 + $0x2d8] sm:$0xff]
  %v5006 = vld [vmem:[%s4895 + $0x2e0] sm:$0xf]
  %v5007 = vld [vmem:[%s4895 + $0x2e4] sm:$0xff]
  %v5008 = vld [vmem:[%s4895 + $0x2ec] sm:$0xff]
  %v5009 = vld [vmem:[%s4895 + $0x2f4] sm:$0xf]
  %v5010 = vld [vmem:[%s4895 + $0x2f8] sm:$0xff]
  %v5011 = vld [vmem:[%s4895 + $0x300] sm:$0xff]
  %v5012 = vld [vmem:[%s4895 + $0x308] sm:$0xf]
  %v5013 = vld [vmem:[%s4895 + $0x30c] sm:$0xff]
  %v5014 = vld [vmem:[%s4895 + $0x314] sm:$0xff]
  %v5015 = vld [vmem:[%s4895 + $0x31c] sm:$0xf]
  %v5016 = vld [vmem:[%s4895 + $0x320] sm:$0xff]
  %v5017 = vld [vmem:[%s4895 + $0x328] sm:$0xff]
  %v5018 = vld [vmem:[%s4895 + $0x330] sm:$0xf]
  %v5019 = vld [vmem:[%s4895 + $0x334] sm:$0xff]
  %v5020 = vld [vmem:[%s4895 + $0x33c] sm:$0xff]
  %v5021 = vld [vmem:[%s4895 + $0x344] sm:$0xf]
  %v5022 = vld [vmem:[%s4895 + $0x348] sm:$0xff]
  %v5023 = vld [vmem:[%s4895 + $0x350] sm:$0xff]
  %v5024 = vld [vmem:[%s4895 + $0x358] sm:$0xf]
  %v5025 = vld [vmem:[%s4895 + $0x35c] sm:$0xff]
  %v5026 = vld [vmem:[%s4895 + $0x364] sm:$0xff]
  %v5027 = vld [vmem:[%s4895 + $0x36c] sm:$0xf]
  %v5160 = vunpack.c.l.b16 %v4896
  %v5161 = vunpack.c.h.b16 %v4896
  %v5162 = vunpack.c.l.b16 %v4897
  %v5163 = vunpack.c.h.b16 %v4897
  %v5164 = vunpack.c.l.b16 %v4898
  %v5165 = vunpack.c.l.b16 %v4899
  %v5166 = vunpack.c.h.b16 %v4899
  %v5167 = vunpack.c.l.b16 %v4900
  %v5168 = vunpack.c.h.b16 %v4900
  %v5169 = vunpack.c.l.b16 %v4901
  %v5170 = vunpack.c.l.b16 %v4902
  %v5171 = vunpack.c.h.b16 %v4902
  %v5172 = vunpack.c.l.b16 %v4903
  %v5173 = vunpack.c.h.b16 %v4903
  %v5174 = vunpack.c.l.b16 %v4904
  %v5175 = vunpack.c.l.b16 %v4905
  %v5176 = vunpack.c.h.b16 %v4905
  %v5177 = vunpack.c.l.b16 %v4906
  %v5178 = vunpack.c.h.b16 %v4906
  %v5179 = vunpack.c.l.b16 %v4907
  %v5180 = vunpack.c.l.b16 %v4908
  %v5181 = vunpack.c.h.b16 %v4908
  %v5182 = vunpack.c.l.b16 %v4909
  %v5183 = vunpack.c.h.b16 %v4909
  %v5184 = vunpack.c.l.b16 %v4910
  %v5185 = vunpack.c.l.b16 %v4911
  %v5186 = vunpack.c.h.b16 %v4911
  %v5187 = vunpack.c.l.b16 %v4912
  %v5188 = vunpack.c.h.b16 %v4912
  %v5189 = vunpack.c.l.b16 %v4913
  %v5190 = vunpack.c.l.b16 %v4914
  %v5191 = vunpack.c.h.b16 %v4914
  %v5192 = vunpack.c.l.b16 %v4915
  %v5193 = vunpack.c.h.b16 %v4915
  %v5194 = vunpack.c.l.b16 %v4916
  %v5195 = vunpack.c.l.b16 %v4917
  %v5196 = vunpack.c.h.b16 %v4917
  %v5197 = vunpack.c.l.b16 %v4918
  %v5198 = vunpack.c.h.b16 %v4918
  %v5199 = vunpack.c.l.b16 %v4919
  %v5200 = vunpack.c.l.b16 %v4920
  %v5201 = vunpack.c.h.b16 %v4920
  %v5202 = vunpack.c.l.b16 %v4921
  %v5203 = vunpack.c.h.b16 %v4921
  %v5204 = vunpack.c.l.b16 %v4922
  %v5205 = vunpack.c.l.b16 %v4923
  %v5206 = vunpack.c.h.b16 %v4923
  %v5207 = vunpack.c.l.b16 %v4924
  %v5208 = vunpack.c.h.b16 %v4924
  %v5209 = vunpack.c.l.b16 %v4925
  %v5210 = vunpack.c.l.b16 %v4926
  %v5211 = vunpack.c.h.b16 %v4926
  %v5212 = vunpack.c.l.b16 %v4927
  %v5213 = vunpack.c.h.b16 %v4927
  %v5214 = vunpack.c.l.b16 %v4928
  %v5215 = vunpack.c.l.b16 %v4929
  %v5216 = vunpack.c.h.b16 %v4929
  %v5217 = vunpack.c.l.b16 %v4930
  %v5218 = vunpack.c.h.b16 %v4930
  %v5219 = vunpack.c.l.b16 %v4931
  %v5220 = vunpack.c.l.b16 %v4932
  %v5221 = vunpack.c.h.b16 %v4932
  %v5222 = vunpack.c.l.b16 %v4933
  %v5223 = vunpack.c.h.b16 %v4933
  %v5224 = vunpack.c.l.b16 %v4934
  %v5225 = vunpack.c.l.b16 %v4935
  %v5226 = vunpack.c.h.b16 %v4935
  %v5227 = vunpack.c.l.b16 %v4936
  %v5228 = vunpack.c.h.b16 %v4936
  %v5229 = vunpack.c.l.b16 %v4937
  %v5230 = vunpack.c.l.b16 %v4938
  %v5231 = vunpack.c.h.b16 %v4938
  %v5232 = vunpack.c.l.b16 %v4939
  %v5233 = vunpack.c.h.b16 %v4939
  %v5234 = vunpack.c.l.b16 %v4940
  %v5235 = vunpack.c.l.b16 %v4941
  %v5236 = vunpack.c.h.b16 %v4941
  %v5237 = vunpack.c.l.b16 %v4942
  %v5238 = vunpack.c.h.b16 %v4942
  %v5239 = vunpack.c.l.b16 %v4943
  %v5240 = vunpack.c.l.b16 %v4944
  %v5241 = vunpack.c.h.b16 %v4944
  %v5242 = vunpack.c.l.b16 %v4945
  %v5243 = vunpack.c.h.b16 %v4945
  %v5244 = vunpack.c.l.b16 %v4946
  %v5245 = vunpack.c.l.b16 %v4947
  %v5246 = vunpack.c.h.b16 %v4947
  %v5247 = vunpack.c.l.b16 %v4948
  %v5248 = vunpack.c.h.b16 %v4948
  %v5249 = vunpack.c.l.b16 %v4949
  %v5250 = vunpack.c.l.b16 %v4950
  %v5251 = vunpack.c.h.b16 %v4950
  %v5252 = vunpack.c.l.b16 %v4951
  %v5253 = vunpack.c.h.b16 %v4951
  %v5254 = vunpack.c.l.b16 %v4952
  %v5255 = vunpack.c.l.b16 %v4953
  %v5256 = vunpack.c.h.b16 %v4953
  %v5257 = vunpack.c.l.b16 %v4954
  %v5258 = vunpack.c.h.b16 %v4954
  %v5259 = vunpack.c.l.b16 %v4955
  %v5260 = vunpack.c.l.b16 %v4956
  %v5261 = vunpack.c.h.b16 %v4956
  %v5262 = vunpack.c.l.b16 %v4957
  %v5263 = vunpack.c.h.b16 %v4957
  %v5264 = vunpack.c.l.b16 %v4958
  %v5265 = vunpack.c.l.b16 %v4959
  %v5266 = vunpack.c.h.b16 %v4959
  %v5267 = vunpack.c.l.b16 %v4960
  %v5268 = vunpack.c.h.b16 %v4960
  %v5269 = vunpack.c.l.b16 %v4961
  %v5270 = vunpack.c.l.b16 %v4962
  %v5271 = vunpack.c.h.b16 %v4962
  %v5272 = vunpack.c.l.b16 %v4963
  %v5273 = vunpack.c.h.b16 %v4963
  %v5274 = vunpack.c.l.b16 %v4964
  %v5275 = vunpack.c.l.b16 %v4965
  %v5276 = vunpack.c.h.b16 %v4965
  %v5277 = vunpack.c.l.b16 %v4966
  %v5278 = vunpack.c.h.b16 %v4966
  %v5279 = vunpack.c.l.b16 %v4967
  %v5280 = vunpack.c.l.b16 %v4968
  %v5281 = vunpack.c.h.b16 %v4968
  %v5282 = vunpack.c.l.b16 %v4969
  %v5283 = vunpack.c.h.b16 %v4969
  %v5284 = vunpack.c.l.b16 %v4970
  %v5285 = vunpack.c.l.b16 %v4971
  %v5286 = vunpack.c.h.b16 %v4971
  %v5287 = vunpack.c.l.b16 %v4972
  %v5288 = vunpack.c.h.b16 %v4972
  %v5289 = vunpack.c.l.b16 %v4973
  %v5290 = vunpack.c.l.b16 %v4974
  %v5291 = vunpack.c.h.b16 %v4974
  %v5292 = vunpack.c.l.b16 %v4975
  %v5293 = vunpack.c.h.b16 %v4975
  %v5294 = vunpack.c.l.b16 %v4976
  %v5295 = vunpack.c.l.b16 %v4977
  %v5296 = vunpack.c.h.b16 %v4977
  %v5297 = vunpack.c.l.b16 %v4978
  %v5298 = vunpack.c.h.b16 %v4978
  %v5299 = vunpack.c.l.b16 %v4979
  %v5300 = vunpack.c.l.b16 %v4980
  %v5301 = vunpack.c.h.b16 %v4980
  %v5302 = vunpack.c.l.b16 %v4981
  %v5303 = vunpack.c.h.b16 %v4981
  %v5304 = vunpack.c.l.b16 %v4982
  %v5305 = vunpack.c.l.b16 %v4983
  %v5306 = vunpack.c.h.b16 %v4983
  %v5307 = vunpack.c.l.b16 %v4984
  %v5308 = vunpack.c.h.b16 %v4984
  %v5309 = vunpack.c.l.b16 %v4985
  %v5310 = vunpack.c.l.b16 %v4986
  %v5311 = vunpack.c.h.b16 %v4986
  %v5312 = vunpack.c.l.b16 %v4987
  %v5313 = vunpack.c.h.b16 %v4987
  %v5314 = vunpack.c.l.b16 %v4988
  %v5315 = vunpack.c.l.b16 %v4989
  %v5316 = vunpack.c.h.b16 %v4989
  %v5317 = vunpack.c.l.b16 %v4990
  %v5318 = vunpack.c.h.b16 %v4990
  %v5319 = vunpack.c.l.b16 %v4991
  %v5320 = vunpack.c.l.b16 %v4992
  %v5321 = vunpack.c.h.b16 %v4992
  %v5322 = vunpack.c.l.b16 %v4993
  %v5323 = vunpack.c.h.b16 %v4993
  %v5324 = vunpack.c.l.b16 %v4994
  %v5325 = vunpack.c.l.b16 %v4995
  %v5326 = vunpack.c.h.b16 %v4995
  %v5327 = vunpack.c.l.b16 %v4996
  %v5328 = vunpack.c.h.b16 %v4996
  %v5329 = vunpack.c.l.b16 %v4997
  %v5330 = vunpack.c.l.b16 %v4998
  %v5331 = vunpack.c.h.b16 %v4998
  %v5332 = vunpack.c.l.b16 %v4999
  %v5333 = vunpack.c.h.b16 %v4999
  %v5334 = vunpack.c.l.b16 %v5000
  %v5335 = vunpack.c.l.b16 %v5001
  %v5336 = vunpack.c.h.b16 %v5001
  %v5337 = vunpack.c.l.b16 %v5002
  %v5338 = vunpack.c.h.b16 %v5002
  %v5339 = vunpack.c.l.b16 %v5003
  %v5340 = vunpack.c.l.b16 %v5004
  %v5341 = vunpack.c.h.b16 %v5004
  %v5342 = vunpack.c.l.b16 %v5005
  %v5343 = vunpack.c.h.b16 %v5005
  %v5344 = vunpack.c.l.b16 %v5006
  %v5345 = vunpack.c.l.b16 %v5007
  %v5346 = vunpack.c.h.b16 %v5007
  %v5347 = vunpack.c.l.b16 %v5008
  %v5348 = vunpack.c.h.b16 %v5008
  %v5349 = vunpack.c.l.b16 %v5009
  %v5350 = vunpack.c.l.b16 %v5010
  %v5351 = vunpack.c.h.b16 %v5010
  %v5352 = vunpack.c.l.b16 %v5011
  %v5353 = vunpack.c.h.b16 %v5011
  %v5354 = vunpack.c.l.b16 %v5012
  %v5355 = vunpack.c.l.b16 %v5013
  %v5356 = vunpack.c.h.b16 %v5013
  %v5357 = vunpack.c.l.b16 %v5014
  %v5358 = vunpack.c.h.b16 %v5014
  %v5359 = vunpack.c.l.b16 %v5015
  %v5360 = vunpack.c.l.b16 %v5016
  %v5361 = vunpack.c.h.b16 %v5016
  %v5362 = vunpack.c.l.b16 %v5017
  %v5363 = vunpack.c.h.b16 %v5017
  %v5364 = vunpack.c.l.b16 %v5018
  %v5365 = vunpack.c.l.b16 %v5019
  %v5366 = vunpack.c.h.b16 %v5019
  %v5367 = vunpack.c.l.b16 %v5020
  %v5368 = vunpack.c.h.b16 %v5020
  %v5369 = vunpack.c.l.b16 %v5021
  %v5370 = vunpack.c.l.b16 %v5022
  %v5371 = vunpack.c.h.b16 %v5022
  %v5372 = vunpack.c.l.b16 %v5023
  %v5373 = vunpack.c.h.b16 %v5023
  %v5374 = vunpack.c.l.b16 %v5024
  %v5375 = vunpack.c.l.b16 %v5025
  %v5376 = vunpack.c.h.b16 %v5025
  %v5377 = vunpack.c.l.b16 %v5026
  %v5378 = vunpack.c.h.b16 %v5026
  %v5379 = vunpack.c.l.b16 %v5027
  %v5380 = vpack.c.b16 %v5165, %v5160
  %v5381 = vpack.c.b16 %v5166, %v5161
  %v5382 = vpack.c.b16 %v5167, %v5162
  %v5383 = vpack.c.b16 %v5168, %v5163
  %v5384 = vpack.c.b16 %v5169, %v5164
  %v5385 = vpack.c.b16 %v5175, %v5170
  %v5386 = vpack.c.b16 %v5176, %v5171
  %v5387 = vpack.c.b16 %v5177, %v5172
  %v5388 = vpack.c.b16 %v5178, %v5173
  %v5389 = vpack.c.b16 %v5179, %v5174
  %v5390 = vpack.c.b16 %v5185, %v5180
  %v5391 = vpack.c.b16 %v5186, %v5181
  %v5392 = vpack.c.b16 %v5187, %v5182
  %v5393 = vpack.c.b16 %v5188, %v5183
  %v5394 = vpack.c.b16 %v5189, %v5184
  %v5395 = vpack.c.b16 %v5195, %v5190
  %v5396 = vpack.c.b16 %v5196, %v5191
  %v5397 = vpack.c.b16 %v5197, %v5192
  %v5398 = vpack.c.b16 %v5198, %v5193
  %v5399 = vpack.c.b16 %v5199, %v5194
  %v5400 = vpack.c.b16 %v5205, %v5200
  %v5401 = vpack.c.b16 %v5206, %v5201
  %v5402 = vpack.c.b16 %v5207, %v5202
  %v5403 = vpack.c.b16 %v5208, %v5203
  %v5404 = vpack.c.b16 %v5209, %v5204
  %v5405 = vpack.c.b16 %v5215, %v5210
  %v5406 = vpack.c.b16 %v5216, %v5211
  %v5407 = vpack.c.b16 %v5217, %v5212
  %v5408 = vpack.c.b16 %v5218, %v5213
  %v5409 = vpack.c.b16 %v5219, %v5214
  %v5410 = vpack.c.b16 %v5225, %v5220
  %v5411 = vpack.c.b16 %v5226, %v5221
  %v5412 = vpack.c.b16 %v5227, %v5222
  %v5413 = vpack.c.b16 %v5228, %v5223
  %v5414 = vpack.c.b16 %v5229, %v5224
  %v5415 = vpack.c.b16 %v5235, %v5230
  %v5416 = vpack.c.b16 %v5236, %v5231
  %v5417 = vpack.c.b16 %v5237, %v5232
  %v5418 = vpack.c.b16 %v5238, %v5233
  %v5419 = vpack.c.b16 %v5239, %v5234
  %v5420 = vpack.c.b16 %v5245, %v5240
  %v5421 = vpack.c.b16 %v5246, %v5241
  %v5422 = vpack.c.b16 %v5247, %v5242
  %v5423 = vpack.c.b16 %v5248, %v5243
  %v5424 = vpack.c.b16 %v5249, %v5244
  %v5425 = vpack.c.b16 %v5255, %v5250
  %v5426 = vpack.c.b16 %v5256, %v5251
  %v5427 = vpack.c.b16 %v5257, %v5252
  %v5428 = vpack.c.b16 %v5258, %v5253
  %v5429 = vpack.c.b16 %v5259, %v5254
  %v5430 = vpack.c.b16 %v5265, %v5260
  %v5431 = vpack.c.b16 %v5266, %v5261
  %v5432 = vpack.c.b16 %v5267, %v5262
  %v5433 = vpack.c.b16 %v5268, %v5263
  %v5434 = vpack.c.b16 %v5269, %v5264
  %v5435 = vpack.c.b16 %v5275, %v5270
  %v5436 = vpack.c.b16 %v5276, %v5271
  %v5437 = vpack.c.b16 %v5277, %v5272
  %v5438 = vpack.c.b16 %v5278, %v5273
  %v5439 = vpack.c.b16 %v5279, %v5274
  %v5440 = vpack.c.b16 %v5285, %v5280
  %v5441 = vpack.c.b16 %v5286, %v5281
  %v5442 = vpack.c.b16 %v5287, %v5282
  %v5443 = vpack.c.b16 %v5288, %v5283
  %v5444 = vpack.c.b16 %v5289, %v5284
  %v5445 = vpack.c.b16 %v5295, %v5290
  %v5446 = vpack.c.b16 %v5296, %v5291
  %v5447 = vpack.c.b16 %v5297, %v5292
  %v5448 = vpack.c.b16 %v5298, %v5293
  %v5449 = vpack.c.b16 %v5299, %v5294
  %v5450 = vpack.c.b16 %v5305, %v5300
  %v5451 = vpack.c.b16 %v5306, %v5301
  %v5452 = vpack.c.b16 %v5307, %v5302
  %v5453 = vpack.c.b16 %v5308, %v5303
  %v5454 = vpack.c.b16 %v5309, %v5304
  %v5455 = vpack.c.b16 %v5315, %v5310
  %v5456 = vpack.c.b16 %v5316, %v5311
  %v5457 = vpack.c.b16 %v5317, %v5312
  %v5458 = vpack.c.b16 %v5318, %v5313
  %v5459 = vpack.c.b16 %v5319, %v5314
  %v5460 = vpack.c.b16 %v5325, %v5320
  %v5461 = vpack.c.b16 %v5326, %v5321
  %v5462 = vpack.c.b16 %v5327, %v5322
  %v5463 = vpack.c.b16 %v5328, %v5323
  %v5464 = vpack.c.b16 %v5329, %v5324
  %v5465 = vpack.c.b16 %v5335, %v5330
  %v5466 = vpack.c.b16 %v5336, %v5331
  %v5467 = vpack.c.b16 %v5337, %v5332
  %v5468 = vpack.c.b16 %v5338, %v5333
  %v5469 = vpack.c.b16 %v5339, %v5334
  %v5470 = vpack.c.b16 %v5345, %v5340
  %v5471 = vpack.c.b16 %v5346, %v5341
  %v5472 = vpack.c.b16 %v5347, %v5342
  %v5473 = vpack.c.b16 %v5348, %v5343
  %v5474 = vpack.c.b16 %v5349, %v5344
  %v5475 = vpack.c.b16 %v5355, %v5350
  %v5476 = vpack.c.b16 %v5356, %v5351
  %v5477 = vpack.c.b16 %v5357, %v5352
  %v5478 = vpack.c.b16 %v5358, %v5353
  %v5479 = vpack.c.b16 %v5359, %v5354
  %v5480 = vpack.c.b16 %v5365, %v5360
  %v5481 = vpack.c.b16 %v5366, %v5361
  %v5482 = vpack.c.b16 %v5367, %v5362
  %v5483 = vpack.c.b16 %v5368, %v5363
  %v5484 = vpack.c.b16 %v5369, %v5364
  %v5485 = vpack.c.b16 %v5375, %v5370
  %v5486 = vpack.c.b16 %v5376, %v5371
  %v5487 = vpack.c.b16 %v5377, %v5372
  %v5488 = vpack.c.b16 %v5378, %v5373
  %v5489 = vpack.c.b16 %v5379, %v5374
  %v5601 = vsel %vm951, %v4882, 0
  %v5604 = vsel %vm951, %v4885, 0
  %v5607 = vsel %vm951, %v4888, 0
  %v5610 = vsel %vm951, %v4891, 0
  %v5613 = vsel %vm951, %v4894, 0
  %5615 = vmatpush.bf16.msra.mxu0 %v5415
  %5616 = vmatpush.bf16.msra.mxu0 %v5410
  %5617 = vmatpush.bf16.msra.mxu0 %v5405
  %5618 = vmatpush.bf16.msra.mxu0 %v5400
  %5619 = vmatpush.bf16.msra.mxu0 %v5395
  %5620 = vmatpush.bf16.msra.mxu0 %v5390
  %5621 = vmatpush.bf16.msra.mxu0 %v5385
  %5622 = vmatpush.bf16.msra.mxu0 %v5380
  %5623 = vmatmul.bf16.gmra.mxu0 %v4880
  %v5624 = vpop.f32.mrf.mxu0
  %v5625 = vadd.f32 0.0, %v5624
  %v5626 = vpop.f32.mrf.mxu0
  %v5627 = vadd.f32 0.0, %v5626
  %5628 = vmatmul.bf16.gmra.mxu0 %v4883
  %v5629 = vpop.f32.mrf.mxu0
  %v5630 = vadd.f32 0.0, %v5629
  %v5631 = vpop.f32.mrf.mxu0
  %v5632 = vadd.f32 0.0, %v5631
  %5633 = vmatmul.bf16.gmra.mxu0 %v4886
  %v5634 = vpop.f32.mrf.mxu0
  %v5635 = vadd.f32 0.0, %v5634
  %v5636 = vpop.f32.mrf.mxu0
  %v5637 = vadd.f32 0.0, %v5636
  %5638 = vmatmul.bf16.gmra.mxu0 %v4889
  %v5639 = vpop.f32.mrf.mxu0
  %v5640 = vadd.f32 0.0, %v5639
  %v5641 = vpop.f32.mrf.mxu0
  %v5642 = vadd.f32 0.0, %v5641
  %5643 = vmatmul.bf16.gmra.mxu0 %v4892
  %v5644 = vpop.f32.mrf.mxu0
  %v5645 = vadd.f32 0.0, %v5644
  %v5646 = vpop.f32.mrf.mxu0
  %5647 = vdwg.mxu0
  %5648 = vmatpush.bf16.msra.mxu0 %v5455
  %5649 = vmatpush.bf16.msra.mxu0 %v5450
  %5650 = vmatpush.bf16.msra.mxu0 %v5445
  %5651 = vmatpush.bf16.msra.mxu0 %v5440
  %5652 = vmatpush.bf16.msra.mxu0 %v5435
  %5653 = vmatpush.bf16.msra.mxu0 %v5430
  %5654 = vmatpush.bf16.msra.mxu0 %v5425
  %5655 = vmatpush.bf16.msra.mxu0 %v5420
  %5656 = vmatmul.bf16.gmra.mxu0 %v4881
  %v5657 = vpop.f32.mrf.mxu0
  %v5658 = vadd.f32 %v5625, %v5657
  %v5659 = vpop.f32.mrf.mxu0
  %v5660 = vadd.f32 %v5627, %v5659
  %5661 = vmatmul.bf16.gmra.mxu0 %v4884
  %v5662 = vpop.f32.mrf.mxu0
  %v5663 = vadd.f32 %v5630, %v5662
  %v5664 = vpop.f32.mrf.mxu0
  %v5665 = vadd.f32 %v5632, %v5664
  %5666 = vmatmul.bf16.gmra.mxu0 %v4887
  %v5667 = vpop.f32.mrf.mxu0
  %v5668 = vadd.f32 %v5635, %v5667
  %v5669 = vpop.f32.mrf.mxu0
  %v5670 = vadd.f32 %v5637, %v5669
  %5671 = vmatmul.bf16.gmra.mxu0 %v4890
  %v5672 = vpop.f32.mrf.mxu0
  %v5673 = vadd.f32 %v5640, %v5672
  %v5674 = vpop.f32.mrf.mxu0
  %v5675 = vadd.f32 %v5642, %v5674
  %5676 = vmatmul.bf16.gmra.mxu0 %v4893
  %v5677 = vpop.f32.mrf.mxu0
  %v5678 = vadd.f32 %v5645, %v5677
  %v5679 = vpop.f32.mrf.mxu0
  %5680 = vdwg.mxu0
  %5681 = vmatpush.bf16.msra.mxu0 0
  %5682 = vmatpush.bf16.msra.mxu0 0
  %5683 = vmatpush.bf16.msra.mxu0 %v5485
  %5684 = vmatpush.bf16.msra.mxu0 %v5480
  %5685 = vmatpush.bf16.msra.mxu0 %v5475
  %5686 = vmatpush.bf16.msra.mxu0 %v5470
  %5687 = vmatpush.bf16.msra.mxu0 %v5465
  %5688 = vmatpush.bf16.msra.mxu0 %v5460
  %5689 = vmatmul.bf16.gmra.mxu0 %v5601
  %v5690 = vpop.f32.mrf.mxu0
  %v5691 = vadd.f32 %v5658, %v5690
  %v5692 = vpop.f32.mrf.mxu0
  %v5693 = vadd.f32 %v5660, %v5692
  %5694 = vmatmul.bf16.gmra.mxu0 %v5604
  %v5695 = vpop.f32.mrf.mxu0
  %v5696 = vadd.f32 %v5663, %v5695
  %v5697 = vpop.f32.mrf.mxu0
  %v5698 = vadd.f32 %v5665, %v5697
  %5699 = vmatmul.bf16.gmra.mxu0 %v5607
  %v5700 = vpop.f32.mrf.mxu0
  %v5701 = vadd.f32 %v5668, %v5700
  %v5702 = vpop.f32.mrf.mxu0
  %v5703 = vadd.f32 %v5670, %v5702
  %5704 = vmatmul.bf16.gmra.mxu0 %v5610
  %v5705 = vpop.f32.mrf.mxu0
  %v5706 = vadd.f32 %v5673, %v5705
  %v5707 = vpop.f32.mrf.mxu0
  %v5708 = vadd.f32 %v5675, %v5707
  %5709 = vmatmul.bf16.gmra.mxu0 %v5613
  %v5710 = vpop.f32.mrf.mxu0
  %v5711 = vadd.f32 %v5678, %v5710
  %v5712 = vpop.f32.mrf.mxu0
  %5713 = vdwg.mxu0
  %5714 = vmatpush.bf16.msra.mxu0 %v5416
  %5715 = vmatpush.bf16.msra.mxu0 %v5411
  %5716 = vmatpush.bf16.msra.mxu0 %v5406
  %5717 = vmatpush.bf16.msra.mxu0 %v5401
  %5718 = vmatpush.bf16.msra.mxu0 %v5396
  %5719 = vmatpush.bf16.msra.mxu0 %v5391
  %5720 = vmatpush.bf16.msra.mxu0 %v5386
  %5721 = vmatpush.bf16.msra.mxu0 %v5381
  %5722 = vmatmul.bf16.gmra.mxu0 %v4880
  %v5723 = vpop.f32.mrf.mxu0
  %v5724 = vadd.f32 0.0, %v5723
  %v5725 = vpop.f32.mrf.mxu0
  %v5726 = vadd.f32 0.0, %v5725
  %5727 = vmatmul.bf16.gmra.mxu0 %v4883
  %v5728 = vpop.f32.mrf.mxu0
  %v5729 = vadd.f32 0.0, %v5728
  %v5730 = vpop.f32.mrf.mxu0
  %v5731 = vadd.f32 0.0, %v5730
  %5732 = vmatmul.bf16.gmra.mxu0 %v4886
  %v5733 = vpop.f32.mrf.mxu0
  %v5734 = vadd.f32 0.0, %v5733
  %v5735 = vpop.f32.mrf.mxu0
  %v5736 = vadd.f32 0.0, %v5735
  %5737 = vmatmul.bf16.gmra.mxu0 %v4889
  %v5738 = vpop.f32.mrf.mxu0
  %v5739 = vadd.f32 0.0, %v5738
  %v5740 = vpop.f32.mrf.mxu0
  %v5741 = vadd.f32 0.0, %v5740
  %5742 = vmatmul.bf16.gmra.mxu0 %v4892
  %v5743 = vpop.f32.mrf.mxu0
  %v5744 = vadd.f32 0.0, %v5743
  %v5745 = vpop.f32.mrf.mxu0
  %5746 = vdwg.mxu0
  %5747 = vmatpush.bf16.msra.mxu0 %v5456
  %5748 = vmatpush.bf16.msra.mxu0 %v5451
  %5749 = vmatpush.bf16.msra.mxu0 %v5446
  %5750 = vmatpush.bf16.msra.mxu0 %v5441
  %5751 = vmatpush.bf16.msra.mxu0 %v5436
  %5752 = vmatpush.bf16.msra.mxu0 %v5431
  %5753 = vmatpush.bf16.msra.mxu0 %v5426
  %5754 = vmatpush.bf16.msra.mxu0 %v5421
  %5755 = vmatmul.bf16.gmra.mxu0 %v4881
  %v5756 = vpop.f32.mrf.mxu0
  %v5757 = vadd.f32 %v5724, %v5756
  %v5758 = vpop.f32.mrf.mxu0
  %v5759 = vadd.f32 %v5726, %v5758
  %5760 = vmatmul.bf16.gmra.mxu0 %v4884
  %v5761 = vpop.f32.mrf.mxu0
  %v5762 = vadd.f32 %v5729, %v5761
  %v5763 = vpop.f32.mrf.mxu0
  %v5764 = vadd.f32 %v5731, %v5763
  %5765 = vmatmul.bf16.gmra.mxu0 %v4887
  %v5766 = vpop.f32.mrf.mxu0
  %v5767 = vadd.f32 %v5734, %v5766
  %v5768 = vpop.f32.mrf.mxu0
  %v5769 = vadd.f32 %v5736, %v5768
  %5770 = vmatmul.bf16.gmra.mxu0 %v4890
  %v5771 = vpop.f32.mrf.mxu0
  %v5772 = vadd.f32 %v5739, %v5771
  %v5773 = vpop.f32.mrf.mxu0
  %v5774 = vadd.f32 %v5741, %v5773
  %5775 = vmatmul.bf16.gmra.mxu0 %v4893
  %v5776 = vpop.f32.mrf.mxu0
  %v5777 = vadd.f32 %v5744, %v5776
  %v5778 = vpop.f32.mrf.mxu0
  %5779 = vdwg.mxu0
  %5780 = vmatpush.bf16.msra.mxu0 0
  %5781 = vmatpush.bf16.msra.mxu0 0
  %5782 = vmatpush.bf16.msra.mxu0 %v5486
  %5783 = vmatpush.bf16.msra.mxu0 %v5481
  %5784 = vmatpush.bf16.msra.mxu0 %v5476
  %5785 = vmatpush.bf16.msra.mxu0 %v5471
  %5786 = vmatpush.bf16.msra.mxu0 %v5466
  %5787 = vmatpush.bf16.msra.mxu0 %v5461
  %5788 = vmatmul.bf16.gmra.mxu0 %v5601
  %v5789 = vpop.f32.mrf.mxu0
  %v5790 = vadd.f32 %v5757, %v5789
  %v5791 = vpop.f32.mrf.mxu0
  %v5792 = vadd.f32 %v5759, %v5791
  %5793 = vmatmul.bf16.gmra.mxu0 %v5604
  %v5794 = vpop.f32.mrf.mxu0
  %v5795 = vadd.f32 %v5762, %v5794
  %v5796 = vpop.f32.mrf.mxu0
  %v5797 = vadd.f32 %v5764, %v5796
  %5798 = vmatmul.bf16.gmra.mxu0 %v5607
  %v5799 = vpop.f32.mrf.mxu0
  %v5800 = vadd.f32 %v5767, %v5799
  %v5801 = vpop.f32.mrf.mxu0
  %v5802 = vadd.f32 %v5769, %v5801
  %5803 = vmatmul.bf16.gmra.mxu0 %v5610
  %v5804 = vpop.f32.mrf.mxu0
  %v5805 = vadd.f32 %v5772, %v5804
  %v5806 = vpop.f32.mrf.mxu0
  %v5807 = vadd.f32 %v5774, %v5806
  %5808 = vmatmul.bf16.gmra.mxu0 %v5613
  %v5809 = vpop.f32.mrf.mxu0
  %v5810 = vadd.f32 %v5777, %v5809
  %v5811 = vpop.f32.mrf.mxu0
  %5812 = vdwg.mxu0
  %5813 = vmatpush.bf16.msra.mxu0 %v5417
  %5814 = vmatpush.bf16.msra.mxu0 %v5412
  %5815 = vmatpush.bf16.msra.mxu0 %v5407
  %5816 = vmatpush.bf16.msra.mxu0 %v5402
  %5817 = vmatpush.bf16.msra.mxu0 %v5397
  %5818 = vmatpush.bf16.msra.mxu0 %v5392
  %5819 = vmatpush.bf16.msra.mxu0 %v5387
  %5820 = vmatpush.bf16.msra.mxu0 %v5382
  %5821 = vmatmul.bf16.gmra.mxu0 %v4880
  %v5822 = vpop.f32.mrf.mxu0
  %v5823 = vadd.f32 0.0, %v5822
  %v5824 = vpop.f32.mrf.mxu0
  %v5825 = vadd.f32 0.0, %v5824
  %5826 = vmatmul.bf16.gmra.mxu0 %v4883
  %v5827 = vpop.f32.mrf.mxu0
  %v5828 = vadd.f32 0.0, %v5827
  %v5829 = vpop.f32.mrf.mxu0
  %v5830 = vadd.f32 0.0, %v5829
  %5831 = vmatmul.bf16.gmra.mxu0 %v4886
  %v5832 = vpop.f32.mrf.mxu0
  %v5833 = vadd.f32 0.0, %v5832
  %v5834 = vpop.f32.mrf.mxu0
  %v5835 = vadd.f32 0.0, %v5834
  %5836 = vmatmul.bf16.gmra.mxu0 %v4889
  %v5837 = vpop.f32.mrf.mxu0
  %v5838 = vadd.f32 0.0, %v5837
  %v5839 = vpop.f32.mrf.mxu0
  %v5840 = vadd.f32 0.0, %v5839
  %5841 = vmatmul.bf16.gmra.mxu0 %v4892
  %v5842 = vpop.f32.mrf.mxu0
  %v5843 = vadd.f32 0.0, %v5842
  %v5844 = vpop.f32.mrf.mxu0
  %5845 = vdwg.mxu0
  %5846 = vmatpush.bf16.msra.mxu0 %v5457
  %5847 = vmatpush.bf16.msra.mxu0 %v5452
  %5848 = vmatpush.bf16.msra.mxu0 %v5447
  %5849 = vmatpush.bf16.msra.mxu0 %v5442
  %5850 = vmatpush.bf16.msra.mxu0 %v5437
  %5851 = vmatpush.bf16.msra.mxu0 %v5432
  %5852 = vmatpush.bf16.msra.mxu0 %v5427
  %5853 = vmatpush.bf16.msra.mxu0 %v5422
  %5854 = vmatmul.bf16.gmra.mxu0 %v4881
  %v5855 = vpop.f32.mrf.mxu0
  %v5856 = vadd.f32 %v5823, %v5855
  %v5857 = vpop.f32.mrf.mxu0
  %v5858 = vadd.f32 %v5825, %v5857
  %5859 = vmatmul.bf16.gmra.mxu0 %v4884
  %v5860 = vpop.f32.mrf.mxu0
  %v5861 = vadd.f32 %v5828, %v5860
  %v5862 = vpop.f32.mrf.mxu0
  %v5863 = vadd.f32 %v5830, %v5862
  %5864 = vmatmul.bf16.gmra.mxu0 %v4887
  %v5865 = vpop.f32.mrf.mxu0
  %v5866 = vadd.f32 %v5833, %v5865
  %v5867 = vpop.f32.mrf.mxu0
  %v5868 = vadd.f32 %v5835, %v5867
  %5869 = vmatmul.bf16.gmra.mxu0 %v4890
  %v5870 = vpop.f32.mrf.mxu0
  %v5871 = vadd.f32 %v5838, %v5870
  %v5872 = vpop.f32.mrf.mxu0
  %v5873 = vadd.f32 %v5840, %v5872
  %5874 = vmatmul.bf16.gmra.mxu0 %v4893
  %v5875 = vpop.f32.mrf.mxu0
  %v5876 = vadd.f32 %v5843, %v5875
  %v5877 = vpop.f32.mrf.mxu0
  %5878 = vdwg.mxu0
  %5879 = vmatpush.bf16.msra.mxu0 0
  %5880 = vmatpush.bf16.msra.mxu0 0
  %5881 = vmatpush.bf16.msra.mxu0 %v5487
  %5882 = vmatpush.bf16.msra.mxu0 %v5482
  %5883 = vmatpush.bf16.msra.mxu0 %v5477
  %5884 = vmatpush.bf16.msra.mxu0 %v5472
  %5885 = vmatpush.bf16.msra.mxu0 %v5467
  %5886 = vmatpush.bf16.msra.mxu0 %v5462
  %5887 = vmatmul.bf16.gmra.mxu0 %v5601
  %v5888 = vpop.f32.mrf.mxu0
  %v5889 = vadd.f32 %v5856, %v5888
  %v5890 = vpop.f32.mrf.mxu0
  %v5891 = vadd.f32 %v5858, %v5890
  %5892 = vmatmul.bf16.gmra.mxu0 %v5604
  %v5893 = vpop.f32.mrf.mxu0
  %v5894 = vadd.f32 %v5861, %v5893
  %v5895 = vpop.f32.mrf.mxu0
  %v5896 = vadd.f32 %v5863, %v5895
  %5897 = vmatmul.bf16.gmra.mxu0 %v5607
  %v5898 = vpop.f32.mrf.mxu0
  %v5899 = vadd.f32 %v5866, %v5898
  %v5900 = vpop.f32.mrf.mxu0
  %v5901 = vadd.f32 %v5868, %v5900
  %5902 = vmatmul.bf16.gmra.mxu0 %v5610
  %v5903 = vpop.f32.mrf.mxu0
  %v5904 = vadd.f32 %v5871, %v5903
  %v5905 = vpop.f32.mrf.mxu0
  %v5906 = vadd.f32 %v5873, %v5905
  %5907 = vmatmul.bf16.gmra.mxu0 %v5613
  %v5908 = vpop.f32.mrf.mxu0
  %v5909 = vadd.f32 %v5876, %v5908
  %v5910 = vpop.f32.mrf.mxu0
  %5911 = vdwg.mxu0
  %5912 = vmatpush.bf16.msra.mxu0 %v5418
  %5913 = vmatpush.bf16.msra.mxu0 %v5413
  %5914 = vmatpush.bf16.msra.mxu0 %v5408
  %5915 = vmatpush.bf16.msra.mxu0 %v5403
  %5916 = vmatpush.bf16.msra.mxu0 %v5398
  %5917 = vmatpush.bf16.msra.mxu0 %v5393
  %5918 = vmatpush.bf16.msra.mxu0 %v5388
  %5919 = vmatpush.bf16.msra.mxu0 %v5383
  %5920 = vmatmul.bf16.gmra.mxu0 %v4880
  %v5921 = vpop.f32.mrf.mxu0
  %v5922 = vadd.f32 0.0, %v5921
  %v5923 = vpop.f32.mrf.mxu0
  %v5924 = vadd.f32 0.0, %v5923
  %5925 = vmatmul.bf16.gmra.mxu0 %v4883
  %v5926 = vpop.f32.mrf.mxu0
  %v5927 = vadd.f32 0.0, %v5926
  %v5928 = vpop.f32.mrf.mxu0
  %v5929 = vadd.f32 0.0, %v5928
  %5930 = vmatmul.bf16.gmra.mxu0 %v4886
  %v5931 = vpop.f32.mrf.mxu0
  %v5932 = vadd.f32 0.0, %v5931
  %v5933 = vpop.f32.mrf.mxu0
  %v5934 = vadd.f32 0.0, %v5933
  %5935 = vmatmul.bf16.gmra.mxu0 %v4889
  %v5936 = vpop.f32.mrf.mxu0
  %v5937 = vadd.f32 0.0, %v5936
  %v5938 = vpop.f32.mrf.mxu0
  %v5939 = vadd.f32 0.0, %v5938
  %5940 = vmatmul.bf16.gmra.mxu0 %v4892
  %v5941 = vpop.f32.mrf.mxu0
  %v5942 = vadd.f32 0.0, %v5941
  %v5943 = vpop.f32.mrf.mxu0
  %5944 = vdwg.mxu0
  %5945 = vmatpush.bf16.msra.mxu0 %v5458
  %5946 = vmatpush.bf16.msra.mxu0 %v5453
  %5947 = vmatpush.bf16.msra.mxu0 %v5448
  %5948 = vmatpush.bf16.msra.mxu0 %v5443
  %5949 = vmatpush.bf16.msra.mxu0 %v5438
  %5950 = vmatpush.bf16.msra.mxu0 %v5433
  %5951 = vmatpush.bf16.msra.mxu0 %v5428
  %5952 = vmatpush.bf16.msra.mxu0 %v5423
  %5953 = vmatmul.bf16.gmra.mxu0 %v4881
  %v5954 = vpop.f32.mrf.mxu0
  %v5955 = vadd.f32 %v5922, %v5954
  %v5956 = vpop.f32.mrf.mxu0
  %v5957 = vadd.f32 %v5924, %v5956
  %5958 = vmatmul.bf16.gmra.mxu0 %v4884
  %v5959 = vpop.f32.mrf.mxu0
  %v5960 = vadd.f32 %v5927, %v5959
  %v5961 = vpop.f32.mrf.mxu0
  %v5962 = vadd.f32 %v5929, %v5961
  %5963 = vmatmul.bf16.gmra.mxu0 %v4887
  %v5964 = vpop.f32.mrf.mxu0
  %v5965 = vadd.f32 %v5932, %v5964
  %v5966 = vpop.f32.mrf.mxu0
  %v5967 = vadd.f32 %v5934, %v5966
  %5968 = vmatmul.bf16.gmra.mxu0 %v4890
  %v5969 = vpop.f32.mrf.mxu0
  %v5970 = vadd.f32 %v5937, %v5969
  %v5971 = vpop.f32.mrf.mxu0
  %v5972 = vadd.f32 %v5939, %v5971
  %5973 = vmatmul.bf16.gmra.mxu0 %v4893
  %v5974 = vpop.f32.mrf.mxu0
  %v5975 = vadd.f32 %v5942, %v5974
  %v5976 = vpop.f32.mrf.mxu0
  %5977 = vdwg.mxu0
  %5978 = vmatpush.bf16.msra.mxu0 0
  %5979 = vmatpush.bf16.msra.mxu0 0
  %5980 = vmatpush.bf16.msra.mxu0 %v5488
  %5981 = vmatpush.bf16.msra.mxu0 %v5483
  %5982 = vmatpush.bf16.msra.mxu0 %v5478
  %5983 = vmatpush.bf16.msra.mxu0 %v5473
  %5984 = vmatpush.bf16.msra.mxu0 %v5468
  %5985 = vmatpush.bf16.msra.mxu0 %v5463
  %5986 = vmatmul.bf16.gmra.mxu0 %v5601
  %v5987 = vpop.f32.mrf.mxu0
  %v5988 = vadd.f32 %v5955, %v5987
  %v5989 = vpop.f32.mrf.mxu0
  %v5990 = vadd.f32 %v5957, %v5989
  %5991 = vmatmul.bf16.gmra.mxu0 %v5604
  %v5992 = vpop.f32.mrf.mxu0
  %v5993 = vadd.f32 %v5960, %v5992
  %v5994 = vpop.f32.mrf.mxu0
  %v5995 = vadd.f32 %v5962, %v5994
  %5996 = vmatmul.bf16.gmra.mxu0 %v5607
  %v5997 = vpop.f32.mrf.mxu0
  %v5998 = vadd.f32 %v5965, %v5997
  %v5999 = vpop.f32.mrf.mxu0
  %v6000 = vadd.f32 %v5967, %v5999
  %6001 = vmatmul.bf16.gmra.mxu0 %v5610
  %v6002 = vpop.f32.mrf.mxu0
  %v6003 = vadd.f32 %v5970, %v6002
  %v6004 = vpop.f32.mrf.mxu0
  %v6005 = vadd.f32 %v5972, %v6004
  %6006 = vmatmul.bf16.gmra.mxu0 %v5613
  %v6007 = vpop.f32.mrf.mxu0
  %v6008 = vadd.f32 %v5975, %v6007
  %v6009 = vpop.f32.mrf.mxu0
  %6010 = vdwg.mxu0
  %6011 = vmatpush.bf16.msra.mxu0 %v5419
  %6012 = vmatpush.bf16.msra.mxu0 %v5414
  %6013 = vmatpush.bf16.msra.mxu0 %v5409
  %6014 = vmatpush.bf16.msra.mxu0 %v5404
  %6015 = vmatpush.bf16.msra.mxu0 %v5399
  %6016 = vmatpush.bf16.msra.mxu0 %v5394
  %6017 = vmatpush.bf16.msra.mxu0 %v5389
  %6018 = vmatpush.bf16.msra.mxu0 %v5384
  %6019 = vmatmul.bf16.gmra.mxu0 %v4880
  %v6020 = vpop.f32.mrf.mxu0
  %v6021 = vadd.f32 0.0, %v6020
  %v6022 = vpop.f32.mrf.mxu0
  %v6023 = vadd.f32 0.0, %v6022
  %6024 = vmatmul.bf16.gmra.mxu0 %v4883
  %v6025 = vpop.f32.mrf.mxu0
  %v6026 = vadd.f32 0.0, %v6025
  %v6027 = vpop.f32.mrf.mxu0
  %v6028 = vadd.f32 0.0, %v6027
  %6029 = vmatmul.bf16.gmra.mxu0 %v4886
  %v6030 = vpop.f32.mrf.mxu0
  %v6031 = vadd.f32 0.0, %v6030
  %v6032 = vpop.f32.mrf.mxu0
  %v6033 = vadd.f32 0.0, %v6032
  %6034 = vmatmul.bf16.gmra.mxu0 %v4889
  %v6035 = vpop.f32.mrf.mxu0
  %v6036 = vadd.f32 0.0, %v6035
  %v6037 = vpop.f32.mrf.mxu0
  %v6038 = vadd.f32 0.0, %v6037
  %6039 = vmatmul.bf16.gmra.mxu0 %v4892
  %v6040 = vpop.f32.mrf.mxu0
  %v6041 = vadd.f32 0.0, %v6040
  %v6042 = vpop.f32.mrf.mxu0
  %6043 = vdwg.mxu0
  %6044 = vmatpush.bf16.msra.mxu0 %v5459
  %6045 = vmatpush.bf16.msra.mxu0 %v5454
  %6046 = vmatpush.bf16.msra.mxu0 %v5449
  %6047 = vmatpush.bf16.msra.mxu0 %v5444
  %6048 = vmatpush.bf16.msra.mxu0 %v5439
  %6049 = vmatpush.bf16.msra.mxu0 %v5434
  %6050 = vmatpush.bf16.msra.mxu0 %v5429
  %6051 = vmatpush.bf16.msra.mxu0 %v5424
  %6052 = vmatmul.bf16.gmra.mxu0 %v4881
  %v6053 = vpop.f32.mrf.mxu0
  %v6054 = vadd.f32 %v6021, %v6053
  %v6055 = vpop.f32.mrf.mxu0
  %v6056 = vadd.f32 %v6023, %v6055
  %6057 = vmatmul.bf16.gmra.mxu0 %v4884
  %v6058 = vpop.f32.mrf.mxu0
  %v6059 = vadd.f32 %v6026, %v6058
  %v6060 = vpop.f32.mrf.mxu0
  %v6061 = vadd.f32 %v6028, %v6060
  %6062 = vmatmul.bf16.gmra.mxu0 %v4887
  %v6063 = vpop.f32.mrf.mxu0
  %v6064 = vadd.f32 %v6031, %v6063
  %v6065 = vpop.f32.mrf.mxu0
  %v6066 = vadd.f32 %v6033, %v6065
  %6067 = vmatmul.bf16.gmra.mxu0 %v4890
  %v6068 = vpop.f32.mrf.mxu0
  %v6069 = vadd.f32 %v6036, %v6068
  %v6070 = vpop.f32.mrf.mxu0
  %v6071 = vadd.f32 %v6038, %v6070
  %6072 = vmatmul.bf16.gmra.mxu0 %v4893
  %v6073 = vpop.f32.mrf.mxu0
  %v6074 = vadd.f32 %v6041, %v6073
  %v6075 = vpop.f32.mrf.mxu0
  %6076 = vdwg.mxu0
  %6077 = vmatpush.bf16.msra.mxu0 0
  %6078 = vmatpush.bf16.msra.mxu0 0
  %6079 = vmatpush.bf16.msra.mxu0 %v5489
  %6080 = vmatpush.bf16.msra.mxu0 %v5484
  %6081 = vmatpush.bf16.msra.mxu0 %v5479
  %6082 = vmatpush.bf16.msra.mxu0 %v5474
  %6083 = vmatpush.bf16.msra.mxu0 %v5469
  %6084 = vmatpush.bf16.msra.mxu0 %v5464
  %6085 = vmatmul.bf16.gmra.mxu0 %v5601
  %v6086 = vpop.f32.mrf.mxu0
  %v6087 = vadd.f32 %v6054, %v6086
  %v6088 = vpop.f32.mrf.mxu0
  %v6089 = vadd.f32 %v6056, %v6088
  %6090 = vmatmul.bf16.gmra.mxu0 %v5604
  %v6091 = vpop.f32.mrf.mxu0
  %v6092 = vadd.f32 %v6059, %v6091
  %v6093 = vpop.f32.mrf.mxu0
  %v6094 = vadd.f32 %v6061, %v6093
  %6095 = vmatmul.bf16.gmra.mxu0 %v5607
  %v6096 = vpop.f32.mrf.mxu0
  %v6097 = vadd.f32 %v6064, %v6096
  %v6098 = vpop.f32.mrf.mxu0
  %v6099 = vadd.f32 %v6066, %v6098
  %6100 = vmatmul.bf16.gmra.mxu0 %v5610
  %v6101 = vpop.f32.mrf.mxu0
  %v6102 = vadd.f32 %v6069, %v6101
  %v6103 = vpop.f32.mrf.mxu0
  %v6104 = vadd.f32 %v6071, %v6103
  %6105 = vmatmul.bf16.gmra.mxu0 %v5613
  %v6106 = vpop.f32.mrf.mxu0
  %v6107 = vadd.f32 %v6074, %v6106
  %v6108 = vpop.f32.mrf.mxu0
  %6109 = vdwg.mxu0
  %v6110 = vadd.f32 %v4808, %v5691
  %v6111 = vadd.f32 %v4809, %v5790
  %v6112 = vadd.f32 %v4810, %v5889
  %v6113 = vadd.f32 %v4811, %v5988
  %v6114 = vadd.f32 %v4812, %v6087
  %v6115 = vadd.f32 %v4813, %v5693
  %v6116 = vadd.f32 %v4814, %v5792
  %v6117 = vadd.f32 %v4815, %v5891
  %v6118 = vadd.f32 %v4816, %v5990
  %v6119 = vadd.f32 %v4817, %v6089
  %v6120 = vadd.f32 %v4818, %v5696
  %v6121 = vadd.f32 %v4819, %v5795
  %v6122 = vadd.f32 %v4820, %v5894
  %v6123 = vadd.f32 %v4821, %v5993
  %v6124 = vadd.f32 %v4822, %v6092
  %v6125 = vadd.f32 %v4823, %v5698
  %v6126 = vadd.f32 %v4824, %v5797
  %v6127 = vadd.f32 %v4825, %v5896
  %v6128 = vadd.f32 %v4826, %v5995
  %v6129 = vadd.f32 %v4827, %v6094
  %v6130 = vadd.f32 %v4828, %v5701
  %v6131 = vadd.f32 %v4829, %v5800
  %v6132 = vadd.f32 %v4830, %v5899
  %v6133 = vadd.f32 %v4831, %v5998
  %v6134 = vadd.f32 %v4832, %v6097
  %v6135 = vadd.f32 %v4833, %v5703
  %v6136 = vadd.f32 %v4834, %v5802
  %v6137 = vadd.f32 %v4835, %v5901
  %v6138 = vadd.f32 %v4836, %v6000
  %v6139 = vadd.f32 %v4837, %v6099
  %v6140 = vadd.f32 %v4838, %v5706
  %v6141 = vadd.f32 %v4839, %v5805
  %v6142 = vadd.f32 %v4840, %v5904
  %v6143 = vadd.f32 %v4841, %v6003
  %v6144 = vadd.f32 %v4842, %v6102
  %v6145 = vadd.f32 %v4843, %v5708
  %v6146 = vadd.f32 %v4844, %v5807
  %v6147 = vadd.f32 %v4845, %v5906
  %v6148 = vadd.f32 %v4846, %v6005
  %v6149 = vadd.f32 %v4847, %v6104
  %v6150 = vadd.f32 %v4848, %v5711
  %v6151 = vadd.f32 %v4849, %v5810
  %v6152 = vadd.f32 %v4850, %v5909
  %v6153 = vadd.f32 %v4851, %v6008
  %v6154 = vadd.f32 %v4852, %v6107
  %6155 = vst [vmem:[#allocation4] sm:$0xff] %v6110
  %6156 = vst [vmem:[#allocation4 + $0x8] sm:$0xff] %v6111
  %6157 = vst [vmem:[#allocation4 + $0x10] sm:$0xff] %v6112
  %6158 = vst [vmem:[#allocation4 + $0x18] sm:$0xff] %v6113
  %6159 = vst.msk [vmem:[#allocation4 + $0x20] sm:$0xff] %vm1983, %v6114
  %6160 = vst [vmem:[#allocation4 + $0x28] sm:$0xff] %v6115
  %6161 = vst [vmem:[#allocation4 + $0x30] sm:$0xff] %v6116
  %6162 = vst [vmem:[#allocation4 + $0x38] sm:$0xff] %v6117
  %6163 = vst [vmem:[#allocation4 + $0x40] sm:$0xff] %v6118
  %6164 = vst.msk [vmem:[#allocation4 + $0x48] sm:$0xff] %vm1983, %v6119
  %6165 = vst [vmem:[#allocation4 + $0x50] sm:$0xff] %v6120
  %6166 = vst [vmem:[#allocation4 + $0x58] sm:$0xff] %v6121
  %6167 = vst [vmem:[#allocation4 + $0x60] sm:$0xff] %v6122
  %6168 = vst [vmem:[#allocation4 + $0x68] sm:$0xff] %v6123
  %6169 = vst.msk [vmem:[#allocation4 + $0x70] sm:$0xff] %vm1983, %v6124
  %6170 = vst [vmem:[#allocation4 + $0x78] sm:$0xff] %v6125
  %6171 = vst [vmem:[#allocation4 + $0x80] sm:$0xff] %v6126
  %6172 = vst [vmem:[#allocation4 + $0x88] sm:$0xff] %v6127
  %6173 = vst [vmem:[#allocation4 + $0x90] sm:$0xff] %v6128
  %6174 = vst.msk [vmem:[#allocation4 + $0x98] sm:$0xff] %vm1983, %v6129
  %6175 = vst [vmem:[#allocation4 + $0xa0] sm:$0xff] %v6130
  %6176 = vst [vmem:[#allocation4 + $0xa8] sm:$0xff] %v6131
  %6177 = vst [vmem:[#allocation4 + $0xb0] sm:$0xff] %v6132
  %6178 = vst [vmem:[#allocation4 + $0xb8] sm:$0xff] %v6133
  %6179 = vst.msk [vmem:[#allocation4 + $0xc0] sm:$0xff] %vm1983, %v6134
  %6180 = vst [vmem:[#allocation4 + $0xc8] sm:$0xff] %v6135
  %6181 = vst [vmem:[#allocation4 + $0xd0] sm:$0xff] %v6136
  %6182 = vst [vmem:[#allocation4 + $0xd8] sm:$0xff] %v6137
  %6183 = vst [vmem:[#allocation4 + $0xe0] sm:$0xff] %v6138
  %6184 = vst.msk [vmem:[#allocation4 + $0xe8] sm:$0xff] %vm1983, %v6139
  %6185 = vst [vmem:[#allocation4 + $0xf0] sm:$0xff] %v6140
  %6186 = vst [vmem:[#allocation4 + $0xf8] sm:$0xff] %v6141
  %6187 = vst [vmem:[#allocation4 + $0x100] sm:$0xff] %v6142
  %6188 = vst [vmem:[#allocation4 + $0x108] sm:$0xff] %v6143
  %6189 = vst.msk [vmem:[#allocation4 + $0x110] sm:$0xff] %vm1983, %v6144
  %6190 = vst [vmem:[#allocation4 + $0x118] sm:$0xff] %v6145
  %6191 = vst [vmem:[#allocation4 + $0x120] sm:$0xff] %v6146
  %6192 = vst [vmem:[#allocation4 + $0x128] sm:$0xff] %v6147
  %6193 = vst [vmem:[#allocation4 + $0x130] sm:$0xff] %v6148
  %6194 = vst.msk [vmem:[#allocation4 + $0x138] sm:$0xff] %vm1983, %v6149
  %6195 = vst [vmem:[#allocation4 + $0x140] sm:$0xff] %v6150
  %6196 = vst [vmem:[#allocation4 + $0x148] sm:$0xff] %v6151
  %6197 = vst [vmem:[#allocation4 + $0x150] sm:$0xff] %v6152
  %6198 = vst [vmem:[#allocation4 + $0x158] sm:$0xff] %v6153
  %6199 = vst.msk [vmem:[#allocation4 + $0x160] sm:$0xff] %vm1983, %v6154
  %v6200 = vld [vmem:[%s9] sm:$0x1]
  %v6202 = vperm.slane %v6200, 0
  %6204 = vst [vmem:[%s10] sm:$0xff] %v6202
  %v6205 = vld [vmem:[%s10] sm:$0xff]
  %v6206 = vld [vmem:[#allocation4] sm:$0xff]
  %v6207 = vld [vmem:[#allocation4 + $0x8] sm:$0xff]
  %v6208 = vld [vmem:[#allocation4 + $0x10] sm:$0xff]
  %v6209 = vld [vmem:[#allocation4 + $0x18] sm:$0xff]
  %v6210 = vld [vmem:[#allocation4 + $0x20] sm:$0xff]
  %v6211 = vpack.c.bf16 %v6206, %v6206
  %v6212 = vpack.c.bf16 %v6207, %v6207
  %v6213 = vpack.c.bf16 %v6208, %v6208
  %v6214 = vpack.c.bf16 %v6209, %v6209
  %v6215 = vpack.c.bf16 %v6210, %v6210
  %v6216 = vld [vmem:[%s8] sm:$0xf]
  %v6217 = vld [vmem:[%s8 + $0x4] sm:$0xf]
  %v6218 = vld [vmem:[%s8 + $0x8] sm:$0xf]
  %v6219 = vld [vmem:[%s8 + $0xc] sm:$0xf]
  %v6220 = vld [vmem:[%s8 + $0x10] sm:$0xf]
  %v6221 = vld [vmem:[%s8 + $0x14] sm:$0xf]
  %v6222 = vld [vmem:[%s8 + $0x18] sm:$0xf]
  %v6223 = vld [vmem:[%s8 + $0x1c] sm:$0xf]
  %v6224 = vld [vmem:[%s8 + $0x20] sm:$0xf]
  %v6225 = vld [vmem:[%s8 + $0x24] sm:$0xf]
  %v6226 = vld [vmem:[%s8 + $0x28] sm:$0xf]
  %v6227 = vld [vmem:[%s8 + $0x2c] sm:$0xf]
  %v6228 = vld [vmem:[%s8 + $0x30] sm:$0xf]
  %v6229 = vld [vmem:[%s8 + $0x34] sm:$0xf]
  %v6230 = vld [vmem:[%s8 + $0x38] sm:$0xf]
  %v6231 = vld [vmem:[%s8 + $0x3c] sm:$0xf]
  %v6232 = vld [vmem:[%s8 + $0x40] sm:$0xf]
  %v6233 = vld [vmem:[%s8 + $0x44] sm:$0xf]
  %v6234 = vld [vmem:[%s8 + $0x48] sm:$0xf]
  %v6235 = vld [vmem:[%s8 + $0x4c] sm:$0xf]
  %v6236 = vld [vmem:[%s8 + $0x50] sm:$0xf]
  %v6237 = vld [vmem:[%s8 + $0x54] sm:$0xf]
  %v6238 = vld [vmem:[%s8 + $0x58] sm:$0xf]
  %v6239 = vld [vmem:[%s8 + $0x5c] sm:$0xf]
  %v6240 = vld [vmem:[%s8 + $0x60] sm:$0xf]
  %v6241 = vld [vmem:[%s8 + $0x64] sm:$0xf]
  %v6242 = vld [vmem:[%s8 + $0x68] sm:$0xf]
  %v6243 = vld [vmem:[%s8 + $0x6c] sm:$0xf]
  %v6244 = vld [vmem:[%s8 + $0x70] sm:$0xf]
  %v6245 = vld [vmem:[%s8 + $0x74] sm:$0xf]
  %v6246 = vld [vmem:[%s8 + $0x78] sm:$0xf]
  %v6247 = vld [vmem:[%s8 + $0x7c] sm:$0xf]
  %v6248 = vld [vmem:[%s8 + $0x80] sm:$0xf]
  %v6249 = vld [vmem:[%s8 + $0x84] sm:$0xf]
  %v6250 = vld [vmem:[%s8 + $0x88] sm:$0xf]
  %v6251 = vld [vmem:[%s8 + $0x8c] sm:$0xf]
  %v6252 = vld [vmem:[%s8 + $0x90] sm:$0xf]
  %v6253 = vld [vmem:[%s8 + $0x94] sm:$0xf]
  %v6254 = vld [vmem:[%s8 + $0x98] sm:$0xf]
  %v6255 = vld [vmem:[%s8 + $0x9c] sm:$0xf]
  %v6256 = vld [vmem:[%s8 + $0xa0] sm:$0xf]
  %v6257 = vld [vmem:[%s8 + $0xa4] sm:$0xf]
  %v6258 = vld [vmem:[%s8 + $0xa8] sm:$0xf]
  %v6259 = vld [vmem:[%s8 + $0xac] sm:$0xf]
  %v6260 = vld [vmem:[%s8 + $0xb0] sm:$0xf]
  %v6261 = vld [vmem:[%s8 + $0xb4] sm:$0xf]
  %v6262 = vld [vmem:[%s8 + $0xb8] sm:$0xf]
  %v6263 = vld [vmem:[%s8 + $0xbc] sm:$0xf]
  %v6264 = vld [vmem:[%s8 + $0xc0] sm:$0xf]
  %v6265 = vld [vmem:[%s8 + $0xc4] sm:$0xf]
  %v6266 = vld [vmem:[%s8 + $0xc8] sm:$0xf]
  %v6267 = vld [vmem:[%s8 + $0xcc] sm:$0xf]
  %v6268 = vld [vmem:[%s8 + $0xd0] sm:$0xf]
  %v6269 = vld [vmem:[%s8 + $0xd4] sm:$0xf]
  %v6270 = vld [vmem:[%s8 + $0xd8] sm:$0xf]
  %v6271 = vld [vmem:[%s8 + $0xdc] sm:$0xf]
  %v6272 = vld [vmem:[%s8 + $0xe0] sm:$0xf]
  %v6273 = vld [vmem:[%s8 + $0xe4] sm:$0xf]
  %v6274 = vld [vmem:[%s8 + $0xe8] sm:$0xf]
  %v6275 = vld [vmem:[%s8 + $0xec] sm:$0xf]
  %v6276 = vld [vmem:[%s8 + $0xf0] sm:$0xf]
  %v6277 = vld [vmem:[%s8 + $0xf4] sm:$0xf]
  %v6278 = vld [vmem:[%s8 + $0xf8] sm:$0xf]
  %v6279 = vld [vmem:[%s8 + $0xfc] sm:$0xf]
  %v6280 = vld [vmem:[%s8 + $0x100] sm:$0xf]
  %v6281 = vld [vmem:[%s8 + $0x104] sm:$0xf]
  %v6282 = vld [vmem:[%s8 + $0x108] sm:$0xf]
  %v6283 = vld [vmem:[%s8 + $0x10c] sm:$0xf]
  %v6284 = vld [vmem:[%s8 + $0x110] sm:$0xf]
  %v6285 = vld [vmem:[%s8 + $0x114] sm:$0xf]
  %v6286 = vld [vmem:[%s8 + $0x118] sm:$0xf]
  %v6287 = vld [vmem:[%s8 + $0x11c] sm:$0xf]
  %v6360 = vunpack.c.l.b16 %v6216
  %v6361 = vunpack.c.l.b16 %v6217
  %v6362 = vunpack.c.l.b16 %v6218
  %v6363 = vunpack.c.l.b16 %v6219
  %v6364 = vunpack.c.l.b16 %v6220
  %v6365 = vunpack.c.l.b16 %v6221
  %v6366 = vunpack.c.l.b16 %v6222
  %v6367 = vunpack.c.l.b16 %v6223
  %v6368 = vunpack.c.l.b16 %v6224
  %v6369 = vunpack.c.l.b16 %v6225
  %v6370 = vunpack.c.l.b16 %v6226
  %v6371 = vunpack.c.l.b16 %v6227
  %v6372 = vunpack.c.l.b16 %v6228
  %v6373 = vunpack.c.l.b16 %v6229
  %v6374 = vunpack.c.l.b16 %v6230
  %v6375 = vunpack.c.l.b16 %v6231
  %v6376 = vunpack.c.l.b16 %v6232
  %v6377 = vunpack.c.l.b16 %v6233
  %v6378 = vunpack.c.l.b16 %v6234
  %v6379 = vunpack.c.l.b16 %v6235
  %v6380 = vunpack.c.l.b16 %v6236
  %v6381 = vunpack.c.l.b16 %v6237
  %v6382 = vunpack.c.l.b16 %v6238
  %v6383 = vunpack.c.l.b16 %v6239
  %v6384 = vunpack.c.l.b16 %v6240
  %v6385 = vunpack.c.l.b16 %v6241
  %v6386 = vunpack.c.l.b16 %v6242
  %v6387 = vunpack.c.l.b16 %v6243
  %v6388 = vunpack.c.l.b16 %v6244
  %v6389 = vunpack.c.l.b16 %v6245
  %v6390 = vunpack.c.l.b16 %v6246
  %v6391 = vunpack.c.l.b16 %v6247
  %v6392 = vunpack.c.l.b16 %v6248
  %v6393 = vunpack.c.l.b16 %v6249
  %v6394 = vunpack.c.l.b16 %v6250
  %v6395 = vunpack.c.l.b16 %v6251
  %v6396 = vunpack.c.l.b16 %v6252
  %v6397 = vunpack.c.l.b16 %v6253
  %v6398 = vunpack.c.l.b16 %v6254
  %v6399 = vunpack.c.l.b16 %v6255
  %v6400 = vunpack.c.l.b16 %v6256
  %v6401 = vunpack.c.l.b16 %v6257
  %v6402 = vunpack.c.l.b16 %v6258
  %v6403 = vunpack.c.l.b16 %v6259
  %v6404 = vunpack.c.l.b16 %v6260
  %v6405 = vunpack.c.l.b16 %v6261
  %v6406 = vunpack.c.l.b16 %v6262
  %v6407 = vunpack.c.l.b16 %v6263
  %v6408 = vunpack.c.l.b16 %v6264
  %v6409 = vunpack.c.l.b16 %v6265
  %v6410 = vunpack.c.l.b16 %v6266
  %v6411 = vunpack.c.l.b16 %v6267
  %v6412 = vunpack.c.l.b16 %v6268
  %v6413 = vunpack.c.l.b16 %v6269
  %v6414 = vunpack.c.l.b16 %v6270
  %v6415 = vunpack.c.l.b16 %v6271
  %v6416 = vunpack.c.l.b16 %v6272
  %v6417 = vunpack.c.l.b16 %v6273
  %v6418 = vunpack.c.l.b16 %v6274
  %v6419 = vunpack.c.l.b16 %v6275
  %v6420 = vunpack.c.l.b16 %v6276
  %v6421 = vunpack.c.l.b16 %v6277
  %v6422 = vunpack.c.l.b16 %v6278
  %v6423 = vunpack.c.l.b16 %v6279
  %v6424 = vunpack.c.l.b16 %v6280
  %v6425 = vunpack.c.l.b16 %v6281
  %v6426 = vunpack.c.l.b16 %v6282
  %v6427 = vunpack.c.l.b16 %v6283
  %v6428 = vunpack.c.l.b16 %v6284
  %v6429 = vunpack.c.l.b16 %v6285
  %v6430 = vunpack.c.l.b16 %v6286
  %v6431 = vunpack.c.l.b16 %v6287
  %v6432 = vpack.c.b16 %v6361, %v6360
  %v6433 = vpack.c.b16 %v6363, %v6362
  %v6434 = vpack.c.b16 %v6365, %v6364
  %v6435 = vpack.c.b16 %v6367, %v6366
  %v6436 = vpack.c.b16 %v6369, %v6368
  %v6437 = vpack.c.b16 %v6371, %v6370
  %v6438 = vpack.c.b16 %v6373, %v6372
  %v6439 = vpack.c.b16 %v6375, %v6374
  %v6440 = vpack.c.b16 %v6377, %v6376
  %v6441 = vpack.c.b16 %v6379, %v6378
  %v6442 = vpack.c.b16 %v6381, %v6380
  %v6443 = vpack.c.b16 %v6383, %v6382
  %v6444 = vpack.c.b16 %v6385, %v6384
  %v6445 = vpack.c.b16 %v6387, %v6386
  %v6446 = vpack.c.b16 %v6389, %v6388
  %v6447 = vpack.c.b16 %v6391, %v6390
  %v6448 = vpack.c.b16 %v6393, %v6392
  %v6449 = vpack.c.b16 %v6395, %v6394
  %v6450 = vpack.c.b16 %v6397, %v6396
  %v6451 = vpack.c.b16 %v6399, %v6398
  %v6452 = vpack.c.b16 %v6401, %v6400
  %v6453 = vpack.c.b16 %v6403, %v6402
  %v6454 = vpack.c.b16 %v6405, %v6404
  %v6455 = vpack.c.b16 %v6407, %v6406
  %v6456 = vpack.c.b16 %v6409, %v6408
  %v6457 = vpack.c.b16 %v6411, %v6410
  %v6458 = vpack.c.b16 %v6413, %v6412
  %v6459 = vpack.c.b16 %v6415, %v6414
  %v6460 = vpack.c.b16 %v6417, %v6416
  %v6461 = vpack.c.b16 %v6419, %v6418
  %v6462 = vpack.c.b16 %v6421, %v6420
  %v6463 = vpack.c.b16 %v6423, %v6422
  %v6464 = vpack.c.b16 %v6425, %v6424
  %v6465 = vpack.c.b16 %v6427, %v6426
  %v6466 = vpack.c.b16 %v6429, %v6428
  %v6467 = vpack.c.b16 %v6431, %v6430
  %v6505 = vsel %vm1983, %v6215, 0
  %6507 = vmatpush.bf16.msra.mxu0 %v6439
  %6508 = vmatpush.bf16.msra.mxu0 %v6438
  %6509 = vmatpush.bf16.msra.mxu0 %v6437
  %6510 = vmatpush.bf16.msra.mxu0 %v6436
  %6511 = vmatpush.bf16.msra.mxu0 %v6435
  %6512 = vmatpush.bf16.msra.mxu0 %v6434
  %6513 = vmatpush.bf16.msra.mxu0 %v6433
  %6514 = vmatpush.bf16.msra.mxu0 %v6432
  %6515 = vmatmul.bf16.gmra.mxu0 %v6211
  %v6516 = vpop.f32.mrf.mxu0
  %v6517 = vadd.f32 0.0, %v6516
  %v6518 = vpop.f32.mrf.mxu0
  %6519 = vdwg.mxu0
  %6520 = vmatpush.bf16.msra.mxu0 %v6447
  %6521 = vmatpush.bf16.msra.mxu0 %v6446
  %6522 = vmatpush.bf16.msra.mxu0 %v6445
  %6523 = vmatpush.bf16.msra.mxu0 %v6444
  %6524 = vmatpush.bf16.msra.mxu0 %v6443
  %6525 = vmatpush.bf16.msra.mxu0 %v6442
  %6526 = vmatpush.bf16.msra.mxu0 %v6441
  %6527 = vmatpush.bf16.msra.mxu0 %v6440
  %6528 = vmatmul.bf16.gmra.mxu0 %v6212
  %v6529 = vpop.f32.mrf.mxu0
  %v6530 = vadd.f32 %v6517, %v6529
  %v6531 = vpop.f32.mrf.mxu0
  %6532 = vdwg.mxu0
  %6533 = vmatpush.bf16.msra.mxu0 %v6455
  %6534 = vmatpush.bf16.msra.mxu0 %v6454
  %6535 = vmatpush.bf16.msra.mxu0 %v6453
  %6536 = vmatpush.bf16.msra.mxu0 %v6452
  %6537 = vmatpush.bf16.msra.mxu0 %v6451
  %6538 = vmatpush.bf16.msra.mxu0 %v6450
  %6539 = vmatpush.bf16.msra.mxu0 %v6449
  %6540 = vmatpush.bf16.msra.mxu0 %v6448
  %6541 = vmatmul.bf16.gmra.mxu0 %v6213
  %v6542 = vpop.f32.mrf.mxu0
  %v6543 = vadd.f32 %v6530, %v6542
  %v6544 = vpop.f32.mrf.mxu0
  %6545 = vdwg.mxu0
  %6546 = vmatpush.bf16.msra.mxu0 %v6463
  %6547 = vmatpush.bf16.msra.mxu0 %v6462
  %6548 = vmatpush.bf16.msra.mxu0 %v6461
  %6549 = vmatpush.bf16.msra.mxu0 %v6460
  %6550 = vmatpush.bf16.msra.mxu0 %v6459
  %6551 = vmatpush.bf16.msra.mxu0 %v6458
  %6552 = vmatpush.bf16.msra.mxu0 %v6457
  %6553 = vmatpush.bf16.msra.mxu0 %v6456
  %6554 = vmatmul.bf16.gmra.mxu0 %v6214
  %v6555 = vpop.f32.mrf.mxu0
  %v6556 = vadd.f32 %v6543, %v6555
  %v6557 = vpop.f32.mrf.mxu0
  %6558 = vdwg.mxu0
  %6559 = vmatpush.bf16.msra.mxu0 0
  %6560 = vmatpush.bf16.msra.mxu0 0
  %6561 = vmatpush.bf16.msra.mxu0 0
  %6562 = vmatpush.bf16.msra.mxu0 0
  %6563 = vmatpush.bf16.msra.mxu0 %v6467
  %6564 = vmatpush.bf16.msra.mxu0 %v6466
  %6565 = vmatpush.bf16.msra.mxu0 %v6465
  %6566 = vmatpush.bf16.msra.mxu0 %v6464
  %6567 = vmatmul.bf16.gmra.mxu0 %v6505
  %v6568 = vpop.f32.mrf.mxu0
  %v6569 = vadd.f32 %v6556, %v6568
  %v6570 = vpop.f32.mrf.mxu0
  %6571 = vdwg.mxu0
  %v6572 = vadd.f32 %v6205, %v6569
  %6573 = vst [vmem:[%s10] sm:$0xff] %v6572
  %v6574 = vld [vmem:[%s10] sm:$0xff]
  %v6575 = vld [vmem:[#allocation4 + $0x28] sm:$0xff]
  %v6576 = vld [vmem:[#allocation4 + $0x30] sm:$0xff]
  %v6577 = vld [vmem:[#allocation4 + $0x38] sm:$0xff]
  %v6578 = vld [vmem:[#allocation4 + $0x40] sm:$0xff]
  %v6579 = vld [vmem:[#allocation4 + $0x48] sm:$0xff]
  %v6580 = vpack.c.bf16 %v6575, %v6575
  %v6581 = vpack.c.bf16 %v6576, %v6576
  %v6582 = vpack.c.bf16 %v6577, %v6577
  %v6583 = vpack.c.bf16 %v6578, %v6578
  %v6584 = vpack.c.bf16 %v6579, %v6579
  %s6585 = scalar_lea.vmem %s8, 288
  %v6586 = vld [vmem:[%s6585] sm:$0xf]
  %v6587 = vld [vmem:[%s6585 + $0x4] sm:$0xf]
  %v6588 = vld [vmem:[%s6585 + $0x8] sm:$0xf]
  %v6589 = vld [vmem:[%s6585 + $0xc] sm:$0xf]
  %v6590 = vld [vmem:[%s6585 + $0x10] sm:$0xf]
  %v6591 = vld [vmem:[%s6585 + $0x14] sm:$0xf]
  %v6592 = vld [vmem:[%s6585 + $0x18] sm:$0xf]
  %v6593 = vld [vmem:[%s6585 + $0x1c] sm:$0xf]
  %v6594 = vld [vmem:[%s6585 + $0x20] sm:$0xf]
  %v6595 = vld [vmem:[%s6585 + $0x24] sm:$0xf]
  %v6596 = vld [vmem:[%s6585 + $0x28] sm:$0xf]
  %v6597 = vld [vmem:[%s6585 + $0x2c] sm:$0xf]
  %v6598 = vld [vmem:[%s6585 + $0x30] sm:$0xf]
  %v6599 = vld [vmem:[%s6585 + $0x34] sm:$0xf]
  %v6600 = vld [vmem:[%s6585 + $0x38] sm:$0xf]
  %v6601 = vld [vmem:[%s6585 + $0x3c] sm:$0xf]
  %v6602 = vld [vmem:[%s6585 + $0x40] sm:$0xf]
  %v6603 = vld [vmem:[%s6585 + $0x44] sm:$0xf]
  %v6604 = vld [vmem:[%s6585 + $0x48] sm:$0xf]
  %v6605 = vld [vmem:[%s6585 + $0x4c] sm:$0xf]
  %v6606 = vld [vmem:[%s6585 + $0x50] sm:$0xf]
  %v6607 = vld [vmem:[%s6585 + $0x54] sm:$0xf]
  %v6608 = vld [vmem:[%s6585 + $0x58] sm:$0xf]
  %v6609 = vld [vmem:[%s6585 + $0x5c] sm:$0xf]
  %v6610 = vld [vmem:[%s6585 + $0x60] sm:$0xf]
  %v6611 = vld [vmem:[%s6585 + $0x64] sm:$0xf]
  %v6612 = vld [vmem:[%s6585 + $0x68] sm:$0xf]
  %v6613 = vld [vmem:[%s6585 + $0x6c] sm:$0xf]
  %v6614 = vld [vmem:[%s6585 + $0x70] sm:$0xf]
  %v6615 = vld [vmem:[%s6585 + $0x74] sm:$0xf]
  %v6616 = vld [vmem:[%s6585 + $0x78] sm:$0xf]
  %v6617 = vld [vmem:[%s6585 + $0x7c] sm:$0xf]
  %v6618 = vld [vmem:[%s6585 + $0x80] sm:$0xf]
  %v6619 = vld [vmem:[%s6585 + $0x84] sm:$0xf]
  %v6620 = vld [vmem:[%s6585 + $0x88] sm:$0xf]
  %v6621 = vld [vmem:[%s6585 + $0x8c] sm:$0xf]
  %v6622 = vld [vmem:[%s6585 + $0x90] sm:$0xf]
  %v6623 = vld [vmem:[%s6585 + $0x94] sm:$0xf]
  %v6624 = vld [vmem:[%s6585 + $0x98] sm:$0xf]
  %v6625 = vld [vmem:[%s6585 + $0x9c] sm:$0xf]
  %v6626 = vld [vmem:[%s6585 + $0xa0] sm:$0xf]
  %v6627 = vld [vmem:[%s6585 + $0xa4] sm:$0xf]
  %v6628 = vld [vmem:[%s6585 + $0xa8] sm:$0xf]
  %v6629 = vld [vmem:[%s6585 + $0xac] sm:$0xf]
  %v6630 = vld [vmem:[%s6585 + $0xb0] sm:$0xf]
  %v6631 = vld [vmem:[%s6585 + $0xb4] sm:$0xf]
  %v6632 = vld [vmem:[%s6585 + $0xb8] sm:$0xf]
  %v6633 = vld [vmem:[%s6585 + $0xbc] sm:$0xf]
  %v6634 = vld [vmem:[%s6585 + $0xc0] sm:$0xf]
  %v6635 = vld [vmem:[%s6585 + $0xc4] sm:$0xf]
  %v6636 = vld [vmem:[%s6585 + $0xc8] sm:$0xf]
  %v6637 = vld [vmem:[%s6585 + $0xcc] sm:$0xf]
  %v6638 = vld [vmem:[%s6585 + $0xd0] sm:$0xf]
  %v6639 = vld [vmem:[%s6585 + $0xd4] sm:$0xf]
  %v6640 = vld [vmem:[%s6585 + $0xd8] sm:$0xf]
  %v6641 = vld [vmem:[%s6585 + $0xdc] sm:$0xf]
  %v6642 = vld [vmem:[%s6585 + $0xe0] sm:$0xf]
  %v6643 = vld [vmem:[%s6585 + $0xe4] sm:$0xf]
  %v6644 = vld [vmem:[%s6585 + $0xe8] sm:$0xf]
  %v6645 = vld [vmem:[%s6585 + $0xec] sm:$0xf]
  %v6646 = vld [vmem:[%s6585 + $0xf0] sm:$0xf]
  %v6647 = vld [vmem:[%s6585 + $0xf4] sm:$0xf]
  %v6648 = vld [vmem:[%s6585 + $0xf8] sm:$0xf]
  %v6649 = vld [vmem:[%s6585 + $0xfc] sm:$0xf]
  %v6650 = vld [vmem:[%s6585 + $0x100] sm:$0xf]
  %v6651 = vld [vmem:[%s6585 + $0x104] sm:$0xf]
  %v6652 = vld [vmem:[%s6585 + $0x108] sm:$0xf]
  %v6653 = vld [vmem:[%s6585 + $0x10c] sm:$0xf]
  %v6654 = vld [vmem:[%s6585 + $0x110] sm:$0xf]
  %v6655 = vld [vmem:[%s6585 + $0x114] sm:$0xf]
  %v6656 = vld [vmem:[%s6585 + $0x118] sm:$0xf]
  %v6657 = vld [vmem:[%s6585 + $0x11c] sm:$0xf]
  %v6730 = vunpack.c.l.b16 %v6586
  %v6731 = vunpack.c.l.b16 %v6587
  %v6732 = vunpack.c.l.b16 %v6588
  %v6733 = vunpack.c.l.b16 %v6589
  %v6734 = vunpack.c.l.b16 %v6590
  %v6735 = vunpack.c.l.b16 %v6591
  %v6736 = vunpack.c.l.b16 %v6592
  %v6737 = vunpack.c.l.b16 %v6593
  %v6738 = vunpack.c.l.b16 %v6594
  %v6739 = vunpack.c.l.b16 %v6595
  %v6740 = vunpack.c.l.b16 %v6596
  %v6741 = vunpack.c.l.b16 %v6597
  %v6742 = vunpack.c.l.b16 %v6598
  %v6743 = vunpack.c.l.b16 %v6599
  %v6744 = vunpack.c.l.b16 %v6600
  %v6745 = vunpack.c.l.b16 %v6601
  %v6746 = vunpack.c.l.b16 %v6602
  %v6747 = vunpack.c.l.b16 %v6603
  %v6748 = vunpack.c.l.b16 %v6604
  %v6749 = vunpack.c.l.b16 %v6605
  %v6750 = vunpack.c.l.b16 %v6606
  %v6751 = vunpack.c.l.b16 %v6607
  %v6752 = vunpack.c.l.b16 %v6608
  %v6753 = vunpack.c.l.b16 %v6609
  %v6754 = vunpack.c.l.b16 %v6610
  %v6755 = vunpack.c.l.b16 %v6611
  %v6756 = vunpack.c.l.b16 %v6612
  %v6757 = vunpack.c.l.b16 %v6613
  %v6758 = vunpack.c.l.b16 %v6614
  %v6759 = vunpack.c.l.b16 %v6615
  %v6760 = vunpack.c.l.b16 %v6616
  %v6761 = vunpack.c.l.b16 %v6617
  %v6762 = vunpack.c.l.b16 %v6618
  %v6763 = vunpack.c.l.b16 %v6619
  %v6764 = vunpack.c.l.b16 %v6620
  %v6765 = vunpack.c.l.b16 %v6621
  %v6766 = vunpack.c.l.b16 %v6622
  %v6767 = vunpack.c.l.b16 %v6623
  %v6768 = vunpack.c.l.b16 %v6624
  %v6769 = vunpack.c.l.b16 %v6625
  %v6770 = vunpack.c.l.b16 %v6626
  %v6771 = vunpack.c.l.b16 %v6627
  %v6772 = vunpack.c.l.b16 %v6628
  %v6773 = vunpack.c.l.b16 %v6629
  %v6774 = vunpack.c.l.b16 %v6630
  %v6775 = vunpack.c.l.b16 %v6631
  %v6776 = vunpack.c.l.b16 %v6632
  %v6777 = vunpack.c.l.b16 %v6633
  %v6778 = vunpack.c.l.b16 %v6634
  %v6779 = vunpack.c.l.b16 %v6635
  %v6780 = vunpack.c.l.b16 %v6636
  %v6781 = vunpack.c.l.b16 %v6637
  %v6782 = vunpack.c.l.b16 %v6638
  %v6783 = vunpack.c.l.b16 %v6639
  %v6784 = vunpack.c.l.b16 %v6640
  %v6785 = vunpack.c.l.b16 %v6641
  %v6786 = vunpack.c.l.b16 %v6642
  %v6787 = vunpack.c.l.b16 %v6643
  %v6788 = vunpack.c.l.b16 %v6644
  %v6789 = vunpack.c.l.b16 %v6645
  %v6790 = vunpack.c.l.b16 %v6646
  %v6791 = vunpack.c.l.b16 %v6647
  %v6792 = vunpack.c.l.b16 %v6648
  %v6793 = vunpack.c.l.b16 %v6649
  %v6794 = vunpack.c.l.b16 %v6650
  %v6795 = vunpack.c.l.b16 %v6651
  %v6796 = vunpack.c.l.b16 %v6652
  %v6797 = vunpack.c.l.b16 %v6653
  %v6798 = vunpack.c.l.b16 %v6654
  %v6799 = vunpack.c.l.b16 %v6655
  %v6800 = vunpack.c.l.b16 %v6656
  %v6801 = vunpack.c.l.b16 %v6657
  %v6802 = vpack.c.b16 %v6731, %v6730
  %v6803 = vpack.c.b16 %v6733, %v6732
  %v6804 = vpack.c.b16 %v6735, %v6734
  %v6805 = vpack.c.b16 %v6737, %v6736
  %v6806 = vpack.c.b16 %v6739, %v6738
  %v6807 = vpack.c.b16 %v6741, %v6740
  %v6808 = vpack.c.b16 %v6743, %v6742
  %v6809 = vpack.c.b16 %v6745, %v6744
  %v6810 = vpack.c.b16 %v6747, %v6746
  %v6811 = vpack.c.b16 %v6749, %v6748
  %v6812 = vpack.c.b16 %v6751, %v6750
  %v6813 = vpack.c.b16 %v6753, %v6752
  %v6814 = vpack.c.b16 %v6755, %v6754
  %v6815 = vpack.c.b16 %v6757, %v6756
  %v6816 = vpack.c.b16 %v6759, %v6758
  %v6817 = vpack.c.b16 %v6761, %v6760
  %v6818 = vpack.c.b16 %v6763, %v6762
  %v6819 = vpack.c.b16 %v6765, %v6764
  %v6820 = vpack.c.b16 %v6767, %v6766
  %v6821 = vpack.c.b16 %v6769, %v6768
  %v6822 = vpack.c.b16 %v6771, %v6770
  %v6823 = vpack.c.b16 %v6773, %v6772
  %v6824 = vpack.c.b16 %v6775, %v6774
  %v6825 = vpack.c.b16 %v6777, %v6776
  %v6826 = vpack.c.b16 %v6779, %v6778
  %v6827 = vpack.c.b16 %v6781, %v6780
  %v6828 = vpack.c.b16 %v6783, %v6782
  %v6829 = vpack.c.b16 %v6785, %v6784
  %v6830 = vpack.c.b16 %v6787, %v6786
  %v6831 = vpack.c.b16 %v6789, %v6788
  %v6832 = vpack.c.b16 %v6791, %v6790
  %v6833 = vpack.c.b16 %v6793, %v6792
  %v6834 = vpack.c.b16 %v6795, %v6794
  %v6835 = vpack.c.b16 %v6797, %v6796
  %v6836 = vpack.c.b16 %v6799, %v6798
  %v6837 = vpack.c.b16 %v6801, %v6800
  %v6875 = vsel %vm1983, %v6584, 0
  %6877 = vmatpush.bf16.msra.mxu0 %v6809
  %6878 = vmatpush.bf16.msra.mxu0 %v6808
  %6879 = vmatpush.bf16.msra.mxu0 %v6807
  %6880 = vmatpush.bf16.msra.mxu0 %v6806
  %6881 = vmatpush.bf16.msra.mxu0 %v6805
  %6882 = vmatpush.bf16.msra.mxu0 %v6804
  %6883 = vmatpush.bf16.msra.mxu0 %v6803
  %6884 = vmatpush.bf16.msra.mxu0 %v6802
  %6885 = vmatmul.bf16.gmra.mxu0 %v6580
  %v6886 = vpop.f32.mrf.mxu0
  %v6887 = vadd.f32 0.0, %v6886
  %v6888 = vpop.f32.mrf.mxu0
  %6889 = vdwg.mxu0
  %6890 = vmatpush.bf16.msra.mxu0 %v6817
  %6891 = vmatpush.bf16.msra.mxu0 %v6816
  %6892 = vmatpush.bf16.msra.mxu0 %v6815
  %6893 = vmatpush.bf16.msra.mxu0 %v6814
  %6894 = vmatpush.bf16.msra.mxu0 %v6813
  %6895 = vmatpush.bf16.msra.mxu0 %v6812
  %6896 = vmatpush.bf16.msra.mxu0 %v6811
  %6897 = vmatpush.bf16.msra.mxu0 %v6810
  %6898 = vmatmul.bf16.gmra.mxu0 %v6581
  %v6899 = vpop.f32.mrf.mxu0
  %v6900 = vadd.f32 %v6887, %v6899
  %v6901 = vpop.f32.mrf.mxu0
  %6902 = vdwg.mxu0
  %6903 = vmatpush.bf16.msra.mxu0 %v6825
  %6904 = vmatpush.bf16.msra.mxu0 %v6824
  %6905 = vmatpush.bf16.msra.mxu0 %v6823
  %6906 = vmatpush.bf16.msra.mxu0 %v6822
  %6907 = vmatpush.bf16.msra.mxu0 %v6821
  %6908 = vmatpush.bf16.msra.mxu0 %v6820
  %6909 = vmatpush.bf16.msra.mxu0 %v6819
  %6910 = vmatpush.bf16.msra.mxu0 %v6818
  %6911 = vmatmul.bf16.gmra.mxu0 %v6582
  %v6912 = vpop.f32.mrf.mxu0
  %v6913 = vadd.f32 %v6900, %v6912
  %v6914 = vpop.f32.mrf.mxu0
  %6915 = vdwg.mxu0
  %6916 = vmatpush.bf16.msra.mxu0 %v6833
  %6917 = vmatpush.bf16.msra.mxu0 %v6832
  %6918 = vmatpush.bf16.msra.mxu0 %v6831
  %6919 = vmatpush.bf16.msra.mxu0 %v6830
  %6920 = vmatpush.bf16.msra.mxu0 %v6829
  %6921 = vmatpush.bf16.msra.mxu0 %v6828
  %6922 = vmatpush.bf16.msra.mxu0 %v6827
  %6923 = vmatpush.bf16.msra.mxu0 %v6826
  %6924 = vmatmul.bf16.gmra.mxu0 %v6583
  %v6925 = vpop.f32.mrf.mxu0
  %v6926 = vadd.f32 %v6913, %v6925
  %v6927 = vpop.f32.mrf.mxu0
  %6928 = vdwg.mxu0
  %6929 = vmatpush.bf16.msra.mxu0 0
  %6930 = vmatpush.bf16.msra.mxu0 0
  %6931 = vmatpush.bf16.msra.mxu0 0
  %6932 = vmatpush.bf16.msra.mxu0 0
  %6933 = vmatpush.bf16.msra.mxu0 %v6837
  %6934 = vmatpush.bf16.msra.mxu0 %v6836
  %6935 = vmatpush.bf16.msra.mxu0 %v6835
  %6936 = vmatpush.bf16.msra.mxu0 %v6834
  %6937 = vmatmul.bf16.gmra.mxu0 %v6875
  %v6938 = vpop.f32.mrf.mxu0
  %v6939 = vadd.f32 %v6926, %v6938
  %v6940 = vpop.f32.mrf.mxu0
  %6941 = vdwg.mxu0
  %v6942 = vadd.f32 %v6574, %v6939
  %6943 = vst [vmem:[%s10] sm:$0xff] %v6942
  %v6944 = vld [vmem:[%s10] sm:$0xff]
  %v6945 = vld [vmem:[#allocation4 + $0x50] sm:$0xff]
  %v6946 = vld [vmem:[#allocation4 + $0x58] sm:$0xff]
  %v6947 = vld [vmem:[#allocation4 + $0x60] sm:$0xff]
  %v6948 = vld [vmem:[#allocation4 + $0x68] sm:$0xff]
  %v6949 = vld [vmem:[#allocation4 + $0x70] sm:$0xff]
  %v6950 = vpack.c.bf16 %v6945, %v6945
  %v6951 = vpack.c.bf16 %v6946, %v6946
  %v6952 = vpack.c.bf16 %v6947, %v6947
  %v6953 = vpack.c.bf16 %v6948, %v6948
  %v6954 = vpack.c.bf16 %v6949, %v6949
  %s6955 = scalar_lea.vmem %s8, 576
  %v6956 = vld [vmem:[%s6955] sm:$0xf]
  %v6957 = vld [vmem:[%s6955 + $0x4] sm:$0xf]
  %v6958 = vld [vmem:[%s6955 + $0x8] sm:$0xf]
  %v6959 = vld [vmem:[%s6955 + $0xc] sm:$0xf]
  %v6960 = vld [vmem:[%s6955 + $0x10] sm:$0xf]
  %v6961 = vld [vmem:[%s6955 + $0x14] sm:$0xf]
  %v6962 = vld [vmem:[%s6955 + $0x18] sm:$0xf]
  %v6963 = vld [vmem:[%s6955 + $0x1c] sm:$0xf]
  %v6964 = vld [vmem:[%s6955 + $0x20] sm:$0xf]
  %v6965 = vld [vmem:[%s6955 + $0x24] sm:$0xf]
  %v6966 = vld [vmem:[%s6955 + $0x28] sm:$0xf]
  %v6967 = vld [vmem:[%s6955 + $0x2c] sm:$0xf]
  %v6968 = vld [vmem:[%s6955 + $0x30] sm:$0xf]
  %v6969 = vld [vmem:[%s6955 + $0x34] sm:$0xf]
  %v6970 = vld [vmem:[%s6955 + $0x38] sm:$0xf]
  %v6971 = vld [vmem:[%s6955 + $0x3c] sm:$0xf]
  %v6972 = vld [vmem:[%s6955 + $0x40] sm:$0xf]
  %v6973 = vld [vmem:[%s6955 + $0x44] sm:$0xf]
  %v6974 = vld [vmem:[%s6955 + $0x48] sm:$0xf]
  %v6975 = vld [vmem:[%s6955 + $0x4c] sm:$0xf]
  %v6976 = vld [vmem:[%s6955 + $0x50] sm:$0xf]
  %v6977 = vld [vmem:[%s6955 + $0x54] sm:$0xf]
  %v6978 = vld [vmem:[%s6955 + $0x58] sm:$0xf]
  %v6979 = vld [vmem:[%s6955 + $0x5c] sm:$0xf]
  %v6980 = vld [vmem:[%s6955 + $0x60] sm:$0xf]
  %v6981 = vld [vmem:[%s6955 + $0x64] sm:$0xf]
  %v6982 = vld [vmem:[%s6955 + $0x68] sm:$0xf]
  %v6983 = vld [vmem:[%s6955 + $0x6c] sm:$0xf]
  %v6984 = vld [vmem:[%s6955 + $0x70] sm:$0xf]
  %v6985 = vld [vmem:[%s6955 + $0x74] sm:$0xf]
  %v6986 = vld [vmem:[%s6955 + $0x78] sm:$0xf]
  %v6987 = vld [vmem:[%s6955 + $0x7c] sm:$0xf]
  %v6988 = vld [vmem:[%s6955 + $0x80] sm:$0xf]
  %v6989 = vld [vmem:[%s6955 + $0x84] sm:$0xf]
  %v6990 = vld [vmem:[%s6955 + $0x88] sm:$0xf]
  %v6991 = vld [vmem:[%s6955 + $0x8c] sm:$0xf]
  %v6992 = vld [vmem:[%s6955 + $0x90] sm:$0xf]
  %v6993 = vld [vmem:[%s6955 + $0x94] sm:$0xf]
  %v6994 = vld [vmem:[%s6955 + $0x98] sm:$0xf]
  %v6995 = vld [vmem:[%s6955 + $0x9c] sm:$0xf]
  %v6996 = vld [vmem:[%s6955 + $0xa0] sm:$0xf]
  %v6997 = vld [vmem:[%s6955 + $0xa4] sm:$0xf]
  %v6998 = vld [vmem:[%s6955 + $0xa8] sm:$0xf]
  %v6999 = vld [vmem:[%s6955 + $0xac] sm:$0xf]
  %v7000 = vld [vmem:[%s6955 + $0xb0] sm:$0xf]
  %v7001 = vld [vmem:[%s6955 + $0xb4] sm:$0xf]
  %v7002 = vld [vmem:[%s6955 + $0xb8] sm:$0xf]
  %v7003 = vld [vmem:[%s6955 + $0xbc] sm:$0xf]
  %v7004 = vld [vmem:[%s6955 + $0xc0] sm:$0xf]
  %v7005 = vld [vmem:[%s6955 + $0xc4] sm:$0xf]
  %v7006 = vld [vmem:[%s6955 + $0xc8] sm:$0xf]
  %v7007 = vld [vmem:[%s6955 + $0xcc] sm:$0xf]
  %v7008 = vld [vmem:[%s6955 + $0xd0] sm:$0xf]
  %v7009 = vld [vmem:[%s6955 + $0xd4] sm:$0xf]
  %v7010 = vld [vmem:[%s6955 + $0xd8] sm:$0xf]
  %v7011 = vld [vmem:[%s6955 + $0xdc] sm:$0xf]
  %v7012 = vld [vmem:[%s6955 + $0xe0] sm:$0xf]
  %v7013 = vld [vmem:[%s6955 + $0xe4] sm:$0xf]
  %v7014 = vld [vmem:[%s6955 + $0xe8] sm:$0xf]
  %v7015 = vld [vmem:[%s6955 + $0xec] sm:$0xf]
  %v7016 = vld [vmem:[%s6955 + $0xf0] sm:$0xf]
  %v7017 = vld [vmem:[%s6955 + $0xf4] sm:$0xf]
  %v7018 = vld [vmem:[%s6955 + $0xf8] sm:$0xf]
  %v7019 = vld [vmem:[%s6955 + $0xfc] sm:$0xf]
  %v7020 = vld [vmem:[%s6955 + $0x100] sm:$0xf]
  %v7021 = vld [vmem:[%s6955 + $0x104] sm:$0xf]
  %v7022 = vld [vmem:[%s6955 + $0x108] sm:$0xf]
  %v7023 = vld [vmem:[%s6955 + $0x10c] sm:$0xf]
  %v7024 = vld [vmem:[%s6955 + $0x110] sm:$0xf]
  %v7025 = vld [vmem:[%s6955 + $0x114] sm:$0xf]
  %v7026 = vld [vmem:[%s6955 + $0x118] sm:$0xf]
  %v7027 = vld [vmem:[%s6955 + $0x11c] sm:$0xf]
  %v7100 = vunpack.c.l.b16 %v6956
  %v7101 = vunpack.c.l.b16 %v6957
  %v7102 = vunpack.c.l.b16 %v6958
  %v7103 = vunpack.c.l.b16 %v6959
  %v7104 = vunpack.c.l.b16 %v6960
  %v7105 = vunpack.c.l.b16 %v6961
  %v7106 = vunpack.c.l.b16 %v6962
  %v7107 = vunpack.c.l.b16 %v6963
  %v7108 = vunpack.c.l.b16 %v6964
  %v7109 = vunpack.c.l.b16 %v6965
  %v7110 = vunpack.c.l.b16 %v6966
  %v7111 = vunpack.c.l.b16 %v6967
  %v7112 = vunpack.c.l.b16 %v6968
  %v7113 = vunpack.c.l.b16 %v6969
  %v7114 = vunpack.c.l.b16 %v6970
  %v7115 = vunpack.c.l.b16 %v6971
  %v7116 = vunpack.c.l.b16 %v6972
  %v7117 = vunpack.c.l.b16 %v6973
  %v7118 = vunpack.c.l.b16 %v6974
  %v7119 = vunpack.c.l.b16 %v6975
  %v7120 = vunpack.c.l.b16 %v6976
  %v7121 = vunpack.c.l.b16 %v6977
  %v7122 = vunpack.c.l.b16 %v6978
  %v7123 = vunpack.c.l.b16 %v6979
  %v7124 = vunpack.c.l.b16 %v6980
  %v7125 = vunpack.c.l.b16 %v6981
  %v7126 = vunpack.c.l.b16 %v6982
  %v7127 = vunpack.c.l.b16 %v6983
  %v7128 = vunpack.c.l.b16 %v6984
  %v7129 = vunpack.c.l.b16 %v6985
  %v7130 = vunpack.c.l.b16 %v6986
  %v7131 = vunpack.c.l.b16 %v6987
  %v7132 = vunpack.c.l.b16 %v6988
  %v7133 = vunpack.c.l.b16 %v6989
  %v7134 = vunpack.c.l.b16 %v6990
  %v7135 = vunpack.c.l.b16 %v6991
  %v7136 = vunpack.c.l.b16 %v6992
  %v7137 = vunpack.c.l.b16 %v6993
  %v7138 = vunpack.c.l.b16 %v6994
  %v7139 = vunpack.c.l.b16 %v6995
  %v7140 = vunpack.c.l.b16 %v6996
  %v7141 = vunpack.c.l.b16 %v6997
  %v7142 = vunpack.c.l.b16 %v6998
  %v7143 = vunpack.c.l.b16 %v6999
  %v7144 = vunpack.c.l.b16 %v7000
  %v7145 = vunpack.c.l.b16 %v7001
  %v7146 = vunpack.c.l.b16 %v7002
  %v7147 = vunpack.c.l.b16 %v7003
  %v7148 = vunpack.c.l.b16 %v7004
  %v7149 = vunpack.c.l.b16 %v7005
  %v7150 = vunpack.c.l.b16 %v7006
  %v7151 = vunpack.c.l.b16 %v7007
  %v7152 = vunpack.c.l.b16 %v7008
  %v7153 = vunpack.c.l.b16 %v7009
  %v7154 = vunpack.c.l.b16 %v7010
  %v7155 = vunpack.c.l.b16 %v7011
  %v7156 = vunpack.c.l.b16 %v7012
  %v7157 = vunpack.c.l.b16 %v7013
  %v7158 = vunpack.c.l.b16 %v7014
  %v7159 = vunpack.c.l.b16 %v7015
  %v7160 = vunpack.c.l.b16 %v7016
  %v7161 = vunpack.c.l.b16 %v7017
  %v7162 = vunpack.c.l.b16 %v7018
  %v7163 = vunpack.c.l.b16 %v7019
  %v7164 = vunpack.c.l.b16 %v7020
  %v7165 = vunpack.c.l.b16 %v7021
  %v7166 = vunpack.c.l.b16 %v7022
  %v7167 = vunpack.c.l.b16 %v7023
  %v7168 = vunpack.c.l.b16 %v7024
  %v7169 = vunpack.c.l.b16 %v7025
  %v7170 = vunpack.c.l.b16 %v7026
  %v7171 = vunpack.c.l.b16 %v7027
  %v7172 = vpack.c.b16 %v7101, %v7100
  %v7173 = vpack.c.b16 %v7103, %v7102
  %v7174 = vpack.c.b16 %v7105, %v7104
  %v7175 = vpack.c.b16 %v7107, %v7106
  %v7176 = vpack.c.b16 %v7109, %v7108
  %v7177 = vpack.c.b16 %v7111, %v7110
  %v7178 = vpack.c.b16 %v7113, %v7112
  %v7179 = vpack.c.b16 %v7115, %v7114
  %v7180 = vpack.c.b16 %v7117, %v7116
  %v7181 = vpack.c.b16 %v7119, %v7118
  %v7182 = vpack.c.b16 %v7121, %v7120
  %v7183 = vpack.c.b16 %v7123, %v7122
  %v7184 = vpack.c.b16 %v7125, %v7124
  %v7185 = vpack.c.b16 %v7127, %v7126
  %v7186 = vpack.c.b16 %v7129, %v7128
  %v7187 = vpack.c.b16 %v7131, %v7130
  %v7188 = vpack.c.b16 %v7133, %v7132
  %v7189 = vpack.c.b16 %v7135, %v7134
  %v7190 = vpack.c.b16 %v7137, %v7136
  %v7191 = vpack.c.b16 %v7139, %v7138
  %v7192 = vpack.c.b16 %v7141, %v7140
  %v7193 = vpack.c.b16 %v7143, %v7142
  %v7194 = vpack.c.b16 %v7145, %v7144
  %v7195 = vpack.c.b16 %v7147, %v7146
  %v7196 = vpack.c.b16 %v7149, %v7148
  %v7197 = vpack.c.b16 %v7151, %v7150
  %v7198 = vpack.c.b16 %v7153, %v7152
  %v7199 = vpack.c.b16 %v7155, %v7154
  %v7200 = vpack.c.b16 %v7157, %v7156
  %v7201 = vpack.c.b16 %v7159, %v7158
  %v7202 = vpack.c.b16 %v7161, %v7160
  %v7203 = vpack.c.b16 %v7163, %v7162
  %v7204 = vpack.c.b16 %v7165, %v7164
  %v7205 = vpack.c.b16 %v7167, %v7166
  %v7206 = vpack.c.b16 %v7169, %v7168
  %v7207 = vpack.c.b16 %v7171, %v7170
  %v7245 = vsel %vm1983, %v6954, 0
  %7247 = vmatpush.bf16.msra.mxu0 %v7179
  %7248 = vmatpush.bf16.msra.mxu0 %v7178
  %7249 = vmatpush.bf16.msra.mxu0 %v7177
  %7250 = vmatpush.bf16.msra.mxu0 %v7176
  %7251 = vmatpush.bf16.msra.mxu0 %v7175
  %7252 = vmatpush.bf16.msra.mxu0 %v7174
  %7253 = vmatpush.bf16.msra.mxu0 %v7173
  %7254 = vmatpush.bf16.msra.mxu0 %v7172
  %7255 = vmatmul.bf16.gmra.mxu0 %v6950
  %v7256 = vpop.f32.mrf.mxu0
  %v7257 = vadd.f32 0.0, %v7256
  %v7258 = vpop.f32.mrf.mxu0
  %7259 = vdwg.mxu0
  %7260 = vmatpush.bf16.msra.mxu0 %v7187
  %7261 = vmatpush.bf16.msra.mxu0 %v7186
  %7262 = vmatpush.bf16.msra.mxu0 %v7185
  %7263 = vmatpush.bf16.msra.mxu0 %v7184
  %7264 = vmatpush.bf16.msra.mxu0 %v7183
  %7265 = vmatpush.bf16.msra.mxu0 %v7182
  %7266 = vmatpush.bf16.msra.mxu0 %v7181
  %7267 = vmatpush.bf16.msra.mxu0 %v7180
  %7268 = vmatmul.bf16.gmra.mxu0 %v6951
  %v7269 = vpop.f32.mrf.mxu0
  %v7270 = vadd.f32 %v7257, %v7269
  %v7271 = vpop.f32.mrf.mxu0
  %7272 = vdwg.mxu0
  %7273 = vmatpush.bf16.msra.mxu0 %v7195
  %7274 = vmatpush.bf16.msra.mxu0 %v7194
  %7275 = vmatpush.bf16.msra.mxu0 %v7193
  %7276 = vmatpush.bf16.msra.mxu0 %v7192
  %7277 = vmatpush.bf16.msra.mxu0 %v7191
  %7278 = vmatpush.bf16.msra.mxu0 %v7190
  %7279 = vmatpush.bf16.msra.mxu0 %v7189
  %7280 = vmatpush.bf16.msra.mxu0 %v7188
  %7281 = vmatmul.bf16.gmra.mxu0 %v6952
  %v7282 = vpop.f32.mrf.mxu0
  %v7283 = vadd.f32 %v7270, %v7282
  %v7284 = vpop.f32.mrf.mxu0
  %7285 = vdwg.mxu0
  %7286 = vmatpush.bf16.msra.mxu0 %v7203
  %7287 = vmatpush.bf16.msra.mxu0 %v7202
  %7288 = vmatpush.bf16.msra.mxu0 %v7201
  %7289 = vmatpush.bf16.msra.mxu0 %v7200
  %7290 = vmatpush.bf16.msra.mxu0 %v7199
  %7291 = vmatpush.bf16.msra.mxu0 %v7198
  %7292 = vmatpush.bf16.msra.mxu0 %v7197
  %7293 = vmatpush.bf16.msra.mxu0 %v7196
  %7294 = vmatmul.bf16.gmra.mxu0 %v6953
  %v7295 = vpop.f32.mrf.mxu0
  %v7296 = vadd.f32 %v7283, %v7295
  %v7297 = vpop.f32.mrf.mxu0
  %7298 = vdwg.mxu0
  %7299 = vmatpush.bf16.msra.mxu0 0
  %7300 = vmatpush.bf16.msra.mxu0 0
  %7301 = vmatpush.bf16.msra.mxu0 0
  %7302 = vmatpush.bf16.msra.mxu0 0
  %7303 = vmatpush.bf16.msra.mxu0 %v7207
  %7304 = vmatpush.bf16.msra.mxu0 %v7206
  %7305 = vmatpush.bf16.msra.mxu0 %v7205
  %7306 = vmatpush.bf16.msra.mxu0 %v7204
  %7307 = vmatmul.bf16.gmra.mxu0 %v7245
  %v7308 = vpop.f32.mrf.mxu0
  %v7309 = vadd.f32 %v7296, %v7308
  %v7310 = vpop.f32.mrf.mxu0
  %7311 = vdwg.mxu0
  %v7312 = vadd.f32 %v6944, %v7309
  %7313 = vst [vmem:[%s10] sm:$0xff] %v7312
  %v7314 = vld [vmem:[%s10] sm:$0xff]
  %v7315 = vld [vmem:[#allocation4 + $0x78] sm:$0xff]
  %v7316 = vld [vmem:[#allocation4 + $0x80] sm:$0xff]
  %v7317 = vld [vmem:[#allocation4 + $0x88] sm:$0xff]
  %v7318 = vld [vmem:[#allocation4 + $0x90] sm:$0xff]
  %v7319 = vld [vmem:[#allocation4 + $0x98] sm:$0xff]
  %v7320 = vpack.c.bf16 %v7315, %v7315
  %v7321 = vpack.c.bf16 %v7316, %v7316
  %v7322 = vpack.c.bf16 %v7317, %v7317
  %v7323 = vpack.c.bf16 %v7318, %v7318
  %v7324 = vpack.c.bf16 %v7319, %v7319
  %s7325 = scalar_lea.vmem %s8, 864
  %v7326 = vld [vmem:[%s7325] sm:$0xf]
  %v7327 = vld [vmem:[%s7325 + $0x4] sm:$0xf]
  %v7328 = vld [vmem:[%s7325 + $0x8] sm:$0xf]
  %v7329 = vld [vmem:[%s7325 + $0xc] sm:$0xf]
  %v7330 = vld [vmem:[%s7325 + $0x10] sm:$0xf]
  %v7331 = vld [vmem:[%s7325 + $0x14] sm:$0xf]
  %v7332 = vld [vmem:[%s7325 + $0x18] sm:$0xf]
  %v7333 = vld [vmem:[%s7325 + $0x1c] sm:$0xf]
  %v7334 = vld [vmem:[%s7325 + $0x20] sm:$0xf]
  %v7335 = vld [vmem:[%s7325 + $0x24] sm:$0xf]
  %v7336 = vld [vmem:[%s7325 + $0x28] sm:$0xf]
  %v7337 = vld [vmem:[%s7325 + $0x2c] sm:$0xf]
  %v7338 = vld [vmem:[%s7325 + $0x30] sm:$0xf]
  %v7339 = vld [vmem:[%s7325 + $0x34] sm:$0xf]
  %v7340 = vld [vmem:[%s7325 + $0x38] sm:$0xf]
  %v7341 = vld [vmem:[%s7325 + $0x3c] sm:$0xf]
  %v7342 = vld [vmem:[%s7325 + $0x40] sm:$0xf]
  %v7343 = vld [vmem:[%s7325 + $0x44] sm:$0xf]
  %v7344 = vld [vmem:[%s7325 + $0x48] sm:$0xf]
  %v7345 = vld [vmem:[%s7325 + $0x4c] sm:$0xf]
  %v7346 = vld [vmem:[%s7325 + $0x50] sm:$0xf]
  %v7347 = vld [vmem:[%s7325 + $0x54] sm:$0xf]
  %v7348 = vld [vmem:[%s7325 + $0x58] sm:$0xf]
  %v7349 = vld [vmem:[%s7325 + $0x5c] sm:$0xf]
  %v7350 = vld [vmem:[%s7325 + $0x60] sm:$0xf]
  %v7351 = vld [vmem:[%s7325 + $0x64] sm:$0xf]
  %v7352 = vld [vmem:[%s7325 + $0x68] sm:$0xf]
  %v7353 = vld [vmem:[%s7325 + $0x6c] sm:$0xf]
  %v7354 = vld [vmem:[%s7325 + $0x70] sm:$0xf]
  %v7355 = vld [vmem:[%s7325 + $0x74] sm:$0xf]
  %v7356 = vld [vmem:[%s7325 + $0x78] sm:$0xf]
  %v7357 = vld [vmem:[%s7325 + $0x7c] sm:$0xf]
  %v7358 = vld [vmem:[%s7325 + $0x80] sm:$0xf]
  %v7359 = vld [vmem:[%s7325 + $0x84] sm:$0xf]
  %v7360 = vld [vmem:[%s7325 + $0x88] sm:$0xf]
  %v7361 = vld [vmem:[%s7325 + $0x8c] sm:$0xf]
  %v7362 = vld [vmem:[%s7325 + $0x90] sm:$0xf]
  %v7363 = vld [vmem:[%s7325 + $0x94] sm:$0xf]
  %v7364 = vld [vmem:[%s7325 + $0x98] sm:$0xf]
  %v7365 = vld [vmem:[%s7325 + $0x9c] sm:$0xf]
  %v7366 = vld [vmem:[%s7325 + $0xa0] sm:$0xf]
  %v7367 = vld [vmem:[%s7325 + $0xa4] sm:$0xf]
  %v7368 = vld [vmem:[%s7325 + $0xa8] sm:$0xf]
  %v7369 = vld [vmem:[%s7325 + $0xac] sm:$0xf]
  %v7370 = vld [vmem:[%s7325 + $0xb0] sm:$0xf]
  %v7371 = vld [vmem:[%s7325 + $0xb4] sm:$0xf]
  %v7372 = vld [vmem:[%s7325 + $0xb8] sm:$0xf]
  %v7373 = vld [vmem:[%s7325 + $0xbc] sm:$0xf]
  %v7374 = vld [vmem:[%s7325 + $0xc0] sm:$0xf]
  %v7375 = vld [vmem:[%s7325 + $0xc4] sm:$0xf]
  %v7376 = vld [vmem:[%s7325 + $0xc8] sm:$0xf]
  %v7377 = vld [vmem:[%s7325 + $0xcc] sm:$0xf]
  %v7378 = vld [vmem:[%s7325 + $0xd0] sm:$0xf]
  %v7379 = vld [vmem:[%s7325 + $0xd4] sm:$0xf]
  %v7380 = vld [vmem:[%s7325 + $0xd8] sm:$0xf]
  %v7381 = vld [vmem:[%s7325 + $0xdc] sm:$0xf]
  %v7382 = vld [vmem:[%s7325 + $0xe0] sm:$0xf]
  %v7383 = vld [vmem:[%s7325 + $0xe4] sm:$0xf]
  %v7384 = vld [vmem:[%s7325 + $0xe8] sm:$0xf]
  %v7385 = vld [vmem:[%s7325 + $0xec] sm:$0xf]
  %v7386 = vld [vmem:[%s7325 + $0xf0] sm:$0xf]
  %v7387 = vld [vmem:[%s7325 + $0xf4] sm:$0xf]
  %v7388 = vld [vmem:[%s7325 + $0xf8] sm:$0xf]
  %v7389 = vld [vmem:[%s7325 + $0xfc] sm:$0xf]
  %v7390 = vld [vmem:[%s7325 + $0x100] sm:$0xf]
  %v7391 = vld [vmem:[%s7325 + $0x104] sm:$0xf]
  %v7392 = vld [vmem:[%s7325 + $0x108] sm:$0xf]
  %v7393 = vld [vmem:[%s7325 + $0x10c] sm:$0xf]
  %v7394 = vld [vmem:[%s7325 + $0x110] sm:$0xf]
  %v7395 = vld [vmem:[%s7325 + $0x114] sm:$0xf]
  %v7396 = vld [vmem:[%s7325 + $0x118] sm:$0xf]
  %v7397 = vld [vmem:[%s7325 + $0x11c] sm:$0xf]
  %v7470 = vunpack.c.l.b16 %v7326
  %v7471 = vunpack.c.l.b16 %v7327
  %v7472 = vunpack.c.l.b16 %v7328
  %v7473 = vunpack.c.l.b16 %v7329
  %v7474 = vunpack.c.l.b16 %v7330
  %v7475 = vunpack.c.l.b16 %v7331
  %v7476 = vunpack.c.l.b16 %v7332
  %v7477 = vunpack.c.l.b16 %v7333
  %v7478 = vunpack.c.l.b16 %v7334
  %v7479 = vunpack.c.l.b16 %v7335
  %v7480 = vunpack.c.l.b16 %v7336
  %v7481 = vunpack.c.l.b16 %v7337
  %v7482 = vunpack.c.l.b16 %v7338
  %v7483 = vunpack.c.l.b16 %v7339
  %v7484 = vunpack.c.l.b16 %v7340
  %v7485 = vunpack.c.l.b16 %v7341
  %v7486 = vunpack.c.l.b16 %v7342
  %v7487 = vunpack.c.l.b16 %v7343
  %v7488 = vunpack.c.l.b16 %v7344
  %v7489 = vunpack.c.l.b16 %v7345
  %v7490 = vunpack.c.l.b16 %v7346
  %v7491 = vunpack.c.l.b16 %v7347
  %v7492 = vunpack.c.l.b16 %v7348
  %v7493 = vunpack.c.l.b16 %v7349
  %v7494 = vunpack.c.l.b16 %v7350
  %v7495 = vunpack.c.l.b16 %v7351
  %v7496 = vunpack.c.l.b16 %v7352
  %v7497 = vunpack.c.l.b16 %v7353
  %v7498 = vunpack.c.l.b16 %v7354
  %v7499 = vunpack.c.l.b16 %v7355
  %v7500 = vunpack.c.l.b16 %v7356
  %v7501 = vunpack.c.l.b16 %v7357
  %v7502 = vunpack.c.l.b16 %v7358
  %v7503 = vunpack.c.l.b16 %v7359
  %v7504 = vunpack.c.l.b16 %v7360
  %v7505 = vunpack.c.l.b16 %v7361
  %v7506 = vunpack.c.l.b16 %v7362
  %v7507 = vunpack.c.l.b16 %v7363
  %v7508 = vunpack.c.l.b16 %v7364
  %v7509 = vunpack.c.l.b16 %v7365
  %v7510 = vunpack.c.l.b16 %v7366
  %v7511 = vunpack.c.l.b16 %v7367
  %v7512 = vunpack.c.l.b16 %v7368
  %v7513 = vunpack.c.l.b16 %v7369
  %v7514 = vunpack.c.l.b16 %v7370
  %v7515 = vunpack.c.l.b16 %v7371
  %v7516 = vunpack.c.l.b16 %v7372
  %v7517 = vunpack.c.l.b16 %v7373
  %v7518 = vunpack.c.l.b16 %v7374
  %v7519 = vunpack.c.l.b16 %v7375
  %v7520 = vunpack.c.l.b16 %v7376
  %v7521 = vunpack.c.l.b16 %v7377
  %v7522 = vunpack.c.l.b16 %v7378
  %v7523 = vunpack.c.l.b16 %v7379
  %v7524 = vunpack.c.l.b16 %v7380
  %v7525 = vunpack.c.l.b16 %v7381
  %v7526 = vunpack.c.l.b16 %v7382
  %v7527 = vunpack.c.l.b16 %v7383
  %v7528 = vunpack.c.l.b16 %v7384
  %v7529 = vunpack.c.l.b16 %v7385
  %v7530 = vunpack.c.l.b16 %v7386
  %v7531 = vunpack.c.l.b16 %v7387
  %v7532 = vunpack.c.l.b16 %v7388
  %v7533 = vunpack.c.l.b16 %v7389
  %v7534 = vunpack.c.l.b16 %v7390
  %v7535 = vunpack.c.l.b16 %v7391
  %v7536 = vunpack.c.l.b16 %v7392
  %v7537 = vunpack.c.l.b16 %v7393
  %v7538 = vunpack.c.l.b16 %v7394
  %v7539 = vunpack.c.l.b16 %v7395
  %v7540 = vunpack.c.l.b16 %v7396
  %v7541 = vunpack.c.l.b16 %v7397
  %v7542 = vpack.c.b16 %v7471, %v7470
  %v7543 = vpack.c.b16 %v7473, %v7472
  %v7544 = vpack.c.b16 %v7475, %v7474
  %v7545 = vpack.c.b16 %v7477, %v7476
  %v7546 = vpack.c.b16 %v7479, %v7478
  %v7547 = vpack.c.b16 %v7481, %v7480
  %v7548 = vpack.c.b16 %v7483, %v7482
  %v7549 = vpack.c.b16 %v7485, %v7484
  %v7550 = vpack.c.b16 %v7487, %v7486
  %v7551 = vpack.c.b16 %v7489, %v7488
  %v7552 = vpack.c.b16 %v7491, %v7490
  %v7553 = vpack.c.b16 %v7493, %v7492
  %v7554 = vpack.c.b16 %v7495, %v7494
  %v7555 = vpack.c.b16 %v7497, %v7496
  %v7556 = vpack.c.b16 %v7499, %v7498
  %v7557 = vpack.c.b16 %v7501, %v7500
  %v7558 = vpack.c.b16 %v7503, %v7502
  %v7559 = vpack.c.b16 %v7505, %v7504
  %v7560 = vpack.c.b16 %v7507, %v7506
  %v7561 = vpack.c.b16 %v7509, %v7508
  %v7562 = vpack.c.b16 %v7511, %v7510
  %v7563 = vpack.c.b16 %v7513, %v7512
  %v7564 = vpack.c.b16 %v7515, %v7514
  %v7565 = vpack.c.b16 %v7517, %v7516
  %v7566 = vpack.c.b16 %v7519, %v7518
  %v7567 = vpack.c.b16 %v7521, %v7520
  %v7568 = vpack.c.b16 %v7523, %v7522
  %v7569 = vpack.c.b16 %v7525, %v7524
  %v7570 = vpack.c.b16 %v7527, %v7526
  %v7571 = vpack.c.b16 %v7529, %v7528
  %v7572 = vpack.c.b16 %v7531, %v7530
  %v7573 = vpack.c.b16 %v7533, %v7532
  %v7574 = vpack.c.b16 %v7535, %v7534
  %v7575 = vpack.c.b16 %v7537, %v7536
  %v7576 = vpack.c.b16 %v7539, %v7538
  %v7577 = vpack.c.b16 %v7541, %v7540
  %v7615 = vsel %vm1983, %v7324, 0
  %7617 = vmatpush.bf16.msra.mxu0 %v7549
  %7618 = vmatpush.bf16.msra.mxu0 %v7548
  %7619 = vmatpush.bf16.msra.mxu0 %v7547
  %7620 = vmatpush.bf16.msra.mxu0 %v7546
  %7621 = vmatpush.bf16.msra.mxu0 %v7545
  %7622 = vmatpush.bf16.msra.mxu0 %v7544
  %7623 = vmatpush.bf16.msra.mxu0 %v7543
  %7624 = vmatpush.bf16.msra.mxu0 %v7542
  %7625 = vmatmul.bf16.gmra.mxu0 %v7320
  %v7626 = vpop.f32.mrf.mxu0
  %v7627 = vadd.f32 0.0, %v7626
  %v7628 = vpop.f32.mrf.mxu0
  %7629 = vdwg.mxu0
  %7630 = vmatpush.bf16.msra.mxu0 %v7557
  %7631 = vmatpush.bf16.msra.mxu0 %v7556
  %7632 = vmatpush.bf16.msra.mxu0 %v7555
  %7633 = vmatpush.bf16.msra.mxu0 %v7554
  %7634 = vmatpush.bf16.msra.mxu0 %v7553
  %7635 = vmatpush.bf16.msra.mxu0 %v7552
  %7636 = vmatpush.bf16.msra.mxu0 %v7551
  %7637 = vmatpush.bf16.msra.mxu0 %v7550
  %7638 = vmatmul.bf16.gmra.mxu0 %v7321
  %v7639 = vpop.f32.mrf.mxu0
  %v7640 = vadd.f32 %v7627, %v7639
  %v7641 = vpop.f32.mrf.mxu0
  %7642 = vdwg.mxu0
  %7643 = vmatpush.bf16.msra.mxu0 %v7565
  %7644 = vmatpush.bf16.msra.mxu0 %v7564
  %7645 = vmatpush.bf16.msra.mxu0 %v7563
  %7646 = vmatpush.bf16.msra.mxu0 %v7562
  %7647 = vmatpush.bf16.msra.mxu0 %v7561
  %7648 = vmatpush.bf16.msra.mxu0 %v7560
  %7649 = vmatpush.bf16.msra.mxu0 %v7559
  %7650 = vmatpush.bf16.msra.mxu0 %v7558
  %7651 = vmatmul.bf16.gmra.mxu0 %v7322
  %v7652 = vpop.f32.mrf.mxu0
  %v7653 = vadd.f32 %v7640, %v7652
  %v7654 = vpop.f32.mrf.mxu0
  %7655 = vdwg.mxu0
  %7656 = vmatpush.bf16.msra.mxu0 %v7573
  %7657 = vmatpush.bf16.msra.mxu0 %v7572
  %7658 = vmatpush.bf16.msra.mxu0 %v7571
  %7659 = vmatpush.bf16.msra.mxu0 %v7570
  %7660 = vmatpush.bf16.msra.mxu0 %v7569
  %7661 = vmatpush.bf16.msra.mxu0 %v7568
  %7662 = vmatpush.bf16.msra.mxu0 %v7567
  %7663 = vmatpush.bf16.msra.mxu0 %v7566
  %7664 = vmatmul.bf16.gmra.mxu0 %v7323
  %v7665 = vpop.f32.mrf.mxu0
  %v7666 = vadd.f32 %v7653, %v7665
  %v7667 = vpop.f32.mrf.mxu0
  %7668 = vdwg.mxu0
  %7669 = vmatpush.bf16.msra.mxu0 0
  %7670 = vmatpush.bf16.msra.mxu0 0
  %7671 = vmatpush.bf16.msra.mxu0 0
  %7672 = vmatpush.bf16.msra.mxu0 0
  %7673 = vmatpush.bf16.msra.mxu0 %v7577
  %7674 = vmatpush.bf16.msra.mxu0 %v7576
  %7675 = vmatpush.bf16.msra.mxu0 %v7575
  %7676 = vmatpush.bf16.msra.mxu0 %v7574
  %7677 = vmatmul.bf16.gmra.mxu0 %v7615
  %v7678 = vpop.f32.mrf.mxu0
  %v7679 = vadd.f32 %v7666, %v7678
  %v7680 = vpop.f32.mrf.mxu0
  %7681 = vdwg.mxu0
  %v7682 = vadd.f32 %v7314, %v7679
  %7683 = vst [vmem:[%s10] sm:$0xff] %v7682
  %v7684 = vld [vmem:[%s10] sm:$0xff]
  %v7685 = vld [vmem:[#allocation4 + $0xa0] sm:$0xff]
  %v7686 = vld [vmem:[#allocation4 + $0xa8] sm:$0xff]
  %v7687 = vld [vmem:[#allocation4 + $0xb0] sm:$0xff]
  %v7688 = vld [vmem:[#allocation4 + $0xb8] sm:$0xff]
  %v7689 = vld [vmem:[#allocation4 + $0xc0] sm:$0xff]
  %v7690 = vpack.c.bf16 %v7685, %v7685
  %v7691 = vpack.c.bf16 %v7686, %v7686
  %v7692 = vpack.c.bf16 %v7687, %v7687
  %v7693 = vpack.c.bf16 %v7688, %v7688
  %v7694 = vpack.c.bf16 %v7689, %v7689
  %s7695 = scalar_lea.vmem %s8, 1152
  %v7696 = vld [vmem:[%s7695] sm:$0xf]
  %v7697 = vld [vmem:[%s7695 + $0x4] sm:$0xf]
  %v7698 = vld [vmem:[%s7695 + $0x8] sm:$0xf]
  %v7699 = vld [vmem:[%s7695 + $0xc] sm:$0xf]
  %v7700 = vld [vmem:[%s7695 + $0x10] sm:$0xf]
  %v7701 = vld [vmem:[%s7695 + $0x14] sm:$0xf]
  %v7702 = vld [vmem:[%s7695 + $0x18] sm:$0xf]
  %v7703 = vld [vmem:[%s7695 + $0x1c] sm:$0xf]
  %v7704 = vld [vmem:[%s7695 + $0x20] sm:$0xf]
  %v7705 = vld [vmem:[%s7695 + $0x24] sm:$0xf]
  %v7706 = vld [vmem:[%s7695 + $0x28] sm:$0xf]
  %v7707 = vld [vmem:[%s7695 + $0x2c] sm:$0xf]
  %v7708 = vld [vmem:[%s7695 + $0x30] sm:$0xf]
  %v7709 = vld [vmem:[%s7695 + $0x34] sm:$0xf]
  %v7710 = vld [vmem:[%s7695 + $0x38] sm:$0xf]
  %v7711 = vld [vmem:[%s7695 + $0x3c] sm:$0xf]
  %v7712 = vld [vmem:[%s7695 + $0x40] sm:$0xf]
  %v7713 = vld [vmem:[%s7695 + $0x44] sm:$0xf]
  %v7714 = vld [vmem:[%s7695 + $0x48] sm:$0xf]
  %v7715 = vld [vmem:[%s7695 + $0x4c] sm:$0xf]
  %v7716 = vld [vmem:[%s7695 + $0x50] sm:$0xf]
  %v7717 = vld [vmem:[%s7695 + $0x54] sm:$0xf]
  %v7718 = vld [vmem:[%s7695 + $0x58] sm:$0xf]
  %v7719 = vld [vmem:[%s7695 + $0x5c] sm:$0xf]
  %v7720 = vld [vmem:[%s7695 + $0x60] sm:$0xf]
  %v7721 = vld [vmem:[%s7695 + $0x64] sm:$0xf]
  %v7722 = vld [vmem:[%s7695 + $0x68] sm:$0xf]
  %v7723 = vld [vmem:[%s7695 + $0x6c] sm:$0xf]
  %v7724 = vld [vmem:[%s7695 + $0x70] sm:$0xf]
  %v7725 = vld [vmem:[%s7695 + $0x74] sm:$0xf]
  %v7726 = vld [vmem:[%s7695 + $0x78] sm:$0xf]
  %v7727 = vld [vmem:[%s7695 + $0x7c] sm:$0xf]
  %v7728 = vld [vmem:[%s7695 + $0x80] sm:$0xf]
  %v7729 = vld [vmem:[%s7695 + $0x84] sm:$0xf]
  %v7730 = vld [vmem:[%s7695 + $0x88] sm:$0xf]
  %v7731 = vld [vmem:[%s7695 + $0x8c] sm:$0xf]
  %v7732 = vld [vmem:[%s7695 + $0x90] sm:$0xf]
  %v7733 = vld [vmem:[%s7695 + $0x94] sm:$0xf]
  %v7734 = vld [vmem:[%s7695 + $0x98] sm:$0xf]
  %v7735 = vld [vmem:[%s7695 + $0x9c] sm:$0xf]
  %v7736 = vld [vmem:[%s7695 + $0xa0] sm:$0xf]
  %v7737 = vld [vmem:[%s7695 + $0xa4] sm:$0xf]
  %v7738 = vld [vmem:[%s7695 + $0xa8] sm:$0xf]
  %v7739 = vld [vmem:[%s7695 + $0xac] sm:$0xf]
  %v7740 = vld [vmem:[%s7695 + $0xb0] sm:$0xf]
  %v7741 = vld [vmem:[%s7695 + $0xb4] sm:$0xf]
  %v7742 = vld [vmem:[%s7695 + $0xb8] sm:$0xf]
  %v7743 = vld [vmem:[%s7695 + $0xbc] sm:$0xf]
  %v7744 = vld [vmem:[%s7695 + $0xc0] sm:$0xf]
  %v7745 = vld [vmem:[%s7695 + $0xc4] sm:$0xf]
  %v7746 = vld [vmem:[%s7695 + $0xc8] sm:$0xf]
  %v7747 = vld [vmem:[%s7695 + $0xcc] sm:$0xf]
  %v7748 = vld [vmem:[%s7695 + $0xd0] sm:$0xf]
  %v7749 = vld [vmem:[%s7695 + $0xd4] sm:$0xf]
  %v7750 = vld [vmem:[%s7695 + $0xd8] sm:$0xf]
  %v7751 = vld [vmem:[%s7695 + $0xdc] sm:$0xf]
  %v7752 = vld [vmem:[%s7695 + $0xe0] sm:$0xf]
  %v7753 = vld [vmem:[%s7695 + $0xe4] sm:$0xf]
  %v7754 = vld [vmem:[%s7695 + $0xe8] sm:$0xf]
  %v7755 = vld [vmem:[%s7695 + $0xec] sm:$0xf]
  %v7756 = vld [vmem:[%s7695 + $0xf0] sm:$0xf]
  %v7757 = vld [vmem:[%s7695 + $0xf4] sm:$0xf]
  %v7758 = vld [vmem:[%s7695 + $0xf8] sm:$0xf]
  %v7759 = vld [vmem:[%s7695 + $0xfc] sm:$0xf]
  %v7760 = vld [vmem:[%s7695 + $0x100] sm:$0xf]
  %v7761 = vld [vmem:[%s7695 + $0x104] sm:$0xf]
  %v7762 = vld [vmem:[%s7695 + $0x108] sm:$0xf]
  %v7763 = vld [vmem:[%s7695 + $0x10c] sm:$0xf]
  %v7764 = vld [vmem:[%s7695 + $0x110] sm:$0xf]
  %v7765 = vld [vmem:[%s7695 + $0x114] sm:$0xf]
  %v7766 = vld [vmem:[%s7695 + $0x118] sm:$0xf]
  %v7767 = vld [vmem:[%s7695 + $0x11c] sm:$0xf]
  %v7840 = vunpack.c.l.b16 %v7696
  %v7841 = vunpack.c.l.b16 %v7697
  %v7842 = vunpack.c.l.b16 %v7698
  %v7843 = vunpack.c.l.b16 %v7699
  %v7844 = vunpack.c.l.b16 %v7700
  %v7845 = vunpack.c.l.b16 %v7701
  %v7846 = vunpack.c.l.b16 %v7702
  %v7847 = vunpack.c.l.b16 %v7703
  %v7848 = vunpack.c.l.b16 %v7704
  %v7849 = vunpack.c.l.b16 %v7705
  %v7850 = vunpack.c.l.b16 %v7706
  %v7851 = vunpack.c.l.b16 %v7707
  %v7852 = vunpack.c.l.b16 %v7708
  %v7853 = vunpack.c.l.b16 %v7709
  %v7854 = vunpack.c.l.b16 %v7710
  %v7855 = vunpack.c.l.b16 %v7711
  %v7856 = vunpack.c.l.b16 %v7712
  %v7857 = vunpack.c.l.b16 %v7713
  %v7858 = vunpack.c.l.b16 %v7714
  %v7859 = vunpack.c.l.b16 %v7715
  %v7860 = vunpack.c.l.b16 %v7716
  %v7861 = vunpack.c.l.b16 %v7717
  %v7862 = vunpack.c.l.b16 %v7718
  %v7863 = vunpack.c.l.b16 %v7719
  %v7864 = vunpack.c.l.b16 %v7720
  %v7865 = vunpack.c.l.b16 %v7721
  %v7866 = vunpack.c.l.b16 %v7722
  %v7867 = vunpack.c.l.b16 %v7723
  %v7868 = vunpack.c.l.b16 %v7724
  %v7869 = vunpack.c.l.b16 %v7725
  %v7870 = vunpack.c.l.b16 %v7726
  %v7871 = vunpack.c.l.b16 %v7727
  %v7872 = vunpack.c.l.b16 %v7728
  %v7873 = vunpack.c.l.b16 %v7729
  %v7874 = vunpack.c.l.b16 %v7730
  %v7875 = vunpack.c.l.b16 %v7731
  %v7876 = vunpack.c.l.b16 %v7732
  %v7877 = vunpack.c.l.b16 %v7733
  %v7878 = vunpack.c.l.b16 %v7734
  %v7879 = vunpack.c.l.b16 %v7735
  %v7880 = vunpack.c.l.b16 %v7736
  %v7881 = vunpack.c.l.b16 %v7737
  %v7882 = vunpack.c.l.b16 %v7738
  %v7883 = vunpack.c.l.b16 %v7739
  %v7884 = vunpack.c.l.b16 %v7740
  %v7885 = vunpack.c.l.b16 %v7741
  %v7886 = vunpack.c.l.b16 %v7742
  %v7887 = vunpack.c.l.b16 %v7743
  %v7888 = vunpack.c.l.b16 %v7744
  %v7889 = vunpack.c.l.b16 %v7745
  %v7890 = vunpack.c.l.b16 %v7746
  %v7891 = vunpack.c.l.b16 %v7747
  %v7892 = vunpack.c.l.b16 %v7748
  %v7893 = vunpack.c.l.b16 %v7749
  %v7894 = vunpack.c.l.b16 %v7750
  %v7895 = vunpack.c.l.b16 %v7751
  %v7896 = vunpack.c.l.b16 %v7752
  %v7897 = vunpack.c.l.b16 %v7753
  %v7898 = vunpack.c.l.b16 %v7754
  %v7899 = vunpack.c.l.b16 %v7755
  %v7900 = vunpack.c.l.b16 %v7756
  %v7901 = vunpack.c.l.b16 %v7757
  %v7902 = vunpack.c.l.b16 %v7758
  %v7903 = vunpack.c.l.b16 %v7759
  %v7904 = vunpack.c.l.b16 %v7760
  %v7905 = vunpack.c.l.b16 %v7761
  %v7906 = vunpack.c.l.b16 %v7762
  %v7907 = vunpack.c.l.b16 %v7763
  %v7908 = vunpack.c.l.b16 %v7764
  %v7909 = vunpack.c.l.b16 %v7765
  %v7910 = vunpack.c.l.b16 %v7766
  %v7911 = vunpack.c.l.b16 %v7767
  %v7912 = vpack.c.b16 %v7841, %v7840
  %v7913 = vpack.c.b16 %v7843, %v7842
  %v7914 = vpack.c.b16 %v7845, %v7844
  %v7915 = vpack.c.b16 %v7847, %v7846
  %v7916 = vpack.c.b16 %v7849, %v7848
  %v7917 = vpack.c.b16 %v7851, %v7850
  %v7918 = vpack.c.b16 %v7853, %v7852
  %v7919 = vpack.c.b16 %v7855, %v7854
  %v7920 = vpack.c.b16 %v7857, %v7856
  %v7921 = vpack.c.b16 %v7859, %v7858
  %v7922 = vpack.c.b16 %v7861, %v7860
  %v7923 = vpack.c.b16 %v7863, %v7862
  %v7924 = vpack.c.b16 %v7865, %v7864
  %v7925 = vpack.c.b16 %v7867, %v7866
  %v7926 = vpack.c.b16 %v7869, %v7868
  %v7927 = vpack.c.b16 %v7871, %v7870
  %v7928 = vpack.c.b16 %v7873, %v7872
  %v7929 = vpack.c.b16 %v7875, %v7874
  %v7930 = vpack.c.b16 %v7877, %v7876
  %v7931 = vpack.c.b16 %v7879, %v7878
  %v7932 = vpack.c.b16 %v7881, %v7880
  %v7933 = vpack.c.b16 %v7883, %v7882
  %v7934 = vpack.c.b16 %v7885, %v7884
  %v7935 = vpack.c.b16 %v7887, %v7886
  %v7936 = vpack.c.b16 %v7889, %v7888
  %v7937 = vpack.c.b16 %v7891, %v7890
  %v7938 = vpack.c.b16 %v7893, %v7892
  %v7939 = vpack.c.b16 %v7895, %v7894
  %v7940 = vpack.c.b16 %v7897, %v7896
  %v7941 = vpack.c.b16 %v7899, %v7898
  %v7942 = vpack.c.b16 %v7901, %v7900
  %v7943 = vpack.c.b16 %v7903, %v7902
  %v7944 = vpack.c.b16 %v7905, %v7904
  %v7945 = vpack.c.b16 %v7907, %v7906
  %v7946 = vpack.c.b16 %v7909, %v7908
  %v7947 = vpack.c.b16 %v7911, %v7910
  %v7985 = vsel %vm1983, %v7694, 0
  %7987 = vmatpush.bf16.msra.mxu0 %v7919
  %7988 = vmatpush.bf16.msra.mxu0 %v7918
  %7989 = vmatpush.bf16.msra.mxu0 %v7917
  %7990 = vmatpush.bf16.msra.mxu0 %v7916
  %7991 = vmatpush.bf16.msra.mxu0 %v7915
  %7992 = vmatpush.bf16.msra.mxu0 %v7914
  %7993 = vmatpush.bf16.msra.mxu0 %v7913
  %7994 = vmatpush.bf16.msra.mxu0 %v7912
  %7995 = vmatmul.bf16.gmra.mxu0 %v7690
  %v7996 = vpop.f32.mrf.mxu0
  %v7997 = vadd.f32 0.0, %v7996
  %v7998 = vpop.f32.mrf.mxu0
  %7999 = vdwg.mxu0
  %8000 = vmatpush.bf16.msra.mxu0 %v7927
  %8001 = vmatpush.bf16.msra.mxu0 %v7926
  %8002 = vmatpush.bf16.msra.mxu0 %v7925
  %8003 = vmatpush.bf16.msra.mxu0 %v7924
  %8004 = vmatpush.bf16.msra.mxu0 %v7923
  %8005 = vmatpush.bf16.msra.mxu0 %v7922
  %8006 = vmatpush.bf16.msra.mxu0 %v7921
  %8007 = vmatpush.bf16.msra.mxu0 %v7920
  %8008 = vmatmul.bf16.gmra.mxu0 %v7691
  %v8009 = vpop.f32.mrf.mxu0
  %v8010 = vadd.f32 %v7997, %v8009
  %v8011 = vpop.f32.mrf.mxu0
  %8012 = vdwg.mxu0
  %8013 = vmatpush.bf16.msra.mxu0 %v7935
  %8014 = vmatpush.bf16.msra.mxu0 %v7934
  %8015 = vmatpush.bf16.msra.mxu0 %v7933
  %8016 = vmatpush.bf16.msra.mxu0 %v7932
  %8017 = vmatpush.bf16.msra.mxu0 %v7931
  %8018 = vmatpush.bf16.msra.mxu0 %v7930
  %8019 = vmatpush.bf16.msra.mxu0 %v7929
  %8020 = vmatpush.bf16.msra.mxu0 %v7928
  %8021 = vmatmul.bf16.gmra.mxu0 %v7692
  %v8022 = vpop.f32.mrf.mxu0
  %v8023 = vadd.f32 %v8010, %v8022
  %v8024 = vpop.f32.mrf.mxu0
  %8025 = vdwg.mxu0
  %8026 = vmatpush.bf16.msra.mxu0 %v7943
  %8027 = vmatpush.bf16.msra.mxu0 %v7942
  %8028 = vmatpush.bf16.msra.mxu0 %v7941
  %8029 = vmatpush.bf16.msra.mxu0 %v7940
  %8030 = vmatpush.bf16.msra.mxu0 %v7939
  %8031 = vmatpush.bf16.msra.mxu0 %v7938
  %8032 = vmatpush.bf16.msra.mxu0 %v7937
  %8033 = vmatpush.bf16.msra.mxu0 %v7936
  %8034 = vmatmul.bf16.gmra.mxu0 %v7693
  %v8035 = vpop.f32.mrf.mxu0
  %v8036 = vadd.f32 %v8023, %v8035
  %v8037 = vpop.f32.mrf.mxu0
  %8038 = vdwg.mxu0
  %8039 = vmatpush.bf16.msra.mxu0 0
  %8040 = vmatpush.bf16.msra.mxu0 0
  %8041 = vmatpush.bf16.msra.mxu0 0
  %8042 = vmatpush.bf16.msra.mxu0 0
  %8043 = vmatpush.bf16.msra.mxu0 %v7947
  %8044 = vmatpush.bf16.msra.mxu0 %v7946
  %8045 = vmatpush.bf16.msra.mxu0 %v7945
  %8046 = vmatpush.bf16.msra.mxu0 %v7944
  %8047 = vmatmul.bf16.gmra.mxu0 %v7985
  %v8048 = vpop.f32.mrf.mxu0
  %v8049 = vadd.f32 %v8036, %v8048
  %v8050 = vpop.f32.mrf.mxu0
  %8051 = vdwg.mxu0
  %v8052 = vadd.f32 %v7684, %v8049
  %8053 = vst [vmem:[%s10] sm:$0xff] %v8052
  %v8054 = vld [vmem:[%s10] sm:$0xff]
  %v8055 = vld [vmem:[#allocation4 + $0xc8] sm:$0xff]
  %v8056 = vld [vmem:[#allocation4 + $0xd0] sm:$0xff]
  %v8057 = vld [vmem:[#allocation4 + $0xd8] sm:$0xff]
  %v8058 = vld [vmem:[#allocation4 + $0xe0] sm:$0xff]
  %v8059 = vld [vmem:[#allocation4 + $0xe8] sm:$0xff]
  %v8060 = vpack.c.bf16 %v8055, %v8055
  %v8061 = vpack.c.bf16 %v8056, %v8056
  %v8062 = vpack.c.bf16 %v8057, %v8057
  %v8063 = vpack.c.bf16 %v8058, %v8058
  %v8064 = vpack.c.bf16 %v8059, %v8059
  %s8065 = scalar_lea.vmem %s8, 1440
  %v8066 = vld [vmem:[%s8065] sm:$0xf]
  %v8067 = vld [vmem:[%s8065 + $0x4] sm:$0xf]
  %v8068 = vld [vmem:[%s8065 + $0x8] sm:$0xf]
  %v8069 = vld [vmem:[%s8065 + $0xc] sm:$0xf]
  %v8070 = vld [vmem:[%s8065 + $0x10] sm:$0xf]
  %v8071 = vld [vmem:[%s8065 + $0x14] sm:$0xf]
  %v8072 = vld [vmem:[%s8065 + $0x18] sm:$0xf]
  %v8073 = vld [vmem:[%s8065 + $0x1c] sm:$0xf]
  %v8074 = vld [vmem:[%s8065 + $0x20] sm:$0xf]
  %v8075 = vld [vmem:[%s8065 + $0x24] sm:$0xf]
  %v8076 = vld [vmem:[%s8065 + $0x28] sm:$0xf]
  %v8077 = vld [vmem:[%s8065 + $0x2c] sm:$0xf]
  %v8078 = vld [vmem:[%s8065 + $0x30] sm:$0xf]
  %v8079 = vld [vmem:[%s8065 + $0x34] sm:$0xf]
  %v8080 = vld [vmem:[%s8065 + $0x38] sm:$0xf]
  %v8081 = vld [vmem:[%s8065 + $0x3c] sm:$0xf]
  %v8082 = vld [vmem:[%s8065 + $0x40] sm:$0xf]
  %v8083 = vld [vmem:[%s8065 + $0x44] sm:$0xf]
  %v8084 = vld [vmem:[%s8065 + $0x48] sm:$0xf]
  %v8085 = vld [vmem:[%s8065 + $0x4c] sm:$0xf]
  %v8086 = vld [vmem:[%s8065 + $0x50] sm:$0xf]
  %v8087 = vld [vmem:[%s8065 + $0x54] sm:$0xf]
  %v8088 = vld [vmem:[%s8065 + $0x58] sm:$0xf]
  %v8089 = vld [vmem:[%s8065 + $0x5c] sm:$0xf]
  %v8090 = vld [vmem:[%s8065 + $0x60] sm:$0xf]
  %v8091 = vld [vmem:[%s8065 + $0x64] sm:$0xf]
  %v8092 = vld [vmem:[%s8065 + $0x68] sm:$0xf]
  %v8093 = vld [vmem:[%s8065 + $0x6c] sm:$0xf]
  %v8094 = vld [vmem:[%s8065 + $0x70] sm:$0xf]
  %v8095 = vld [vmem:[%s8065 + $0x74] sm:$0xf]
  %v8096 = vld [vmem:[%s8065 + $0x78] sm:$0xf]
  %v8097 = vld [vmem:[%s8065 + $0x7c] sm:$0xf]
  %v8098 = vld [vmem:[%s8065 + $0x80] sm:$0xf]
  %v8099 = vld [vmem:[%s8065 + $0x84] sm:$0xf]
  %v8100 = vld [vmem:[%s8065 + $0x88] sm:$0xf]
  %v8101 = vld [vmem:[%s8065 + $0x8c] sm:$0xf]
  %v8102 = vld [vmem:[%s8065 + $0x90] sm:$0xf]
  %v8103 = vld [vmem:[%s8065 + $0x94] sm:$0xf]
  %v8104 = vld [vmem:[%s8065 + $0x98] sm:$0xf]
  %v8105 = vld [vmem:[%s8065 + $0x9c] sm:$0xf]
  %v8106 = vld [vmem:[%s8065 + $0xa0] sm:$0xf]
  %v8107 = vld [vmem:[%s8065 + $0xa4] sm:$0xf]
  %v8108 = vld [vmem:[%s8065 + $0xa8] sm:$0xf]
  %v8109 = vld [vmem:[%s8065 + $0xac] sm:$0xf]
  %v8110 = vld [vmem:[%s8065 + $0xb0] sm:$0xf]
  %v8111 = vld [vmem:[%s8065 + $0xb4] sm:$0xf]
  %v8112 = vld [vmem:[%s8065 + $0xb8] sm:$0xf]
  %v8113 = vld [vmem:[%s8065 + $0xbc] sm:$0xf]
  %v8114 = vld [vmem:[%s8065 + $0xc0] sm:$0xf]
  %v8115 = vld [vmem:[%s8065 + $0xc4] sm:$0xf]
  %v8116 = vld [vmem:[%s8065 + $0xc8] sm:$0xf]
  %v8117 = vld [vmem:[%s8065 + $0xcc] sm:$0xf]
  %v8118 = vld [vmem:[%s8065 + $0xd0] sm:$0xf]
  %v8119 = vld [vmem:[%s8065 + $0xd4] sm:$0xf]
  %v8120 = vld [vmem:[%s8065 + $0xd8] sm:$0xf]
  %v8121 = vld [vmem:[%s8065 + $0xdc] sm:$0xf]
  %v8122 = vld [vmem:[%s8065 + $0xe0] sm:$0xf]
  %v8123 = vld [vmem:[%s8065 + $0xe4] sm:$0xf]
  %v8124 = vld [vmem:[%s8065 + $0xe8] sm:$0xf]
  %v8125 = vld [vmem:[%s8065 + $0xec] sm:$0xf]
  %v8126 = vld [vmem:[%s8065 + $0xf0] sm:$0xf]
  %v8127 = vld [vmem:[%s8065 + $0xf4] sm:$0xf]
  %v8128 = vld [vmem:[%s8065 + $0xf8] sm:$0xf]
  %v8129 = vld [vmem:[%s8065 + $0xfc] sm:$0xf]
  %v8130 = vld [vmem:[%s8065 + $0x100] sm:$0xf]
  %v8131 = vld [vmem:[%s8065 + $0x104] sm:$0xf]
  %v8132 = vld [vmem:[%s8065 + $0x108] sm:$0xf]
  %v8133 = vld [vmem:[%s8065 + $0x10c] sm:$0xf]
  %v8134 = vld [vmem:[%s8065 + $0x110] sm:$0xf]
  %v8135 = vld [vmem:[%s8065 + $0x114] sm:$0xf]
  %v8136 = vld [vmem:[%s8065 + $0x118] sm:$0xf]
  %v8137 = vld [vmem:[%s8065 + $0x11c] sm:$0xf]
  %v8210 = vunpack.c.l.b16 %v8066
  %v8211 = vunpack.c.l.b16 %v8067
  %v8212 = vunpack.c.l.b16 %v8068
  %v8213 = vunpack.c.l.b16 %v8069
  %v8214 = vunpack.c.l.b16 %v8070
  %v8215 = vunpack.c.l.b16 %v8071
  %v8216 = vunpack.c.l.b16 %v8072
  %v8217 = vunpack.c.l.b16 %v8073
  %v8218 = vunpack.c.l.b16 %v8074
  %v8219 = vunpack.c.l.b16 %v8075
  %v8220 = vunpack.c.l.b16 %v8076
  %v8221 = vunpack.c.l.b16 %v8077
  %v8222 = vunpack.c.l.b16 %v8078
  %v8223 = vunpack.c.l.b16 %v8079
  %v8224 = vunpack.c.l.b16 %v8080
  %v8225 = vunpack.c.l.b16 %v8081
  %v8226 = vunpack.c.l.b16 %v8082
  %v8227 = vunpack.c.l.b16 %v8083
  %v8228 = vunpack.c.l.b16 %v8084
  %v8229 = vunpack.c.l.b16 %v8085
  %v8230 = vunpack.c.l.b16 %v8086
  %v8231 = vunpack.c.l.b16 %v8087
  %v8232 = vunpack.c.l.b16 %v8088
  %v8233 = vunpack.c.l.b16 %v8089
  %v8234 = vunpack.c.l.b16 %v8090
  %v8235 = vunpack.c.l.b16 %v8091
  %v8236 = vunpack.c.l.b16 %v8092
  %v8237 = vunpack.c.l.b16 %v8093
  %v8238 = vunpack.c.l.b16 %v8094
  %v8239 = vunpack.c.l.b16 %v8095
  %v8240 = vunpack.c.l.b16 %v8096
  %v8241 = vunpack.c.l.b16 %v8097
  %v8242 = vunpack.c.l.b16 %v8098
  %v8243 = vunpack.c.l.b16 %v8099
  %v8244 = vunpack.c.l.b16 %v8100
  %v8245 = vunpack.c.l.b16 %v8101
  %v8246 = vunpack.c.l.b16 %v8102
  %v8247 = vunpack.c.l.b16 %v8103
  %v8248 = vunpack.c.l.b16 %v8104
  %v8249 = vunpack.c.l.b16 %v8105
  %v8250 = vunpack.c.l.b16 %v8106
  %v8251 = vunpack.c.l.b16 %v8107
  %v8252 = vunpack.c.l.b16 %v8108
  %v8253 = vunpack.c.l.b16 %v8109
  %v8254 = vunpack.c.l.b16 %v8110
  %v8255 = vunpack.c.l.b16 %v8111
  %v8256 = vunpack.c.l.b16 %v8112
  %v8257 = vunpack.c.l.b16 %v8113
  %v8258 = vunpack.c.l.b16 %v8114
  %v8259 = vunpack.c.l.b16 %v8115
  %v8260 = vunpack.c.l.b16 %v8116
  %v8261 = vunpack.c.l.b16 %v8117
  %v8262 = vunpack.c.l.b16 %v8118
  %v8263 = vunpack.c.l.b16 %v8119
  %v8264 = vunpack.c.l.b16 %v8120
  %v8265 = vunpack.c.l.b16 %v8121
  %v8266 = vunpack.c.l.b16 %v8122
  %v8267 = vunpack.c.l.b16 %v8123
  %v8268 = vunpack.c.l.b16 %v8124
  %v8269 = vunpack.c.l.b16 %v8125
  %v8270 = vunpack.c.l.b16 %v8126
  %v8271 = vunpack.c.l.b16 %v8127
  %v8272 = vunpack.c.l.b16 %v8128
  %v8273 = vunpack.c.l.b16 %v8129
  %v8274 = vunpack.c.l.b16 %v8130
  %v8275 = vunpack.c.l.b16 %v8131
  %v8276 = vunpack.c.l.b16 %v8132
  %v8277 = vunpack.c.l.b16 %v8133
  %v8278 = vunpack.c.l.b16 %v8134
  %v8279 = vunpack.c.l.b16 %v8135
  %v8280 = vunpack.c.l.b16 %v8136
  %v8281 = vunpack.c.l.b16 %v8137
  %v8282 = vpack.c.b16 %v8211, %v8210
  %v8283 = vpack.c.b16 %v8213, %v8212
  %v8284 = vpack.c.b16 %v8215, %v8214
  %v8285 = vpack.c.b16 %v8217, %v8216
  %v8286 = vpack.c.b16 %v8219, %v8218
  %v8287 = vpack.c.b16 %v8221, %v8220
  %v8288 = vpack.c.b16 %v8223, %v8222
  %v8289 = vpack.c.b16 %v8225, %v8224
  %v8290 = vpack.c.b16 %v8227, %v8226
  %v8291 = vpack.c.b16 %v8229, %v8228
  %v8292 = vpack.c.b16 %v8231, %v8230
  %v8293 = vpack.c.b16 %v8233, %v8232
  %v8294 = vpack.c.b16 %v8235, %v8234
  %v8295 = vpack.c.b16 %v8237, %v8236
  %v8296 = vpack.c.b16 %v8239, %v8238
  %v8297 = vpack.c.b16 %v8241, %v8240
  %v8298 = vpack.c.b16 %v8243, %v8242
  %v8299 = vpack.c.b16 %v8245, %v8244
  %v8300 = vpack.c.b16 %v8247, %v8246
  %v8301 = vpack.c.b16 %v8249, %v8248
  %v8302 = vpack.c.b16 %v8251, %v8250
  %v8303 = vpack.c.b16 %v8253, %v8252
  %v8304 = vpack.c.b16 %v8255, %v8254
  %v8305 = vpack.c.b16 %v8257, %v8256
  %v8306 = vpack.c.b16 %v8259, %v8258
  %v8307 = vpack.c.b16 %v8261, %v8260
  %v8308 = vpack.c.b16 %v8263, %v8262
  %v8309 = vpack.c.b16 %v8265, %v8264
  %v8310 = vpack.c.b16 %v8267, %v8266
  %v8311 = vpack.c.b16 %v8269, %v8268
  %v8312 = vpack.c.b16 %v8271, %v8270
  %v8313 = vpack.c.b16 %v8273, %v8272
  %v8314 = vpack.c.b16 %v8275, %v8274
  %v8315 = vpack.c.b16 %v8277, %v8276
  %v8316 = vpack.c.b16 %v8279, %v8278
  %v8317 = vpack.c.b16 %v8281, %v8280
  %v8355 = vsel %vm1983, %v8064, 0
  %8357 = vmatpush.bf16.msra.mxu0 %v8289
  %8358 = vmatpush.bf16.msra.mxu0 %v8288
  %8359 = vmatpush.bf16.msra.mxu0 %v8287
  %8360 = vmatpush.bf16.msra.mxu0 %v8286
  %8361 = vmatpush.bf16.msra.mxu0 %v8285
  %8362 = vmatpush.bf16.msra.mxu0 %v8284
  %8363 = vmatpush.bf16.msra.mxu0 %v8283
  %8364 = vmatpush.bf16.msra.mxu0 %v8282
  %8365 = vmatmul.bf16.gmra.mxu0 %v8060
  %v8366 = vpop.f32.mrf.mxu0
  %v8367 = vadd.f32 0.0, %v8366
  %v8368 = vpop.f32.mrf.mxu0
  %8369 = vdwg.mxu0
  %8370 = vmatpush.bf16.msra.mxu0 %v8297
  %8371 = vmatpush.bf16.msra.mxu0 %v8296
  %8372 = vmatpush.bf16.msra.mxu0 %v8295
  %8373 = vmatpush.bf16.msra.mxu0 %v8294
  %8374 = vmatpush.bf16.msra.mxu0 %v8293
  %8375 = vmatpush.bf16.msra.mxu0 %v8292
  %8376 = vmatpush.bf16.msra.mxu0 %v8291
  %8377 = vmatpush.bf16.msra.mxu0 %v8290
  %8378 = vmatmul.bf16.gmra.mxu0 %v8061
  %v8379 = vpop.f32.mrf.mxu0
  %v8380 = vadd.f32 %v8367, %v8379
  %v8381 = vpop.f32.mrf.mxu0
  %8382 = vdwg.mxu0
  %8383 = vmatpush.bf16.msra.mxu0 %v8305
  %8384 = vmatpush.bf16.msra.mxu0 %v8304
  %8385 = vmatpush.bf16.msra.mxu0 %v8303
  %8386 = vmatpush.bf16.msra.mxu0 %v8302
  %8387 = vmatpush.bf16.msra.mxu0 %v8301
  %8388 = vmatpush.bf16.msra.mxu0 %v8300
  %8389 = vmatpush.bf16.msra.mxu0 %v8299
  %8390 = vmatpush.bf16.msra.mxu0 %v8298
  %8391 = vmatmul.bf16.gmra.mxu0 %v8062
  %v8392 = vpop.f32.mrf.mxu0
  %v8393 = vadd.f32 %v8380, %v8392
  %v8394 = vpop.f32.mrf.mxu0
  %8395 = vdwg.mxu0
  %8396 = vmatpush.bf16.msra.mxu0 %v8313
  %8397 = vmatpush.bf16.msra.mxu0 %v8312
  %8398 = vmatpush.bf16.msra.mxu0 %v8311
  %8399 = vmatpush.bf16.msra.mxu0 %v8310
  %8400 = vmatpush.bf16.msra.mxu0 %v8309
  %8401 = vmatpush.bf16.msra.mxu0 %v8308
  %8402 = vmatpush.bf16.msra.mxu0 %v8307
  %8403 = vmatpush.bf16.msra.mxu0 %v8306
  %8404 = vmatmul.bf16.gmra.mxu0 %v8063
  %v8405 = vpop.f32.mrf.mxu0
  %v8406 = vadd.f32 %v8393, %v8405
  %v8407 = vpop.f32.mrf.mxu0
  %8408 = vdwg.mxu0
  %8409 = vmatpush.bf16.msra.mxu0 0
  %8410 = vmatpush.bf16.msra.mxu0 0
  %8411 = vmatpush.bf16.msra.mxu0 0
  %8412 = vmatpush.bf16.msra.mxu0 0
  %8413 = vmatpush.bf16.msra.mxu0 %v8317
  %8414 = vmatpush.bf16.msra.mxu0 %v8316
  %8415 = vmatpush.bf16.msra.mxu0 %v8315
  %8416 = vmatpush.bf16.msra.mxu0 %v8314
  %8417 = vmatmul.bf16.gmra.mxu0 %v8355
  %v8418 = vpop.f32.mrf.mxu0
  %v8419 = vadd.f32 %v8406, %v8418
  %v8420 = vpop.f32.mrf.mxu0
  %8421 = vdwg.mxu0
  %v8422 = vadd.f32 %v8054, %v8419
  %8423 = vst [vmem:[%s10] sm:$0xff] %v8422
  %v8424 = vld [vmem:[%s10] sm:$0xff]
  %v8425 = vld [vmem:[#allocation4 + $0xf0] sm:$0xff]
  %v8426 = vld [vmem:[#allocation4 + $0xf8] sm:$0xff]
  %v8427 = vld [vmem:[#allocation4 + $0x100] sm:$0xff]
  %v8428 = vld [vmem:[#allocation4 + $0x108] sm:$0xff]
  %v8429 = vld [vmem:[#allocation4 + $0x110] sm:$0xff]
  %v8430 = vpack.c.bf16 %v8425, %v8425
  %v8431 = vpack.c.bf16 %v8426, %v8426
  %v8432 = vpack.c.bf16 %v8427, %v8427
  %v8433 = vpack.c.bf16 %v8428, %v8428
  %v8434 = vpack.c.bf16 %v8429, %v8429
  %s8435 = scalar_lea.vmem %s8, 1728
  %v8436 = vld [vmem:[%s8435] sm:$0xf]
  %v8437 = vld [vmem:[%s8435 + $0x4] sm:$0xf]
  %v8438 = vld [vmem:[%s8435 + $0x8] sm:$0xf]
  %v8439 = vld [vmem:[%s8435 + $0xc] sm:$0xf]
  %v8440 = vld [vmem:[%s8435 + $0x10] sm:$0xf]
  %v8441 = vld [vmem:[%s8435 + $0x14] sm:$0xf]
  %v8442 = vld [vmem:[%s8435 + $0x18] sm:$0xf]
  %v8443 = vld [vmem:[%s8435 + $0x1c] sm:$0xf]
  %v8444 = vld [vmem:[%s8435 + $0x20] sm:$0xf]
  %v8445 = vld [vmem:[%s8435 + $0x24] sm:$0xf]
  %v8446 = vld [vmem:[%s8435 + $0x28] sm:$0xf]
  %v8447 = vld [vmem:[%s8435 + $0x2c] sm:$0xf]
  %v8448 = vld [vmem:[%s8435 + $0x30] sm:$0xf]
  %v8449 = vld [vmem:[%s8435 + $0x34] sm:$0xf]
  %v8450 = vld [vmem:[%s8435 + $0x38] sm:$0xf]
  %v8451 = vld [vmem:[%s8435 + $0x3c] sm:$0xf]
  %v8452 = vld [vmem:[%s8435 + $0x40] sm:$0xf]
  %v8453 = vld [vmem:[%s8435 + $0x44] sm:$0xf]
  %v8454 = vld [vmem:[%s8435 + $0x48] sm:$0xf]
  %v8455 = vld [vmem:[%s8435 + $0x4c] sm:$0xf]
  %v8456 = vld [vmem:[%s8435 + $0x50] sm:$0xf]
  %v8457 = vld [vmem:[%s8435 + $0x54] sm:$0xf]
  %v8458 = vld [vmem:[%s8435 + $0x58] sm:$0xf]
  %v8459 = vld [vmem:[%s8435 + $0x5c] sm:$0xf]
  %v8460 = vld [vmem:[%s8435 + $0x60] sm:$0xf]
  %v8461 = vld [vmem:[%s8435 + $0x64] sm:$0xf]
  %v8462 = vld [vmem:[%s8435 + $0x68] sm:$0xf]
  %v8463 = vld [vmem:[%s8435 + $0x6c] sm:$0xf]
  %v8464 = vld [vmem:[%s8435 + $0x70] sm:$0xf]
  %v8465 = vld [vmem:[%s8435 + $0x74] sm:$0xf]
  %v8466 = vld [vmem:[%s8435 + $0x78] sm:$0xf]
  %v8467 = vld [vmem:[%s8435 + $0x7c] sm:$0xf]
  %v8468 = vld [vmem:[%s8435 + $0x80] sm:$0xf]
  %v8469 = vld [vmem:[%s8435 + $0x84] sm:$0xf]
  %v8470 = vld [vmem:[%s8435 + $0x88] sm:$0xf]
  %v8471 = vld [vmem:[%s8435 + $0x8c] sm:$0xf]
  %v8472 = vld [vmem:[%s8435 + $0x90] sm:$0xf]
  %v8473 = vld [vmem:[%s8435 + $0x94] sm:$0xf]
  %v8474 = vld [vmem:[%s8435 + $0x98] sm:$0xf]
  %v8475 = vld [vmem:[%s8435 + $0x9c] sm:$0xf]
  %v8476 = vld [vmem:[%s8435 + $0xa0] sm:$0xf]
  %v8477 = vld [vmem:[%s8435 + $0xa4] sm:$0xf]
  %v8478 = vld [vmem:[%s8435 + $0xa8] sm:$0xf]
  %v8479 = vld [vmem:[%s8435 + $0xac] sm:$0xf]
  %v8480 = vld [vmem:[%s8435 + $0xb0] sm:$0xf]
  %v8481 = vld [vmem:[%s8435 + $0xb4] sm:$0xf]
  %v8482 = vld [vmem:[%s8435 + $0xb8] sm:$0xf]
  %v8483 = vld [vmem:[%s8435 + $0xbc] sm:$0xf]
  %v8484 = vld [vmem:[%s8435 + $0xc0] sm:$0xf]
  %v8485 = vld [vmem:[%s8435 + $0xc4] sm:$0xf]
  %v8486 = vld [vmem:[%s8435 + $0xc8] sm:$0xf]
  %v8487 = vld [vmem:[%s8435 + $0xcc] sm:$0xf]
  %v8488 = vld [vmem:[%s8435 + $0xd0] sm:$0xf]
  %v8489 = vld [vmem:[%s8435 + $0xd4] sm:$0xf]
  %v8490 = vld [vmem:[%s8435 + $0xd8] sm:$0xf]
  %v8491 = vld [vmem:[%s8435 + $0xdc] sm:$0xf]
  %v8492 = vld [vmem:[%s8435 + $0xe0] sm:$0xf]
  %v8493 = vld [vmem:[%s8435 + $0xe4] sm:$0xf]
  %v8494 = vld [vmem:[%s8435 + $0xe8] sm:$0xf]
  %v8495 = vld [vmem:[%s8435 + $0xec] sm:$0xf]
  %v8496 = vld [vmem:[%s8435 + $0xf0] sm:$0xf]
  %v8497 = vld [vmem:[%s8435 + $0xf4] sm:$0xf]
  %v8498 = vld [vmem:[%s8435 + $0xf8] sm:$0xf]
  %v8499 = vld [vmem:[%s8435 + $0xfc] sm:$0xf]
  %v8500 = vld [vmem:[%s8435 + $0x100] sm:$0xf]
  %v8501 = vld [vmem:[%s8435 + $0x104] sm:$0xf]
  %v8502 = vld [vmem:[%s8435 + $0x108] sm:$0xf]
  %v8503 = vld [vmem:[%s8435 + $0x10c] sm:$0xf]
  %v8504 = vld [vmem:[%s8435 + $0x110] sm:$0xf]
  %v8505 = vld [vmem:[%s8435 + $0x114] sm:$0xf]
  %v8506 = vld [vmem:[%s8435 + $0x118] sm:$0xf]
  %v8507 = vld [vmem:[%s8435 + $0x11c] sm:$0xf]
  %v8580 = vunpack.c.l.b16 %v8436
  %v8581 = vunpack.c.l.b16 %v8437
  %v8582 = vunpack.c.l.b16 %v8438
  %v8583 = vunpack.c.l.b16 %v8439
  %v8584 = vunpack.c.l.b16 %v8440
  %v8585 = vunpack.c.l.b16 %v8441
  %v8586 = vunpack.c.l.b16 %v8442
  %v8587 = vunpack.c.l.b16 %v8443
  %v8588 = vunpack.c.l.b16 %v8444
  %v8589 = vunpack.c.l.b16 %v8445
  %v8590 = vunpack.c.l.b16 %v8446
  %v8591 = vunpack.c.l.b16 %v8447
  %v8592 = vunpack.c.l.b16 %v8448
  %v8593 = vunpack.c.l.b16 %v8449
  %v8594 = vunpack.c.l.b16 %v8450
  %v8595 = vunpack.c.l.b16 %v8451
  %v8596 = vunpack.c.l.b16 %v8452
  %v8597 = vunpack.c.l.b16 %v8453
  %v8598 = vunpack.c.l.b16 %v8454
  %v8599 = vunpack.c.l.b16 %v8455
  %v8600 = vunpack.c.l.b16 %v8456
  %v8601 = vunpack.c.l.b16 %v8457
  %v8602 = vunpack.c.l.b16 %v8458
  %v8603 = vunpack.c.l.b16 %v8459
  %v8604 = vunpack.c.l.b16 %v8460
  %v8605 = vunpack.c.l.b16 %v8461
  %v8606 = vunpack.c.l.b16 %v8462
  %v8607 = vunpack.c.l.b16 %v8463
  %v8608 = vunpack.c.l.b16 %v8464
  %v8609 = vunpack.c.l.b16 %v8465
  %v8610 = vunpack.c.l.b16 %v8466
  %v8611 = vunpack.c.l.b16 %v8467
  %v8612 = vunpack.c.l.b16 %v8468
  %v8613 = vunpack.c.l.b16 %v8469
  %v8614 = vunpack.c.l.b16 %v8470
  %v8615 = vunpack.c.l.b16 %v8471
  %v8616 = vunpack.c.l.b16 %v8472
  %v8617 = vunpack.c.l.b16 %v8473
  %v8618 = vunpack.c.l.b16 %v8474
  %v8619 = vunpack.c.l.b16 %v8475
  %v8620 = vunpack.c.l.b16 %v8476
  %v8621 = vunpack.c.l.b16 %v8477
  %v8622 = vunpack.c.l.b16 %v8478
  %v8623 = vunpack.c.l.b16 %v8479
  %v8624 = vunpack.c.l.b16 %v8480
  %v8625 = vunpack.c.l.b16 %v8481
  %v8626 = vunpack.c.l.b16 %v8482
  %v8627 = vunpack.c.l.b16 %v8483
  %v8628 = vunpack.c.l.b16 %v8484
  %v8629 = vunpack.c.l.b16 %v8485
  %v8630 = vunpack.c.l.b16 %v8486
  %v8631 = vunpack.c.l.b16 %v8487
  %v8632 = vunpack.c.l.b16 %v8488
  %v8633 = vunpack.c.l.b16 %v8489
  %v8634 = vunpack.c.l.b16 %v8490
  %v8635 = vunpack.c.l.b16 %v8491
  %v8636 = vunpack.c.l.b16 %v8492
  %v8637 = vunpack.c.l.b16 %v8493
  %v8638 = vunpack.c.l.b16 %v8494
  %v8639 = vunpack.c.l.b16 %v8495
  %v8640 = vunpack.c.l.b16 %v8496
  %v8641 = vunpack.c.l.b16 %v8497
  %v8642 = vunpack.c.l.b16 %v8498
  %v8643 = vunpack.c.l.b16 %v8499
  %v8644 = vunpack.c.l.b16 %v8500
  %v8645 = vunpack.c.l.b16 %v8501
  %v8646 = vunpack.c.l.b16 %v8502
  %v8647 = vunpack.c.l.b16 %v8503
  %v8648 = vunpack.c.l.b16 %v8504
  %v8649 = vunpack.c.l.b16 %v8505
  %v8650 = vunpack.c.l.b16 %v8506
  %v8651 = vunpack.c.l.b16 %v8507
  %v8652 = vpack.c.b16 %v8581, %v8580
  %v8653 = vpack.c.b16 %v8583, %v8582
  %v8654 = vpack.c.b16 %v8585, %v8584
  %v8655 = vpack.c.b16 %v8587, %v8586
  %v8656 = vpack.c.b16 %v8589, %v8588
  %v8657 = vpack.c.b16 %v8591, %v8590
  %v8658 = vpack.c.b16 %v8593, %v8592
  %v8659 = vpack.c.b16 %v8595, %v8594
  %v8660 = vpack.c.b16 %v8597, %v8596
  %v8661 = vpack.c.b16 %v8599, %v8598
  %v8662 = vpack.c.b16 %v8601, %v8600
  %v8663 = vpack.c.b16 %v8603, %v8602
  %v8664 = vpack.c.b16 %v8605, %v8604
  %v8665 = vpack.c.b16 %v8607, %v8606
  %v8666 = vpack.c.b16 %v8609, %v8608
  %v8667 = vpack.c.b16 %v8611, %v8610
  %v8668 = vpack.c.b16 %v8613, %v8612
  %v8669 = vpack.c.b16 %v8615, %v8614
  %v8670 = vpack.c.b16 %v8617, %v8616
  %v8671 = vpack.c.b16 %v8619, %v8618
  %v8672 = vpack.c.b16 %v8621, %v8620
  %v8673 = vpack.c.b16 %v8623, %v8622
  %v8674 = vpack.c.b16 %v8625, %v8624
  %v8675 = vpack.c.b16 %v8627, %v8626
  %v8676 = vpack.c.b16 %v8629, %v8628
  %v8677 = vpack.c.b16 %v8631, %v8630
  %v8678 = vpack.c.b16 %v8633, %v8632
  %v8679 = vpack.c.b16 %v8635, %v8634
  %v8680 = vpack.c.b16 %v8637, %v8636
  %v8681 = vpack.c.b16 %v8639, %v8638
  %v8682 = vpack.c.b16 %v8641, %v8640
  %v8683 = vpack.c.b16 %v8643, %v8642
  %v8684 = vpack.c.b16 %v8645, %v8644
  %v8685 = vpack.c.b16 %v8647, %v8646
  %v8686 = vpack.c.b16 %v8649, %v8648
  %v8687 = vpack.c.b16 %v8651, %v8650
  %v8725 = vsel %vm1983, %v8434, 0
  %8727 = vmatpush.bf16.msra.mxu0 %v8659
  %8728 = vmatpush.bf16.msra.mxu0 %v8658
  %8729 = vmatpush.bf16.msra.mxu0 %v8657
  %8730 = vmatpush.bf16.msra.mxu0 %v8656
  %8731 = vmatpush.bf16.msra.mxu0 %v8655
  %8732 = vmatpush.bf16.msra.mxu0 %v8654
  %8733 = vmatpush.bf16.msra.mxu0 %v8653
  %8734 = vmatpush.bf16.msra.mxu0 %v8652
  %8735 = vmatmul.bf16.gmra.mxu0 %v8430
  %v8736 = vpop.f32.mrf.mxu0
  %v8737 = vadd.f32 0.0, %v8736
  %v8738 = vpop.f32.mrf.mxu0
  %8739 = vdwg.mxu0
  %8740 = vmatpush.bf16.msra.mxu0 %v8667
  %8741 = vmatpush.bf16.msra.mxu0 %v8666
  %8742 = vmatpush.bf16.msra.mxu0 %v8665
  %8743 = vmatpush.bf16.msra.mxu0 %v8664
  %8744 = vmatpush.bf16.msra.mxu0 %v8663
  %8745 = vmatpush.bf16.msra.mxu0 %v8662
  %8746 = vmatpush.bf16.msra.mxu0 %v8661
  %8747 = vmatpush.bf16.msra.mxu0 %v8660
  %8748 = vmatmul.bf16.gmra.mxu0 %v8431
  %v8749 = vpop.f32.mrf.mxu0
  %v8750 = vadd.f32 %v8737, %v8749
  %v8751 = vpop.f32.mrf.mxu0
  %8752 = vdwg.mxu0
  %8753 = vmatpush.bf16.msra.mxu0 %v8675
  %8754 = vmatpush.bf16.msra.mxu0 %v8674
  %8755 = vmatpush.bf16.msra.mxu0 %v8673
  %8756 = vmatpush.bf16.msra.mxu0 %v8672
  %8757 = vmatpush.bf16.msra.mxu0 %v8671
  %8758 = vmatpush.bf16.msra.mxu0 %v8670
  %8759 = vmatpush.bf16.msra.mxu0 %v8669
  %8760 = vmatpush.bf16.msra.mxu0 %v8668
  %8761 = vmatmul.bf16.gmra.mxu0 %v8432
  %v8762 = vpop.f32.mrf.mxu0
  %v8763 = vadd.f32 %v8750, %v8762
  %v8764 = vpop.f32.mrf.mxu0
  %8765 = vdwg.mxu0
  %8766 = vmatpush.bf16.msra.mxu0 %v8683
  %8767 = vmatpush.bf16.msra.mxu0 %v8682
  %8768 = vmatpush.bf16.msra.mxu0 %v8681
  %8769 = vmatpush.bf16.msra.mxu0 %v8680
  %8770 = vmatpush.bf16.msra.mxu0 %v8679
  %8771 = vmatpush.bf16.msra.mxu0 %v8678
  %8772 = vmatpush.bf16.msra.mxu0 %v8677
  %8773 = vmatpush.bf16.msra.mxu0 %v8676
  %8774 = vmatmul.bf16.gmra.mxu0 %v8433
  %v8775 = vpop.f32.mrf.mxu0
  %v8776 = vadd.f32 %v8763, %v8775
  %v8777 = vpop.f32.mrf.mxu0
  %8778 = vdwg.mxu0
  %8779 = vmatpush.bf16.msra.mxu0 0
  %8780 = vmatpush.bf16.msra.mxu0 0
  %8781 = vmatpush.bf16.msra.mxu0 0
  %8782 = vmatpush.bf16.msra.mxu0 0
  %8783 = vmatpush.bf16.msra.mxu0 %v8687
  %8784 = vmatpush.bf16.msra.mxu0 %v8686
  %8785 = vmatpush.bf16.msra.mxu0 %v8685
  %8786 = vmatpush.bf16.msra.mxu0 %v8684
  %8787 = vmatmul.bf16.gmra.mxu0 %v8725
  %v8788 = vpop.f32.mrf.mxu0
  %v8789 = vadd.f32 %v8776, %v8788
  %v8790 = vpop.f32.mrf.mxu0
  %8791 = vdwg.mxu0
  %v8792 = vadd.f32 %v8424, %v8789
  %8793 = vst [vmem:[%s10] sm:$0xff] %v8792
  %v8794 = vld [vmem:[%s10] sm:$0xff]
  %v8795 = vld [vmem:[#allocation4 + $0x118] sm:$0xff]
  %v8796 = vld [vmem:[#allocation4 + $0x120] sm:$0xff]
  %v8797 = vld [vmem:[#allocation4 + $0x128] sm:$0xff]
  %v8798 = vld [vmem:[#allocation4 + $0x130] sm:$0xff]
  %v8799 = vld [vmem:[#allocation4 + $0x138] sm:$0xff]
  %v8800 = vpack.c.bf16 %v8795, %v8795
  %v8801 = vpack.c.bf16 %v8796, %v8796
  %v8802 = vpack.c.bf16 %v8797, %v8797
  %v8803 = vpack.c.bf16 %v8798, %v8798
  %v8804 = vpack.c.bf16 %v8799, %v8799
  %s8805 = scalar_lea.vmem %s8, 2016
  %v8806 = vld [vmem:[%s8805] sm:$0xf]
  %v8807 = vld [vmem:[%s8805 + $0x4] sm:$0xf]
  %v8808 = vld [vmem:[%s8805 + $0x8] sm:$0xf]
  %v8809 = vld [vmem:[%s8805 + $0xc] sm:$0xf]
  %v8810 = vld [vmem:[%s8805 + $0x10] sm:$0xf]
  %v8811 = vld [vmem:[%s8805 + $0x14] sm:$0xf]
  %v8812 = vld [vmem:[%s8805 + $0x18] sm:$0xf]
  %v8813 = vld [vmem:[%s8805 + $0x1c] sm:$0xf]
  %v8814 = vld [vmem:[%s8805 + $0x20] sm:$0xf]
  %v8815 = vld [vmem:[%s8805 + $0x24] sm:$0xf]
  %v8816 = vld [vmem:[%s8805 + $0x28] sm:$0xf]
  %v8817 = vld [vmem:[%s8805 + $0x2c] sm:$0xf]
  %v8818 = vld [vmem:[%s8805 + $0x30] sm:$0xf]
  %v8819 = vld [vmem:[%s8805 + $0x34] sm:$0xf]
  %v8820 = vld [vmem:[%s8805 + $0x38] sm:$0xf]
  %v8821 = vld [vmem:[%s8805 + $0x3c] sm:$0xf]
  %v8822 = vld [vmem:[%s8805 + $0x40] sm:$0xf]
  %v8823 = vld [vmem:[%s8805 + $0x44] sm:$0xf]
  %v8824 = vld [vmem:[%s8805 + $0x48] sm:$0xf]
  %v8825 = vld [vmem:[%s8805 + $0x4c] sm:$0xf]
  %v8826 = vld [vmem:[%s8805 + $0x50] sm:$0xf]
  %v8827 = vld [vmem:[%s8805 + $0x54] sm:$0xf]
  %v8828 = vld [vmem:[%s8805 + $0x58] sm:$0xf]
  %v8829 = vld [vmem:[%s8805 + $0x5c] sm:$0xf]
  %v8830 = vld [vmem:[%s8805 + $0x60] sm:$0xf]
  %v8831 = vld [vmem:[%s8805 + $0x64] sm:$0xf]
  %v8832 = vld [vmem:[%s8805 + $0x68] sm:$0xf]
  %v8833 = vld [vmem:[%s8805 + $0x6c] sm:$0xf]
  %v8834 = vld [vmem:[%s8805 + $0x70] sm:$0xf]
  %v8835 = vld [vmem:[%s8805 + $0x74] sm:$0xf]
  %v8836 = vld [vmem:[%s8805 + $0x78] sm:$0xf]
  %v8837 = vld [vmem:[%s8805 + $0x7c] sm:$0xf]
  %v8838 = vld [vmem:[%s8805 + $0x80] sm:$0xf]
  %v8839 = vld [vmem:[%s8805 + $0x84] sm:$0xf]
  %v8840 = vld [vmem:[%s8805 + $0x88] sm:$0xf]
  %v8841 = vld [vmem:[%s8805 + $0x8c] sm:$0xf]
  %v8842 = vld [vmem:[%s8805 + $0x90] sm:$0xf]
  %v8843 = vld [vmem:[%s8805 + $0x94] sm:$0xf]
  %v8844 = vld [vmem:[%s8805 + $0x98] sm:$0xf]
  %v8845 = vld [vmem:[%s8805 + $0x9c] sm:$0xf]
  %v8846 = vld [vmem:[%s8805 + $0xa0] sm:$0xf]
  %v8847 = vld [vmem:[%s8805 + $0xa4] sm:$0xf]
  %v8848 = vld [vmem:[%s8805 + $0xa8] sm:$0xf]
  %v8849 = vld [vmem:[%s8805 + $0xac] sm:$0xf]
  %v8850 = vld [vmem:[%s8805 + $0xb0] sm:$0xf]
  %v8851 = vld [vmem:[%s8805 + $0xb4] sm:$0xf]
  %v8852 = vld [vmem:[%s8805 + $0xb8] sm:$0xf]
  %v8853 = vld [vmem:[%s8805 + $0xbc] sm:$0xf]
  %v8854 = vld [vmem:[%s8805 + $0xc0] sm:$0xf]
  %v8855 = vld [vmem:[%s8805 + $0xc4] sm:$0xf]
  %v8856 = vld [vmem:[%s8805 + $0xc8] sm:$0xf]
  %v8857 = vld [vmem:[%s8805 + $0xcc] sm:$0xf]
  %v8858 = vld [vmem:[%s8805 + $0xd0] sm:$0xf]
  %v8859 = vld [vmem:[%s8805 + $0xd4] sm:$0xf]
  %v8860 = vld [vmem:[%s8805 + $0xd8] sm:$0xf]
  %v8861 = vld [vmem:[%s8805 + $0xdc] sm:$0xf]
  %v8862 = vld [vmem:[%s8805 + $0xe0] sm:$0xf]
  %v8863 = vld [vmem:[%s8805 + $0xe4] sm:$0xf]
  %v8864 = vld [vmem:[%s8805 + $0xe8] sm:$0xf]
  %v8865 = vld [vmem:[%s8805 + $0xec] sm:$0xf]
  %v8866 = vld [vmem:[%s8805 + $0xf0] sm:$0xf]
  %v8867 = vld [vmem:[%s8805 + $0xf4] sm:$0xf]
  %v8868 = vld [vmem:[%s8805 + $0xf8] sm:$0xf]
  %v8869 = vld [vmem:[%s8805 + $0xfc] sm:$0xf]
  %v8870 = vld [vmem:[%s8805 + $0x100] sm:$0xf]
  %v8871 = vld [vmem:[%s8805 + $0x104] sm:$0xf]
  %v8872 = vld [vmem:[%s8805 + $0x108] sm:$0xf]
  %v8873 = vld [vmem:[%s8805 + $0x10c] sm:$0xf]
  %v8874 = vld [vmem:[%s8805 + $0x110] sm:$0xf]
  %v8875 = vld [vmem:[%s8805 + $0x114] sm:$0xf]
  %v8876 = vld [vmem:[%s8805 + $0x118] sm:$0xf]
  %v8877 = vld [vmem:[%s8805 + $0x11c] sm:$0xf]
  %v8950 = vunpack.c.l.b16 %v8806
  %v8951 = vunpack.c.l.b16 %v8807
  %v8952 = vunpack.c.l.b16 %v8808
  %v8953 = vunpack.c.l.b16 %v8809
  %v8954 = vunpack.c.l.b16 %v8810
  %v8955 = vunpack.c.l.b16 %v8811
  %v8956 = vunpack.c.l.b16 %v8812
  %v8957 = vunpack.c.l.b16 %v8813
  %v8958 = vunpack.c.l.b16 %v8814
  %v8959 = vunpack.c.l.b16 %v8815
  %v8960 = vunpack.c.l.b16 %v8816
  %v8961 = vunpack.c.l.b16 %v8817
  %v8962 = vunpack.c.l.b16 %v8818
  %v8963 = vunpack.c.l.b16 %v8819
  %v8964 = vunpack.c.l.b16 %v8820
  %v8965 = vunpack.c.l.b16 %v8821
  %v8966 = vunpack.c.l.b16 %v8822
  %v8967 = vunpack.c.l.b16 %v8823
  %v8968 = vunpack.c.l.b16 %v8824
  %v8969 = vunpack.c.l.b16 %v8825
  %v8970 = vunpack.c.l.b16 %v8826
  %v8971 = vunpack.c.l.b16 %v8827
  %v8972 = vunpack.c.l.b16 %v8828
  %v8973 = vunpack.c.l.b16 %v8829
  %v8974 = vunpack.c.l.b16 %v8830
  %v8975 = vunpack.c.l.b16 %v8831
  %v8976 = vunpack.c.l.b16 %v8832
  %v8977 = vunpack.c.l.b16 %v8833
  %v8978 = vunpack.c.l.b16 %v8834
  %v8979 = vunpack.c.l.b16 %v8835
  %v8980 = vunpack.c.l.b16 %v8836
  %v8981 = vunpack.c.l.b16 %v8837
  %v8982 = vunpack.c.l.b16 %v8838
  %v8983 = vunpack.c.l.b16 %v8839
  %v8984 = vunpack.c.l.b16 %v8840
  %v8985 = vunpack.c.l.b16 %v8841
  %v8986 = vunpack.c.l.b16 %v8842
  %v8987 = vunpack.c.l.b16 %v8843
  %v8988 = vunpack.c.l.b16 %v8844
  %v8989 = vunpack.c.l.b16 %v8845
  %v8990 = vunpack.c.l.b16 %v8846
  %v8991 = vunpack.c.l.b16 %v8847
  %v8992 = vunpack.c.l.b16 %v8848
  %v8993 = vunpack.c.l.b16 %v8849
  %v8994 = vunpack.c.l.b16 %v8850
  %v8995 = vunpack.c.l.b16 %v8851
  %v8996 = vunpack.c.l.b16 %v8852
  %v8997 = vunpack.c.l.b16 %v8853
  %v8998 = vunpack.c.l.b16 %v8854
  %v8999 = vunpack.c.l.b16 %v8855
  %v9000 = vunpack.c.l.b16 %v8856
  %v9001 = vunpack.c.l.b16 %v8857
  %v9002 = vunpack.c.l.b16 %v8858
  %v9003 = vunpack.c.l.b16 %v8859
  %v9004 = vunpack.c.l.b16 %v8860
  %v9005 = vunpack.c.l.b16 %v8861
  %v9006 = vunpack.c.l.b16 %v8862
  %v9007 = vunpack.c.l.b16 %v8863
  %v9008 = vunpack.c.l.b16 %v8864
  %v9009 = vunpack.c.l.b16 %v8865
  %v9010 = vunpack.c.l.b16 %v8866
  %v9011 = vunpack.c.l.b16 %v8867
  %v9012 = vunpack.c.l.b16 %v8868
  %v9013 = vunpack.c.l.b16 %v8869
  %v9014 = vunpack.c.l.b16 %v8870
  %v9015 = vunpack.c.l.b16 %v8871
  %v9016 = vunpack.c.l.b16 %v8872
  %v9017 = vunpack.c.l.b16 %v8873
  %v9018 = vunpack.c.l.b16 %v8874
  %v9019 = vunpack.c.l.b16 %v8875
  %v9020 = vunpack.c.l.b16 %v8876
  %v9021 = vunpack.c.l.b16 %v8877
  %v9022 = vpack.c.b16 %v8951, %v8950
  %v9023 = vpack.c.b16 %v8953, %v8952
  %v9024 = vpack.c.b16 %v8955, %v8954
  %v9025 = vpack.c.b16 %v8957, %v8956
  %v9026 = vpack.c.b16 %v8959, %v8958
  %v9027 = vpack.c.b16 %v8961, %v8960
  %v9028 = vpack.c.b16 %v8963, %v8962
  %v9029 = vpack.c.b16 %v8965, %v8964
  %v9030 = vpack.c.b16 %v8967, %v8966
  %v9031 = vpack.c.b16 %v8969, %v8968
  %v9032 = vpack.c.b16 %v8971, %v8970
  %v9033 = vpack.c.b16 %v8973, %v8972
  %v9034 = vpack.c.b16 %v8975, %v8974
  %v9035 = vpack.c.b16 %v8977, %v8976
  %v9036 = vpack.c.b16 %v8979, %v8978
  %v9037 = vpack.c.b16 %v8981, %v8980
  %v9038 = vpack.c.b16 %v8983, %v8982
  %v9039 = vpack.c.b16 %v8985, %v8984
  %v9040 = vpack.c.b16 %v8987, %v8986
  %v9041 = vpack.c.b16 %v8989, %v8988
  %v9042 = vpack.c.b16 %v8991, %v8990
  %v9043 = vpack.c.b16 %v8993, %v8992
  %v9044 = vpack.c.b16 %v8995, %v8994
  %v9045 = vpack.c.b16 %v8997, %v8996
  %v9046 = vpack.c.b16 %v8999, %v8998
  %v9047 = vpack.c.b16 %v9001, %v9000
  %v9048 = vpack.c.b16 %v9003, %v9002
  %v9049 = vpack.c.b16 %v9005, %v9004
  %v9050 = vpack.c.b16 %v9007, %v9006
  %v9051 = vpack.c.b16 %v9009, %v9008
  %v9052 = vpack.c.b16 %v9011, %v9010
  %v9053 = vpack.c.b16 %v9013, %v9012
  %v9054 = vpack.c.b16 %v9015, %v9014
  %v9055 = vpack.c.b16 %v9017, %v9016
  %v9056 = vpack.c.b16 %v9019, %v9018
  %v9057 = vpack.c.b16 %v9021, %v9020
  %v9095 = vsel %vm1983, %v8804, 0
  %9097 = vmatpush.bf16.msra.mxu0 %v9029
  %9098 = vmatpush.bf16.msra.mxu0 %v9028
  %9099 = vmatpush.bf16.msra.mxu0 %v9027
  %9100 = vmatpush.bf16.msra.mxu0 %v9026
  %9101 = vmatpush.bf16.msra.mxu0 %v9025
  %9102 = vmatpush.bf16.msra.mxu0 %v9024
  %9103 = vmatpush.bf16.msra.mxu0 %v9023
  %9104 = vmatpush.bf16.msra.mxu0 %v9022
  %9105 = vmatmul.bf16.gmra.mxu0 %v8800
  %v9106 = vpop.f32.mrf.mxu0
  %v9107 = vadd.f32 0.0, %v9106
  %v9108 = vpop.f32.mrf.mxu0
  %9109 = vdwg.mxu0
  %9110 = vmatpush.bf16.msra.mxu0 %v9037
  %9111 = vmatpush.bf16.msra.mxu0 %v9036
  %9112 = vmatpush.bf16.msra.mxu0 %v9035
  %9113 = vmatpush.bf16.msra.mxu0 %v9034
  %9114 = vmatpush.bf16.msra.mxu0 %v9033
  %9115 = vmatpush.bf16.msra.mxu0 %v9032
  %9116 = vmatpush.bf16.msra.mxu0 %v9031
  %9117 = vmatpush.bf16.msra.mxu0 %v9030
  %9118 = vmatmul.bf16.gmra.mxu0 %v8801
  %v9119 = vpop.f32.mrf.mxu0
  %v9120 = vadd.f32 %v9107, %v9119
  %v9121 = vpop.f32.mrf.mxu0
  %9122 = vdwg.mxu0
  %9123 = vmatpush.bf16.msra.mxu0 %v9045
  %9124 = vmatpush.bf16.msra.mxu0 %v9044
  %9125 = vmatpush.bf16.msra.mxu0 %v9043
  %9126 = vmatpush.bf16.msra.mxu0 %v9042
  %9127 = vmatpush.bf16.msra.mxu0 %v9041
  %9128 = vmatpush.bf16.msra.mxu0 %v9040
  %9129 = vmatpush.bf16.msra.mxu0 %v9039
  %9130 = vmatpush.bf16.msra.mxu0 %v9038
  %9131 = vmatmul.bf16.gmra.mxu0 %v8802
  %v9132 = vpop.f32.mrf.mxu0
  %v9133 = vadd.f32 %v9120, %v9132
  %v9134 = vpop.f32.mrf.mxu0
  %9135 = vdwg.mxu0
  %9136 = vmatpush.bf16.msra.mxu0 %v9053
  %9137 = vmatpush.bf16.msra.mxu0 %v9052
  %9138 = vmatpush.bf16.msra.mxu0 %v9051
  %9139 = vmatpush.bf16.msra.mxu0 %v9050
  %9140 = vmatpush.bf16.msra.mxu0 %v9049
  %9141 = vmatpush.bf16.msra.mxu0 %v9048
  %9142 = vmatpush.bf16.msra.mxu0 %v9047
  %9143 = vmatpush.bf16.msra.mxu0 %v9046
  %9144 = vmatmul.bf16.gmra.mxu0 %v8803
  %v9145 = vpop.f32.mrf.mxu0
  %v9146 = vadd.f32 %v9133, %v9145
  %v9147 = vpop.f32.mrf.mxu0
  %9148 = vdwg.mxu0
  %9149 = vmatpush.bf16.msra.mxu0 0
  %9150 = vmatpush.bf16.msra.mxu0 0
  %9151 = vmatpush.bf16.msra.mxu0 0
  %9152 = vmatpush.bf16.msra.mxu0 0
  %9153 = vmatpush.bf16.msra.mxu0 %v9057
  %9154 = vmatpush.bf16.msra.mxu0 %v9056
  %9155 = vmatpush.bf16.msra.mxu0 %v9055
  %9156 = vmatpush.bf16.msra.mxu0 %v9054
  %9157 = vmatmul.bf16.gmra.mxu0 %v9095
  %v9158 = vpop.f32.mrf.mxu0
  %v9159 = vadd.f32 %v9146, %v9158
  %v9160 = vpop.f32.mrf.mxu0
  %9161 = vdwg.mxu0
  %v9162 = vadd.f32 %v8794, %v9159
  %9163 = vst [vmem:[%s10] sm:$0xff] %v9162
  %v9164 = vld [vmem:[%s10] sm:$0xff]
  %v9165 = vld [vmem:[#allocation4 + $0x140] sm:$0xff]
  %v9166 = vld [vmem:[#allocation4 + $0x148] sm:$0xff]
  %v9167 = vld [vmem:[#allocation4 + $0x150] sm:$0xff]
  %v9168 = vld [vmem:[#allocation4 + $0x158] sm:$0xff]
  %v9169 = vld [vmem:[#allocation4 + $0x160] sm:$0xff]
  %v9170 = vpack.c.bf16 %v9165, %v9165
  %v9171 = vpack.c.bf16 %v9166, %v9166
  %v9172 = vpack.c.bf16 %v9167, %v9167
  %v9173 = vpack.c.bf16 %v9168, %v9168
  %v9174 = vpack.c.bf16 %v9169, %v9169
  %s9175 = scalar_lea.vmem %s8, 2304
  %v9176 = vld [vmem:[%s9175] sm:$0xf]
  %v9177 = vld [vmem:[%s9175 + $0x4] sm:$0xf]
  %v9178 = vld [vmem:[%s9175 + $0x8] sm:$0xf]
  %v9179 = vld [vmem:[%s9175 + $0xc] sm:$0xf]
  %v9180 = vld [vmem:[%s9175 + $0x10] sm:$0xf]
  %v9181 = vld [vmem:[%s9175 + $0x14] sm:$0xf]
  %v9182 = vld [vmem:[%s9175 + $0x18] sm:$0xf]
  %v9183 = vld [vmem:[%s9175 + $0x1c] sm:$0xf]
  %v9184 = vld [vmem:[%s9175 + $0x20] sm:$0xf]
  %v9185 = vld [vmem:[%s9175 + $0x24] sm:$0xf]
  %v9186 = vld [vmem:[%s9175 + $0x28] sm:$0xf]
  %v9187 = vld [vmem:[%s9175 + $0x2c] sm:$0xf]
  %v9188 = vld [vmem:[%s9175 + $0x30] sm:$0xf]
  %v9189 = vld [vmem:[%s9175 + $0x34] sm:$0xf]
  %v9190 = vld [vmem:[%s9175 + $0x38] sm:$0xf]
  %v9191 = vld [vmem:[%s9175 + $0x3c] sm:$0xf]
  %v9192 = vld [vmem:[%s9175 + $0x40] sm:$0xf]
  %v9193 = vld [vmem:[%s9175 + $0x44] sm:$0xf]
  %v9194 = vld [vmem:[%s9175 + $0x48] sm:$0xf]
  %v9195 = vld [vmem:[%s9175 + $0x4c] sm:$0xf]
  %v9196 = vld [vmem:[%s9175 + $0x50] sm:$0xf]
  %v9197 = vld [vmem:[%s9175 + $0x54] sm:$0xf]
  %v9198 = vld [vmem:[%s9175 + $0x58] sm:$0xf]
  %v9199 = vld [vmem:[%s9175 + $0x5c] sm:$0xf]
  %v9200 = vld [vmem:[%s9175 + $0x60] sm:$0xf]
  %v9201 = vld [vmem:[%s9175 + $0x64] sm:$0xf]
  %v9202 = vld [vmem:[%s9175 + $0x68] sm:$0xf]
  %v9203 = vld [vmem:[%s9175 + $0x6c] sm:$0xf]
  %v9204 = vld [vmem:[%s9175 + $0x70] sm:$0xf]
  %v9205 = vld [vmem:[%s9175 + $0x74] sm:$0xf]
  %v9206 = vld [vmem:[%s9175 + $0x78] sm:$0xf]
  %v9207 = vld [vmem:[%s9175 + $0x7c] sm:$0xf]
  %v9208 = vld [vmem:[%s9175 + $0x80] sm:$0xf]
  %v9209 = vld [vmem:[%s9175 + $0x84] sm:$0xf]
  %v9210 = vld [vmem:[%s9175 + $0x88] sm:$0xf]
  %v9211 = vld [vmem:[%s9175 + $0x8c] sm:$0xf]
  %v9212 = vld [vmem:[%s9175 + $0x90] sm:$0xf]
  %v9213 = vld [vmem:[%s9175 + $0x94] sm:$0xf]
  %v9214 = vld [vmem:[%s9175 + $0x98] sm:$0xf]
  %v9215 = vld [vmem:[%s9175 + $0x9c] sm:$0xf]
  %v9216 = vld [vmem:[%s9175 + $0xa0] sm:$0xf]
  %v9217 = vld [vmem:[%s9175 + $0xa4] sm:$0xf]
  %v9218 = vld [vmem:[%s9175 + $0xa8] sm:$0xf]
  %v9219 = vld [vmem:[%s9175 + $0xac] sm:$0xf]
  %v9220 = vld [vmem:[%s9175 + $0xb0] sm:$0xf]
  %v9221 = vld [vmem:[%s9175 + $0xb4] sm:$0xf]
  %v9222 = vld [vmem:[%s9175 + $0xb8] sm:$0xf]
  %v9223 = vld [vmem:[%s9175 + $0xbc] sm:$0xf]
  %v9224 = vld [vmem:[%s9175 + $0xc0] sm:$0xf]
  %v9225 = vld [vmem:[%s9175 + $0xc4] sm:$0xf]
  %v9226 = vld [vmem:[%s9175 + $0xc8] sm:$0xf]
  %v9227 = vld [vmem:[%s9175 + $0xcc] sm:$0xf]
  %v9228 = vld [vmem:[%s9175 + $0xd0] sm:$0xf]
  %v9229 = vld [vmem:[%s9175 + $0xd4] sm:$0xf]
  %v9230 = vld [vmem:[%s9175 + $0xd8] sm:$0xf]
  %v9231 = vld [vmem:[%s9175 + $0xdc] sm:$0xf]
  %v9232 = vld [vmem:[%s9175 + $0xe0] sm:$0xf]
  %v9233 = vld [vmem:[%s9175 + $0xe4] sm:$0xf]
  %v9234 = vld [vmem:[%s9175 + $0xe8] sm:$0xf]
  %v9235 = vld [vmem:[%s9175 + $0xec] sm:$0xf]
  %v9236 = vld [vmem:[%s9175 + $0xf0] sm:$0xf]
  %v9237 = vld [vmem:[%s9175 + $0xf4] sm:$0xf]
  %v9238 = vld [vmem:[%s9175 + $0xf8] sm:$0xf]
  %v9239 = vld [vmem:[%s9175 + $0xfc] sm:$0xf]
  %v9240 = vld [vmem:[%s9175 + $0x100] sm:$0xf]
  %v9241 = vld [vmem:[%s9175 + $0x104] sm:$0xf]
  %v9242 = vld [vmem:[%s9175 + $0x108] sm:$0xf]
  %v9243 = vld [vmem:[%s9175 + $0x10c] sm:$0xf]
  %v9244 = vld [vmem:[%s9175 + $0x110] sm:$0xf]
  %v9245 = vld [vmem:[%s9175 + $0x114] sm:$0xf]
  %v9246 = vld [vmem:[%s9175 + $0x118] sm:$0xf]
  %v9247 = vld [vmem:[%s9175 + $0x11c] sm:$0xf]
  %v9320 = vunpack.c.l.b16 %v9176
  %v9321 = vunpack.c.l.b16 %v9177
  %v9322 = vunpack.c.l.b16 %v9178
  %v9323 = vunpack.c.l.b16 %v9179
  %v9324 = vunpack.c.l.b16 %v9180
  %v9325 = vunpack.c.l.b16 %v9181
  %v9326 = vunpack.c.l.b16 %v9182
  %v9327 = vunpack.c.l.b16 %v9183
  %v9328 = vunpack.c.l.b16 %v9184
  %v9329 = vunpack.c.l.b16 %v9185
  %v9330 = vunpack.c.l.b16 %v9186
  %v9331 = vunpack.c.l.b16 %v9187
  %v9332 = vunpack.c.l.b16 %v9188
  %v9333 = vunpack.c.l.b16 %v9189
  %v9334 = vunpack.c.l.b16 %v9190
  %v9335 = vunpack.c.l.b16 %v9191
  %v9336 = vunpack.c.l.b16 %v9192
  %v9337 = vunpack.c.l.b16 %v9193
  %v9338 = vunpack.c.l.b16 %v9194
  %v9339 = vunpack.c.l.b16 %v9195
  %v9340 = vunpack.c.l.b16 %v9196
  %v9341 = vunpack.c.l.b16 %v9197
  %v9342 = vunpack.c.l.b16 %v9198
  %v9343 = vunpack.c.l.b16 %v9199
  %v9344 = vunpack.c.l.b16 %v9200
  %v9345 = vunpack.c.l.b16 %v9201
  %v9346 = vunpack.c.l.b16 %v9202
  %v9347 = vunpack.c.l.b16 %v9203
  %v9348 = vunpack.c.l.b16 %v9204
  %v9349 = vunpack.c.l.b16 %v9205
  %v9350 = vunpack.c.l.b16 %v9206
  %v9351 = vunpack.c.l.b16 %v9207
  %v9352 = vunpack.c.l.b16 %v9208
  %v9353 = vunpack.c.l.b16 %v9209
  %v9354 = vunpack.c.l.b16 %v9210
  %v9355 = vunpack.c.l.b16 %v9211
  %v9356 = vunpack.c.l.b16 %v9212
  %v9357 = vunpack.c.l.b16 %v9213
  %v9358 = vunpack.c.l.b16 %v9214
  %v9359 = vunpack.c.l.b16 %v9215
  %v9360 = vunpack.c.l.b16 %v9216
  %v9361 = vunpack.c.l.b16 %v9217
  %v9362 = vunpack.c.l.b16 %v9218
  %v9363 = vunpack.c.l.b16 %v9219
  %v9364 = vunpack.c.l.b16 %v9220
  %v9365 = vunpack.c.l.b16 %v9221
  %v9366 = vunpack.c.l.b16 %v9222
  %v9367 = vunpack.c.l.b16 %v9223
  %v9368 = vunpack.c.l.b16 %v9224
  %v9369 = vunpack.c.l.b16 %v9225
  %v9370 = vunpack.c.l.b16 %v9226
  %v9371 = vunpack.c.l.b16 %v9227
  %v9372 = vunpack.c.l.b16 %v9228
  %v9373 = vunpack.c.l.b16 %v9229
  %v9374 = vunpack.c.l.b16 %v9230
  %v9375 = vunpack.c.l.b16 %v9231
  %v9376 = vunpack.c.l.b16 %v9232
  %v9377 = vunpack.c.l.b16 %v9233
  %v9378 = vunpack.c.l.b16 %v9234
  %v9379 = vunpack.c.l.b16 %v9235
  %v9380 = vunpack.c.l.b16 %v9236
  %v9381 = vunpack.c.l.b16 %v9237
  %v9382 = vunpack.c.l.b16 %v9238
  %v9383 = vunpack.c.l.b16 %v9239
  %v9384 = vunpack.c.l.b16 %v9240
  %v9385 = vunpack.c.l.b16 %v9241
  %v9386 = vunpack.c.l.b16 %v9242
  %v9387 = vunpack.c.l.b16 %v9243
  %v9388 = vunpack.c.l.b16 %v9244
  %v9389 = vunpack.c.l.b16 %v9245
  %v9390 = vunpack.c.l.b16 %v9246
  %v9391 = vunpack.c.l.b16 %v9247
  %v9392 = vpack.c.b16 %v9321, %v9320
  %v9393 = vpack.c.b16 %v9323, %v9322
  %v9394 = vpack.c.b16 %v9325, %v9324
  %v9395 = vpack.c.b16 %v9327, %v9326
  %v9396 = vpack.c.b16 %v9329, %v9328
  %v9397 = vpack.c.b16 %v9331, %v9330
  %v9398 = vpack.c.b16 %v9333, %v9332
  %v9399 = vpack.c.b16 %v9335, %v9334
  %v9400 = vpack.c.b16 %v9337, %v9336
  %v9401 = vpack.c.b16 %v9339, %v9338
  %v9402 = vpack.c.b16 %v9341, %v9340
  %v9403 = vpack.c.b16 %v9343, %v9342
  %v9404 = vpack.c.b16 %v9345, %v9344
  %v9405 = vpack.c.b16 %v9347, %v9346
  %v9406 = vpack.c.b16 %v9349, %v9348
  %v9407 = vpack.c.b16 %v9351, %v9350
  %v9408 = vpack.c.b16 %v9353, %v9352
  %v9409 = vpack.c.b16 %v9355, %v9354
  %v9410 = vpack.c.b16 %v9357, %v9356
  %v9411 = vpack.c.b16 %v9359, %v9358
  %v9412 = vpack.c.b16 %v9361, %v9360
  %v9413 = vpack.c.b16 %v9363, %v9362
  %v9414 = vpack.c.b16 %v9365, %v9364
  %v9415 = vpack.c.b16 %v9367, %v9366
  %v9416 = vpack.c.b16 %v9369, %v9368
  %v9417 = vpack.c.b16 %v9371, %v9370
  %v9418 = vpack.c.b16 %v9373, %v9372
  %v9419 = vpack.c.b16 %v9375, %v9374
  %v9420 = vpack.c.b16 %v9377, %v9376
  %v9421 = vpack.c.b16 %v9379, %v9378
  %v9422 = vpack.c.b16 %v9381, %v9380
  %v9423 = vpack.c.b16 %v9383, %v9382
  %v9424 = vpack.c.b16 %v9385, %v9384
  %v9425 = vpack.c.b16 %v9387, %v9386
  %v9426 = vpack.c.b16 %v9389, %v9388
  %v9427 = vpack.c.b16 %v9391, %v9390
  %v9465 = vsel %vm1983, %v9174, 0
  %9467 = vmatpush.bf16.msra.mxu0 %v9399
  %9468 = vmatpush.bf16.msra.mxu0 %v9398
  %9469 = vmatpush.bf16.msra.mxu0 %v9397
  %9470 = vmatpush.bf16.msra.mxu0 %v9396
  %9471 = vmatpush.bf16.msra.mxu0 %v9395
  %9472 = vmatpush.bf16.msra.mxu0 %v9394
  %9473 = vmatpush.bf16.msra.mxu0 %v9393
  %9474 = vmatpush.bf16.msra.mxu0 %v9392
  %9475 = vmatmul.bf16.gmra.mxu0 %v9170
  %v9476 = vpop.f32.mrf.mxu0
  %v9477 = vadd.f32 0.0, %v9476
  %v9478 = vpop.f32.mrf.mxu0
  %9479 = vdwg.mxu0
  %9480 = vmatpush.bf16.msra.mxu0 %v9407
  %9481 = vmatpush.bf16.msra.mxu0 %v9406
  %9482 = vmatpush.bf16.msra.mxu0 %v9405
  %9483 = vmatpush.bf16.msra.mxu0 %v9404
  %9484 = vmatpush.bf16.msra.mxu0 %v9403
  %9485 = vmatpush.bf16.msra.mxu0 %v9402
  %9486 = vmatpush.bf16.msra.mxu0 %v9401
  %9487 = vmatpush.bf16.msra.mxu0 %v9400
  %9488 = vmatmul.bf16.gmra.mxu0 %v9171
  %v9489 = vpop.f32.mrf.mxu0
  %v9490 = vadd.f32 %v9477, %v9489
  %v9491 = vpop.f32.mrf.mxu0
  %9492 = vdwg.mxu0
  %9493 = vmatpush.bf16.msra.mxu0 %v9415
  %9494 = vmatpush.bf16.msra.mxu0 %v9414
  %9495 = vmatpush.bf16.msra.mxu0 %v9413
  %9496 = vmatpush.bf16.msra.mxu0 %v9412
  %9497 = vmatpush.bf16.msra.mxu0 %v9411
  %9498 = vmatpush.bf16.msra.mxu0 %v9410
  %9499 = vmatpush.bf16.msra.mxu0 %v9409
  %9500 = vmatpush.bf16.msra.mxu0 %v9408
  %9501 = vmatmul.bf16.gmra.mxu0 %v9172
  %v9502 = vpop.f32.mrf.mxu0
  %v9503 = vadd.f32 %v9490, %v9502
  %v9504 = vpop.f32.mrf.mxu0
  %9505 = vdwg.mxu0
  %9506 = vmatpush.bf16.msra.mxu0 %v9423
  %9507 = vmatpush.bf16.msra.mxu0 %v9422
  %9508 = vmatpush.bf16.msra.mxu0 %v9421
  %9509 = vmatpush.bf16.msra.mxu0 %v9420
  %9510 = vmatpush.bf16.msra.mxu0 %v9419
  %9511 = vmatpush.bf16.msra.mxu0 %v9418
  %9512 = vmatpush.bf16.msra.mxu0 %v9417
  %9513 = vmatpush.bf16.msra.mxu0 %v9416
  %9514 = vmatmul.bf16.gmra.mxu0 %v9173
  %v9515 = vpop.f32.mrf.mxu0
  %v9516 = vadd.f32 %v9503, %v9515
  %v9517 = vpop.f32.mrf.mxu0
  %9518 = vdwg.mxu0
  %9519 = vmatpush.bf16.msra.mxu0 0
  %9520 = vmatpush.bf16.msra.mxu0 0
  %9521 = vmatpush.bf16.msra.mxu0 0
  %9522 = vmatpush.bf16.msra.mxu0 0
  %9523 = vmatpush.bf16.msra.mxu0 %v9427
  %9524 = vmatpush.bf16.msra.mxu0 %v9426
  %9525 = vmatpush.bf16.msra.mxu0 %v9425
  %9526 = vmatpush.bf16.msra.mxu0 %v9424
  %9527 = vmatmul.bf16.gmra.mxu0 %v9465
  %v9528 = vpop.f32.mrf.mxu0
  %v9529 = vadd.f32 %v9516, %v9528
  %v9530 = vpop.f32.mrf.mxu0
  %9531 = vdwg.mxu0
  %v9532 = vadd.f32 %v9164, %v9529
  %9533 = vst [vmem:[%s10] sm:$0xff] %v9532
  // Predicated region
  $region42: #{model_forward.1} parent=0 // pred_check
    _
  $region43: #{model_forward.1} parent=0 // pred_check_branch
    %9535 = sbr.rel (0) target = $region45
  $region44: #{model_forward.1} parent=0 // pred_region
    _
  $region45: #{model_forward.1} parent=0 // pred_fallthru
    _
  // Predicated region
  $region46: #{model_forward.1} parent=0 // pred_check
    _
  $region47: #{model_forward.1} parent=0 // pred_check_branch
    %9537 = sbr.rel (0) target = $region49
  $region48: #{model_forward.1} parent=0 // pred_region
    _
  $region49: #{model_forward.1} parent=0 // pred_fallthru
    _

</llo_original>
